<compile_context>
chip_gen: v7x
topology: tpu7x:2x2x1
jax: 0.10.0
libtpu: 0.0.40
codegen_flags: <defaults>
</compile_context>

<pallas_src>
import functools

import jax
import jax.numpy as jnp
import numpy as np
from jax import lax
from jax.experimental import pallas as pl
from jax.experimental.pallas import tpu as pltpu


def _fd_embedding_kernel(x_ref, w_ref, b_ref, f_ref, out_ref, *, unroll):
    # x_ref:   (D, S_tile)   one lane tile of the flattened (B*S) axis
    # w_ref:   (CN, 2H, 1)   stacked [sin | cos] weights
    # b_ref:   (CN, 2H, 1)   stacked biases (cos half already shifted by pi/2)
    # f_ref:   (D, 2H, 1)    fusion factors, pre-scaled by 1/(D*2H)
    # out_ref: (CN, S_tile)
    D, S = x_ref.shape
    CN = w_ref.shape[0]

    def body(d, acc):
        # Tiny (CN, 2H, 1) parameter loads inside the loop: ~1.5 KiB of vld per
        # d, lane-splat happens inside the multiply (no pre-broadcast slabs).
        w = w_ref[...]
        b = b_ref[...]
        xrow = x_ref[pl.ds(d, 1), :][None]          # (1, 1, S)
        fs = f_ref[pl.ds(d, 1)]                     # (1, 2H, 1)
        phase = xrow * w + b                        # (CN, 2H, S) single fma stream
        contrib = fs * jnp.sin(phase)               # single sin stream (cos folded)
        return acc + jnp.sum(contrib, axis=1)       # heads+branch: sublane reduce

    acc = lax.fori_loop(0, D, body,
                        jnp.zeros((CN, S), jnp.float32),
                        unroll=unroll)
    out_ref[...] = acc.astype(out_ref.dtype)


def _pick_s_tile(total, cap=512):
    """Lane-aligned tile over the flattened B*S axis.

    Capped at 512 (the body is compute-bound, so 256-512 already amortizes the
    ~0.35us/step overhead while keeping live (CN, 2H, S_tile) slabs small) and
    split so the grid has >= 2 parallel steps whenever the workload allows
    (v7x has 2 TensorCores per chip).
    """
    t_up = pl.cdiv(total, 128) * 128
    if t_up <= 128:
        return 128
    if t_up <= cap:
        return max(128, (t_up // 2) // 128 * 128)   # prefer >= 2 grid steps
    return cap


def fd_embedding_forward(x, params, *, channels, c_date, n_nodes, heads,
                         s_tile=None, d_unroll=4):
    B, S, D = x.shape
    assert D == c_date, "last dim of x must equal c_date"
    CN = channels * n_nodes
    H = heads

    # ---- host-side parameter prep (tiny arrays, done once) ----
    w = jnp.asarray(params["weight"], jnp.float32)        # (C, N, H, 2)
    b = jnp.asarray(params["bias"], jnp.float32)          # (2*C*N*H,)
    fusion = jnp.asarray(params["fusion"], jnp.float32)   # (1,1,1,1,D,2H)

    b4 = b.reshape(channels, n_nodes, H, 2)
    wsin = w[..., 0].reshape(CN, H)
    wcos = w[..., 1].reshape(CN, H)
    bsin = b4[..., 0].reshape(CN, H)
    bcos = b4[..., 1].reshape(CN, H)

    # Branch stacking: cos(p) = sin(p + pi/2), fold the shift into the cos bias
    # and stack [sin | cos] along a 2H sublane axis.
    wstk = jnp.concatenate([wsin, wcos], axis=1).reshape(CN, 2 * H, 1)
    bstk = jnp.concatenate([bsin, bcos + jnp.float32(0.5 * np.pi)],
                           axis=1).reshape(CN, 2 * H, 1)
    # fusion is already ordered [sin heads | cos heads] on its last axis; fold
    # the 1/(D*2H) mean into it.
    scale = 1.0 / float(D * 2 * H)
    fstk = (fusion.reshape(c_date, 2 * H) * scale).reshape(c_date, 2 * H, 1)

    # ---- pack B and S jointly into the lane axis ----
    T = B * S
    if s_tile is None:
        s_tile = _pick_s_tile(T)
    assert s_tile % 128 == 0, "s_tile must be a multiple of 128"
    n_tiles = pl.cdiv(T, s_tile)
    t_pad = n_tiles * s_tile

    x_t = jnp.transpose(x.reshape(T, D).astype(jnp.float32), (1, 0))  # (D, B*S)
    if t_pad != T:
        x_t = jnp.pad(x_t, ((0, 0), (0, t_pad - T)))

    kernel = functools.partial(_fd_embedding_kernel,
                               unroll=max(1, min(d_unroll, D)))

    # Advisory cost hint: elementwise / transcendental bound, tiny I/O.
    elems = CN * 2 * H * D * t_pad
    cost = pl.CostEstimate(
        flops=4 * elems,
        transcendentals=elems,
        bytes_accessed=4 * (D * t_pad + CN * t_pad + 4 * CN * H + 2 * D * H))

    out_flat = pl.pallas_call(
        kernel,
        out_shape=jax.ShapeDtypeStruct((CN, t_pad), x.dtype),
        grid_spec=pltpu.PrefetchScalarGridSpec(
            num_scalar_prefetch=0,
            grid=(n_tiles,),
            in_specs=[
                pl.BlockSpec((D, s_tile), lambda t: (0, t)),
                pl.BlockSpec((CN, 2 * H, 1), lambda t: (0, 0, 0)),
                pl.BlockSpec((CN, 2 * H, 1), lambda t: (0, 0, 0)),
                pl.BlockSpec((c_date, 2 * H, 1), lambda t: (0, 0, 0)),
            ],
            out_specs=pl.BlockSpec((CN, s_tile), lambda t: (0, t)),
        ),
        compiler_params=pltpu.CompilerParams(
            dimension_semantics=("parallel",)),
        cost_estimate=cost,
    )(x_t, wstk, bstk, fstk)

    out = out_flat[:, :T].reshape(CN, B, S)          # drop lane padding
    out = jnp.transpose(out, (1, 0, 2)).reshape(B, channels, n_nodes, S)
    return out


def init_params(key, channels, c_date, n_nodes, heads, embed_period, sigma=0.1):
    """Deterministic re-implementation of FDEmbedding.projection_init."""
    k1, k2, k3 = jax.random.split(key, 3)
    period = list(embed_period)[:heads]
    if len(period) < heads:
        period = period + [1 for _ in range(heads - len(period))]
    period = jnp.asarray(period, jnp.float32).reshape(1, 1, heads, 1)
    weight = jax.random.normal(k1, (channels, n_nodes, heads, 2), jnp.float32)
    weight = 2.0 * np.pi * period + sigma * weight            # (C, N, H, 2)
    bias = 2.0 * np.pi * jax.random.uniform(
        k2, (2 * channels * n_nodes * heads,), jnp.float32)
    fusion = jax.random.normal(
        k3, (1, 1, 1, 1, c_date, 2 * heads), jnp.float32)
    return {"weight": weight, "bias": bias, "fusion": fusion}


def fd_embedding_ref(x, params, *, channels, n_nodes, heads):
    """Pure-JAX reference matching the PyTorch forward exactly (sin AND cos)."""
    B, S, D = x.shape
    w_flat = params["weight"].reshape(-1)            # (2*C*N*H,)
    b_flat = params["bias"]
    phases = x[..., None] * w_flat + b_flat          # (B,S,D,2CNH)
    phases = phases.reshape(B, S, D, channels, n_nodes, heads, 2)
    phases = jnp.transpose(phases, (0, 3, 4, 1, 2, 5, 6))  # (B,C,N,S,D,H,2)
    v_sin = jnp.sin(phases[..., 0])
    v_cos = jnp.cos(phases[..., 1])
    values = jnp.concatenate((v_sin, v_cos), axis=-1)       # (B,C,N,S,D,2H)
    y = params["fusion"] * values
    return y.mean((4, 5))                                   # (B,C,N,S)


if __name__ == "__main__":
    channels, c_date, n_nodes, heads = 4, 4, 3, 8
    embed_period = [24, 12, 6]        # shorter than heads -> padded with 1s

    key = jax.random.PRNGKey(0)
    kx1, kx2, kp = jax.random.split(key, 3)
    params = init_params(kp, channels, c_date, n_nodes, heads, embed_period)

    # Tolerances: the kernel computes cos(p) as sin(p + pi/2) with pi/2 folded
    # into the bias host-side; with |phase| up to a few hundred the f32 add
    # rounding differs from the reference's direct cos path by O(1e-4) per
    # term, so we allow a few 1e-4 on the 64-term mean (real layout/indexing
    # bugs produce O(0.1) errors and are still caught).
    RTOL, ATOL = 5e-3, 5e-4

    # Case 1: tiny S (=8). B*S packs lane-dense into ONE 128-wide tile instead
    # of a zero-padded 128-lane strip per batch row.
    B, S = 2, 8
    x = jax.random.normal(kx1, (B, S, c_date), jnp.float32)
    out = jax.block_until_ready(fd_embedding_forward(
        x, params, channels=channels, c_date=c_date,
        n_nodes=n_nodes, heads=heads))
    ref = fd_embedding_ref(x, params, channels=channels,
                           n_nodes=n_nodes, heads=heads)
    assert out.shape == (B, channels, n_nodes, S)
    np.testing.assert_allclose(np.asarray(out), np.asarray(ref),
                               rtol=RTOL, atol=ATOL)

    # Case 2: S not lane-aligned (B*S = 400 -> two 256-wide tiles, tail lanes
    # padded and sliced off; grid has 2 parallel steps for v7x megacore).
    B2, S2 = 2, 200
    x2 = jax.random.normal(kx2, (B2, S2, c_date), jnp.float32)
    out2 = jax.block_until_ready(fd_embedding_forward(
        x2, params, channels=channels, c_date=c_date,
        n_nodes=n_nodes, heads=heads))
    ref2 = fd_embedding_ref(x2, params, channels=channels,
                            n_nodes=n_nodes, heads=heads)
    np.testing.assert_allclose(np.asarray(out2), np.asarray(ref2),
                               rtol=RTOL, atol=ATOL)

    print("KERNEL_OK")
</pallas_src>

<mosaic_0001>
module attributes {stable_mosaic.version = 11 : i64} {
  func.func @_fd_embedding_kernel(%arg0: i32, %arg1: memref<4x128xf32, #tpu.memory_space<vmem>>, %arg2: memref<12x16x1xf32, #tpu.memory_space<vmem>>, %arg3: memref<12x16x1xf32, #tpu.memory_space<vmem>>, %arg4: memref<4x16x1xf32, #tpu.memory_space<vmem>>, %arg5: memref<12x128xf32, #tpu.memory_space<vmem>>) attributes {dimension_semantics = [#tpu.dimension_semantics<parallel>], iteration_bounds = array<i64: 1>, scalar_prefetch = 0 : i64, scratch_operands = 0 : i64, tpu.core_type = #tpu.core_type<tc>, window_params = [{transform_indices = @transform_0, window_bounds = array<i64: 4, 128>}, {pipeline_mode = #tpu.pipeline_mode<synchronous>, transform_indices = @transform_1, window_bounds = array<i64: 12, 16, 1>}, {pipeline_mode = #tpu.pipeline_mode<synchronous>, transform_indices = @transform_2, window_bounds = array<i64: 12, 16, 1>}, {pipeline_mode = #tpu.pipeline_mode<synchronous>, transform_indices = @transform_3, window_bounds = array<i64: 4, 16, 1>}, {transform_indices = @transform_4, window_bounds = array<i64: 12, 128>}]} {
    %cst = arith.constant 0.000000e+00 : f32
    %0 = vector.broadcast %cst : f32 to vector<12x128xf32>
    %c0_i32 = arith.constant 0 : i32
    %c0 = arith.constant 0 : index
    %c0_0 = arith.constant 0 : index
    %c0_1 = arith.constant 0 : index
    %1 = vector.load %arg2[%c0, %c0_0, %c0_1] : memref<12x16x1xf32, #tpu.memory_space<vmem>>, vector<12x16x1xf32>
    %c0_2 = arith.constant 0 : index
    %c0_3 = arith.constant 0 : index
    %c0_4 = arith.constant 0 : index
    %2 = vector.load %arg3[%c0_2, %c0_3, %c0_4] : memref<12x16x1xf32, #tpu.memory_space<vmem>>, vector<12x16x1xf32>
    %3 = arith.index_cast %c0_i32 : i32 to index
    %c0_5 = arith.constant 0 : index
    %4 = vector.load %arg1[%3, %c0_5] : memref<4x128xf32, #tpu.memory_space<vmem>>, vector<1x128xf32>
    %5 = vector.shape_cast %4 : vector<1x128xf32> to vector<1x1x128xf32>
    %6 = arith.index_cast %c0_i32 : i32 to index
    %c0_6 = arith.constant 0 : index
    %c0_7 = arith.constant 0 : index
    %7 = vector.load %arg4[%6, %c0_6, %c0_7] : memref<4x16x1xf32, #tpu.memory_space<vmem>>, vector<1x16x1xf32>
    %8 = vector.broadcast %5 : vector<1x1x128xf32> to vector<12x16x128xf32>
    %9 = vector.broadcast %1 : vector<12x16x1xf32> to vector<12x16x128xf32>
    %10 = arith.mulf %8, %9 : vector<12x16x128xf32>
    %11 = vector.broadcast %2 : vector<12x16x1xf32> to vector<12x16x128xf32>
    %12 = arith.addf %10, %11 : vector<12x16x128xf32>
    %13 = math.sin %12 : vector<12x16x128xf32>
    %14 = vector.broadcast %7 : vector<1x16x1xf32> to vector<12x16x128xf32>
    %15 = arith.mulf %14, %13 : vector<12x16x128xf32>
    %cst_8 = arith.constant dense<0.000000e+00> : vector<12x128xf32>
    %16 = vector.multi_reduction <add>, %15, %cst_8 [1] : vector<12x16x128xf32> to vector<12x128xf32>
    %17 = arith.addf %0, %16 : vector<12x128xf32>
    %c1_i32 = arith.constant 1 : i32
    %c0_9 = arith.constant 0 : index
    %c0_10 = arith.constant 0 : index
    %c0_11 = arith.constant 0 : index
    %18 = vector.load %arg2[%c0_9, %c0_10, %c0_11] : memref<12x16x1xf32, #tpu.memory_space<vmem>>, vector<12x16x1xf32>
    %c0_12 = arith.constant 0 : index
    %c0_13 = arith.constant 0 : index
    %c0_14 = arith.constant 0 : index
    %19 = vector.load %arg3[%c0_12, %c0_13, %c0_14] : memref<12x16x1xf32, #tpu.memory_space<vmem>>, vector<12x16x1xf32>
    %20 = arith.index_cast %c1_i32 : i32 to index
    %c0_15 = arith.constant 0 : index
    %21 = vector.load %arg1[%20, %c0_15] : memref<4x128xf32, #tpu.memory_space<vmem>>, vector<1x128xf32>
    %22 = vector.shape_cast %21 : vector<1x128xf32> to vector<1x1x128xf32>
    %23 = arith.index_cast %c1_i32 : i32 to index
    %c0_16 = arith.constant 0 : index
    %c0_17 = arith.constant 0 : index
    %24 = vector.load %arg4[%23, %c0_16, %c0_17] : memref<4x16x1xf32, #tpu.memory_space<vmem>>, vector<1x16x1xf32>
    %25 = vector.broadcast %22 : vector<1x1x128xf32> to vector<12x16x128xf32>
    %26 = vector.broadcast %18 : vector<12x16x1xf32> to vector<12x16x128xf32>
    %27 = arith.mulf %25, %26 : vector<12x16x128xf32>
    %28 = vector.broadcast %19 : vector<12x16x1xf32> to vector<12x16x128xf32>
    %29 = arith.addf %27, %28 : vector<12x16x128xf32>
    %30 = math.sin %29 : vector<12x16x128xf32>
    %31 = vector.broadcast %24 : vector<1x16x1xf32> to vector<12x16x128xf32>
    %32 = arith.mulf %31, %30 : vector<12x16x128xf32>
    %cst_18 = arith.constant dense<0.000000e+00> : vector<12x128xf32>
    %33 = vector.multi_reduction <add>, %32, %cst_18 [1] : vector<12x16x128xf32> to vector<12x128xf32>
    %34 = arith.addf %17, %33 : vector<12x128xf32>
    %c2_i32 = arith.constant 2 : i32
    %c0_19 = arith.constant 0 : index
    %c0_20 = arith.constant 0 : index
    %c0_21 = arith.constant 0 : index
    %35 = vector.load %arg2[%c0_19, %c0_20, %c0_21] : memref<12x16x1xf32, #tpu.memory_space<vmem>>, vector<12x16x1xf32>
    %c0_22 = arith.constant 0 : index
    %c0_23 = arith.constant 0 : index
    %c0_24 = arith.constant 0 : index
    %36 = vector.load %arg3[%c0_22, %c0_23, %c0_24] : memref<12x16x1xf32, #tpu.memory_space<vmem>>, vector<12x16x1xf32>
    %37 = arith.index_cast %c2_i32 : i32 to index
    %c0_25 = arith.constant 0 : index
    %38 = vector.load %arg1[%37, %c0_25] : memref<4x128xf32, #tpu.memory_space<vmem>>, vector<1x128xf32>
    %39 = vector.shape_cast %38 : vector<1x128xf32> to vector<1x1x128xf32>
    %40 = arith.index_cast %c2_i32 : i32 to index
    %c0_26 = arith.constant 0 : index
    %c0_27 = arith.constant 0 : index
    %41 = vector.load %arg4[%40, %c0_26, %c0_27] : memref<4x16x1xf32, #tpu.memory_space<vmem>>, vector<1x16x1xf32>
    %42 = vector.broadcast %39 : vector<1x1x128xf32> to vector<12x16x128xf32>
    %43 = vector.broadcast %35 : vector<12x16x1xf32> to vector<12x16x128xf32>
    %44 = arith.mulf %42, %43 : vector<12x16x128xf32>
    %45 = vector.broadcast %36 : vector<12x16x1xf32> to vector<12x16x128xf32>
    %46 = arith.addf %44, %45 : vector<12x16x128xf32>
    %47 = math.sin %46 : vector<12x16x128xf32>
    %48 = vector.broadcast %41 : vector<1x16x1xf32> to vector<12x16x128xf32>
    %49 = arith.mulf %48, %47 : vector<12x16x128xf32>
    %cst_28 = arith.constant dense<0.000000e+00> : vector<12x128xf32>
    %50 = vector.multi_reduction <add>, %49, %cst_28 [1] : vector<12x16x128xf32> to vector<12x128xf32>
    %51 = arith.addf %34, %50 : vector<12x128xf32>
    %c3_i32 = arith.constant 3 : i32
    %c0_29 = arith.constant 0 : index
    %c0_30 = arith.constant 0 : index
    %c0_31 = arith.constant 0 : index
    %52 = vector.load %arg2[%c0_29, %c0_30, %c0_31] : memref<12x16x1xf32, #tpu.memory_space<vmem>>, vector<12x16x1xf32>
    %c0_32 = arith.constant 0 : index
    %c0_33 = arith.constant 0 : index
    %c0_34 = arith.constant 0 : index
    %53 = vector.load %arg3[%c0_32, %c0_33, %c0_34] : memref<12x16x1xf32, #tpu.memory_space<vmem>>, vector<12x16x1xf32>
    %54 = arith.index_cast %c3_i32 : i32 to index
    %c0_35 = arith.constant 0 : index
    %55 = vector.load %arg1[%54, %c0_35] : memref<4x128xf32, #tpu.memory_space<vmem>>, vector<1x128xf32>
    %56 = vector.shape_cast %55 : vector<1x128xf32> to vector<1x1x128xf32>
    %57 = arith.index_cast %c3_i32 : i32 to index
    %c0_36 = arith.constant 0 : index
    %c0_37 = arith.constant 0 : index
    %58 = vector.load %arg4[%57, %c0_36, %c0_37] : memref<4x16x1xf32, #tpu.memory_space<vmem>>, vector<1x16x1xf32>
    %59 = vector.broadcast %56 : vector<1x1x128xf32> to vector<12x16x128xf32>
    %60 = vector.broadcast %52 : vector<12x16x1xf32> to vector<12x16x128xf32>
    %61 = arith.mulf %59, %60 : vector<12x16x128xf32>
    %62 = vector.broadcast %53 : vector<12x16x1xf32> to vector<12x16x128xf32>
    %63 = arith.addf %61, %62 : vector<12x16x128xf32>
    %64 = math.sin %63 : vector<12x16x128xf32>
    %65 = vector.broadcast %58 : vector<1x16x1xf32> to vector<12x16x128xf32>
    %66 = arith.mulf %65, %64 : vector<12x16x128xf32>
    %cst_38 = arith.constant dense<0.000000e+00> : vector<12x128xf32>
    %67 = vector.multi_reduction <add>, %66, %cst_38 [1] : vector<12x16x128xf32> to vector<12x128xf32>
    %68 = arith.addf %51, %67 : vector<12x128xf32>
    %c4_i32 = arith.constant 4 : i32
    %c0_39 = arith.constant 0 : index
    %c0_40 = arith.constant 0 : index
    %69 = vector.load %arg5[%c0_39, %c0_40] : memref<12x128xf32, #tpu.memory_space<vmem>>, vector<12x128xf32>
    tpu.vector_store %arg5[%c0_39, %c0_40], %68 {strides = array<i32>} : memref<12x128xf32, #tpu.memory_space<vmem>>, vector<12x128xf32>,
    return
  }
  func.func @transform_0(%arg0: i32) -> (i32, i32) {
    %c0_i32 = arith.constant 0 : i32
    %c0_i32_0 = arith.constant 0 : i32
    return %c0_i32, %arg0 : i32, i32
  }
  func.func @transform_1(%arg0: i32) -> (i32, i32, i32) {
    %c0_i32 = arith.constant 0 : i32
    %c0_i32_0 = arith.constant 0 : i32
    %c0_i32_1 = arith.constant 0 : i32
    %c0_i32_2 = arith.constant 0 : i32
    return %c0_i32, %c0_i32_0, %c0_i32_1 : i32, i32, i32
  }
  func.func @transform_2(%arg0: i32) -> (i32, i32, i32) {
    %c0_i32 = arith.constant 0 : i32
    %c0_i32_0 = arith.constant 0 : i32
    %c0_i32_1 = arith.constant 0 : i32
    %c0_i32_2 = arith.constant 0 : i32
    return %c0_i32, %c0_i32_0, %c0_i32_1 : i32, i32, i32
  }
  func.func @transform_3(%arg0: i32) -> (i32, i32, i32) {
    %c0_i32 = arith.constant 0 : i32
    %c0_i32_0 = arith.constant 0 : i32
    %c0_i32_1 = arith.constant 0 : i32
    %c0_i32_2 = arith.constant 0 : i32
    return %c0_i32, %c0_i32_0, %c0_i32_1 : i32, i32, i32
  }
  func.func @transform_4(%arg0: i32) -> (i32, i32) {
    %c0_i32 = arith.constant 0 : i32
    %c0_i32_0 = arith.constant 0 : i32
    return %c0_i32, %arg0 : i32, i32
  }
}

</mosaic_0001>

<llo_original>
// kernel: tpu_custom_call.1
$region0: #{tpu_custom_call.1}
  #allocation0 [shape = 'u32[]', space=smem, size = 0x4, offset = 0x4, fixed_abs, tag = 'smem constant byte address 0x4 - core index']
  #allocation1 [shape = 'u32[144,128]{1,0:T(1,128)}', space=vmem, size = 0x12000, scoped, tag = 'internal scratch']
  %s0 = inlined_call_operand.vmem [shape: f32[4,128], index: 0, kind: input, shape index: {}]
  %s1 = inlined_call_operand.vmem [shape: f32[12,16,1], index: 1, kind: input, shape index: {}]
  %s2 = inlined_call_operand.vmem [shape: f32[12,16,1], index: 2, kind: input, shape index: {}]
  %s3 = inlined_call_operand.vmem [shape: f32[4,16,1], index: 3, kind: input, shape index: {}]
  %s4 = inlined_call_operand.hbm [shape: f32[12,128], index: 4, kind: output, shape index: {}]
  %s5 = sld [smem:[#allocation0]]
  $region26: #{tpu_custom_call.1} parent=0
    _
  %s7 = ssub.s32 1, %s5
  %s8 = scalar_select 0, %s7, %s5
  $region1: #{tpu_custom_call.1} parent=0
    #allocation2 [shape = 'u8[8192]{0}', space=vmem, size = 0x2000, scoped, tag = 'output window, operand 0, single buffered']
    #allocation3 [shape = 's32[1]{0}', space=sflag, size = 0x4, scoped, tag = 'scoped memory for tpu_custom_call.1']
    %9 = vsyncpa [#allocation3], 0
    // Predicated region
    $region2: #{tpu_custom_call.1} parent=1 // pred_check
      _
    $region3: #{tpu_custom_call.1} parent=1 // pred_check_branch
      %11 = sbr.rel (0) target = $region5
    $region4: #{tpu_custom_call.1} parent=1 // pred_region
      _
    $region5: #{tpu_custom_call.1} parent=1 // pred_fallthru
      _
    // Predicated region
    $region6: #{tpu_custom_call.1} parent=1 // pred_check
      _
    $region7: #{tpu_custom_call.1} parent=1 // pred_check_branch
      %13 = sbr.rel (0) target = $region9
    $region8: #{tpu_custom_call.1} parent=1 // pred_region
      _
    $region9: #{tpu_custom_call.1} parent=1 // pred_fallthru
      _
    // Predicated region
    $region10: #{tpu_custom_call.1} parent=1 // pred_check
      _
    $region11: #{tpu_custom_call.1} parent=1 // pred_check_branch
      %15 = sbr.rel (0) target = $region13
    $region12: #{tpu_custom_call.1} parent=1 // pred_region
      _
    $region13: #{tpu_custom_call.1} parent=1 // pred_fallthru
      _
    // Predicated region
    $region14: #{tpu_custom_call.1} parent=1 // pred_check
      _
    $region15: #{tpu_custom_call.1} parent=1 // pred_check_branch
      %17 = sbr.rel (0) target = $region17
    $region16: #{tpu_custom_call.1} parent=1 // pred_region
      _
    $region17: #{tpu_custom_call.1} parent=1 // pred_fallthru
      _
    %v18 = vld [vmem:[%s1] sm:$0xff]
    %v19 = vld [vmem:[%s1 + $0x8] sm:$0xff]
    %v20 = vld [vmem:[%s1 + $0x10] sm:$0xff]
    %v21 = vld [vmem:[%s1 + $0x18] sm:$0xff]
    %v22 = vld [vmem:[%s1 + $0x20] sm:$0xff]
    %v23 = vld [vmem:[%s1 + $0x28] sm:$0xff]
    %v24 = vld [vmem:[%s1 + $0x30] sm:$0xff]
    %v25 = vld [vmem:[%s1 + $0x38] sm:$0xff]
    %v26 = vld [vmem:[%s1 + $0x40] sm:$0xff]
    %v27 = vld [vmem:[%s1 + $0x48] sm:$0xff]
    %v28 = vld [vmem:[%s1 + $0x50] sm:$0xff]
    %v29 = vld [vmem:[%s1 + $0x58] sm:$0xff]
    %v30 = vld [vmem:[%s1 + $0x60] sm:$0xff]
    %v31 = vld [vmem:[%s1 + $0x68] sm:$0xff]
    %v32 = vld [vmem:[%s1 + $0x70] sm:$0xff]
    %v33 = vld [vmem:[%s1 + $0x78] sm:$0xff]
    %v34 = vld [vmem:[%s1 + $0x80] sm:$0xff]
    %v35 = vld [vmem:[%s1 + $0x88] sm:$0xff]
    %v36 = vld [vmem:[%s1 + $0x90] sm:$0xff]
    %v37 = vld [vmem:[%s1 + $0x98] sm:$0xff]
    %v38 = vld [vmem:[%s1 + $0xa0] sm:$0xff]
    %v39 = vld [vmem:[%s1 + $0xa8] sm:$0xff]
    %v40 = vld [vmem:[%s1 + $0xb0] sm:$0xff]
    %v41 = vld [vmem:[%s1 + $0xb8] sm:$0xff]
    %v42 = vld [vmem:[%s2] sm:$0xff]
    %v43 = vld [vmem:[%s2 + $0x8] sm:$0xff]
    %v44 = vld [vmem:[%s2 + $0x10] sm:$0xff]
    %v45 = vld [vmem:[%s2 + $0x18] sm:$0xff]
    %v46 = vld [vmem:[%s2 + $0x20] sm:$0xff]
    %v47 = vld [vmem:[%s2 + $0x28] sm:$0xff]
    %v48 = vld [vmem:[%s2 + $0x30] sm:$0xff]
    %v49 = vld [vmem:[%s2 + $0x38] sm:$0xff]
    %v50 = vld [vmem:[%s2 + $0x40] sm:$0xff]
    %v51 = vld [vmem:[%s2 + $0x48] sm:$0xff]
    %v52 = vld [vmem:[%s2 + $0x50] sm:$0xff]
    %v53 = vld [vmem:[%s2 + $0x58] sm:$0xff]
    %v54 = vld [vmem:[%s2 + $0x60] sm:$0xff]
    %v55 = vld [vmem:[%s2 + $0x68] sm:$0xff]
    %v56 = vld [vmem:[%s2 + $0x70] sm:$0xff]
    %v57 = vld [vmem:[%s2 + $0x78] sm:$0xff]
    %v58 = vld [vmem:[%s2 + $0x80] sm:$0xff]
    %v59 = vld [vmem:[%s2 + $0x88] sm:$0xff]
    %v60 = vld [vmem:[%s2 + $0x90] sm:$0xff]
    %v61 = vld [vmem:[%s2 + $0x98] sm:$0xff]
    %v62 = vld [vmem:[%s2 + $0xa0] sm:$0xff]
    %v63 = vld [vmem:[%s2 + $0xa8] sm:$0xff]
    %v64 = vld [vmem:[%s2 + $0xb0] sm:$0xff]
    %v65 = vld [vmem:[%s2 + $0xb8] sm:$0xff]
    %v66 = vld [vmem:[%s0] sm:$0x1]
    %v67 = vld [vmem:[%s3] sm:$0xff]
    %v68 = vld [vmem:[%s3 + $0x8] sm:$0xff]
    %v69 = vlaneseq
    %v70 = vshrl.u32 %v69, 7
    %v71 = vsub.s32 0, %v70
    %v72 = vrot.slane %v66, %v71
    %74 = vset.pattern.permute.xlu0 0
    %75 = vperm.xlu0 %74, %v18
    %v76 = vpop.permute.xlu0 %75
    %79 = vset.pattern.permute.xlu0 0
    %80 = vperm.xlu0 %79, %v19
    %v81 = vpop.permute.xlu0 %80
    %84 = vset.pattern.permute.xlu0 0
    %85 = vperm.xlu0 %84, %v20
    %v86 = vpop.permute.xlu0 %85
    %89 = vset.pattern.permute.xlu0 0
    %90 = vperm.xlu0 %89, %v21
    %v91 = vpop.permute.xlu0 %90
    %94 = vset.pattern.permute.xlu0 0
    %95 = vperm.xlu0 %94, %v22
    %v96 = vpop.permute.xlu0 %95
    %99 = vset.pattern.permute.xlu0 0
    %100 = vperm.xlu0 %99, %v23
    %v101 = vpop.permute.xlu0 %100
    %104 = vset.pattern.permute.xlu0 0
    %105 = vperm.xlu0 %104, %v24
    %v106 = vpop.permute.xlu0 %105
    %109 = vset.pattern.permute.xlu0 0
    %110 = vperm.xlu0 %109, %v25
    %v111 = vpop.permute.xlu0 %110
    %114 = vset.pattern.permute.xlu0 0
    %115 = vperm.xlu0 %114, %v26
    %v116 = vpop.permute.xlu0 %115
    %119 = vset.pattern.permute.xlu0 0
    %120 = vperm.xlu0 %119, %v27
    %v121 = vpop.permute.xlu0 %120
    %124 = vset.pattern.permute.xlu0 0
    %125 = vperm.xlu0 %124, %v28
    %v126 = vpop.permute.xlu0 %125
    %129 = vset.pattern.permute.xlu0 0
    %130 = vperm.xlu0 %129, %v29
    %v131 = vpop.permute.xlu0 %130
    %134 = vset.pattern.permute.xlu0 0
    %135 = vperm.xlu0 %134, %v30
    %v136 = vpop.permute.xlu0 %135
    %139 = vset.pattern.permute.xlu0 0
    %140 = vperm.xlu0 %139, %v31
    %v141 = vpop.permute.xlu0 %140
    %144 = vset.pattern.permute.xlu0 0
    %145 = vperm.xlu0 %144, %v32
    %v146 = vpop.permute.xlu0 %145
    %149 = vset.pattern.permute.xlu0 0
    %150 = vperm.xlu0 %149, %v33
    %v151 = vpop.permute.xlu0 %150
    %154 = vset.pattern.permute.xlu0 0
    %155 = vperm.xlu0 %154, %v34
    %v156 = vpop.permute.xlu0 %155
    %159 = vset.pattern.permute.xlu0 0
    %160 = vperm.xlu0 %159, %v35
    %v161 = vpop.permute.xlu0 %160
    %164 = vset.pattern.permute.xlu0 0
    %165 = vperm.xlu0 %164, %v36
    %v166 = vpop.permute.xlu0 %165
    %169 = vset.pattern.permute.xlu0 0
    %170 = vperm.xlu0 %169, %v37
    %v171 = vpop.permute.xlu0 %170
    %174 = vset.pattern.permute.xlu0 0
    %175 = vperm.xlu0 %174, %v38
    %v176 = vpop.permute.xlu0 %175
    %179 = vset.pattern.permute.xlu0 0
    %180 = vperm.xlu0 %179, %v39
    %v181 = vpop.permute.xlu0 %180
    %184 = vset.pattern.permute.xlu0 0
    %185 = vperm.xlu0 %184, %v40
    %v186 = vpop.permute.xlu0 %185
    %189 = vset.pattern.permute.xlu0 0
    %190 = vperm.xlu0 %189, %v41
    %v191 = vpop.permute.xlu0 %190
    %v193 = vmul.f32 %v72, %v76
    %v194 = vmul.f32 %v72, %v81
    %v195 = vmul.f32 %v72, %v86
    %v196 = vmul.f32 %v72, %v91
    %v197 = vmul.f32 %v72, %v96
    %v198 = vmul.f32 %v72, %v101
    %v199 = vmul.f32 %v72, %v106
    %v200 = vmul.f32 %v72, %v111
    %v201 = vmul.f32 %v72, %v116
    %v202 = vmul.f32 %v72, %v121
    %v203 = vmul.f32 %v72, %v126
    %v204 = vmul.f32 %v72, %v131
    %v205 = vmul.f32 %v72, %v136
    %v206 = vmul.f32 %v72, %v141
    %v207 = vmul.f32 %v72, %v146
    %v208 = vmul.f32 %v72, %v151
    %v209 = vmul.f32 %v72, %v156
    %v210 = vmul.f32 %v72, %v161
    %v211 = vmul.f32 %v72, %v166
    %v212 = vmul.f32 %v72, %v171
    %v213 = vmul.f32 %v72, %v176
    %v214 = vmul.f32 %v72, %v181
    %v215 = vmul.f32 %v72, %v186
    %v216 = vmul.f32 %v72, %v191
    %218 = vset.pattern.permute.xlu0 0
    %219 = vperm.xlu0 %218, %v42
    %v220 = vpop.permute.xlu0 %219
    %223 = vset.pattern.permute.xlu0 0
    %224 = vperm.xlu0 %223, %v43
    %v225 = vpop.permute.xlu0 %224
    %228 = vset.pattern.permute.xlu0 0
    %229 = vperm.xlu0 %228, %v44
    %v230 = vpop.permute.xlu0 %229
    %233 = vset.pattern.permute.xlu0 0
    %234 = vperm.xlu0 %233, %v45
    %v235 = vpop.permute.xlu0 %234
    %238 = vset.pattern.permute.xlu0 0
    %239 = vperm.xlu0 %238, %v46
    %v240 = vpop.permute.xlu0 %239
    %243 = vset.pattern.permute.xlu0 0
    %244 = vperm.xlu0 %243, %v47
    %v245 = vpop.permute.xlu0 %244
    %248 = vset.pattern.permute.xlu0 0
    %249 = vperm.xlu0 %248, %v48
    %v250 = vpop.permute.xlu0 %249
    %253 = vset.pattern.permute.xlu0 0
    %254 = vperm.xlu0 %253, %v49
    %v255 = vpop.permute.xlu0 %254
    %258 = vset.pattern.permute.xlu0 0
    %259 = vperm.xlu0 %258, %v50
    %v260 = vpop.permute.xlu0 %259
    %263 = vset.pattern.permute.xlu0 0
    %264 = vperm.xlu0 %263, %v51
    %v265 = vpop.permute.xlu0 %264
    %268 = vset.pattern.permute.xlu0 0
    %269 = vperm.xlu0 %268, %v52
    %v270 = vpop.permute.xlu0 %269
    %273 = vset.pattern.permute.xlu0 0
    %274 = vperm.xlu0 %273, %v53
    %v275 = vpop.permute.xlu0 %274
    %278 = vset.pattern.permute.xlu0 0
    %279 = vperm.xlu0 %278, %v54
    %v280 = vpop.permute.xlu0 %279
    %283 = vset.pattern.permute.xlu0 0
    %284 = vperm.xlu0 %283, %v55
    %v285 = vpop.permute.xlu0 %284
    %288 = vset.pattern.permute.xlu0 0
    %289 = vperm.xlu0 %288, %v56
    %v290 = vpop.permute.xlu0 %289
    %293 = vset.pattern.permute.xlu0 0
    %294 = vperm.xlu0 %293, %v57
    %v295 = vpop.permute.xlu0 %294
    %298 = vset.pattern.permute.xlu0 0
    %299 = vperm.xlu0 %298, %v58
    %v300 = vpop.permute.xlu0 %299
    %303 = vset.pattern.permute.xlu0 0
    %304 = vperm.xlu0 %303, %v59
    %v305 = vpop.permute.xlu0 %304
    %308 = vset.pattern.permute.xlu0 0
    %309 = vperm.xlu0 %308, %v60
    %v310 = vpop.permute.xlu0 %309
    %313 = vset.pattern.permute.xlu0 0
    %314 = vperm.xlu0 %313, %v61
    %v315 = vpop.permute.xlu0 %314
    %318 = vset.pattern.permute.xlu0 0
    %319 = vperm.xlu0 %318, %v62
    %v320 = vpop.permute.xlu0 %319
    %323 = vset.pattern.permute.xlu0 0
    %324 = vperm.xlu0 %323, %v63
    %v325 = vpop.permute.xlu0 %324
    %328 = vset.pattern.permute.xlu0 0
    %329 = vperm.xlu0 %328, %v64
    %v330 = vpop.permute.xlu0 %329
    %333 = vset.pattern.permute.xlu0 0
    %334 = vperm.xlu0 %333, %v65
    %v335 = vpop.permute.xlu0 %334
    %v337 = vadd.f32 %v193, %v220
    %v338 = vadd.f32 %v194, %v225
    %v339 = vadd.f32 %v195, %v230
    %v340 = vadd.f32 %v196, %v235
    %v341 = vadd.f32 %v197, %v240
    %v342 = vadd.f32 %v198, %v245
    %v343 = vadd.f32 %v199, %v250
    %v344 = vadd.f32 %v200, %v255
    %v345 = vadd.f32 %v201, %v260
    %v346 = vadd.f32 %v202, %v265
    %v347 = vadd.f32 %v203, %v270
    %v348 = vadd.f32 %v204, %v275
    %v349 = vadd.f32 %v205, %v280
    %v350 = vadd.f32 %v206, %v285
    %v351 = vadd.f32 %v207, %v290
    %v352 = vadd.f32 %v208, %v295
    %v353 = vadd.f32 %v209, %v300
    %v354 = vadd.f32 %v210, %v305
    %v355 = vadd.f32 %v211, %v310
    %v356 = vadd.f32 %v212, %v315
    %v357 = vadd.f32 %v213, %v320
    %v358 = vadd.f32 %v214, %v325
    %v359 = vadd.f32 %v215, %v330
    %v360 = vadd.f32 %v216, %v335
    %v361 = vand.u32 2147483647, %v337
    %vm362 = vcmp.le.f32.partialorder %v361, 0.7853982
    %vm363 = vcmp.lt.s32.totalorder %v337, 0
    %v364 = vand.u32 %v337, 2139095040
    %v365 = vshrl.u32 %v364, 23
    %v366 = vsub.s32 %v365, 127
    %v367 = vand.u32 2147483647, %v337
    %v368 = vand.u32 %v367, 8388607
    %v369 = vor.u32 %v368, 8388608
    %v370 = vsub.s32 0, %v369
    %v371 = vadd.s32 %v366, 1
    %vm372 = vcmp.gt.s32.totalorder %v371, 0
    %v373 = vsel %vm372, %v371, 0
    %v374 = vshrl.u32 %v373, 5
    %v375 = vand.u32 %v373, 31
    %v376 = vsub.s32 32, %v375
    %v377 = vshrl.u32 683565275, %v376
    %v378 = vshll.u32 683565275, %v375
    %v379 = vshrl.u32 2475754826, %v376
    %v380 = vor.u32 %v378, %v379
    %v381 = vshll.u32 2475754826, %v375
    %v382 = vshrl.u32 2131351028, %v376
    %v383 = vor.u32 %v381, %v382
    %v384 = vshll.u32 2131351028, %v375
    %v385 = vshrl.u32 2102212464, %v376
    %v386 = vor.u32 %v384, %v385
    %v387 = vshll.u32 2102212464, %v375
    %v388 = vshrl.u32 920167782, %v376
    %v389 = vor.u32 %v387, %v388
    %v390 = vshll.u32 920167782, %v375
    %v391 = vshrl.u32 1326507024, %v376
    %v392 = vor.u32 %v390, %v391
    %vm393 = vcmp.lt.s32.totalorder %v374, 1
    %vm394 = vcmp.lt.s32.totalorder %v374, 2
    %vm395 = vcmp.lt.s32.totalorder %v374, 3
    %vm396 = vcmp.lt.s32.totalorder %v374, 4
    %v397 = vsel %vm393, %v377, %v380
    %v398 = vsel %vm396, %v386, 2102212464
    %v399 = vsel %vm395, %v383, %v398
    %v400 = vsel %vm394, %v397, %v399
    %v401 = vsel %vm393, %v380, %v383
    %v402 = vsel %vm396, %v389, 920167782
    %v403 = vsel %vm395, %v386, %v402
    %v404 = vsel %vm394, %v401, %v403
    %v405 = vsel %vm393, %v383, %v386
    %v406 = vsel %vm396, %v392, 1326507024
    %v407 = vsel %vm395, %v389, %v406
    %v408 = vsel %vm394, %v405, %v407
    %v409 = vshll.u32 %v369, 8
    %v410 = vmul.u32.u64.compose %v409, %v408
    %v411 = vextract.low.u32 %v410
    %v412 = vextract.high.u32 %v410
    %v413 = vmul.u32.u64.compose %v409, %v404
    %v414 = vextract.low.u32 %v413
    %v415 = vextract.high.u32 %v413
    %v416 = vmul.u32 %v409, %v400
    %v417 = vadd.s32 %v412, %v414
    %vm418 = vc.u32 %v412, %v414
    %v419 = vadd.s32 %v415, 1
    %v420 = vsel %vm418, %v419, %v415
    %v421 = vadd.s32 %v416, %v420
    %v422 = vadd.s32 %v421, 536870912
    %v423 = vshrl.u32 %v422, 30
    %v424 = vshll.u32 %v423, 30
    %v425 = vsub.s32 %v421, %v424
    %vm426 = vcmp.lt.s32.totalorder %v425, 0
    %v427 = vsub.s32 0, %v425
    %v428 = vsel %vm426, %v427, %v425
    %v429 = vclz %v428
    %v430 = vsub.s32 %v429, 2
    %vm431 = vcmp.gt.s32.totalorder 0, %v430
    %v432 = vsel %vm431, 0, %v430
    %v433 = vsub.s32 32, %v432
    %v434 = vshll.u32 %v425, %v432
    %v435 = vshrl.u32 %v417, %v433
    %v436 = vor.u32 %v434, %v435
    %v437 = vsub.s32 4294967266, %v432
    %v438 = vadd.s32 %v437, 127
    %v439 = vshll.u32 %v438, 23
    %v440 = vor.u32 4788187, %v439
    %v441 = vand.u32 2147483647, %v440
    %v443 = vcvt.s32.f32 %v436
    %v444 = vmul.f32 %v443, %v441
    %v445 = vxor.u32 %v444, 2147483648
    %v446 = vsel %vm363, %v445, %v444
    %v447 = vsub.s32 4, %v423
    %v448 = vsel %vm363, %v447, %v423
    %v449 = vsel %vm362, %v337, %v446
    %v450 = vsel %vm362, 0, %v448
    %v451 = vcosq.f32.pop %v449
    %v452 = vsinq.f32.pop %v449
    %vm453 = vweird.f32 %v337
    %v454 = vadd.s32 %v450, 3
    %v455 = vand.u32 %v454, 3
    %vm456 = vcmp.lt.s32.totalorder %v455, 2
    %vm457 = vcmp.eq.s32.totalorder %v455, 0
    %v458 = vxor.u32 %v452, 2147483648
    %v459 = vsel %vm457, %v451, %v458
    %vm460 = vcmp.eq.s32.totalorder %v455, 2
    %v461 = vxor.u32 %v451, 2147483648
    %v462 = vsel %vm460, %v461, %v452
    %v463 = vsel %vm456, %v459, %v462
    %v464 = vsel %vm453, nan, %v463
    %v465 = vand.u32 2147483647, %v338
    %vm466 = vcmp.le.f32.partialorder %v465, 0.7853982
    %vm467 = vcmp.lt.s32.totalorder %v338, 0
    %v468 = vand.u32 %v338, 2139095040
    %v469 = vshrl.u32 %v468, 23
    %v470 = vsub.s32 %v469, 127
    %v471 = vand.u32 2147483647, %v338
    %v472 = vand.u32 %v471, 8388607
    %v473 = vor.u32 %v472, 8388608
    %v474 = vsub.s32 0, %v473
    %v475 = vadd.s32 %v470, 1
    %vm476 = vcmp.gt.s32.totalorder %v475, 0
    %v477 = vsel %vm476, %v475, 0
    %v478 = vshrl.u32 %v477, 5
    %v479 = vand.u32 %v477, 31
    %v480 = vsub.s32 32, %v479
    %v481 = vshrl.u32 683565275, %v480
    %v482 = vshll.u32 683565275, %v479
    %v483 = vshrl.u32 2475754826, %v480
    %v484 = vor.u32 %v482, %v483
    %v485 = vshll.u32 2475754826, %v479
    %v486 = vshrl.u32 2131351028, %v480
    %v487 = vor.u32 %v485, %v486
    %v488 = vshll.u32 2131351028, %v479
    %v489 = vshrl.u32 2102212464, %v480
    %v490 = vor.u32 %v488, %v489
    %v491 = vshll.u32 2102212464, %v479
    %v492 = vshrl.u32 920167782, %v480
    %v493 = vor.u32 %v491, %v492
    %v494 = vshll.u32 920167782, %v479
    %v495 = vshrl.u32 1326507024, %v480
    %v496 = vor.u32 %v494, %v495
    %vm497 = vcmp.lt.s32.totalorder %v478, 1
    %vm498 = vcmp.lt.s32.totalorder %v478, 2
    %vm499 = vcmp.lt.s32.totalorder %v478, 3
    %vm500 = vcmp.lt.s32.totalorder %v478, 4
    %v501 = vsel %vm497, %v481, %v484
    %v502 = vsel %vm500, %v490, 2102212464
    %v503 = vsel %vm499, %v487, %v502
    %v504 = vsel %vm498, %v501, %v503
    %v505 = vsel %vm497, %v484, %v487
    %v506 = vsel %vm500, %v493, 920167782
    %v507 = vsel %vm499, %v490, %v506
    %v508 = vsel %vm498, %v505, %v507
    %v509 = vsel %vm497, %v487, %v490
    %v510 = vsel %vm500, %v496, 1326507024
    %v511 = vsel %vm499, %v493, %v510
    %v512 = vsel %vm498, %v509, %v511
    %v513 = vshll.u32 %v473, 8
    %v514 = vmul.u32.u64.compose %v513, %v512
    %v515 = vextract.low.u32 %v514
    %v516 = vextract.high.u32 %v514
    %v517 = vmul.u32.u64.compose %v513, %v508
    %v518 = vextract.low.u32 %v517
    %v519 = vextract.high.u32 %v517
    %v520 = vmul.u32 %v513, %v504
    %v521 = vadd.s32 %v516, %v518
    %vm522 = vc.u32 %v516, %v518
    %v523 = vadd.s32 %v519, 1
    %v524 = vsel %vm522, %v523, %v519
    %v525 = vadd.s32 %v520, %v524
    %v526 = vadd.s32 %v525, 536870912
    %v527 = vshrl.u32 %v526, 30
    %v528 = vshll.u32 %v527, 30
    %v529 = vsub.s32 %v525, %v528
    %vm530 = vcmp.lt.s32.totalorder %v529, 0
    %v531 = vsub.s32 0, %v529
    %v532 = vsel %vm530, %v531, %v529
    %v533 = vclz %v532
    %v534 = vsub.s32 %v533, 2
    %vm535 = vcmp.gt.s32.totalorder 0, %v534
    %v536 = vsel %vm535, 0, %v534
    %v537 = vsub.s32 32, %v536
    %v538 = vshll.u32 %v529, %v536
    %v539 = vshrl.u32 %v521, %v537
    %v540 = vor.u32 %v538, %v539
    %v541 = vsub.s32 4294967266, %v536
    %v542 = vadd.s32 %v541, 127
    %v543 = vshll.u32 %v542, 23
    %v544 = vor.u32 4788187, %v543
    %v545 = vand.u32 2147483647, %v544
    %v547 = vcvt.s32.f32 %v540
    %v548 = vmul.f32 %v547, %v545
    %v549 = vxor.u32 %v548, 2147483648
    %v550 = vsel %vm467, %v549, %v548
    %v551 = vsub.s32 4, %v527
    %v552 = vsel %vm467, %v551, %v527
    %v553 = vsel %vm466, %v338, %v550
    %v554 = vsel %vm466, 0, %v552
    %v555 = vcosq.f32.pop %v553
    %v556 = vsinq.f32.pop %v553
    %vm557 = vweird.f32 %v338
    %v558 = vadd.s32 %v554, 3
    %v559 = vand.u32 %v558, 3
    %vm560 = vcmp.lt.s32.totalorder %v559, 2
    %vm561 = vcmp.eq.s32.totalorder %v559, 0
    %v562 = vxor.u32 %v556, 2147483648
    %v563 = vsel %vm561, %v555, %v562
    %vm564 = vcmp.eq.s32.totalorder %v559, 2
    %v565 = vxor.u32 %v555, 2147483648
    %v566 = vsel %vm564, %v565, %v556
    %v567 = vsel %vm560, %v563, %v566
    %v568 = vsel %vm557, nan, %v567
    %v569 = vand.u32 2147483647, %v339
    %vm570 = vcmp.le.f32.partialorder %v569, 0.7853982
    %vm571 = vcmp.lt.s32.totalorder %v339, 0
    %v572 = vand.u32 %v339, 2139095040
    %v573 = vshrl.u32 %v572, 23
    %v574 = vsub.s32 %v573, 127
    %v575 = vand.u32 2147483647, %v339
    %v576 = vand.u32 %v575, 8388607
    %v577 = vor.u32 %v576, 8388608
    %v578 = vsub.s32 0, %v577
    %v579 = vadd.s32 %v574, 1
    %vm580 = vcmp.gt.s32.totalorder %v579, 0
    %v581 = vsel %vm580, %v579, 0
    %v582 = vshrl.u32 %v581, 5
    %v583 = vand.u32 %v581, 31
    %v584 = vsub.s32 32, %v583
    %v585 = vshrl.u32 683565275, %v584
    %v586 = vshll.u32 683565275, %v583
    %v587 = vshrl.u32 2475754826, %v584
    %v588 = vor.u32 %v586, %v587
    %v589 = vshll.u32 2475754826, %v583
    %v590 = vshrl.u32 2131351028, %v584
    %v591 = vor.u32 %v589, %v590
    %v592 = vshll.u32 2131351028, %v583
    %v593 = vshrl.u32 2102212464, %v584
    %v594 = vor.u32 %v592, %v593
    %v595 = vshll.u32 2102212464, %v583
    %v596 = vshrl.u32 920167782, %v584
    %v597 = vor.u32 %v595, %v596
    %v598 = vshll.u32 920167782, %v583
    %v599 = vshrl.u32 1326507024, %v584
    %v600 = vor.u32 %v598, %v599
    %vm601 = vcmp.lt.s32.totalorder %v582, 1
    %vm602 = vcmp.lt.s32.totalorder %v582, 2
    %vm603 = vcmp.lt.s32.totalorder %v582, 3
    %vm604 = vcmp.lt.s32.totalorder %v582, 4
    %v605 = vsel %vm601, %v585, %v588
    %v606 = vsel %vm604, %v594, 2102212464
    %v607 = vsel %vm603, %v591, %v606
    %v608 = vsel %vm602, %v605, %v607
    %v609 = vsel %vm601, %v588, %v591
    %v610 = vsel %vm604, %v597, 920167782
    %v611 = vsel %vm603, %v594, %v610
    %v612 = vsel %vm602, %v609, %v611
    %v613 = vsel %vm601, %v591, %v594
    %v614 = vsel %vm604, %v600, 1326507024
    %v615 = vsel %vm603, %v597, %v614
    %v616 = vsel %vm602, %v613, %v615
    %v617 = vshll.u32 %v577, 8
    %v618 = vmul.u32.u64.compose %v617, %v616
    %v619 = vextract.low.u32 %v618
    %v620 = vextract.high.u32 %v618
    %v621 = vmul.u32.u64.compose %v617, %v612
    %v622 = vextract.low.u32 %v621
    %v623 = vextract.high.u32 %v621
    %v624 = vmul.u32 %v617, %v608
    %v625 = vadd.s32 %v620, %v622
    %vm626 = vc.u32 %v620, %v622
    %v627 = vadd.s32 %v623, 1
    %v628 = vsel %vm626, %v627, %v623
    %v629 = vadd.s32 %v624, %v628
    %v630 = vadd.s32 %v629, 536870912
    %v631 = vshrl.u32 %v630, 30
    %v632 = vshll.u32 %v631, 30
    %v633 = vsub.s32 %v629, %v632
    %vm634 = vcmp.lt.s32.totalorder %v633, 0
    %v635 = vsub.s32 0, %v633
    %v636 = vsel %vm634, %v635, %v633
    %v637 = vclz %v636
    %v638 = vsub.s32 %v637, 2
    %vm639 = vcmp.gt.s32.totalorder 0, %v638
    %v640 = vsel %vm639, 0, %v638
    %v641 = vsub.s32 32, %v640
    %v642 = vshll.u32 %v633, %v640
    %v643 = vshrl.u32 %v625, %v641
    %v644 = vor.u32 %v642, %v643
    %v645 = vsub.s32 4294967266, %v640
    %v646 = vadd.s32 %v645, 127
    %v647 = vshll.u32 %v646, 23
    %v648 = vor.u32 4788187, %v647
    %v649 = vand.u32 2147483647, %v648
    %v651 = vcvt.s32.f32 %v644
    %v652 = vmul.f32 %v651, %v649
    %v653 = vxor.u32 %v652, 2147483648
    %v654 = vsel %vm571, %v653, %v652
    %v655 = vsub.s32 4, %v631
    %v656 = vsel %vm571, %v655, %v631
    %v657 = vsel %vm570, %v339, %v654
    %v658 = vsel %vm570, 0, %v656
    %v659 = vcosq.f32.pop %v657
    %v660 = vsinq.f32.pop %v657
    %vm661 = vweird.f32 %v339
    %v662 = vadd.s32 %v658, 3
    %v663 = vand.u32 %v662, 3
    %vm664 = vcmp.lt.s32.totalorder %v663, 2
    %vm665 = vcmp.eq.s32.totalorder %v663, 0
    %v666 = vxor.u32 %v660, 2147483648
    %v667 = vsel %vm665, %v659, %v666
    %vm668 = vcmp.eq.s32.totalorder %v663, 2
    %v669 = vxor.u32 %v659, 2147483648
    %v670 = vsel %vm668, %v669, %v660
    %v671 = vsel %vm664, %v667, %v670
    %v672 = vsel %vm661, nan, %v671
    %v673 = vand.u32 2147483647, %v340
    %vm674 = vcmp.le.f32.partialorder %v673, 0.7853982
    %vm675 = vcmp.lt.s32.totalorder %v340, 0
    %v676 = vand.u32 %v340, 2139095040
    %v677 = vshrl.u32 %v676, 23
    %v678 = vsub.s32 %v677, 127
    %v679 = vand.u32 2147483647, %v340
    %v680 = vand.u32 %v679, 8388607
    %v681 = vor.u32 %v680, 8388608
    %v682 = vsub.s32 0, %v681
    %v683 = vadd.s32 %v678, 1
    %vm684 = vcmp.gt.s32.totalorder %v683, 0
    %v685 = vsel %vm684, %v683, 0
    %v686 = vshrl.u32 %v685, 5
    %v687 = vand.u32 %v685, 31
    %v688 = vsub.s32 32, %v687
    %v689 = vshrl.u32 683565275, %v688
    %v690 = vshll.u32 683565275, %v687
    %v691 = vshrl.u32 2475754826, %v688
    %v692 = vor.u32 %v690, %v691
    %v693 = vshll.u32 2475754826, %v687
    %v694 = vshrl.u32 2131351028, %v688
    %v695 = vor.u32 %v693, %v694
    %v696 = vshll.u32 2131351028, %v687
    %v697 = vshrl.u32 2102212464, %v688
    %v698 = vor.u32 %v696, %v697
    %v699 = vshll.u32 2102212464, %v687
    %v700 = vshrl.u32 920167782, %v688
    %v701 = vor.u32 %v699, %v700
    %v702 = vshll.u32 920167782, %v687
    %v703 = vshrl.u32 1326507024, %v688
    %v704 = vor.u32 %v702, %v703
    %vm705 = vcmp.lt.s32.totalorder %v686, 1
    %vm706 = vcmp.lt.s32.totalorder %v686, 2
    %vm707 = vcmp.lt.s32.totalorder %v686, 3
    %vm708 = vcmp.lt.s32.totalorder %v686, 4
    %v709 = vsel %vm705, %v689, %v692
    %v710 = vsel %vm708, %v698, 2102212464
    %v711 = vsel %vm707, %v695, %v710
    %v712 = vsel %vm706, %v709, %v711
    %v713 = vsel %vm705, %v692, %v695
    %v714 = vsel %vm708, %v701, 920167782
    %v715 = vsel %vm707, %v698, %v714
    %v716 = vsel %vm706, %v713, %v715
    %v717 = vsel %vm705, %v695, %v698
    %v718 = vsel %vm708, %v704, 1326507024
    %v719 = vsel %vm707, %v701, %v718
    %v720 = vsel %vm706, %v717, %v719
    %v721 = vshll.u32 %v681, 8
    %v722 = vmul.u32.u64.compose %v721, %v720
    %v723 = vextract.low.u32 %v722
    %v724 = vextract.high.u32 %v722
    %v725 = vmul.u32.u64.compose %v721, %v716
    %v726 = vextract.low.u32 %v725
    %v727 = vextract.high.u32 %v725
    %v728 = vmul.u32 %v721, %v712
    %v729 = vadd.s32 %v724, %v726
    %vm730 = vc.u32 %v724, %v726
    %v731 = vadd.s32 %v727, 1
    %v732 = vsel %vm730, %v731, %v727
    %v733 = vadd.s32 %v728, %v732
    %v734 = vadd.s32 %v733, 536870912
    %v735 = vshrl.u32 %v734, 30
    %v736 = vshll.u32 %v735, 30
    %v737 = vsub.s32 %v733, %v736
    %vm738 = vcmp.lt.s32.totalorder %v737, 0
    %v739 = vsub.s32 0, %v737
    %v740 = vsel %vm738, %v739, %v737
    %v741 = vclz %v740
    %v742 = vsub.s32 %v741, 2
    %vm743 = vcmp.gt.s32.totalorder 0, %v742
    %v744 = vsel %vm743, 0, %v742
    %v745 = vsub.s32 32, %v744
    %v746 = vshll.u32 %v737, %v744
    %v747 = vshrl.u32 %v729, %v745
    %v748 = vor.u32 %v746, %v747
    %v749 = vsub.s32 4294967266, %v744
    %v750 = vadd.s32 %v749, 127
    %v751 = vshll.u32 %v750, 23
    %v752 = vor.u32 4788187, %v751
    %v753 = vand.u32 2147483647, %v752
    %v755 = vcvt.s32.f32 %v748
    %v756 = vmul.f32 %v755, %v753
    %v757 = vxor.u32 %v756, 2147483648
    %v758 = vsel %vm675, %v757, %v756
    %v759 = vsub.s32 4, %v735
    %v760 = vsel %vm675, %v759, %v735
    %v761 = vsel %vm674, %v340, %v758
    %v762 = vsel %vm674, 0, %v760
    %v763 = vcosq.f32.pop %v761
    %v764 = vsinq.f32.pop %v761
    %vm765 = vweird.f32 %v340
    %v766 = vadd.s32 %v762, 3
    %v767 = vand.u32 %v766, 3
    %vm768 = vcmp.lt.s32.totalorder %v767, 2
    %vm769 = vcmp.eq.s32.totalorder %v767, 0
    %v770 = vxor.u32 %v764, 2147483648
    %v771 = vsel %vm769, %v763, %v770
    %vm772 = vcmp.eq.s32.totalorder %v767, 2
    %v773 = vxor.u32 %v763, 2147483648
    %v774 = vsel %vm772, %v773, %v764
    %v775 = vsel %vm768, %v771, %v774
    %v776 = vsel %vm765, nan, %v775
    %v777 = vand.u32 2147483647, %v341
    %vm778 = vcmp.le.f32.partialorder %v777, 0.7853982
    %vm779 = vcmp.lt.s32.totalorder %v341, 0
    %v780 = vand.u32 %v341, 2139095040
    %v781 = vshrl.u32 %v780, 23
    %v782 = vsub.s32 %v781, 127
    %v783 = vand.u32 2147483647, %v341
    %v784 = vand.u32 %v783, 8388607
    %v785 = vor.u32 %v784, 8388608
    %v786 = vsub.s32 0, %v785
    %v787 = vadd.s32 %v782, 1
    %vm788 = vcmp.gt.s32.totalorder %v787, 0
    %v789 = vsel %vm788, %v787, 0
    %v790 = vshrl.u32 %v789, 5
    %v791 = vand.u32 %v789, 31
    %v792 = vsub.s32 32, %v791
    %v793 = vshrl.u32 683565275, %v792
    %v794 = vshll.u32 683565275, %v791
    %v795 = vshrl.u32 2475754826, %v792
    %v796 = vor.u32 %v794, %v795
    %v797 = vshll.u32 2475754826, %v791
    %v798 = vshrl.u32 2131351028, %v792
    %v799 = vor.u32 %v797, %v798
    %v800 = vshll.u32 2131351028, %v791
    %v801 = vshrl.u32 2102212464, %v792
    %v802 = vor.u32 %v800, %v801
    %v803 = vshll.u32 2102212464, %v791
    %v804 = vshrl.u32 920167782, %v792
    %v805 = vor.u32 %v803, %v804
    %v806 = vshll.u32 920167782, %v791
    %v807 = vshrl.u32 1326507024, %v792
    %v808 = vor.u32 %v806, %v807
    %vm809 = vcmp.lt.s32.totalorder %v790, 1
    %vm810 = vcmp.lt.s32.totalorder %v790, 2
    %vm811 = vcmp.lt.s32.totalorder %v790, 3
    %vm812 = vcmp.lt.s32.totalorder %v790, 4
    %v813 = vsel %vm809, %v793, %v796
    %v814 = vsel %vm812, %v802, 2102212464
    %v815 = vsel %vm811, %v799, %v814
    %v816 = vsel %vm810, %v813, %v815
    %v817 = vsel %vm809, %v796, %v799
    %v818 = vsel %vm812, %v805, 920167782
    %v819 = vsel %vm811, %v802, %v818
    %v820 = vsel %vm810, %v817, %v819
    %v821 = vsel %vm809, %v799, %v802
    %v822 = vsel %vm812, %v808, 1326507024
    %v823 = vsel %vm811, %v805, %v822
    %v824 = vsel %vm810, %v821, %v823
    %v825 = vshll.u32 %v785, 8
    %v826 = vmul.u32.u64.compose %v825, %v824
    %v827 = vextract.low.u32 %v826
    %v828 = vextract.high.u32 %v826
    %v829 = vmul.u32.u64.compose %v825, %v820
    %v830 = vextract.low.u32 %v829
    %v831 = vextract.high.u32 %v829
    %v832 = vmul.u32 %v825, %v816
    %v833 = vadd.s32 %v828, %v830
    %vm834 = vc.u32 %v828, %v830
    %v835 = vadd.s32 %v831, 1
    %v836 = vsel %vm834, %v835, %v831
    %v837 = vadd.s32 %v832, %v836
    %v838 = vadd.s32 %v837, 536870912
    %v839 = vshrl.u32 %v838, 30
    %v840 = vshll.u32 %v839, 30
    %v841 = vsub.s32 %v837, %v840
    %vm842 = vcmp.lt.s32.totalorder %v841, 0
    %v843 = vsub.s32 0, %v841
    %v844 = vsel %vm842, %v843, %v841
    %v845 = vclz %v844
    %v846 = vsub.s32 %v845, 2
    %vm847 = vcmp.gt.s32.totalorder 0, %v846
    %v848 = vsel %vm847, 0, %v846
    %v849 = vsub.s32 32, %v848
    %v850 = vshll.u32 %v841, %v848
    %v851 = vshrl.u32 %v833, %v849
    %v852 = vor.u32 %v850, %v851
    %v853 = vsub.s32 4294967266, %v848
    %v854 = vadd.s32 %v853, 127
    %v855 = vshll.u32 %v854, 23
    %v856 = vor.u32 4788187, %v855
    %v857 = vand.u32 2147483647, %v856
    %v859 = vcvt.s32.f32 %v852
    %v860 = vmul.f32 %v859, %v857
    %v861 = vxor.u32 %v860, 2147483648
    %v862 = vsel %vm779, %v861, %v860
    %v863 = vsub.s32 4, %v839
    %v864 = vsel %vm779, %v863, %v839
    %v865 = vsel %vm778, %v341, %v862
    %v866 = vsel %vm778, 0, %v864
    %v867 = vcosq.f32.pop %v865
    %v868 = vsinq.f32.pop %v865
    %vm869 = vweird.f32 %v341
    %v870 = vadd.s32 %v866, 3
    %v871 = vand.u32 %v870, 3
    %vm872 = vcmp.lt.s32.totalorder %v871, 2
    %vm873 = vcmp.eq.s32.totalorder %v871, 0
    %v874 = vxor.u32 %v868, 2147483648
    %v875 = vsel %vm873, %v867, %v874
    %vm876 = vcmp.eq.s32.totalorder %v871, 2
    %v877 = vxor.u32 %v867, 2147483648
    %v878 = vsel %vm876, %v877, %v868
    %v879 = vsel %vm872, %v875, %v878
    %v880 = vsel %vm869, nan, %v879
    %v881 = vand.u32 2147483647, %v342
    %vm882 = vcmp.le.f32.partialorder %v881, 0.7853982
    %vm883 = vcmp.lt.s32.totalorder %v342, 0
    %v884 = vand.u32 %v342, 2139095040
    %v885 = vshrl.u32 %v884, 23
    %v886 = vsub.s32 %v885, 127
    %v887 = vand.u32 2147483647, %v342
    %v888 = vand.u32 %v887, 8388607
    %v889 = vor.u32 %v888, 8388608
    %v890 = vsub.s32 0, %v889
    %v891 = vadd.s32 %v886, 1
    %vm892 = vcmp.gt.s32.totalorder %v891, 0
    %v893 = vsel %vm892, %v891, 0
    %v894 = vshrl.u32 %v893, 5
    %v895 = vand.u32 %v893, 31
    %v896 = vsub.s32 32, %v895
    %v897 = vshrl.u32 683565275, %v896
    %v898 = vshll.u32 683565275, %v895
    %v899 = vshrl.u32 2475754826, %v896
    %v900 = vor.u32 %v898, %v899
    %v901 = vshll.u32 2475754826, %v895
    %v902 = vshrl.u32 2131351028, %v896
    %v903 = vor.u32 %v901, %v902
    %v904 = vshll.u32 2131351028, %v895
    %v905 = vshrl.u32 2102212464, %v896
    %v906 = vor.u32 %v904, %v905
    %v907 = vshll.u32 2102212464, %v895
    %v908 = vshrl.u32 920167782, %v896
    %v909 = vor.u32 %v907, %v908
    %v910 = vshll.u32 920167782, %v895
    %v911 = vshrl.u32 1326507024, %v896
    %v912 = vor.u32 %v910, %v911
    %vm913 = vcmp.lt.s32.totalorder %v894, 1
    %vm914 = vcmp.lt.s32.totalorder %v894, 2
    %vm915 = vcmp.lt.s32.totalorder %v894, 3
    %vm916 = vcmp.lt.s32.totalorder %v894, 4
    %v917 = vsel %vm913, %v897, %v900
    %v918 = vsel %vm916, %v906, 2102212464
    %v919 = vsel %vm915, %v903, %v918
    %v920 = vsel %vm914, %v917, %v919
    %v921 = vsel %vm913, %v900, %v903
    %v922 = vsel %vm916, %v909, 920167782
    %v923 = vsel %vm915, %v906, %v922
    %v924 = vsel %vm914, %v921, %v923
    %v925 = vsel %vm913, %v903, %v906
    %v926 = vsel %vm916, %v912, 1326507024
    %v927 = vsel %vm915, %v909, %v926
    %v928 = vsel %vm914, %v925, %v927
    %v929 = vshll.u32 %v889, 8
    %v930 = vmul.u32.u64.compose %v929, %v928
    %v931 = vextract.low.u32 %v930
    %v932 = vextract.high.u32 %v930
    %v933 = vmul.u32.u64.compose %v929, %v924
    %v934 = vextract.low.u32 %v933
    %v935 = vextract.high.u32 %v933
    %v936 = vmul.u32 %v929, %v920
    %v937 = vadd.s32 %v932, %v934
    %vm938 = vc.u32 %v932, %v934
    %v939 = vadd.s32 %v935, 1
    %v940 = vsel %vm938, %v939, %v935
    %v941 = vadd.s32 %v936, %v940
    %v942 = vadd.s32 %v941, 536870912
    %v943 = vshrl.u32 %v942, 30
    %v944 = vshll.u32 %v943, 30
    %v945 = vsub.s32 %v941, %v944
    %vm946 = vcmp.lt.s32.totalorder %v945, 0
    %v947 = vsub.s32 0, %v945
    %v948 = vsel %vm946, %v947, %v945
    %v949 = vclz %v948
    %v950 = vsub.s32 %v949, 2
    %vm951 = vcmp.gt.s32.totalorder 0, %v950
    %v952 = vsel %vm951, 0, %v950
    %v953 = vsub.s32 32, %v952
    %v954 = vshll.u32 %v945, %v952
    %v955 = vshrl.u32 %v937, %v953
    %v956 = vor.u32 %v954, %v955
    %v957 = vsub.s32 4294967266, %v952
    %v958 = vadd.s32 %v957, 127
    %v959 = vshll.u32 %v958, 23
    %v960 = vor.u32 4788187, %v959
    %v961 = vand.u32 2147483647, %v960
    %v963 = vcvt.s32.f32 %v956
    %v964 = vmul.f32 %v963, %v961
    %v965 = vxor.u32 %v964, 2147483648
    %v966 = vsel %vm883, %v965, %v964
    %v967 = vsub.s32 4, %v943
    %v968 = vsel %vm883, %v967, %v943
    %v969 = vsel %vm882, %v342, %v966
    %v970 = vsel %vm882, 0, %v968
    %v971 = vcosq.f32.pop %v969
    %v972 = vsinq.f32.pop %v969
    %vm973 = vweird.f32 %v342
    %v974 = vadd.s32 %v970, 3
    %v975 = vand.u32 %v974, 3
    %vm976 = vcmp.lt.s32.totalorder %v975, 2
    %vm977 = vcmp.eq.s32.totalorder %v975, 0
    %v978 = vxor.u32 %v972, 2147483648
    %v979 = vsel %vm977, %v971, %v978
    %vm980 = vcmp.eq.s32.totalorder %v975, 2
    %v981 = vxor.u32 %v971, 2147483648
    %v982 = vsel %vm980, %v981, %v972
    %v983 = vsel %vm976, %v979, %v982
    %v984 = vsel %vm973, nan, %v983
    %v985 = vand.u32 2147483647, %v343
    %vm986 = vcmp.le.f32.partialorder %v985, 0.7853982
    %vm987 = vcmp.lt.s32.totalorder %v343, 0
    %v988 = vand.u32 %v343, 2139095040
    %v989 = vshrl.u32 %v988, 23
    %v990 = vsub.s32 %v989, 127
    %v991 = vand.u32 2147483647, %v343
    %v992 = vand.u32 %v991, 8388607
    %v993 = vor.u32 %v992, 8388608
    %v994 = vsub.s32 0, %v993
    %v995 = vadd.s32 %v990, 1
    %vm996 = vcmp.gt.s32.totalorder %v995, 0
    %v997 = vsel %vm996, %v995, 0
    %v998 = vshrl.u32 %v997, 5
    %v999 = vand.u32 %v997, 31
    %v1000 = vsub.s32 32, %v999
    %v1001 = vshrl.u32 683565275, %v1000
    %v1002 = vshll.u32 683565275, %v999
    %v1003 = vshrl.u32 2475754826, %v1000
    %v1004 = vor.u32 %v1002, %v1003
    %v1005 = vshll.u32 2475754826, %v999
    %v1006 = vshrl.u32 2131351028, %v1000
    %v1007 = vor.u32 %v1005, %v1006
    %v1008 = vshll.u32 2131351028, %v999
    %v1009 = vshrl.u32 2102212464, %v1000
    %v1010 = vor.u32 %v1008, %v1009
    %v1011 = vshll.u32 2102212464, %v999
    %v1012 = vshrl.u32 920167782, %v1000
    %v1013 = vor.u32 %v1011, %v1012
    %v1014 = vshll.u32 920167782, %v999
    %v1015 = vshrl.u32 1326507024, %v1000
    %v1016 = vor.u32 %v1014, %v1015
    %vm1017 = vcmp.lt.s32.totalorder %v998, 1
    %vm1018 = vcmp.lt.s32.totalorder %v998, 2
    %vm1019 = vcmp.lt.s32.totalorder %v998, 3
    %vm1020 = vcmp.lt.s32.totalorder %v998, 4
    %v1021 = vsel %vm1017, %v1001, %v1004
    %v1022 = vsel %vm1020, %v1010, 2102212464
    %v1023 = vsel %vm1019, %v1007, %v1022
    %v1024 = vsel %vm1018, %v1021, %v1023
    %v1025 = vsel %vm1017, %v1004, %v1007
    %v1026 = vsel %vm1020, %v1013, 920167782
    %v1027 = vsel %vm1019, %v1010, %v1026
    %v1028 = vsel %vm1018, %v1025, %v1027
    %v1029 = vsel %vm1017, %v1007, %v1010
    %v1030 = vsel %vm1020, %v1016, 1326507024
    %v1031 = vsel %vm1019, %v1013, %v1030
    %v1032 = vsel %vm1018, %v1029, %v1031
    %v1033 = vshll.u32 %v993, 8
    %v1034 = vmul.u32.u64.compose %v1033, %v1032
    %v1035 = vextract.low.u32 %v1034
    %v1036 = vextract.high.u32 %v1034
    %v1037 = vmul.u32.u64.compose %v1033, %v1028
    %v1038 = vextract.low.u32 %v1037
    %v1039 = vextract.high.u32 %v1037
    %v1040 = vmul.u32 %v1033, %v1024
    %v1041 = vadd.s32 %v1036, %v1038
    %vm1042 = vc.u32 %v1036, %v1038
    %v1043 = vadd.s32 %v1039, 1
    %v1044 = vsel %vm1042, %v1043, %v1039
    %v1045 = vadd.s32 %v1040, %v1044
    %v1046 = vadd.s32 %v1045, 536870912
    %v1047 = vshrl.u32 %v1046, 30
    %v1048 = vshll.u32 %v1047, 30
    %v1049 = vsub.s32 %v1045, %v1048
    %vm1050 = vcmp.lt.s32.totalorder %v1049, 0
    %v1051 = vsub.s32 0, %v1049
    %v1052 = vsel %vm1050, %v1051, %v1049
    %v1053 = vclz %v1052
    %v1054 = vsub.s32 %v1053, 2
    %vm1055 = vcmp.gt.s32.totalorder 0, %v1054
    %v1056 = vsel %vm1055, 0, %v1054
    %v1057 = vsub.s32 32, %v1056
    %v1058 = vshll.u32 %v1049, %v1056
    %v1059 = vshrl.u32 %v1041, %v1057
    %v1060 = vor.u32 %v1058, %v1059
    %v1061 = vsub.s32 4294967266, %v1056
    %v1062 = vadd.s32 %v1061, 127
    %v1063 = vshll.u32 %v1062, 23
    %v1064 = vor.u32 4788187, %v1063
    %v1065 = vand.u32 2147483647, %v1064
    %v1067 = vcvt.s32.f32 %v1060
    %v1068 = vmul.f32 %v1067, %v1065
    %v1069 = vxor.u32 %v1068, 2147483648
    %v1070 = vsel %vm987, %v1069, %v1068
    %v1071 = vsub.s32 4, %v1047
    %v1072 = vsel %vm987, %v1071, %v1047
    %v1073 = vsel %vm986, %v343, %v1070
    %v1074 = vsel %vm986, 0, %v1072
    %v1075 = vcosq.f32.pop %v1073
    %v1076 = vsinq.f32.pop %v1073
    %vm1077 = vweird.f32 %v343
    %v1078 = vadd.s32 %v1074, 3
    %v1079 = vand.u32 %v1078, 3
    %vm1080 = vcmp.lt.s32.totalorder %v1079, 2
    %vm1081 = vcmp.eq.s32.totalorder %v1079, 0
    %v1082 = vxor.u32 %v1076, 2147483648
    %v1083 = vsel %vm1081, %v1075, %v1082
    %vm1084 = vcmp.eq.s32.totalorder %v1079, 2
    %v1085 = vxor.u32 %v1075, 2147483648
    %v1086 = vsel %vm1084, %v1085, %v1076
    %v1087 = vsel %vm1080, %v1083, %v1086
    %v1088 = vsel %vm1077, nan, %v1087
    %v1089 = vand.u32 2147483647, %v344
    %vm1090 = vcmp.le.f32.partialorder %v1089, 0.7853982
    %vm1091 = vcmp.lt.s32.totalorder %v344, 0
    %v1092 = vand.u32 %v344, 2139095040
    %v1093 = vshrl.u32 %v1092, 23
    %v1094 = vsub.s32 %v1093, 127
    %v1095 = vand.u32 2147483647, %v344
    %v1096 = vand.u32 %v1095, 8388607
    %v1097 = vor.u32 %v1096, 8388608
    %v1098 = vsub.s32 0, %v1097
    %v1099 = vadd.s32 %v1094, 1
    %vm1100 = vcmp.gt.s32.totalorder %v1099, 0
    %v1101 = vsel %vm1100, %v1099, 0
    %v1102 = vshrl.u32 %v1101, 5
    %v1103 = vand.u32 %v1101, 31
    %v1104 = vsub.s32 32, %v1103
    %v1105 = vshrl.u32 683565275, %v1104
    %v1106 = vshll.u32 683565275, %v1103
    %v1107 = vshrl.u32 2475754826, %v1104
    %v1108 = vor.u32 %v1106, %v1107
    %v1109 = vshll.u32 2475754826, %v1103
    %v1110 = vshrl.u32 2131351028, %v1104
    %v1111 = vor.u32 %v1109, %v1110
    %v1112 = vshll.u32 2131351028, %v1103
    %v1113 = vshrl.u32 2102212464, %v1104
    %v1114 = vor.u32 %v1112, %v1113
    %v1115 = vshll.u32 2102212464, %v1103
    %v1116 = vshrl.u32 920167782, %v1104
    %v1117 = vor.u32 %v1115, %v1116
    %v1118 = vshll.u32 920167782, %v1103
    %v1119 = vshrl.u32 1326507024, %v1104
    %v1120 = vor.u32 %v1118, %v1119
    %vm1121 = vcmp.lt.s32.totalorder %v1102, 1
    %vm1122 = vcmp.lt.s32.totalorder %v1102, 2
    %vm1123 = vcmp.lt.s32.totalorder %v1102, 3
    %vm1124 = vcmp.lt.s32.totalorder %v1102, 4
    %v1125 = vsel %vm1121, %v1105, %v1108
    %v1126 = vsel %vm1124, %v1114, 2102212464
    %v1127 = vsel %vm1123, %v1111, %v1126
    %v1128 = vsel %vm1122, %v1125, %v1127
    %v1129 = vsel %vm1121, %v1108, %v1111
    %v1130 = vsel %vm1124, %v1117, 920167782
    %v1131 = vsel %vm1123, %v1114, %v1130
    %v1132 = vsel %vm1122, %v1129, %v1131
    %v1133 = vsel %vm1121, %v1111, %v1114
    %v1134 = vsel %vm1124, %v1120, 1326507024
    %v1135 = vsel %vm1123, %v1117, %v1134
    %v1136 = vsel %vm1122, %v1133, %v1135
    %v1137 = vshll.u32 %v1097, 8
    %v1138 = vmul.u32.u64.compose %v1137, %v1136
    %v1139 = vextract.low.u32 %v1138
    %v1140 = vextract.high.u32 %v1138
    %v1141 = vmul.u32.u64.compose %v1137, %v1132
    %v1142 = vextract.low.u32 %v1141
    %v1143 = vextract.high.u32 %v1141
    %v1144 = vmul.u32 %v1137, %v1128
    %v1145 = vadd.s32 %v1140, %v1142
    %vm1146 = vc.u32 %v1140, %v1142
    %v1147 = vadd.s32 %v1143, 1
    %v1148 = vsel %vm1146, %v1147, %v1143
    %v1149 = vadd.s32 %v1144, %v1148
    %v1150 = vadd.s32 %v1149, 536870912
    %v1151 = vshrl.u32 %v1150, 30
    %v1152 = vshll.u32 %v1151, 30
    %v1153 = vsub.s32 %v1149, %v1152
    %vm1154 = vcmp.lt.s32.totalorder %v1153, 0
    %v1155 = vsub.s32 0, %v1153
    %v1156 = vsel %vm1154, %v1155, %v1153
    %v1157 = vclz %v1156
    %v1158 = vsub.s32 %v1157, 2
    %vm1159 = vcmp.gt.s32.totalorder 0, %v1158
    %v1160 = vsel %vm1159, 0, %v1158
    %v1161 = vsub.s32 32, %v1160
    %v1162 = vshll.u32 %v1153, %v1160
    %v1163 = vshrl.u32 %v1145, %v1161
    %v1164 = vor.u32 %v1162, %v1163
    %v1165 = vsub.s32 4294967266, %v1160
    %v1166 = vadd.s32 %v1165, 127
    %v1167 = vshll.u32 %v1166, 23
    %v1168 = vor.u32 4788187, %v1167
    %v1169 = vand.u32 2147483647, %v1168
    %v1171 = vcvt.s32.f32 %v1164
    %v1172 = vmul.f32 %v1171, %v1169
    %v1173 = vxor.u32 %v1172, 2147483648
    %v1174 = vsel %vm1091, %v1173, %v1172
    %v1175 = vsub.s32 4, %v1151
    %v1176 = vsel %vm1091, %v1175, %v1151
    %v1177 = vsel %vm1090, %v344, %v1174
    %v1178 = vsel %vm1090, 0, %v1176
    %v1179 = vcosq.f32.pop %v1177
    %v1180 = vsinq.f32.pop %v1177
    %vm1181 = vweird.f32 %v344
    %v1182 = vadd.s32 %v1178, 3
    %v1183 = vand.u32 %v1182, 3
    %vm1184 = vcmp.lt.s32.totalorder %v1183, 2
    %vm1185 = vcmp.eq.s32.totalorder %v1183, 0
    %v1186 = vxor.u32 %v1180, 2147483648
    %v1187 = vsel %vm1185, %v1179, %v1186
    %vm1188 = vcmp.eq.s32.totalorder %v1183, 2
    %v1189 = vxor.u32 %v1179, 2147483648
    %v1190 = vsel %vm1188, %v1189, %v1180
    %v1191 = vsel %vm1184, %v1187, %v1190
    %v1192 = vsel %vm1181, nan, %v1191
    %v1193 = vand.u32 2147483647, %v345
    %vm1194 = vcmp.le.f32.partialorder %v1193, 0.7853982
    %vm1195 = vcmp.lt.s32.totalorder %v345, 0
    %v1196 = vand.u32 %v345, 2139095040
    %v1197 = vshrl.u32 %v1196, 23
    %v1198 = vsub.s32 %v1197, 127
    %v1199 = vand.u32 2147483647, %v345
    %v1200 = vand.u32 %v1199, 8388607
    %v1201 = vor.u32 %v1200, 8388608
    %v1202 = vsub.s32 0, %v1201
    %v1203 = vadd.s32 %v1198, 1
    %vm1204 = vcmp.gt.s32.totalorder %v1203, 0
    %v1205 = vsel %vm1204, %v1203, 0
    %v1206 = vshrl.u32 %v1205, 5
    %v1207 = vand.u32 %v1205, 31
    %v1208 = vsub.s32 32, %v1207
    %v1209 = vshrl.u32 683565275, %v1208
    %v1210 = vshll.u32 683565275, %v1207
    %v1211 = vshrl.u32 2475754826, %v1208
    %v1212 = vor.u32 %v1210, %v1211
    %v1213 = vshll.u32 2475754826, %v1207
    %v1214 = vshrl.u32 2131351028, %v1208
    %v1215 = vor.u32 %v1213, %v1214
    %v1216 = vshll.u32 2131351028, %v1207
    %v1217 = vshrl.u32 2102212464, %v1208
    %v1218 = vor.u32 %v1216, %v1217
    %v1219 = vshll.u32 2102212464, %v1207
    %v1220 = vshrl.u32 920167782, %v1208
    %v1221 = vor.u32 %v1219, %v1220
    %v1222 = vshll.u32 920167782, %v1207
    %v1223 = vshrl.u32 1326507024, %v1208
    %v1224 = vor.u32 %v1222, %v1223
    %vm1225 = vcmp.lt.s32.totalorder %v1206, 1
    %vm1226 = vcmp.lt.s32.totalorder %v1206, 2
    %vm1227 = vcmp.lt.s32.totalorder %v1206, 3
    %vm1228 = vcmp.lt.s32.totalorder %v1206, 4
    %v1229 = vsel %vm1225, %v1209, %v1212
    %v1230 = vsel %vm1228, %v1218, 2102212464
    %v1231 = vsel %vm1227, %v1215, %v1230
    %v1232 = vsel %vm1226, %v1229, %v1231
    %v1233 = vsel %vm1225, %v1212, %v1215
    %v1234 = vsel %vm1228, %v1221, 920167782
    %v1235 = vsel %vm1227, %v1218, %v1234
    %v1236 = vsel %vm1226, %v1233, %v1235
    %v1237 = vsel %vm1225, %v1215, %v1218
    %v1238 = vsel %vm1228, %v1224, 1326507024
    %v1239 = vsel %vm1227, %v1221, %v1238
    %v1240 = vsel %vm1226, %v1237, %v1239
    %v1241 = vshll.u32 %v1201, 8
    %v1242 = vmul.u32.u64.compose %v1241, %v1240
    %v1243 = vextract.low.u32 %v1242
    %v1244 = vextract.high.u32 %v1242
    %v1245 = vmul.u32.u64.compose %v1241, %v1236
    %v1246 = vextract.low.u32 %v1245
    %v1247 = vextract.high.u32 %v1245
    %v1248 = vmul.u32 %v1241, %v1232
    %v1249 = vadd.s32 %v1244, %v1246
    %vm1250 = vc.u32 %v1244, %v1246
    %v1251 = vadd.s32 %v1247, 1
    %v1252 = vsel %vm1250, %v1251, %v1247
    %v1253 = vadd.s32 %v1248, %v1252
    %v1254 = vadd.s32 %v1253, 536870912
    %v1255 = vshrl.u32 %v1254, 30
    %v1256 = vshll.u32 %v1255, 30
    %v1257 = vsub.s32 %v1253, %v1256
    %vm1258 = vcmp.lt.s32.totalorder %v1257, 0
    %v1259 = vsub.s32 0, %v1257
    %v1260 = vsel %vm1258, %v1259, %v1257
    %v1261 = vclz %v1260
    %v1262 = vsub.s32 %v1261, 2
    %vm1263 = vcmp.gt.s32.totalorder 0, %v1262
    %v1264 = vsel %vm1263, 0, %v1262
    %v1265 = vsub.s32 32, %v1264
    %v1266 = vshll.u32 %v1257, %v1264
    %v1267 = vshrl.u32 %v1249, %v1265
    %v1268 = vor.u32 %v1266, %v1267
    %v1269 = vsub.s32 4294967266, %v1264
    %v1270 = vadd.s32 %v1269, 127
    %v1271 = vshll.u32 %v1270, 23
    %v1272 = vor.u32 4788187, %v1271
    %v1273 = vand.u32 2147483647, %v1272
    %v1275 = vcvt.s32.f32 %v1268
    %v1276 = vmul.f32 %v1275, %v1273
    %v1277 = vxor.u32 %v1276, 2147483648
    %v1278 = vsel %vm1195, %v1277, %v1276
    %v1279 = vsub.s32 4, %v1255
    %v1280 = vsel %vm1195, %v1279, %v1255
    %v1281 = vsel %vm1194, %v345, %v1278
    %v1282 = vsel %vm1194, 0, %v1280
    %v1283 = vcosq.f32.pop %v1281
    %v1284 = vsinq.f32.pop %v1281
    %vm1285 = vweird.f32 %v345
    %v1286 = vadd.s32 %v1282, 3
    %v1287 = vand.u32 %v1286, 3
    %vm1288 = vcmp.lt.s32.totalorder %v1287, 2
    %vm1289 = vcmp.eq.s32.totalorder %v1287, 0
    %v1290 = vxor.u32 %v1284, 2147483648
    %v1291 = vsel %vm1289, %v1283, %v1290
    %vm1292 = vcmp.eq.s32.totalorder %v1287, 2
    %v1293 = vxor.u32 %v1283, 2147483648
    %v1294 = vsel %vm1292, %v1293, %v1284
    %v1295 = vsel %vm1288, %v1291, %v1294
    %v1296 = vsel %vm1285, nan, %v1295
    %v1297 = vand.u32 2147483647, %v346
    %vm1298 = vcmp.le.f32.partialorder %v1297, 0.7853982
    %vm1299 = vcmp.lt.s32.totalorder %v346, 0
    %v1300 = vand.u32 %v346, 2139095040
    %v1301 = vshrl.u32 %v1300, 23
    %v1302 = vsub.s32 %v1301, 127
    %v1303 = vand.u32 2147483647, %v346
    %v1304 = vand.u32 %v1303, 8388607
    %v1305 = vor.u32 %v1304, 8388608
    %v1306 = vsub.s32 0, %v1305
    %v1307 = vadd.s32 %v1302, 1
    %vm1308 = vcmp.gt.s32.totalorder %v1307, 0
    %v1309 = vsel %vm1308, %v1307, 0
    %v1310 = vshrl.u32 %v1309, 5
    %v1311 = vand.u32 %v1309, 31
    %v1312 = vsub.s32 32, %v1311
    %v1313 = vshrl.u32 683565275, %v1312
    %v1314 = vshll.u32 683565275, %v1311
    %v1315 = vshrl.u32 2475754826, %v1312
    %v1316 = vor.u32 %v1314, %v1315
    %v1317 = vshll.u32 2475754826, %v1311
    %v1318 = vshrl.u32 2131351028, %v1312
    %v1319 = vor.u32 %v1317, %v1318
    %v1320 = vshll.u32 2131351028, %v1311
    %v1321 = vshrl.u32 2102212464, %v1312
    %v1322 = vor.u32 %v1320, %v1321
    %v1323 = vshll.u32 2102212464, %v1311
    %v1324 = vshrl.u32 920167782, %v1312
    %v1325 = vor.u32 %v1323, %v1324
    %v1326 = vshll.u32 920167782, %v1311
    %v1327 = vshrl.u32 1326507024, %v1312
    %v1328 = vor.u32 %v1326, %v1327
    %vm1329 = vcmp.lt.s32.totalorder %v1310, 1
    %vm1330 = vcmp.lt.s32.totalorder %v1310, 2
    %vm1331 = vcmp.lt.s32.totalorder %v1310, 3
    %vm1332 = vcmp.lt.s32.totalorder %v1310, 4
    %v1333 = vsel %vm1329, %v1313, %v1316
    %v1334 = vsel %vm1332, %v1322, 2102212464
    %v1335 = vsel %vm1331, %v1319, %v1334
    %v1336 = vsel %vm1330, %v1333, %v1335
    %v1337 = vsel %vm1329, %v1316, %v1319
    %v1338 = vsel %vm1332, %v1325, 920167782
    %v1339 = vsel %vm1331, %v1322, %v1338
    %v1340 = vsel %vm1330, %v1337, %v1339
    %v1341 = vsel %vm1329, %v1319, %v1322
    %v1342 = vsel %vm1332, %v1328, 1326507024
    %v1343 = vsel %vm1331, %v1325, %v1342
    %v1344 = vsel %vm1330, %v1341, %v1343
    %v1345 = vshll.u32 %v1305, 8
    %v1346 = vmul.u32.u64.compose %v1345, %v1344
    %v1347 = vextract.low.u32 %v1346
    %v1348 = vextract.high.u32 %v1346
    %v1349 = vmul.u32.u64.compose %v1345, %v1340
    %v1350 = vextract.low.u32 %v1349
    %v1351 = vextract.high.u32 %v1349
    %v1352 = vmul.u32 %v1345, %v1336
    %v1353 = vadd.s32 %v1348, %v1350
    %vm1354 = vc.u32 %v1348, %v1350
    %v1355 = vadd.s32 %v1351, 1
    %v1356 = vsel %vm1354, %v1355, %v1351
    %v1357 = vadd.s32 %v1352, %v1356
    %v1358 = vadd.s32 %v1357, 536870912
    %v1359 = vshrl.u32 %v1358, 30
    %v1360 = vshll.u32 %v1359, 30
    %v1361 = vsub.s32 %v1357, %v1360
    %vm1362 = vcmp.lt.s32.totalorder %v1361, 0
    %v1363 = vsub.s32 0, %v1361
    %v1364 = vsel %vm1362, %v1363, %v1361
    %v1365 = vclz %v1364
    %v1366 = vsub.s32 %v1365, 2
    %vm1367 = vcmp.gt.s32.totalorder 0, %v1366
    %v1368 = vsel %vm1367, 0, %v1366
    %v1369 = vsub.s32 32, %v1368
    %v1370 = vshll.u32 %v1361, %v1368
    %v1371 = vshrl.u32 %v1353, %v1369
    %v1372 = vor.u32 %v1370, %v1371
    %v1373 = vsub.s32 4294967266, %v1368
    %v1374 = vadd.s32 %v1373, 127
    %v1375 = vshll.u32 %v1374, 23
    %v1376 = vor.u32 4788187, %v1375
    %v1377 = vand.u32 2147483647, %v1376
    %v1379 = vcvt.s32.f32 %v1372
    %v1380 = vmul.f32 %v1379, %v1377
    %v1381 = vxor.u32 %v1380, 2147483648
    %v1382 = vsel %vm1299, %v1381, %v1380
    %v1383 = vsub.s32 4, %v1359
    %v1384 = vsel %vm1299, %v1383, %v1359
    %v1385 = vsel %vm1298, %v346, %v1382
    %v1386 = vsel %vm1298, 0, %v1384
    %v1387 = vcosq.f32.pop %v1385
    %v1388 = vsinq.f32.pop %v1385
    %vm1389 = vweird.f32 %v346
    %v1390 = vadd.s32 %v1386, 3
    %v1391 = vand.u32 %v1390, 3
    %vm1392 = vcmp.lt.s32.totalorder %v1391, 2
    %vm1393 = vcmp.eq.s32.totalorder %v1391, 0
    %v1394 = vxor.u32 %v1388, 2147483648
    %v1395 = vsel %vm1393, %v1387, %v1394
    %vm1396 = vcmp.eq.s32.totalorder %v1391, 2
    %v1397 = vxor.u32 %v1387, 2147483648
    %v1398 = vsel %vm1396, %v1397, %v1388
    %v1399 = vsel %vm1392, %v1395, %v1398
    %v1400 = vsel %vm1389, nan, %v1399
    %v1401 = vand.u32 2147483647, %v347
    %vm1402 = vcmp.le.f32.partialorder %v1401, 0.7853982
    %vm1403 = vcmp.lt.s32.totalorder %v347, 0
    %v1404 = vand.u32 %v347, 2139095040
    %v1405 = vshrl.u32 %v1404, 23
    %v1406 = vsub.s32 %v1405, 127
    %v1407 = vand.u32 2147483647, %v347
    %v1408 = vand.u32 %v1407, 8388607
    %v1409 = vor.u32 %v1408, 8388608
    %v1410 = vsub.s32 0, %v1409
    %v1411 = vadd.s32 %v1406, 1
    %vm1412 = vcmp.gt.s32.totalorder %v1411, 0
    %v1413 = vsel %vm1412, %v1411, 0
    %v1414 = vshrl.u32 %v1413, 5
    %v1415 = vand.u32 %v1413, 31
    %v1416 = vsub.s32 32, %v1415
    %v1417 = vshrl.u32 683565275, %v1416
    %v1418 = vshll.u32 683565275, %v1415
    %v1419 = vshrl.u32 2475754826, %v1416
    %v1420 = vor.u32 %v1418, %v1419
    %v1421 = vshll.u32 2475754826, %v1415
    %v1422 = vshrl.u32 2131351028, %v1416
    %v1423 = vor.u32 %v1421, %v1422
    %v1424 = vshll.u32 2131351028, %v1415
    %v1425 = vshrl.u32 2102212464, %v1416
    %v1426 = vor.u32 %v1424, %v1425
    %v1427 = vshll.u32 2102212464, %v1415
    %v1428 = vshrl.u32 920167782, %v1416
    %v1429 = vor.u32 %v1427, %v1428
    %v1430 = vshll.u32 920167782, %v1415
    %v1431 = vshrl.u32 1326507024, %v1416
    %v1432 = vor.u32 %v1430, %v1431
    %vm1433 = vcmp.lt.s32.totalorder %v1414, 1
    %vm1434 = vcmp.lt.s32.totalorder %v1414, 2
    %vm1435 = vcmp.lt.s32.totalorder %v1414, 3
    %vm1436 = vcmp.lt.s32.totalorder %v1414, 4
    %v1437 = vsel %vm1433, %v1417, %v1420
    %v1438 = vsel %vm1436, %v1426, 2102212464
    %v1439 = vsel %vm1435, %v1423, %v1438
    %v1440 = vsel %vm1434, %v1437, %v1439
    %v1441 = vsel %vm1433, %v1420, %v1423
    %v1442 = vsel %vm1436, %v1429, 920167782
    %v1443 = vsel %vm1435, %v1426, %v1442
    %v1444 = vsel %vm1434, %v1441, %v1443
    %v1445 = vsel %vm1433, %v1423, %v1426
    %v1446 = vsel %vm1436, %v1432, 1326507024
    %v1447 = vsel %vm1435, %v1429, %v1446
    %v1448 = vsel %vm1434, %v1445, %v1447
    %v1449 = vshll.u32 %v1409, 8
    %v1450 = vmul.u32.u64.compose %v1449, %v1448
    %v1451 = vextract.low.u32 %v1450
    %v1452 = vextract.high.u32 %v1450
    %v1453 = vmul.u32.u64.compose %v1449, %v1444
    %v1454 = vextract.low.u32 %v1453
    %v1455 = vextract.high.u32 %v1453
    %v1456 = vmul.u32 %v1449, %v1440
    %v1457 = vadd.s32 %v1452, %v1454
    %vm1458 = vc.u32 %v1452, %v1454
    %v1459 = vadd.s32 %v1455, 1
    %v1460 = vsel %vm1458, %v1459, %v1455
    %v1461 = vadd.s32 %v1456, %v1460
    %v1462 = vadd.s32 %v1461, 536870912
    %v1463 = vshrl.u32 %v1462, 30
    %v1464 = vshll.u32 %v1463, 30
    %v1465 = vsub.s32 %v1461, %v1464
    %vm1466 = vcmp.lt.s32.totalorder %v1465, 0
    %v1467 = vsub.s32 0, %v1465
    %v1468 = vsel %vm1466, %v1467, %v1465
    %v1469 = vclz %v1468
    %v1470 = vsub.s32 %v1469, 2
    %vm1471 = vcmp.gt.s32.totalorder 0, %v1470
    %v1472 = vsel %vm1471, 0, %v1470
    %v1473 = vsub.s32 32, %v1472
    %v1474 = vshll.u32 %v1465, %v1472
    %v1475 = vshrl.u32 %v1457, %v1473
    %v1476 = vor.u32 %v1474, %v1475
    %v1477 = vsub.s32 4294967266, %v1472
    %v1478 = vadd.s32 %v1477, 127
    %v1479 = vshll.u32 %v1478, 23
    %v1480 = vor.u32 4788187, %v1479
    %v1481 = vand.u32 2147483647, %v1480
    %v1483 = vcvt.s32.f32 %v1476
    %v1484 = vmul.f32 %v1483, %v1481
    %v1485 = vxor.u32 %v1484, 2147483648
    %v1486 = vsel %vm1403, %v1485, %v1484
    %v1487 = vsub.s32 4, %v1463
    %v1488 = vsel %vm1403, %v1487, %v1463
    %v1489 = vsel %vm1402, %v347, %v1486
    %v1490 = vsel %vm1402, 0, %v1488
    %v1491 = vcosq.f32.pop %v1489
    %v1492 = vsinq.f32.pop %v1489
    %vm1493 = vweird.f32 %v347
    %v1494 = vadd.s32 %v1490, 3
    %v1495 = vand.u32 %v1494, 3
    %vm1496 = vcmp.lt.s32.totalorder %v1495, 2
    %vm1497 = vcmp.eq.s32.totalorder %v1495, 0
    %v1498 = vxor.u32 %v1492, 2147483648
    %v1499 = vsel %vm1497, %v1491, %v1498
    %vm1500 = vcmp.eq.s32.totalorder %v1495, 2
    %v1501 = vxor.u32 %v1491, 2147483648
    %v1502 = vsel %vm1500, %v1501, %v1492
    %v1503 = vsel %vm1496, %v1499, %v1502
    %v1504 = vsel %vm1493, nan, %v1503
    %v1505 = vand.u32 2147483647, %v348
    %vm1506 = vcmp.le.f32.partialorder %v1505, 0.7853982
    %vm1507 = vcmp.lt.s32.totalorder %v348, 0
    %v1508 = vand.u32 %v348, 2139095040
    %v1509 = vshrl.u32 %v1508, 23
    %v1510 = vsub.s32 %v1509, 127
    %v1511 = vand.u32 2147483647, %v348
    %v1512 = vand.u32 %v1511, 8388607
    %v1513 = vor.u32 %v1512, 8388608
    %v1514 = vsub.s32 0, %v1513
    %v1515 = vadd.s32 %v1510, 1
    %vm1516 = vcmp.gt.s32.totalorder %v1515, 0
    %v1517 = vsel %vm1516, %v1515, 0
    %v1518 = vshrl.u32 %v1517, 5
    %v1519 = vand.u32 %v1517, 31
    %v1520 = vsub.s32 32, %v1519
    %v1521 = vshrl.u32 683565275, %v1520
    %v1522 = vshll.u32 683565275, %v1519
    %v1523 = vshrl.u32 2475754826, %v1520
    %v1524 = vor.u32 %v1522, %v1523
    %v1525 = vshll.u32 2475754826, %v1519
    %v1526 = vshrl.u32 2131351028, %v1520
    %v1527 = vor.u32 %v1525, %v1526
    %v1528 = vshll.u32 2131351028, %v1519
    %v1529 = vshrl.u32 2102212464, %v1520
    %v1530 = vor.u32 %v1528, %v1529
    %v1531 = vshll.u32 2102212464, %v1519
    %v1532 = vshrl.u32 920167782, %v1520
    %v1533 = vor.u32 %v1531, %v1532
    %v1534 = vshll.u32 920167782, %v1519
    %v1535 = vshrl.u32 1326507024, %v1520
    %v1536 = vor.u32 %v1534, %v1535
    %vm1537 = vcmp.lt.s32.totalorder %v1518, 1
    %vm1538 = vcmp.lt.s32.totalorder %v1518, 2
    %vm1539 = vcmp.lt.s32.totalorder %v1518, 3
    %vm1540 = vcmp.lt.s32.totalorder %v1518, 4
    %v1541 = vsel %vm1537, %v1521, %v1524
    %v1542 = vsel %vm1540, %v1530, 2102212464
    %v1543 = vsel %vm1539, %v1527, %v1542
    %v1544 = vsel %vm1538, %v1541, %v1543
    %v1545 = vsel %vm1537, %v1524, %v1527
    %v1546 = vsel %vm1540, %v1533, 920167782
    %v1547 = vsel %vm1539, %v1530, %v1546
    %v1548 = vsel %vm1538, %v1545, %v1547
    %v1549 = vsel %vm1537, %v1527, %v1530
    %v1550 = vsel %vm1540, %v1536, 1326507024
    %v1551 = vsel %vm1539, %v1533, %v1550
    %v1552 = vsel %vm1538, %v1549, %v1551
    %v1553 = vshll.u32 %v1513, 8
    %v1554 = vmul.u32.u64.compose %v1553, %v1552
    %v1555 = vextract.low.u32 %v1554
    %v1556 = vextract.high.u32 %v1554
    %v1557 = vmul.u32.u64.compose %v1553, %v1548
    %v1558 = vextract.low.u32 %v1557
    %v1559 = vextract.high.u32 %v1557
    %v1560 = vmul.u32 %v1553, %v1544
    %v1561 = vadd.s32 %v1556, %v1558
    %vm1562 = vc.u32 %v1556, %v1558
    %v1563 = vadd.s32 %v1559, 1
    %v1564 = vsel %vm1562, %v1563, %v1559
    %v1565 = vadd.s32 %v1560, %v1564
    %v1566 = vadd.s32 %v1565, 536870912
    %v1567 = vshrl.u32 %v1566, 30
    %v1568 = vshll.u32 %v1567, 30
    %v1569 = vsub.s32 %v1565, %v1568
    %vm1570 = vcmp.lt.s32.totalorder %v1569, 0
    %v1571 = vsub.s32 0, %v1569
    %v1572 = vsel %vm1570, %v1571, %v1569
    %v1573 = vclz %v1572
    %v1574 = vsub.s32 %v1573, 2
    %vm1575 = vcmp.gt.s32.totalorder 0, %v1574
    %v1576 = vsel %vm1575, 0, %v1574
    %v1577 = vsub.s32 32, %v1576
    %v1578 = vshll.u32 %v1569, %v1576
    %v1579 = vshrl.u32 %v1561, %v1577
    %v1580 = vor.u32 %v1578, %v1579
    %v1581 = vsub.s32 4294967266, %v1576
    %v1582 = vadd.s32 %v1581, 127
    %v1583 = vshll.u32 %v1582, 23
    %v1584 = vor.u32 4788187, %v1583
    %v1585 = vand.u32 2147483647, %v1584
    %v1587 = vcvt.s32.f32 %v1580
    %v1588 = vmul.f32 %v1587, %v1585
    %v1589 = vxor.u32 %v1588, 2147483648
    %v1590 = vsel %vm1507, %v1589, %v1588
    %v1591 = vsub.s32 4, %v1567
    %v1592 = vsel %vm1507, %v1591, %v1567
    %v1593 = vsel %vm1506, %v348, %v1590
    %v1594 = vsel %vm1506, 0, %v1592
    %v1595 = vcosq.f32.pop %v1593
    %v1596 = vsinq.f32.pop %v1593
    %vm1597 = vweird.f32 %v348
    %v1598 = vadd.s32 %v1594, 3
    %v1599 = vand.u32 %v1598, 3
    %vm1600 = vcmp.lt.s32.totalorder %v1599, 2
    %vm1601 = vcmp.eq.s32.totalorder %v1599, 0
    %v1602 = vxor.u32 %v1596, 2147483648
    %v1603 = vsel %vm1601, %v1595, %v1602
    %vm1604 = vcmp.eq.s32.totalorder %v1599, 2
    %v1605 = vxor.u32 %v1595, 2147483648
    %v1606 = vsel %vm1604, %v1605, %v1596
    %v1607 = vsel %vm1600, %v1603, %v1606
    %v1608 = vsel %vm1597, nan, %v1607
    %v1609 = vand.u32 2147483647, %v349
    %vm1610 = vcmp.le.f32.partialorder %v1609, 0.7853982
    %vm1611 = vcmp.lt.s32.totalorder %v349, 0
    %v1612 = vand.u32 %v349, 2139095040
    %v1613 = vshrl.u32 %v1612, 23
    %v1614 = vsub.s32 %v1613, 127
    %v1615 = vand.u32 2147483647, %v349
    %v1616 = vand.u32 %v1615, 8388607
    %v1617 = vor.u32 %v1616, 8388608
    %v1618 = vsub.s32 0, %v1617
    %v1619 = vadd.s32 %v1614, 1
    %vm1620 = vcmp.gt.s32.totalorder %v1619, 0
    %v1621 = vsel %vm1620, %v1619, 0
    %v1622 = vshrl.u32 %v1621, 5
    %v1623 = vand.u32 %v1621, 31
    %v1624 = vsub.s32 32, %v1623
    %v1625 = vshrl.u32 683565275, %v1624
    %v1626 = vshll.u32 683565275, %v1623
    %v1627 = vshrl.u32 2475754826, %v1624
    %v1628 = vor.u32 %v1626, %v1627
    %v1629 = vshll.u32 2475754826, %v1623
    %v1630 = vshrl.u32 2131351028, %v1624
    %v1631 = vor.u32 %v1629, %v1630
    %v1632 = vshll.u32 2131351028, %v1623
    %v1633 = vshrl.u32 2102212464, %v1624
    %v1634 = vor.u32 %v1632, %v1633
    %v1635 = vshll.u32 2102212464, %v1623
    %v1636 = vshrl.u32 920167782, %v1624
    %v1637 = vor.u32 %v1635, %v1636
    %v1638 = vshll.u32 920167782, %v1623
    %v1639 = vshrl.u32 1326507024, %v1624
    %v1640 = vor.u32 %v1638, %v1639
    %vm1641 = vcmp.lt.s32.totalorder %v1622, 1
    %vm1642 = vcmp.lt.s32.totalorder %v1622, 2
    %vm1643 = vcmp.lt.s32.totalorder %v1622, 3
    %vm1644 = vcmp.lt.s32.totalorder %v1622, 4
    %v1645 = vsel %vm1641, %v1625, %v1628
    %v1646 = vsel %vm1644, %v1634, 2102212464
    %v1647 = vsel %vm1643, %v1631, %v1646
    %v1648 = vsel %vm1642, %v1645, %v1647
    %v1649 = vsel %vm1641, %v1628, %v1631
    %v1650 = vsel %vm1644, %v1637, 920167782
    %v1651 = vsel %vm1643, %v1634, %v1650
    %v1652 = vsel %vm1642, %v1649, %v1651
    %v1653 = vsel %vm1641, %v1631, %v1634
    %v1654 = vsel %vm1644, %v1640, 1326507024
    %v1655 = vsel %vm1643, %v1637, %v1654
    %v1656 = vsel %vm1642, %v1653, %v1655
    %v1657 = vshll.u32 %v1617, 8
    %v1658 = vmul.u32.u64.compose %v1657, %v1656
    %v1659 = vextract.low.u32 %v1658
    %v1660 = vextract.high.u32 %v1658
    %v1661 = vmul.u32.u64.compose %v1657, %v1652
    %v1662 = vextract.low.u32 %v1661
    %v1663 = vextract.high.u32 %v1661
    %v1664 = vmul.u32 %v1657, %v1648
    %v1665 = vadd.s32 %v1660, %v1662
    %vm1666 = vc.u32 %v1660, %v1662
    %v1667 = vadd.s32 %v1663, 1
    %v1668 = vsel %vm1666, %v1667, %v1663
    %v1669 = vadd.s32 %v1664, %v1668
    %v1670 = vadd.s32 %v1669, 536870912
    %v1671 = vshrl.u32 %v1670, 30
    %v1672 = vshll.u32 %v1671, 30
    %v1673 = vsub.s32 %v1669, %v1672
    %vm1674 = vcmp.lt.s32.totalorder %v1673, 0
    %v1675 = vsub.s32 0, %v1673
    %v1676 = vsel %vm1674, %v1675, %v1673
    %v1677 = vclz %v1676
    %v1678 = vsub.s32 %v1677, 2
    %vm1679 = vcmp.gt.s32.totalorder 0, %v1678
    %v1680 = vsel %vm1679, 0, %v1678
    %v1681 = vsub.s32 32, %v1680
    %v1682 = vshll.u32 %v1673, %v1680
    %v1683 = vshrl.u32 %v1665, %v1681
    %v1684 = vor.u32 %v1682, %v1683
    %v1685 = vsub.s32 4294967266, %v1680
    %v1686 = vadd.s32 %v1685, 127
    %v1687 = vshll.u32 %v1686, 23
    %v1688 = vor.u32 4788187, %v1687
    %v1689 = vand.u32 2147483647, %v1688
    %v1691 = vcvt.s32.f32 %v1684
    %v1692 = vmul.f32 %v1691, %v1689
    %v1693 = vxor.u32 %v1692, 2147483648
    %v1694 = vsel %vm1611, %v1693, %v1692
    %v1695 = vsub.s32 4, %v1671
    %v1696 = vsel %vm1611, %v1695, %v1671
    %v1697 = vsel %vm1610, %v349, %v1694
    %v1698 = vsel %vm1610, 0, %v1696
    %v1699 = vcosq.f32.pop %v1697
    %v1700 = vsinq.f32.pop %v1697
    %vm1701 = vweird.f32 %v349
    %v1702 = vadd.s32 %v1698, 3
    %v1703 = vand.u32 %v1702, 3
    %vm1704 = vcmp.lt.s32.totalorder %v1703, 2
    %vm1705 = vcmp.eq.s32.totalorder %v1703, 0
    %v1706 = vxor.u32 %v1700, 2147483648
    %v1707 = vsel %vm1705, %v1699, %v1706
    %vm1708 = vcmp.eq.s32.totalorder %v1703, 2
    %v1709 = vxor.u32 %v1699, 2147483648
    %v1710 = vsel %vm1708, %v1709, %v1700
    %v1711 = vsel %vm1704, %v1707, %v1710
    %v1712 = vsel %vm1701, nan, %v1711
    %v1713 = vand.u32 2147483647, %v350
    %vm1714 = vcmp.le.f32.partialorder %v1713, 0.7853982
    %vm1715 = vcmp.lt.s32.totalorder %v350, 0
    %v1716 = vand.u32 %v350, 2139095040
    %v1717 = vshrl.u32 %v1716, 23
    %v1718 = vsub.s32 %v1717, 127
    %v1719 = vand.u32 2147483647, %v350
    %v1720 = vand.u32 %v1719, 8388607
    %v1721 = vor.u32 %v1720, 8388608
    %v1722 = vsub.s32 0, %v1721
    %v1723 = vadd.s32 %v1718, 1
    %vm1724 = vcmp.gt.s32.totalorder %v1723, 0
    %v1725 = vsel %vm1724, %v1723, 0
    %v1726 = vshrl.u32 %v1725, 5
    %v1727 = vand.u32 %v1725, 31
    %v1728 = vsub.s32 32, %v1727
    %v1729 = vshrl.u32 683565275, %v1728
    %v1730 = vshll.u32 683565275, %v1727
    %v1731 = vshrl.u32 2475754826, %v1728
    %v1732 = vor.u32 %v1730, %v1731
    %v1733 = vshll.u32 2475754826, %v1727
    %v1734 = vshrl.u32 2131351028, %v1728
    %v1735 = vor.u32 %v1733, %v1734
    %v1736 = vshll.u32 2131351028, %v1727
    %v1737 = vshrl.u32 2102212464, %v1728
    %v1738 = vor.u32 %v1736, %v1737
    %v1739 = vshll.u32 2102212464, %v1727
    %v1740 = vshrl.u32 920167782, %v1728
    %v1741 = vor.u32 %v1739, %v1740
    %v1742 = vshll.u32 920167782, %v1727
    %v1743 = vshrl.u32 1326507024, %v1728
    %v1744 = vor.u32 %v1742, %v1743
    %vm1745 = vcmp.lt.s32.totalorder %v1726, 1
    %vm1746 = vcmp.lt.s32.totalorder %v1726, 2
    %vm1747 = vcmp.lt.s32.totalorder %v1726, 3
    %vm1748 = vcmp.lt.s32.totalorder %v1726, 4
    %v1749 = vsel %vm1745, %v1729, %v1732
    %v1750 = vsel %vm1748, %v1738, 2102212464
    %v1751 = vsel %vm1747, %v1735, %v1750
    %v1752 = vsel %vm1746, %v1749, %v1751
    %v1753 = vsel %vm1745, %v1732, %v1735
    %v1754 = vsel %vm1748, %v1741, 920167782
    %v1755 = vsel %vm1747, %v1738, %v1754
    %v1756 = vsel %vm1746, %v1753, %v1755
    %v1757 = vsel %vm1745, %v1735, %v1738
    %v1758 = vsel %vm1748, %v1744, 1326507024
    %v1759 = vsel %vm1747, %v1741, %v1758
    %v1760 = vsel %vm1746, %v1757, %v1759
    %v1761 = vshll.u32 %v1721, 8
    %v1762 = vmul.u32.u64.compose %v1761, %v1760
    %v1763 = vextract.low.u32 %v1762
    %v1764 = vextract.high.u32 %v1762
    %v1765 = vmul.u32.u64.compose %v1761, %v1756
    %v1766 = vextract.low.u32 %v1765
    %v1767 = vextract.high.u32 %v1765
    %v1768 = vmul.u32 %v1761, %v1752
    %v1769 = vadd.s32 %v1764, %v1766
    %vm1770 = vc.u32 %v1764, %v1766
    %v1771 = vadd.s32 %v1767, 1
    %v1772 = vsel %vm1770, %v1771, %v1767
    %v1773 = vadd.s32 %v1768, %v1772
    %v1774 = vadd.s32 %v1773, 536870912
    %v1775 = vshrl.u32 %v1774, 30
    %v1776 = vshll.u32 %v1775, 30
    %v1777 = vsub.s32 %v1773, %v1776
    %vm1778 = vcmp.lt.s32.totalorder %v1777, 0
    %v1779 = vsub.s32 0, %v1777
    %v1780 = vsel %vm1778, %v1779, %v1777
    %v1781 = vclz %v1780
    %v1782 = vsub.s32 %v1781, 2
    %vm1783 = vcmp.gt.s32.totalorder 0, %v1782
    %v1784 = vsel %vm1783, 0, %v1782
    %v1785 = vsub.s32 32, %v1784
    %v1786 = vshll.u32 %v1777, %v1784
    %v1787 = vshrl.u32 %v1769, %v1785
    %v1788 = vor.u32 %v1786, %v1787
    %v1789 = vsub.s32 4294967266, %v1784
    %v1790 = vadd.s32 %v1789, 127
    %v1791 = vshll.u32 %v1790, 23
    %v1792 = vor.u32 4788187, %v1791
    %v1793 = vand.u32 2147483647, %v1792
    %v1795 = vcvt.s32.f32 %v1788
    %v1796 = vmul.f32 %v1795, %v1793
    %v1797 = vxor.u32 %v1796, 2147483648
    %v1798 = vsel %vm1715, %v1797, %v1796
    %v1799 = vsub.s32 4, %v1775
    %v1800 = vsel %vm1715, %v1799, %v1775
    %v1801 = vsel %vm1714, %v350, %v1798
    %v1802 = vsel %vm1714, 0, %v1800
    %v1803 = vcosq.f32.pop %v1801
    %v1804 = vsinq.f32.pop %v1801
    %vm1805 = vweird.f32 %v350
    %v1806 = vadd.s32 %v1802, 3
    %v1807 = vand.u32 %v1806, 3
    %vm1808 = vcmp.lt.s32.totalorder %v1807, 2
    %vm1809 = vcmp.eq.s32.totalorder %v1807, 0
    %v1810 = vxor.u32 %v1804, 2147483648
    %v1811 = vsel %vm1809, %v1803, %v1810
    %vm1812 = vcmp.eq.s32.totalorder %v1807, 2
    %v1813 = vxor.u32 %v1803, 2147483648
    %v1814 = vsel %vm1812, %v1813, %v1804
    %v1815 = vsel %vm1808, %v1811, %v1814
    %v1816 = vsel %vm1805, nan, %v1815
    %v1817 = vand.u32 2147483647, %v351
    %vm1818 = vcmp.le.f32.partialorder %v1817, 0.7853982
    %vm1819 = vcmp.lt.s32.totalorder %v351, 0
    %v1820 = vand.u32 %v351, 2139095040
    %v1821 = vshrl.u32 %v1820, 23
    %v1822 = vsub.s32 %v1821, 127
    %v1823 = vand.u32 2147483647, %v351
    %v1824 = vand.u32 %v1823, 8388607
    %v1825 = vor.u32 %v1824, 8388608
    %v1826 = vsub.s32 0, %v1825
    %v1827 = vadd.s32 %v1822, 1
    %vm1828 = vcmp.gt.s32.totalorder %v1827, 0
    %v1829 = vsel %vm1828, %v1827, 0
    %v1830 = vshrl.u32 %v1829, 5
    %v1831 = vand.u32 %v1829, 31
    %v1832 = vsub.s32 32, %v1831
    %v1833 = vshrl.u32 683565275, %v1832
    %v1834 = vshll.u32 683565275, %v1831
    %v1835 = vshrl.u32 2475754826, %v1832
    %v1836 = vor.u32 %v1834, %v1835
    %v1837 = vshll.u32 2475754826, %v1831
    %v1838 = vshrl.u32 2131351028, %v1832
    %v1839 = vor.u32 %v1837, %v1838
    %v1840 = vshll.u32 2131351028, %v1831
    %v1841 = vshrl.u32 2102212464, %v1832
    %v1842 = vor.u32 %v1840, %v1841
    %v1843 = vshll.u32 2102212464, %v1831
    %v1844 = vshrl.u32 920167782, %v1832
    %v1845 = vor.u32 %v1843, %v1844
    %v1846 = vshll.u32 920167782, %v1831
    %v1847 = vshrl.u32 1326507024, %v1832
    %v1848 = vor.u32 %v1846, %v1847
    %vm1849 = vcmp.lt.s32.totalorder %v1830, 1
    %vm1850 = vcmp.lt.s32.totalorder %v1830, 2
    %vm1851 = vcmp.lt.s32.totalorder %v1830, 3
    %vm1852 = vcmp.lt.s32.totalorder %v1830, 4
    %v1853 = vsel %vm1849, %v1833, %v1836
    %v1854 = vsel %vm1852, %v1842, 2102212464
    %v1855 = vsel %vm1851, %v1839, %v1854
    %v1856 = vsel %vm1850, %v1853, %v1855
    %v1857 = vsel %vm1849, %v1836, %v1839
    %v1858 = vsel %vm1852, %v1845, 920167782
    %v1859 = vsel %vm1851, %v1842, %v1858
    %v1860 = vsel %vm1850, %v1857, %v1859
    %v1861 = vsel %vm1849, %v1839, %v1842
    %v1862 = vsel %vm1852, %v1848, 1326507024
    %v1863 = vsel %vm1851, %v1845, %v1862
    %v1864 = vsel %vm1850, %v1861, %v1863
    %v1865 = vshll.u32 %v1825, 8
    %v1866 = vmul.u32.u64.compose %v1865, %v1864
    %v1867 = vextract.low.u32 %v1866
    %v1868 = vextract.high.u32 %v1866
    %v1869 = vmul.u32.u64.compose %v1865, %v1860
    %v1870 = vextract.low.u32 %v1869
    %v1871 = vextract.high.u32 %v1869
    %v1872 = vmul.u32 %v1865, %v1856
    %v1873 = vadd.s32 %v1868, %v1870
    %vm1874 = vc.u32 %v1868, %v1870
    %v1875 = vadd.s32 %v1871, 1
    %v1876 = vsel %vm1874, %v1875, %v1871
    %v1877 = vadd.s32 %v1872, %v1876
    %v1878 = vadd.s32 %v1877, 536870912
    %v1879 = vshrl.u32 %v1878, 30
    %v1880 = vshll.u32 %v1879, 30
    %v1881 = vsub.s32 %v1877, %v1880
    %vm1882 = vcmp.lt.s32.totalorder %v1881, 0
    %v1883 = vsub.s32 0, %v1881
    %v1884 = vsel %vm1882, %v1883, %v1881
    %v1885 = vclz %v1884
    %v1886 = vsub.s32 %v1885, 2
    %vm1887 = vcmp.gt.s32.totalorder 0, %v1886
    %v1888 = vsel %vm1887, 0, %v1886
    %v1889 = vsub.s32 32, %v1888
    %v1890 = vshll.u32 %v1881, %v1888
    %v1891 = vshrl.u32 %v1873, %v1889
    %v1892 = vor.u32 %v1890, %v1891
    %v1893 = vsub.s32 4294967266, %v1888
    %v1894 = vadd.s32 %v1893, 127
    %v1895 = vshll.u32 %v1894, 23
    %v1896 = vor.u32 4788187, %v1895
    %v1897 = vand.u32 2147483647, %v1896
    %v1899 = vcvt.s32.f32 %v1892
    %v1900 = vmul.f32 %v1899, %v1897
    %v1901 = vxor.u32 %v1900, 2147483648
    %v1902 = vsel %vm1819, %v1901, %v1900
    %v1903 = vsub.s32 4, %v1879
    %v1904 = vsel %vm1819, %v1903, %v1879
    %v1905 = vsel %vm1818, %v351, %v1902
    %v1906 = vsel %vm1818, 0, %v1904
    %v1907 = vcosq.f32.pop %v1905
    %v1908 = vsinq.f32.pop %v1905
    %vm1909 = vweird.f32 %v351
    %v1910 = vadd.s32 %v1906, 3
    %v1911 = vand.u32 %v1910, 3
    %vm1912 = vcmp.lt.s32.totalorder %v1911, 2
    %vm1913 = vcmp.eq.s32.totalorder %v1911, 0
    %v1914 = vxor.u32 %v1908, 2147483648
    %v1915 = vsel %vm1913, %v1907, %v1914
    %vm1916 = vcmp.eq.s32.totalorder %v1911, 2
    %v1917 = vxor.u32 %v1907, 2147483648
    %v1918 = vsel %vm1916, %v1917, %v1908
    %v1919 = vsel %vm1912, %v1915, %v1918
    %v1920 = vsel %vm1909, nan, %v1919
    %v1921 = vand.u32 2147483647, %v352
    %vm1922 = vcmp.le.f32.partialorder %v1921, 0.7853982
    %vm1923 = vcmp.lt.s32.totalorder %v352, 0
    %v1924 = vand.u32 %v352, 2139095040
    %v1925 = vshrl.u32 %v1924, 23
    %v1926 = vsub.s32 %v1925, 127
    %v1927 = vand.u32 2147483647, %v352
    %v1928 = vand.u32 %v1927, 8388607
    %v1929 = vor.u32 %v1928, 8388608
    %v1930 = vsub.s32 0, %v1929
    %v1931 = vadd.s32 %v1926, 1
    %vm1932 = vcmp.gt.s32.totalorder %v1931, 0
    %v1933 = vsel %vm1932, %v1931, 0
    %v1934 = vshrl.u32 %v1933, 5
    %v1935 = vand.u32 %v1933, 31
    %v1936 = vsub.s32 32, %v1935
    %v1937 = vshrl.u32 683565275, %v1936
    %v1938 = vshll.u32 683565275, %v1935
    %v1939 = vshrl.u32 2475754826, %v1936
    %v1940 = vor.u32 %v1938, %v1939
    %v1941 = vshll.u32 2475754826, %v1935
    %v1942 = vshrl.u32 2131351028, %v1936
    %v1943 = vor.u32 %v1941, %v1942
    %v1944 = vshll.u32 2131351028, %v1935
    %v1945 = vshrl.u32 2102212464, %v1936
    %v1946 = vor.u32 %v1944, %v1945
    %v1947 = vshll.u32 2102212464, %v1935
    %v1948 = vshrl.u32 920167782, %v1936
    %v1949 = vor.u32 %v1947, %v1948
    %v1950 = vshll.u32 920167782, %v1935
    %v1951 = vshrl.u32 1326507024, %v1936
    %v1952 = vor.u32 %v1950, %v1951
    %vm1953 = vcmp.lt.s32.totalorder %v1934, 1
    %vm1954 = vcmp.lt.s32.totalorder %v1934, 2
    %vm1955 = vcmp.lt.s32.totalorder %v1934, 3
    %vm1956 = vcmp.lt.s32.totalorder %v1934, 4
    %v1957 = vsel %vm1953, %v1937, %v1940
    %v1958 = vsel %vm1956, %v1946, 2102212464
    %v1959 = vsel %vm1955, %v1943, %v1958
    %v1960 = vsel %vm1954, %v1957, %v1959
    %v1961 = vsel %vm1953, %v1940, %v1943
    %v1962 = vsel %vm1956, %v1949, 920167782
    %v1963 = vsel %vm1955, %v1946, %v1962
    %v1964 = vsel %vm1954, %v1961, %v1963
    %v1965 = vsel %vm1953, %v1943, %v1946
    %v1966 = vsel %vm1956, %v1952, 1326507024
    %v1967 = vsel %vm1955, %v1949, %v1966
    %v1968 = vsel %vm1954, %v1965, %v1967
    %v1969 = vshll.u32 %v1929, 8
    %v1970 = vmul.u32.u64.compose %v1969, %v1968
    %v1971 = vextract.low.u32 %v1970
    %v1972 = vextract.high.u32 %v1970
    %v1973 = vmul.u32.u64.compose %v1969, %v1964
    %v1974 = vextract.low.u32 %v1973
    %v1975 = vextract.high.u32 %v1973
    %v1976 = vmul.u32 %v1969, %v1960
    %v1977 = vadd.s32 %v1972, %v1974
    %vm1978 = vc.u32 %v1972, %v1974
    %v1979 = vadd.s32 %v1975, 1
    %v1980 = vsel %vm1978, %v1979, %v1975
    %v1981 = vadd.s32 %v1976, %v1980
    %v1982 = vadd.s32 %v1981, 536870912
    %v1983 = vshrl.u32 %v1982, 30
    %v1984 = vshll.u32 %v1983, 30
    %v1985 = vsub.s32 %v1981, %v1984
    %vm1986 = vcmp.lt.s32.totalorder %v1985, 0
    %v1987 = vsub.s32 0, %v1985
    %v1988 = vsel %vm1986, %v1987, %v1985
    %v1989 = vclz %v1988
    %v1990 = vsub.s32 %v1989, 2
    %vm1991 = vcmp.gt.s32.totalorder 0, %v1990
    %v1992 = vsel %vm1991, 0, %v1990
    %v1993 = vsub.s32 32, %v1992
    %v1994 = vshll.u32 %v1985, %v1992
    %v1995 = vshrl.u32 %v1977, %v1993
    %v1996 = vor.u32 %v1994, %v1995
    %v1997 = vsub.s32 4294967266, %v1992
    %v1998 = vadd.s32 %v1997, 127
    %v1999 = vshll.u32 %v1998, 23
    %v2000 = vor.u32 4788187, %v1999
    %v2001 = vand.u32 2147483647, %v2000
    %v2003 = vcvt.s32.f32 %v1996
    %v2004 = vmul.f32 %v2003, %v2001
    %v2005 = vxor.u32 %v2004, 2147483648
    %v2006 = vsel %vm1923, %v2005, %v2004
    %v2007 = vsub.s32 4, %v1983
    %v2008 = vsel %vm1923, %v2007, %v1983
    %v2009 = vsel %vm1922, %v352, %v2006
    %v2010 = vsel %vm1922, 0, %v2008
    %v2011 = vcosq.f32.pop %v2009
    %v2012 = vsinq.f32.pop %v2009
    %vm2013 = vweird.f32 %v352
    %v2014 = vadd.s32 %v2010, 3
    %v2015 = vand.u32 %v2014, 3
    %vm2016 = vcmp.lt.s32.totalorder %v2015, 2
    %vm2017 = vcmp.eq.s32.totalorder %v2015, 0
    %v2018 = vxor.u32 %v2012, 2147483648
    %v2019 = vsel %vm2017, %v2011, %v2018
    %vm2020 = vcmp.eq.s32.totalorder %v2015, 2
    %v2021 = vxor.u32 %v2011, 2147483648
    %v2022 = vsel %vm2020, %v2021, %v2012
    %v2023 = vsel %vm2016, %v2019, %v2022
    %v2024 = vsel %vm2013, nan, %v2023
    %v2025 = vand.u32 2147483647, %v353
    %vm2026 = vcmp.le.f32.partialorder %v2025, 0.7853982
    %vm2027 = vcmp.lt.s32.totalorder %v353, 0
    %v2028 = vand.u32 %v353, 2139095040
    %v2029 = vshrl.u32 %v2028, 23
    %v2030 = vsub.s32 %v2029, 127
    %v2031 = vand.u32 2147483647, %v353
    %v2032 = vand.u32 %v2031, 8388607
    %v2033 = vor.u32 %v2032, 8388608
    %v2034 = vsub.s32 0, %v2033
    %v2035 = vadd.s32 %v2030, 1
    %vm2036 = vcmp.gt.s32.totalorder %v2035, 0
    %v2037 = vsel %vm2036, %v2035, 0
    %v2038 = vshrl.u32 %v2037, 5
    %v2039 = vand.u32 %v2037, 31
    %v2040 = vsub.s32 32, %v2039
    %v2041 = vshrl.u32 683565275, %v2040
    %v2042 = vshll.u32 683565275, %v2039
    %v2043 = vshrl.u32 2475754826, %v2040
    %v2044 = vor.u32 %v2042, %v2043
    %v2045 = vshll.u32 2475754826, %v2039
    %v2046 = vshrl.u32 2131351028, %v2040
    %v2047 = vor.u32 %v2045, %v2046
    %v2048 = vshll.u32 2131351028, %v2039
    %v2049 = vshrl.u32 2102212464, %v2040
    %v2050 = vor.u32 %v2048, %v2049
    %v2051 = vshll.u32 2102212464, %v2039
    %v2052 = vshrl.u32 920167782, %v2040
    %v2053 = vor.u32 %v2051, %v2052
    %v2054 = vshll.u32 920167782, %v2039
    %v2055 = vshrl.u32 1326507024, %v2040
    %v2056 = vor.u32 %v2054, %v2055
    %vm2057 = vcmp.lt.s32.totalorder %v2038, 1
    %vm2058 = vcmp.lt.s32.totalorder %v2038, 2
    %vm2059 = vcmp.lt.s32.totalorder %v2038, 3
    %vm2060 = vcmp.lt.s32.totalorder %v2038, 4
    %v2061 = vsel %vm2057, %v2041, %v2044
    %v2062 = vsel %vm2060, %v2050, 2102212464
    %v2063 = vsel %vm2059, %v2047, %v2062
    %v2064 = vsel %vm2058, %v2061, %v2063
    %v2065 = vsel %vm2057, %v2044, %v2047
    %v2066 = vsel %vm2060, %v2053, 920167782
    %v2067 = vsel %vm2059, %v2050, %v2066
    %v2068 = vsel %vm2058, %v2065, %v2067
    %v2069 = vsel %vm2057, %v2047, %v2050
    %v2070 = vsel %vm2060, %v2056, 1326507024
    %v2071 = vsel %vm2059, %v2053, %v2070
    %v2072 = vsel %vm2058, %v2069, %v2071
    %v2073 = vshll.u32 %v2033, 8
    %v2074 = vmul.u32.u64.compose %v2073, %v2072
    %v2075 = vextract.low.u32 %v2074
    %v2076 = vextract.high.u32 %v2074
    %v2077 = vmul.u32.u64.compose %v2073, %v2068
    %v2078 = vextract.low.u32 %v2077
    %v2079 = vextract.high.u32 %v2077
    %v2080 = vmul.u32 %v2073, %v2064
    %v2081 = vadd.s32 %v2076, %v2078
    %vm2082 = vc.u32 %v2076, %v2078
    %v2083 = vadd.s32 %v2079, 1
    %v2084 = vsel %vm2082, %v2083, %v2079
    %v2085 = vadd.s32 %v2080, %v2084
    %v2086 = vadd.s32 %v2085, 536870912
    %v2087 = vshrl.u32 %v2086, 30
    %v2088 = vshll.u32 %v2087, 30
    %v2089 = vsub.s32 %v2085, %v2088
    %vm2090 = vcmp.lt.s32.totalorder %v2089, 0
    %v2091 = vsub.s32 0, %v2089
    %v2092 = vsel %vm2090, %v2091, %v2089
    %v2093 = vclz %v2092
    %v2094 = vsub.s32 %v2093, 2
    %vm2095 = vcmp.gt.s32.totalorder 0, %v2094
    %v2096 = vsel %vm2095, 0, %v2094
    %v2097 = vsub.s32 32, %v2096
    %v2098 = vshll.u32 %v2089, %v2096
    %v2099 = vshrl.u32 %v2081, %v2097
    %v2100 = vor.u32 %v2098, %v2099
    %v2101 = vsub.s32 4294967266, %v2096
    %v2102 = vadd.s32 %v2101, 127
    %v2103 = vshll.u32 %v2102, 23
    %v2104 = vor.u32 4788187, %v2103
    %v2105 = vand.u32 2147483647, %v2104
    %v2107 = vcvt.s32.f32 %v2100
    %v2108 = vmul.f32 %v2107, %v2105
    %v2109 = vxor.u32 %v2108, 2147483648
    %v2110 = vsel %vm2027, %v2109, %v2108
    %v2111 = vsub.s32 4, %v2087
    %v2112 = vsel %vm2027, %v2111, %v2087
    %v2113 = vsel %vm2026, %v353, %v2110
    %v2114 = vsel %vm2026, 0, %v2112
    %v2115 = vcosq.f32.pop %v2113
    %v2116 = vsinq.f32.pop %v2113
    %vm2117 = vweird.f32 %v353
    %v2118 = vadd.s32 %v2114, 3
    %v2119 = vand.u32 %v2118, 3
    %vm2120 = vcmp.lt.s32.totalorder %v2119, 2
    %vm2121 = vcmp.eq.s32.totalorder %v2119, 0
    %v2122 = vxor.u32 %v2116, 2147483648
    %v2123 = vsel %vm2121, %v2115, %v2122
    %vm2124 = vcmp.eq.s32.totalorder %v2119, 2
    %v2125 = vxor.u32 %v2115, 2147483648
    %v2126 = vsel %vm2124, %v2125, %v2116
    %v2127 = vsel %vm2120, %v2123, %v2126
    %v2128 = vsel %vm2117, nan, %v2127
    %v2129 = vand.u32 2147483647, %v354
    %vm2130 = vcmp.le.f32.partialorder %v2129, 0.7853982
    %vm2131 = vcmp.lt.s32.totalorder %v354, 0
    %v2132 = vand.u32 %v354, 2139095040
    %v2133 = vshrl.u32 %v2132, 23
    %v2134 = vsub.s32 %v2133, 127
    %v2135 = vand.u32 2147483647, %v354
    %v2136 = vand.u32 %v2135, 8388607
    %v2137 = vor.u32 %v2136, 8388608
    %v2138 = vsub.s32 0, %v2137
    %v2139 = vadd.s32 %v2134, 1
    %vm2140 = vcmp.gt.s32.totalorder %v2139, 0
    %v2141 = vsel %vm2140, %v2139, 0
    %v2142 = vshrl.u32 %v2141, 5
    %v2143 = vand.u32 %v2141, 31
    %v2144 = vsub.s32 32, %v2143
    %v2145 = vshrl.u32 683565275, %v2144
    %v2146 = vshll.u32 683565275, %v2143
    %v2147 = vshrl.u32 2475754826, %v2144
    %v2148 = vor.u32 %v2146, %v2147
    %v2149 = vshll.u32 2475754826, %v2143
    %v2150 = vshrl.u32 2131351028, %v2144
    %v2151 = vor.u32 %v2149, %v2150
    %v2152 = vshll.u32 2131351028, %v2143
    %v2153 = vshrl.u32 2102212464, %v2144
    %v2154 = vor.u32 %v2152, %v2153
    %v2155 = vshll.u32 2102212464, %v2143
    %v2156 = vshrl.u32 920167782, %v2144
    %v2157 = vor.u32 %v2155, %v2156
    %v2158 = vshll.u32 920167782, %v2143
    %v2159 = vshrl.u32 1326507024, %v2144
    %v2160 = vor.u32 %v2158, %v2159
    %vm2161 = vcmp.lt.s32.totalorder %v2142, 1
    %vm2162 = vcmp.lt.s32.totalorder %v2142, 2
    %vm2163 = vcmp.lt.s32.totalorder %v2142, 3
    %vm2164 = vcmp.lt.s32.totalorder %v2142, 4
    %v2165 = vsel %vm2161, %v2145, %v2148
    %v2166 = vsel %vm2164, %v2154, 2102212464
    %v2167 = vsel %vm2163, %v2151, %v2166
    %v2168 = vsel %vm2162, %v2165, %v2167
    %v2169 = vsel %vm2161, %v2148, %v2151
    %v2170 = vsel %vm2164, %v2157, 920167782
    %v2171 = vsel %vm2163, %v2154, %v2170
    %v2172 = vsel %vm2162, %v2169, %v2171
    %v2173 = vsel %vm2161, %v2151, %v2154
    %v2174 = vsel %vm2164, %v2160, 1326507024
    %v2175 = vsel %vm2163, %v2157, %v2174
    %v2176 = vsel %vm2162, %v2173, %v2175
    %v2177 = vshll.u32 %v2137, 8
    %v2178 = vmul.u32.u64.compose %v2177, %v2176
    %v2179 = vextract.low.u32 %v2178
    %v2180 = vextract.high.u32 %v2178
    %v2181 = vmul.u32.u64.compose %v2177, %v2172
    %v2182 = vextract.low.u32 %v2181
    %v2183 = vextract.high.u32 %v2181
    %v2184 = vmul.u32 %v2177, %v2168
    %v2185 = vadd.s32 %v2180, %v2182
    %vm2186 = vc.u32 %v2180, %v2182
    %v2187 = vadd.s32 %v2183, 1
    %v2188 = vsel %vm2186, %v2187, %v2183
    %v2189 = vadd.s32 %v2184, %v2188
    %v2190 = vadd.s32 %v2189, 536870912
    %v2191 = vshrl.u32 %v2190, 30
    %v2192 = vshll.u32 %v2191, 30
    %v2193 = vsub.s32 %v2189, %v2192
    %vm2194 = vcmp.lt.s32.totalorder %v2193, 0
    %v2195 = vsub.s32 0, %v2193
    %v2196 = vsel %vm2194, %v2195, %v2193
    %v2197 = vclz %v2196
    %v2198 = vsub.s32 %v2197, 2
    %vm2199 = vcmp.gt.s32.totalorder 0, %v2198
    %v2200 = vsel %vm2199, 0, %v2198
    %v2201 = vsub.s32 32, %v2200
    %v2202 = vshll.u32 %v2193, %v2200
    %v2203 = vshrl.u32 %v2185, %v2201
    %v2204 = vor.u32 %v2202, %v2203
    %v2205 = vsub.s32 4294967266, %v2200
    %v2206 = vadd.s32 %v2205, 127
    %v2207 = vshll.u32 %v2206, 23
    %v2208 = vor.u32 4788187, %v2207
    %v2209 = vand.u32 2147483647, %v2208
    %v2211 = vcvt.s32.f32 %v2204
    %v2212 = vmul.f32 %v2211, %v2209
    %v2213 = vxor.u32 %v2212, 2147483648
    %v2214 = vsel %vm2131, %v2213, %v2212
    %v2215 = vsub.s32 4, %v2191
    %v2216 = vsel %vm2131, %v2215, %v2191
    %v2217 = vsel %vm2130, %v354, %v2214
    %v2218 = vsel %vm2130, 0, %v2216
    %v2219 = vcosq.f32.pop %v2217
    %v2220 = vsinq.f32.pop %v2217
    %vm2221 = vweird.f32 %v354
    %v2222 = vadd.s32 %v2218, 3
    %v2223 = vand.u32 %v2222, 3
    %vm2224 = vcmp.lt.s32.totalorder %v2223, 2
    %vm2225 = vcmp.eq.s32.totalorder %v2223, 0
    %v2226 = vxor.u32 %v2220, 2147483648
    %v2227 = vsel %vm2225, %v2219, %v2226
    %vm2228 = vcmp.eq.s32.totalorder %v2223, 2
    %v2229 = vxor.u32 %v2219, 2147483648
    %v2230 = vsel %vm2228, %v2229, %v2220
    %v2231 = vsel %vm2224, %v2227, %v2230
    %v2232 = vsel %vm2221, nan, %v2231
    %v2233 = vand.u32 2147483647, %v355
    %vm2234 = vcmp.le.f32.partialorder %v2233, 0.7853982
    %vm2235 = vcmp.lt.s32.totalorder %v355, 0
    %v2236 = vand.u32 %v355, 2139095040
    %v2237 = vshrl.u32 %v2236, 23
    %v2238 = vsub.s32 %v2237, 127
    %v2239 = vand.u32 2147483647, %v355
    %v2240 = vand.u32 %v2239, 8388607
    %v2241 = vor.u32 %v2240, 8388608
    %v2242 = vsub.s32 0, %v2241
    %v2243 = vadd.s32 %v2238, 1
    %vm2244 = vcmp.gt.s32.totalorder %v2243, 0
    %v2245 = vsel %vm2244, %v2243, 0
    %v2246 = vshrl.u32 %v2245, 5
    %v2247 = vand.u32 %v2245, 31
    %v2248 = vsub.s32 32, %v2247
    %v2249 = vshrl.u32 683565275, %v2248
    %v2250 = vshll.u32 683565275, %v2247
    %v2251 = vshrl.u32 2475754826, %v2248
    %v2252 = vor.u32 %v2250, %v2251
    %v2253 = vshll.u32 2475754826, %v2247
    %v2254 = vshrl.u32 2131351028, %v2248
    %v2255 = vor.u32 %v2253, %v2254
    %v2256 = vshll.u32 2131351028, %v2247
    %v2257 = vshrl.u32 2102212464, %v2248
    %v2258 = vor.u32 %v2256, %v2257
    %v2259 = vshll.u32 2102212464, %v2247
    %v2260 = vshrl.u32 920167782, %v2248
    %v2261 = vor.u32 %v2259, %v2260
    %v2262 = vshll.u32 920167782, %v2247
    %v2263 = vshrl.u32 1326507024, %v2248
    %v2264 = vor.u32 %v2262, %v2263
    %vm2265 = vcmp.lt.s32.totalorder %v2246, 1
    %vm2266 = vcmp.lt.s32.totalorder %v2246, 2
    %vm2267 = vcmp.lt.s32.totalorder %v2246, 3
    %vm2268 = vcmp.lt.s32.totalorder %v2246, 4
    %v2269 = vsel %vm2265, %v2249, %v2252
    %v2270 = vsel %vm2268, %v2258, 2102212464
    %v2271 = vsel %vm2267, %v2255, %v2270
    %v2272 = vsel %vm2266, %v2269, %v2271
    %v2273 = vsel %vm2265, %v2252, %v2255
    %v2274 = vsel %vm2268, %v2261, 920167782
    %v2275 = vsel %vm2267, %v2258, %v2274
    %v2276 = vsel %vm2266, %v2273, %v2275
    %v2277 = vsel %vm2265, %v2255, %v2258
    %v2278 = vsel %vm2268, %v2264, 1326507024
    %v2279 = vsel %vm2267, %v2261, %v2278
    %v2280 = vsel %vm2266, %v2277, %v2279
    %v2281 = vshll.u32 %v2241, 8
    %v2282 = vmul.u32.u64.compose %v2281, %v2280
    %v2283 = vextract.low.u32 %v2282
    %v2284 = vextract.high.u32 %v2282
    %v2285 = vmul.u32.u64.compose %v2281, %v2276
    %v2286 = vextract.low.u32 %v2285
    %v2287 = vextract.high.u32 %v2285
    %v2288 = vmul.u32 %v2281, %v2272
    %v2289 = vadd.s32 %v2284, %v2286
    %vm2290 = vc.u32 %v2284, %v2286
    %v2291 = vadd.s32 %v2287, 1
    %v2292 = vsel %vm2290, %v2291, %v2287
    %v2293 = vadd.s32 %v2288, %v2292
    %v2294 = vadd.s32 %v2293, 536870912
    %v2295 = vshrl.u32 %v2294, 30
    %v2296 = vshll.u32 %v2295, 30
    %v2297 = vsub.s32 %v2293, %v2296
    %vm2298 = vcmp.lt.s32.totalorder %v2297, 0
    %v2299 = vsub.s32 0, %v2297
    %v2300 = vsel %vm2298, %v2299, %v2297
    %v2301 = vclz %v2300
    %v2302 = vsub.s32 %v2301, 2
    %vm2303 = vcmp.gt.s32.totalorder 0, %v2302
    %v2304 = vsel %vm2303, 0, %v2302
    %v2305 = vsub.s32 32, %v2304
    %v2306 = vshll.u32 %v2297, %v2304
    %v2307 = vshrl.u32 %v2289, %v2305
    %v2308 = vor.u32 %v2306, %v2307
    %v2309 = vsub.s32 4294967266, %v2304
    %v2310 = vadd.s32 %v2309, 127
    %v2311 = vshll.u32 %v2310, 23
    %v2312 = vor.u32 4788187, %v2311
    %v2313 = vand.u32 2147483647, %v2312
    %v2315 = vcvt.s32.f32 %v2308
    %v2316 = vmul.f32 %v2315, %v2313
    %v2317 = vxor.u32 %v2316, 2147483648
    %v2318 = vsel %vm2235, %v2317, %v2316
    %v2319 = vsub.s32 4, %v2295
    %v2320 = vsel %vm2235, %v2319, %v2295
    %v2321 = vsel %vm2234, %v355, %v2318
    %v2322 = vsel %vm2234, 0, %v2320
    %v2323 = vcosq.f32.pop %v2321
    %v2324 = vsinq.f32.pop %v2321
    %vm2325 = vweird.f32 %v355
    %v2326 = vadd.s32 %v2322, 3
    %v2327 = vand.u32 %v2326, 3
    %vm2328 = vcmp.lt.s32.totalorder %v2327, 2
    %vm2329 = vcmp.eq.s32.totalorder %v2327, 0
    %v2330 = vxor.u32 %v2324, 2147483648
    %v2331 = vsel %vm2329, %v2323, %v2330
    %vm2332 = vcmp.eq.s32.totalorder %v2327, 2
    %v2333 = vxor.u32 %v2323, 2147483648
    %v2334 = vsel %vm2332, %v2333, %v2324
    %v2335 = vsel %vm2328, %v2331, %v2334
    %v2336 = vsel %vm2325, nan, %v2335
    %v2337 = vand.u32 2147483647, %v356
    %vm2338 = vcmp.le.f32.partialorder %v2337, 0.7853982
    %vm2339 = vcmp.lt.s32.totalorder %v356, 0
    %v2340 = vand.u32 %v356, 2139095040
    %v2341 = vshrl.u32 %v2340, 23
    %v2342 = vsub.s32 %v2341, 127
    %v2343 = vand.u32 2147483647, %v356
    %v2344 = vand.u32 %v2343, 8388607
    %v2345 = vor.u32 %v2344, 8388608
    %v2346 = vsub.s32 0, %v2345
    %v2347 = vadd.s32 %v2342, 1
    %vm2348 = vcmp.gt.s32.totalorder %v2347, 0
    %v2349 = vsel %vm2348, %v2347, 0
    %v2350 = vshrl.u32 %v2349, 5
    %v2351 = vand.u32 %v2349, 31
    %v2352 = vsub.s32 32, %v2351
    %v2353 = vshrl.u32 683565275, %v2352
    %v2354 = vshll.u32 683565275, %v2351
    %v2355 = vshrl.u32 2475754826, %v2352
    %v2356 = vor.u32 %v2354, %v2355
    %v2357 = vshll.u32 2475754826, %v2351
    %v2358 = vshrl.u32 2131351028, %v2352
    %v2359 = vor.u32 %v2357, %v2358
    %v2360 = vshll.u32 2131351028, %v2351
    %v2361 = vshrl.u32 2102212464, %v2352
    %v2362 = vor.u32 %v2360, %v2361
    %v2363 = vshll.u32 2102212464, %v2351
    %v2364 = vshrl.u32 920167782, %v2352
    %v2365 = vor.u32 %v2363, %v2364
    %v2366 = vshll.u32 920167782, %v2351
    %v2367 = vshrl.u32 1326507024, %v2352
    %v2368 = vor.u32 %v2366, %v2367
    %vm2369 = vcmp.lt.s32.totalorder %v2350, 1
    %vm2370 = vcmp.lt.s32.totalorder %v2350, 2
    %vm2371 = vcmp.lt.s32.totalorder %v2350, 3
    %vm2372 = vcmp.lt.s32.totalorder %v2350, 4
    %v2373 = vsel %vm2369, %v2353, %v2356
    %v2374 = vsel %vm2372, %v2362, 2102212464
    %v2375 = vsel %vm2371, %v2359, %v2374
    %v2376 = vsel %vm2370, %v2373, %v2375
    %v2377 = vsel %vm2369, %v2356, %v2359
    %v2378 = vsel %vm2372, %v2365, 920167782
    %v2379 = vsel %vm2371, %v2362, %v2378
    %v2380 = vsel %vm2370, %v2377, %v2379
    %v2381 = vsel %vm2369, %v2359, %v2362
    %v2382 = vsel %vm2372, %v2368, 1326507024
    %v2383 = vsel %vm2371, %v2365, %v2382
    %v2384 = vsel %vm2370, %v2381, %v2383
    %v2385 = vshll.u32 %v2345, 8
    %v2386 = vmul.u32.u64.compose %v2385, %v2384
    %v2387 = vextract.low.u32 %v2386
    %v2388 = vextract.high.u32 %v2386
    %v2389 = vmul.u32.u64.compose %v2385, %v2380
    %v2390 = vextract.low.u32 %v2389
    %v2391 = vextract.high.u32 %v2389
    %v2392 = vmul.u32 %v2385, %v2376
    %v2393 = vadd.s32 %v2388, %v2390
    %vm2394 = vc.u32 %v2388, %v2390
    %v2395 = vadd.s32 %v2391, 1
    %v2396 = vsel %vm2394, %v2395, %v2391
    %v2397 = vadd.s32 %v2392, %v2396
    %v2398 = vadd.s32 %v2397, 536870912
    %v2399 = vshrl.u32 %v2398, 30
    %v2400 = vshll.u32 %v2399, 30
    %v2401 = vsub.s32 %v2397, %v2400
    %vm2402 = vcmp.lt.s32.totalorder %v2401, 0
    %v2403 = vsub.s32 0, %v2401
    %v2404 = vsel %vm2402, %v2403, %v2401
    %v2405 = vclz %v2404
    %v2406 = vsub.s32 %v2405, 2
    %vm2407 = vcmp.gt.s32.totalorder 0, %v2406
    %v2408 = vsel %vm2407, 0, %v2406
    %v2409 = vsub.s32 32, %v2408
    %v2410 = vshll.u32 %v2401, %v2408
    %v2411 = vshrl.u32 %v2393, %v2409
    %v2412 = vor.u32 %v2410, %v2411
    %v2413 = vsub.s32 4294967266, %v2408
    %v2414 = vadd.s32 %v2413, 127
    %v2415 = vshll.u32 %v2414, 23
    %v2416 = vor.u32 4788187, %v2415
    %v2417 = vand.u32 2147483647, %v2416
    %v2419 = vcvt.s32.f32 %v2412
    %v2420 = vmul.f32 %v2419, %v2417
    %v2421 = vxor.u32 %v2420, 2147483648
    %v2422 = vsel %vm2339, %v2421, %v2420
    %v2423 = vsub.s32 4, %v2399
    %v2424 = vsel %vm2339, %v2423, %v2399
    %v2425 = vsel %vm2338, %v356, %v2422
    %v2426 = vsel %vm2338, 0, %v2424
    %v2427 = vcosq.f32.pop %v2425
    %v2428 = vsinq.f32.pop %v2425
    %vm2429 = vweird.f32 %v356
    %v2430 = vadd.s32 %v2426, 3
    %v2431 = vand.u32 %v2430, 3
    %vm2432 = vcmp.lt.s32.totalorder %v2431, 2
    %vm2433 = vcmp.eq.s32.totalorder %v2431, 0
    %v2434 = vxor.u32 %v2428, 2147483648
    %v2435 = vsel %vm2433, %v2427, %v2434
    %vm2436 = vcmp.eq.s32.totalorder %v2431, 2
    %v2437 = vxor.u32 %v2427, 2147483648
    %v2438 = vsel %vm2436, %v2437, %v2428
    %v2439 = vsel %vm2432, %v2435, %v2438
    %v2440 = vsel %vm2429, nan, %v2439
    %v2441 = vand.u32 2147483647, %v357
    %vm2442 = vcmp.le.f32.partialorder %v2441, 0.7853982
    %vm2443 = vcmp.lt.s32.totalorder %v357, 0
    %v2444 = vand.u32 %v357, 2139095040
    %v2445 = vshrl.u32 %v2444, 23
    %v2446 = vsub.s32 %v2445, 127
    %v2447 = vand.u32 2147483647, %v357
    %v2448 = vand.u32 %v2447, 8388607
    %v2449 = vor.u32 %v2448, 8388608
    %v2450 = vsub.s32 0, %v2449
    %v2451 = vadd.s32 %v2446, 1
    %vm2452 = vcmp.gt.s32.totalorder %v2451, 0
    %v2453 = vsel %vm2452, %v2451, 0
    %v2454 = vshrl.u32 %v2453, 5
    %v2455 = vand.u32 %v2453, 31
    %v2456 = vsub.s32 32, %v2455
    %v2457 = vshrl.u32 683565275, %v2456
    %v2458 = vshll.u32 683565275, %v2455
    %v2459 = vshrl.u32 2475754826, %v2456
    %v2460 = vor.u32 %v2458, %v2459
    %v2461 = vshll.u32 2475754826, %v2455
    %v2462 = vshrl.u32 2131351028, %v2456
    %v2463 = vor.u32 %v2461, %v2462
    %v2464 = vshll.u32 2131351028, %v2455
    %v2465 = vshrl.u32 2102212464, %v2456
    %v2466 = vor.u32 %v2464, %v2465
    %v2467 = vshll.u32 2102212464, %v2455
    %v2468 = vshrl.u32 920167782, %v2456
    %v2469 = vor.u32 %v2467, %v2468
    %v2470 = vshll.u32 920167782, %v2455
    %v2471 = vshrl.u32 1326507024, %v2456
    %v2472 = vor.u32 %v2470, %v2471
    %vm2473 = vcmp.lt.s32.totalorder %v2454, 1
    %vm2474 = vcmp.lt.s32.totalorder %v2454, 2
    %vm2475 = vcmp.lt.s32.totalorder %v2454, 3
    %vm2476 = vcmp.lt.s32.totalorder %v2454, 4
    %v2477 = vsel %vm2473, %v2457, %v2460
    %v2478 = vsel %vm2476, %v2466, 2102212464
    %v2479 = vsel %vm2475, %v2463, %v2478
    %v2480 = vsel %vm2474, %v2477, %v2479
    %v2481 = vsel %vm2473, %v2460, %v2463
    %v2482 = vsel %vm2476, %v2469, 920167782
    %v2483 = vsel %vm2475, %v2466, %v2482
    %v2484 = vsel %vm2474, %v2481, %v2483
    %v2485 = vsel %vm2473, %v2463, %v2466
    %v2486 = vsel %vm2476, %v2472, 1326507024
    %v2487 = vsel %vm2475, %v2469, %v2486
    %v2488 = vsel %vm2474, %v2485, %v2487
    %v2489 = vshll.u32 %v2449, 8
    %v2490 = vmul.u32.u64.compose %v2489, %v2488
    %v2491 = vextract.low.u32 %v2490
    %v2492 = vextract.high.u32 %v2490
    %v2493 = vmul.u32.u64.compose %v2489, %v2484
    %v2494 = vextract.low.u32 %v2493
    %v2495 = vextract.high.u32 %v2493
    %v2496 = vmul.u32 %v2489, %v2480
    %v2497 = vadd.s32 %v2492, %v2494
    %vm2498 = vc.u32 %v2492, %v2494
    %v2499 = vadd.s32 %v2495, 1
    %v2500 = vsel %vm2498, %v2499, %v2495
    %v2501 = vadd.s32 %v2496, %v2500
    %v2502 = vadd.s32 %v2501, 536870912
    %v2503 = vshrl.u32 %v2502, 30
    %v2504 = vshll.u32 %v2503, 30
    %v2505 = vsub.s32 %v2501, %v2504
    %vm2506 = vcmp.lt.s32.totalorder %v2505, 0
    %v2507 = vsub.s32 0, %v2505
    %v2508 = vsel %vm2506, %v2507, %v2505
    %v2509 = vclz %v2508
    %v2510 = vsub.s32 %v2509, 2
    %vm2511 = vcmp.gt.s32.totalorder 0, %v2510
    %v2512 = vsel %vm2511, 0, %v2510
    %v2513 = vsub.s32 32, %v2512
    %v2514 = vshll.u32 %v2505, %v2512
    %v2515 = vshrl.u32 %v2497, %v2513
    %v2516 = vor.u32 %v2514, %v2515
    %v2517 = vsub.s32 4294967266, %v2512
    %v2518 = vadd.s32 %v2517, 127
    %v2519 = vshll.u32 %v2518, 23
    %v2520 = vor.u32 4788187, %v2519
    %v2521 = vand.u32 2147483647, %v2520
    %v2523 = vcvt.s32.f32 %v2516
    %v2524 = vmul.f32 %v2523, %v2521
    %v2525 = vxor.u32 %v2524, 2147483648
    %v2526 = vsel %vm2443, %v2525, %v2524
    %v2527 = vsub.s32 4, %v2503
    %v2528 = vsel %vm2443, %v2527, %v2503
    %v2529 = vsel %vm2442, %v357, %v2526
    %v2530 = vsel %vm2442, 0, %v2528
    %v2531 = vcosq.f32.pop %v2529
    %v2532 = vsinq.f32.pop %v2529
    %vm2533 = vweird.f32 %v357
    %v2534 = vadd.s32 %v2530, 3
    %v2535 = vand.u32 %v2534, 3
    %vm2536 = vcmp.lt.s32.totalorder %v2535, 2
    %vm2537 = vcmp.eq.s32.totalorder %v2535, 0
    %v2538 = vxor.u32 %v2532, 2147483648
    %v2539 = vsel %vm2537, %v2531, %v2538
    %vm2540 = vcmp.eq.s32.totalorder %v2535, 2
    %v2541 = vxor.u32 %v2531, 2147483648
    %v2542 = vsel %vm2540, %v2541, %v2532
    %v2543 = vsel %vm2536, %v2539, %v2542
    %v2544 = vsel %vm2533, nan, %v2543
    %v2545 = vand.u32 2147483647, %v358
    %vm2546 = vcmp.le.f32.partialorder %v2545, 0.7853982
    %vm2547 = vcmp.lt.s32.totalorder %v358, 0
    %v2548 = vand.u32 %v358, 2139095040
    %v2549 = vshrl.u32 %v2548, 23
    %v2550 = vsub.s32 %v2549, 127
    %v2551 = vand.u32 2147483647, %v358
    %v2552 = vand.u32 %v2551, 8388607
    %v2553 = vor.u32 %v2552, 8388608
    %v2554 = vsub.s32 0, %v2553
    %v2555 = vadd.s32 %v2550, 1
    %vm2556 = vcmp.gt.s32.totalorder %v2555, 0
    %v2557 = vsel %vm2556, %v2555, 0
    %v2558 = vshrl.u32 %v2557, 5
    %v2559 = vand.u32 %v2557, 31
    %v2560 = vsub.s32 32, %v2559
    %v2561 = vshrl.u32 683565275, %v2560
    %v2562 = vshll.u32 683565275, %v2559
    %v2563 = vshrl.u32 2475754826, %v2560
    %v2564 = vor.u32 %v2562, %v2563
    %v2565 = vshll.u32 2475754826, %v2559
    %v2566 = vshrl.u32 2131351028, %v2560
    %v2567 = vor.u32 %v2565, %v2566
    %v2568 = vshll.u32 2131351028, %v2559
    %v2569 = vshrl.u32 2102212464, %v2560
    %v2570 = vor.u32 %v2568, %v2569
    %v2571 = vshll.u32 2102212464, %v2559
    %v2572 = vshrl.u32 920167782, %v2560
    %v2573 = vor.u32 %v2571, %v2572
    %v2574 = vshll.u32 920167782, %v2559
    %v2575 = vshrl.u32 1326507024, %v2560
    %v2576 = vor.u32 %v2574, %v2575
    %vm2577 = vcmp.lt.s32.totalorder %v2558, 1
    %vm2578 = vcmp.lt.s32.totalorder %v2558, 2
    %vm2579 = vcmp.lt.s32.totalorder %v2558, 3
    %vm2580 = vcmp.lt.s32.totalorder %v2558, 4
    %v2581 = vsel %vm2577, %v2561, %v2564
    %v2582 = vsel %vm2580, %v2570, 2102212464
    %v2583 = vsel %vm2579, %v2567, %v2582
    %v2584 = vsel %vm2578, %v2581, %v2583
    %v2585 = vsel %vm2577, %v2564, %v2567
    %v2586 = vsel %vm2580, %v2573, 920167782
    %v2587 = vsel %vm2579, %v2570, %v2586
    %v2588 = vsel %vm2578, %v2585, %v2587
    %v2589 = vsel %vm2577, %v2567, %v2570
    %v2590 = vsel %vm2580, %v2576, 1326507024
    %v2591 = vsel %vm2579, %v2573, %v2590
    %v2592 = vsel %vm2578, %v2589, %v2591
    %v2593 = vshll.u32 %v2553, 8
    %v2594 = vmul.u32.u64.compose %v2593, %v2592
    %v2595 = vextract.low.u32 %v2594
    %v2596 = vextract.high.u32 %v2594
    %v2597 = vmul.u32.u64.compose %v2593, %v2588
    %v2598 = vextract.low.u32 %v2597
    %v2599 = vextract.high.u32 %v2597
    %v2600 = vmul.u32 %v2593, %v2584
    %v2601 = vadd.s32 %v2596, %v2598
    %vm2602 = vc.u32 %v2596, %v2598
    %v2603 = vadd.s32 %v2599, 1
    %v2604 = vsel %vm2602, %v2603, %v2599
    %v2605 = vadd.s32 %v2600, %v2604
    %v2606 = vadd.s32 %v2605, 536870912
    %v2607 = vshrl.u32 %v2606, 30
    %v2608 = vshll.u32 %v2607, 30
    %v2609 = vsub.s32 %v2605, %v2608
    %vm2610 = vcmp.lt.s32.totalorder %v2609, 0
    %v2611 = vsub.s32 0, %v2609
    %v2612 = vsel %vm2610, %v2611, %v2609
    %v2613 = vclz %v2612
    %v2614 = vsub.s32 %v2613, 2
    %vm2615 = vcmp.gt.s32.totalorder 0, %v2614
    %v2616 = vsel %vm2615, 0, %v2614
    %v2617 = vsub.s32 32, %v2616
    %v2618 = vshll.u32 %v2609, %v2616
    %v2619 = vshrl.u32 %v2601, %v2617
    %v2620 = vor.u32 %v2618, %v2619
    %v2621 = vsub.s32 4294967266, %v2616
    %v2622 = vadd.s32 %v2621, 127
    %v2623 = vshll.u32 %v2622, 23
    %v2624 = vor.u32 4788187, %v2623
    %v2625 = vand.u32 2147483647, %v2624
    %v2627 = vcvt.s32.f32 %v2620
    %v2628 = vmul.f32 %v2627, %v2625
    %v2629 = vxor.u32 %v2628, 2147483648
    %v2630 = vsel %vm2547, %v2629, %v2628
    %v2631 = vsub.s32 4, %v2607
    %v2632 = vsel %vm2547, %v2631, %v2607
    %v2633 = vsel %vm2546, %v358, %v2630
    %v2634 = vsel %vm2546, 0, %v2632
    %v2635 = vcosq.f32.pop %v2633
    %v2636 = vsinq.f32.pop %v2633
    %vm2637 = vweird.f32 %v358
    %v2638 = vadd.s32 %v2634, 3
    %v2639 = vand.u32 %v2638, 3
    %vm2640 = vcmp.lt.s32.totalorder %v2639, 2
    %vm2641 = vcmp.eq.s32.totalorder %v2639, 0
    %v2642 = vxor.u32 %v2636, 2147483648
    %v2643 = vsel %vm2641, %v2635, %v2642
    %vm2644 = vcmp.eq.s32.totalorder %v2639, 2
    %v2645 = vxor.u32 %v2635, 2147483648
    %v2646 = vsel %vm2644, %v2645, %v2636
    %v2647 = vsel %vm2640, %v2643, %v2646
    %v2648 = vsel %vm2637, nan, %v2647
    %v2649 = vand.u32 2147483647, %v359
    %vm2650 = vcmp.le.f32.partialorder %v2649, 0.7853982
    %vm2651 = vcmp.lt.s32.totalorder %v359, 0
    %v2652 = vand.u32 %v359, 2139095040
    %v2653 = vshrl.u32 %v2652, 23
    %v2654 = vsub.s32 %v2653, 127
    %v2655 = vand.u32 2147483647, %v359
    %v2656 = vand.u32 %v2655, 8388607
    %v2657 = vor.u32 %v2656, 8388608
    %v2658 = vsub.s32 0, %v2657
    %v2659 = vadd.s32 %v2654, 1
    %vm2660 = vcmp.gt.s32.totalorder %v2659, 0
    %v2661 = vsel %vm2660, %v2659, 0
    %v2662 = vshrl.u32 %v2661, 5
    %v2663 = vand.u32 %v2661, 31
    %v2664 = vsub.s32 32, %v2663
    %v2665 = vshrl.u32 683565275, %v2664
    %v2666 = vshll.u32 683565275, %v2663
    %v2667 = vshrl.u32 2475754826, %v2664
    %v2668 = vor.u32 %v2666, %v2667
    %v2669 = vshll.u32 2475754826, %v2663
    %v2670 = vshrl.u32 2131351028, %v2664
    %v2671 = vor.u32 %v2669, %v2670
    %v2672 = vshll.u32 2131351028, %v2663
    %v2673 = vshrl.u32 2102212464, %v2664
    %v2674 = vor.u32 %v2672, %v2673
    %v2675 = vshll.u32 2102212464, %v2663
    %v2676 = vshrl.u32 920167782, %v2664
    %v2677 = vor.u32 %v2675, %v2676
    %v2678 = vshll.u32 920167782, %v2663
    %v2679 = vshrl.u32 1326507024, %v2664
    %v2680 = vor.u32 %v2678, %v2679
    %vm2681 = vcmp.lt.s32.totalorder %v2662, 1
    %vm2682 = vcmp.lt.s32.totalorder %v2662, 2
    %vm2683 = vcmp.lt.s32.totalorder %v2662, 3
    %vm2684 = vcmp.lt.s32.totalorder %v2662, 4
    %v2685 = vsel %vm2681, %v2665, %v2668
    %v2686 = vsel %vm2684, %v2674, 2102212464
    %v2687 = vsel %vm2683, %v2671, %v2686
    %v2688 = vsel %vm2682, %v2685, %v2687
    %v2689 = vsel %vm2681, %v2668, %v2671
    %v2690 = vsel %vm2684, %v2677, 920167782
    %v2691 = vsel %vm2683, %v2674, %v2690
    %v2692 = vsel %vm2682, %v2689, %v2691
    %v2693 = vsel %vm2681, %v2671, %v2674
    %v2694 = vsel %vm2684, %v2680, 1326507024
    %v2695 = vsel %vm2683, %v2677, %v2694
    %v2696 = vsel %vm2682, %v2693, %v2695
    %v2697 = vshll.u32 %v2657, 8
    %v2698 = vmul.u32.u64.compose %v2697, %v2696
    %v2699 = vextract.low.u32 %v2698
    %v2700 = vextract.high.u32 %v2698
    %v2701 = vmul.u32.u64.compose %v2697, %v2692
    %v2702 = vextract.low.u32 %v2701
    %v2703 = vextract.high.u32 %v2701
    %v2704 = vmul.u32 %v2697, %v2688
    %v2705 = vadd.s32 %v2700, %v2702
    %vm2706 = vc.u32 %v2700, %v2702
    %v2707 = vadd.s32 %v2703, 1
    %v2708 = vsel %vm2706, %v2707, %v2703
    %v2709 = vadd.s32 %v2704, %v2708
    %v2710 = vadd.s32 %v2709, 536870912
    %v2711 = vshrl.u32 %v2710, 30
    %v2712 = vshll.u32 %v2711, 30
    %v2713 = vsub.s32 %v2709, %v2712
    %vm2714 = vcmp.lt.s32.totalorder %v2713, 0
    %v2715 = vsub.s32 0, %v2713
    %v2716 = vsel %vm2714, %v2715, %v2713
    %v2717 = vclz %v2716
    %v2718 = vsub.s32 %v2717, 2
    %vm2719 = vcmp.gt.s32.totalorder 0, %v2718
    %v2720 = vsel %vm2719, 0, %v2718
    %v2721 = vsub.s32 32, %v2720
    %v2722 = vshll.u32 %v2713, %v2720
    %v2723 = vshrl.u32 %v2705, %v2721
    %v2724 = vor.u32 %v2722, %v2723
    %v2725 = vsub.s32 4294967266, %v2720
    %v2726 = vadd.s32 %v2725, 127
    %v2727 = vshll.u32 %v2726, 23
    %v2728 = vor.u32 4788187, %v2727
    %v2729 = vand.u32 2147483647, %v2728
    %v2731 = vcvt.s32.f32 %v2724
    %v2732 = vmul.f32 %v2731, %v2729
    %v2733 = vxor.u32 %v2732, 2147483648
    %v2734 = vsel %vm2651, %v2733, %v2732
    %v2735 = vsub.s32 4, %v2711
    %v2736 = vsel %vm2651, %v2735, %v2711
    %v2737 = vsel %vm2650, %v359, %v2734
    %v2738 = vsel %vm2650, 0, %v2736
    %v2739 = vcosq.f32.pop %v2737
    %v2740 = vsinq.f32.pop %v2737
    %vm2741 = vweird.f32 %v359
    %v2742 = vadd.s32 %v2738, 3
    %v2743 = vand.u32 %v2742, 3
    %vm2744 = vcmp.lt.s32.totalorder %v2743, 2
    %vm2745 = vcmp.eq.s32.totalorder %v2743, 0
    %v2746 = vxor.u32 %v2740, 2147483648
    %v2747 = vsel %vm2745, %v2739, %v2746
    %vm2748 = vcmp.eq.s32.totalorder %v2743, 2
    %v2749 = vxor.u32 %v2739, 2147483648
    %v2750 = vsel %vm2748, %v2749, %v2740
    %v2751 = vsel %vm2744, %v2747, %v2750
    %v2752 = vsel %vm2741, nan, %v2751
    %v2753 = vand.u32 2147483647, %v360
    %vm2754 = vcmp.le.f32.partialorder %v2753, 0.7853982
    %vm2755 = vcmp.lt.s32.totalorder %v360, 0
    %v2756 = vand.u32 %v360, 2139095040
    %v2757 = vshrl.u32 %v2756, 23
    %v2758 = vsub.s32 %v2757, 127
    %v2759 = vand.u32 2147483647, %v360
    %v2760 = vand.u32 %v2759, 8388607
    %v2761 = vor.u32 %v2760, 8388608
    %v2762 = vsub.s32 0, %v2761
    %v2763 = vadd.s32 %v2758, 1
    %vm2764 = vcmp.gt.s32.totalorder %v2763, 0
    %v2765 = vsel %vm2764, %v2763, 0
    %v2766 = vshrl.u32 %v2765, 5
    %v2767 = vand.u32 %v2765, 31
    %v2768 = vsub.s32 32, %v2767
    %v2769 = vshrl.u32 683565275, %v2768
    %v2770 = vshll.u32 683565275, %v2767
    %v2771 = vshrl.u32 2475754826, %v2768
    %v2772 = vor.u32 %v2770, %v2771
    %v2773 = vshll.u32 2475754826, %v2767
    %v2774 = vshrl.u32 2131351028, %v2768
    %v2775 = vor.u32 %v2773, %v2774
    %v2776 = vshll.u32 2131351028, %v2767
    %v2777 = vshrl.u32 2102212464, %v2768
    %v2778 = vor.u32 %v2776, %v2777
    %v2779 = vshll.u32 2102212464, %v2767
    %v2780 = vshrl.u32 920167782, %v2768
    %v2781 = vor.u32 %v2779, %v2780
    %v2782 = vshll.u32 920167782, %v2767
    %v2783 = vshrl.u32 1326507024, %v2768
    %v2784 = vor.u32 %v2782, %v2783
    %vm2785 = vcmp.lt.s32.totalorder %v2766, 1
    %vm2786 = vcmp.lt.s32.totalorder %v2766, 2
    %vm2787 = vcmp.lt.s32.totalorder %v2766, 3
    %vm2788 = vcmp.lt.s32.totalorder %v2766, 4
    %v2789 = vsel %vm2785, %v2769, %v2772
    %v2790 = vsel %vm2788, %v2778, 2102212464
    %v2791 = vsel %vm2787, %v2775, %v2790
    %v2792 = vsel %vm2786, %v2789, %v2791
    %v2793 = vsel %vm2785, %v2772, %v2775
    %v2794 = vsel %vm2788, %v2781, 920167782
    %v2795 = vsel %vm2787, %v2778, %v2794
    %v2796 = vsel %vm2786, %v2793, %v2795
    %v2797 = vsel %vm2785, %v2775, %v2778
    %v2798 = vsel %vm2788, %v2784, 1326507024
    %v2799 = vsel %vm2787, %v2781, %v2798
    %v2800 = vsel %vm2786, %v2797, %v2799
    %v2801 = vshll.u32 %v2761, 8
    %v2802 = vmul.u32.u64.compose %v2801, %v2800
    %v2803 = vextract.low.u32 %v2802
    %v2804 = vextract.high.u32 %v2802
    %v2805 = vmul.u32.u64.compose %v2801, %v2796
    %v2806 = vextract.low.u32 %v2805
    %v2807 = vextract.high.u32 %v2805
    %v2808 = vmul.u32 %v2801, %v2792
    %v2809 = vadd.s32 %v2804, %v2806
    %vm2810 = vc.u32 %v2804, %v2806
    %v2811 = vadd.s32 %v2807, 1
    %v2812 = vsel %vm2810, %v2811, %v2807
    %v2813 = vadd.s32 %v2808, %v2812
    %v2814 = vadd.s32 %v2813, 536870912
    %v2815 = vshrl.u32 %v2814, 30
    %v2816 = vshll.u32 %v2815, 30
    %v2817 = vsub.s32 %v2813, %v2816
    %vm2818 = vcmp.lt.s32.totalorder %v2817, 0
    %v2819 = vsub.s32 0, %v2817
    %v2820 = vsel %vm2818, %v2819, %v2817
    %v2821 = vclz %v2820
    %v2822 = vsub.s32 %v2821, 2
    %vm2823 = vcmp.gt.s32.totalorder 0, %v2822
    %v2824 = vsel %vm2823, 0, %v2822
    %v2825 = vsub.s32 32, %v2824
    %v2826 = vshll.u32 %v2817, %v2824
    %v2827 = vshrl.u32 %v2809, %v2825
    %v2828 = vor.u32 %v2826, %v2827
    %v2829 = vsub.s32 4294967266, %v2824
    %v2830 = vadd.s32 %v2829, 127
    %v2831 = vshll.u32 %v2830, 23
    %v2832 = vor.u32 4788187, %v2831
    %v2833 = vand.u32 2147483647, %v2832
    %v2835 = vcvt.s32.f32 %v2828
    %v2836 = vmul.f32 %v2835, %v2833
    %v2837 = vxor.u32 %v2836, 2147483648
    %v2838 = vsel %vm2755, %v2837, %v2836
    %v2839 = vsub.s32 4, %v2815
    %v2840 = vsel %vm2755, %v2839, %v2815
    %v2841 = vsel %vm2754, %v360, %v2838
    %v2842 = vsel %vm2754, 0, %v2840
    %v2843 = vcosq.f32.pop %v2841
    %v2844 = vsinq.f32.pop %v2841
    %vm2845 = vweird.f32 %v360
    %v2846 = vadd.s32 %v2842, 3
    %v2847 = vand.u32 %v2846, 3
    %vm2848 = vcmp.lt.s32.totalorder %v2847, 2
    %vm2849 = vcmp.eq.s32.totalorder %v2847, 0
    %v2850 = vxor.u32 %v2844, 2147483648
    %v2851 = vsel %vm2849, %v2843, %v2850
    %vm2852 = vcmp.eq.s32.totalorder %v2847, 2
    %v2853 = vxor.u32 %v2843, 2147483648
    %v2854 = vsel %vm2852, %v2853, %v2844
    %v2855 = vsel %vm2848, %v2851, %v2854
    %v2856 = vsel %vm2845, nan, %v2855
    %2858 = vset.pattern.permute.xlu0 0
    %2859 = vperm.xlu0 %2858, %v67
    %v2860 = vpop.permute.xlu0 %2859
    %2863 = vset.pattern.permute.xlu0 0
    %2864 = vperm.xlu0 %2863, %v68
    %v2865 = vpop.permute.xlu0 %2864
    %v2867 = vmul.f32 %v2860, %v464
    %v2868 = vmul.f32 %v2865, %v568
    %v2869 = vmul.f32 %v2860, %v672
    %v2870 = vmul.f32 %v2865, %v776
    %v2871 = vmul.f32 %v2860, %v880
    %v2872 = vmul.f32 %v2865, %v984
    %v2873 = vmul.f32 %v2860, %v1088
    %v2874 = vmul.f32 %v2865, %v1192
    %v2875 = vmul.f32 %v2860, %v1296
    %v2876 = vmul.f32 %v2865, %v1400
    %v2877 = vmul.f32 %v2860, %v1504
    %v2878 = vmul.f32 %v2865, %v1608
    %v2879 = vmul.f32 %v2860, %v1712
    %v2880 = vmul.f32 %v2865, %v1816
    %v2881 = vmul.f32 %v2860, %v1920
    %v2882 = vmul.f32 %v2865, %v2024
    %v2883 = vmul.f32 %v2860, %v2128
    %v2884 = vmul.f32 %v2865, %v2232
    %v2885 = vmul.f32 %v2860, %v2336
    %v2886 = vmul.f32 %v2865, %v2440
    %v2887 = vmul.f32 %v2860, %v2544
    %v2888 = vmul.f32 %v2865, %v2648
    %v2889 = vmul.f32 %v2860, %v2752
    %v2890 = vmul.f32 %v2865, %v2856
    %v2891 = vadd.f32 %v2867, %v2868
    %v2892 = vrot.slane %v2891, 4
    %v2893 = vadd.f32 %v2891, %v2892
    %v2894 = vrot.slane %v2893, 2
    %v2895 = vadd.f32 %v2893, %v2894
    %v2896 = vrot.slane %v2895, 1
    %v2897 = vadd.f32 %v2895, %v2896
    %v2898 = vadd.f32 %v2869, %v2870
    %v2899 = vrot.slane %v2898, 4
    %v2900 = vadd.f32 %v2898, %v2899
    %v2901 = vrot.slane %v2900, 2
    %v2902 = vadd.f32 %v2900, %v2901
    %v2903 = vrot.slane %v2902, 1
    %v2904 = vadd.f32 %v2902, %v2903
    %v2905 = vadd.f32 %v2871, %v2872
    %v2906 = vrot.slane %v2905, 4
    %v2907 = vadd.f32 %v2905, %v2906
    %v2908 = vrot.slane %v2907, 2
    %v2909 = vadd.f32 %v2907, %v2908
    %v2910 = vrot.slane %v2909, 1
    %v2911 = vadd.f32 %v2909, %v2910
    %v2912 = vadd.f32 %v2873, %v2874
    %v2913 = vrot.slane %v2912, 4
    %v2914 = vadd.f32 %v2912, %v2913
    %v2915 = vrot.slane %v2914, 2
    %v2916 = vadd.f32 %v2914, %v2915
    %v2917 = vrot.slane %v2916, 1
    %v2918 = vadd.f32 %v2916, %v2917
    %v2919 = vadd.f32 %v2875, %v2876
    %v2920 = vrot.slane %v2919, 4
    %v2921 = vadd.f32 %v2919, %v2920
    %v2922 = vrot.slane %v2921, 2
    %v2923 = vadd.f32 %v2921, %v2922
    %v2924 = vrot.slane %v2923, 1
    %v2925 = vadd.f32 %v2923, %v2924
    %v2926 = vadd.f32 %v2877, %v2878
    %v2927 = vrot.slane %v2926, 4
    %v2928 = vadd.f32 %v2926, %v2927
    %v2929 = vrot.slane %v2928, 2
    %v2930 = vadd.f32 %v2928, %v2929
    %v2931 = vrot.slane %v2930, 1
    %v2932 = vadd.f32 %v2930, %v2931
    %v2933 = vadd.f32 %v2879, %v2880
    %v2934 = vrot.slane %v2933, 4
    %v2935 = vadd.f32 %v2933, %v2934
    %v2936 = vrot.slane %v2935, 2
    %v2937 = vadd.f32 %v2935, %v2936
    %v2938 = vrot.slane %v2937, 1
    %v2939 = vadd.f32 %v2937, %v2938
    %v2940 = vadd.f32 %v2881, %v2882
    %v2941 = vrot.slane %v2940, 4
    %v2942 = vadd.f32 %v2940, %v2941
    %v2943 = vrot.slane %v2942, 2
    %v2944 = vadd.f32 %v2942, %v2943
    %v2945 = vrot.slane %v2944, 1
    %v2946 = vadd.f32 %v2944, %v2945
    %v2947 = vadd.f32 %v2883, %v2884
    %v2948 = vrot.slane %v2947, 4
    %v2949 = vadd.f32 %v2947, %v2948
    %v2950 = vrot.slane %v2949, 2
    %v2951 = vadd.f32 %v2949, %v2950
    %v2952 = vrot.slane %v2951, 1
    %v2953 = vadd.f32 %v2951, %v2952
    %v2954 = vadd.f32 %v2885, %v2886
    %v2955 = vrot.slane %v2954, 4
    %v2956 = vadd.f32 %v2954, %v2955
    %v2957 = vrot.slane %v2956, 2
    %v2958 = vadd.f32 %v2956, %v2957
    %v2959 = vrot.slane %v2958, 1
    %v2960 = vadd.f32 %v2958, %v2959
    %v2961 = vadd.f32 %v2887, %v2888
    %v2962 = vrot.slane %v2961, 4
    %v2963 = vadd.f32 %v2961, %v2962
    %v2964 = vrot.slane %v2963, 2
    %v2965 = vadd.f32 %v2963, %v2964
    %v2966 = vrot.slane %v2965, 1
    %v2967 = vadd.f32 %v2965, %v2966
    %v2968 = vadd.f32 %v2889, %v2890
    %v2969 = vrot.slane %v2968, 4
    %v2970 = vadd.f32 %v2968, %v2969
    %v2971 = vrot.slane %v2970, 2
    %v2972 = vadd.f32 %v2970, %v2971
    %v2973 = vrot.slane %v2972, 1
    %v2974 = vadd.f32 %v2972, %v2973
    %v2975 = vadd.f32 %v2897, 0.0
    %v2976 = vadd.f32 %v2904, 0.0
    %v2977 = vadd.f32 %v2911, 0.0
    %v2978 = vadd.f32 %v2918, 0.0
    %v2979 = vadd.f32 %v2925, 0.0
    %v2980 = vadd.f32 %v2932, 0.0
    %v2981 = vadd.f32 %v2939, 0.0
    %v2982 = vadd.f32 %v2946, 0.0
    %v2983 = vadd.f32 %v2953, 0.0
    %v2984 = vadd.f32 %v2960, 0.0
    %v2985 = vadd.f32 %v2967, 0.0
    %v2986 = vadd.f32 %v2974, 0.0
    %v2987 = vld [vmem:[%s0 + $0x1] sm:$0x1]
    %s2988 = scalar_lea.vmem %s3, 16
    %v2989 = vld [vmem:[%s2988] sm:$0xff]
    %v2990 = vld [vmem:[%s2988 + $0x8] sm:$0xff]
    %v2991 = vlaneseq
    %v2992 = vshrl.u32 %v2991, 7
    %v2993 = vsub.s32 0, %v2992
    %v2994 = vrot.slane %v2987, %v2993
    %v2995 = vmul.f32 %v2994, %v76
    %v2996 = vmul.f32 %v2994, %v81
    %v2997 = vmul.f32 %v2994, %v86
    %v2998 = vmul.f32 %v2994, %v91
    %v2999 = vmul.f32 %v2994, %v96
    %v3000 = vmul.f32 %v2994, %v101
    %v3001 = vmul.f32 %v2994, %v106
    %v3002 = vmul.f32 %v2994, %v111
    %v3003 = vmul.f32 %v2994, %v116
    %v3004 = vmul.f32 %v2994, %v121
    %v3005 = vmul.f32 %v2994, %v126
    %v3006 = vmul.f32 %v2994, %v131
    %v3007 = vmul.f32 %v2994, %v136
    %v3008 = vmul.f32 %v2994, %v141
    %v3009 = vmul.f32 %v2994, %v146
    %v3010 = vmul.f32 %v2994, %v151
    %v3011 = vmul.f32 %v2994, %v156
    %v3012 = vmul.f32 %v2994, %v161
    %v3013 = vmul.f32 %v2994, %v166
    %v3014 = vmul.f32 %v2994, %v171
    %v3015 = vmul.f32 %v2994, %v176
    %v3016 = vmul.f32 %v2994, %v181
    %v3017 = vmul.f32 %v2994, %v186
    %v3018 = vmul.f32 %v2994, %v191
    %v3019 = vadd.f32 %v2995, %v220
    %v3020 = vadd.f32 %v2996, %v225
    %v3021 = vadd.f32 %v2997, %v230
    %v3022 = vadd.f32 %v2998, %v235
    %v3023 = vadd.f32 %v2999, %v240
    %v3024 = vadd.f32 %v3000, %v245
    %v3025 = vadd.f32 %v3001, %v250
    %v3026 = vadd.f32 %v3002, %v255
    %v3027 = vadd.f32 %v3003, %v260
    %v3028 = vadd.f32 %v3004, %v265
    %v3029 = vadd.f32 %v3005, %v270
    %v3030 = vadd.f32 %v3006, %v275
    %v3031 = vadd.f32 %v3007, %v280
    %v3032 = vadd.f32 %v3008, %v285
    %v3033 = vadd.f32 %v3009, %v290
    %v3034 = vadd.f32 %v3010, %v295
    %v3035 = vadd.f32 %v3011, %v300
    %v3036 = vadd.f32 %v3012, %v305
    %v3037 = vadd.f32 %v3013, %v310
    %v3038 = vadd.f32 %v3014, %v315
    %v3039 = vadd.f32 %v3015, %v320
    %v3040 = vadd.f32 %v3016, %v325
    %v3041 = vadd.f32 %v3017, %v330
    %v3042 = vadd.f32 %v3018, %v335
    %v3043 = vand.u32 2147483647, %v3019
    %vm3044 = vcmp.le.f32.partialorder %v3043, 0.7853982
    %vm3045 = vcmp.lt.s32.totalorder %v3019, 0
    %v3046 = vand.u32 %v3019, 2139095040
    %v3047 = vshrl.u32 %v3046, 23
    %v3048 = vsub.s32 %v3047, 127
    %v3049 = vand.u32 2147483647, %v3019
    %v3050 = vand.u32 %v3049, 8388607
    %v3051 = vor.u32 %v3050, 8388608
    %v3052 = vsub.s32 0, %v3051
    %v3053 = vadd.s32 %v3048, 1
    %vm3054 = vcmp.gt.s32.totalorder %v3053, 0
    %v3055 = vsel %vm3054, %v3053, 0
    %v3056 = vshrl.u32 %v3055, 5
    %v3057 = vand.u32 %v3055, 31
    %v3058 = vsub.s32 32, %v3057
    %v3059 = vshrl.u32 683565275, %v3058
    %v3060 = vshll.u32 683565275, %v3057
    %v3061 = vshrl.u32 2475754826, %v3058
    %v3062 = vor.u32 %v3060, %v3061
    %v3063 = vshll.u32 2475754826, %v3057
    %v3064 = vshrl.u32 2131351028, %v3058
    %v3065 = vor.u32 %v3063, %v3064
    %v3066 = vshll.u32 2131351028, %v3057
    %v3067 = vshrl.u32 2102212464, %v3058
    %v3068 = vor.u32 %v3066, %v3067
    %v3069 = vshll.u32 2102212464, %v3057
    %v3070 = vshrl.u32 920167782, %v3058
    %v3071 = vor.u32 %v3069, %v3070
    %v3072 = vshll.u32 920167782, %v3057
    %v3073 = vshrl.u32 1326507024, %v3058
    %v3074 = vor.u32 %v3072, %v3073
    %vm3075 = vcmp.lt.s32.totalorder %v3056, 1
    %vm3076 = vcmp.lt.s32.totalorder %v3056, 2
    %vm3077 = vcmp.lt.s32.totalorder %v3056, 3
    %vm3078 = vcmp.lt.s32.totalorder %v3056, 4
    %v3079 = vsel %vm3075, %v3059, %v3062
    %v3080 = vsel %vm3078, %v3068, 2102212464
    %v3081 = vsel %vm3077, %v3065, %v3080
    %v3082 = vsel %vm3076, %v3079, %v3081
    %v3083 = vsel %vm3075, %v3062, %v3065
    %v3084 = vsel %vm3078, %v3071, 920167782
    %v3085 = vsel %vm3077, %v3068, %v3084
    %v3086 = vsel %vm3076, %v3083, %v3085
    %v3087 = vsel %vm3075, %v3065, %v3068
    %v3088 = vsel %vm3078, %v3074, 1326507024
    %v3089 = vsel %vm3077, %v3071, %v3088
    %v3090 = vsel %vm3076, %v3087, %v3089
    %v3091 = vshll.u32 %v3051, 8
    %v3092 = vmul.u32.u64.compose %v3091, %v3090
    %v3093 = vextract.low.u32 %v3092
    %v3094 = vextract.high.u32 %v3092
    %v3095 = vmul.u32.u64.compose %v3091, %v3086
    %v3096 = vextract.low.u32 %v3095
    %v3097 = vextract.high.u32 %v3095
    %v3098 = vmul.u32 %v3091, %v3082
    %v3099 = vadd.s32 %v3094, %v3096
    %vm3100 = vc.u32 %v3094, %v3096
    %v3101 = vadd.s32 %v3097, 1
    %v3102 = vsel %vm3100, %v3101, %v3097
    %v3103 = vadd.s32 %v3098, %v3102
    %v3104 = vadd.s32 %v3103, 536870912
    %v3105 = vshrl.u32 %v3104, 30
    %v3106 = vshll.u32 %v3105, 30
    %v3107 = vsub.s32 %v3103, %v3106
    %vm3108 = vcmp.lt.s32.totalorder %v3107, 0
    %v3109 = vsub.s32 0, %v3107
    %v3110 = vsel %vm3108, %v3109, %v3107
    %v3111 = vclz %v3110
    %v3112 = vsub.s32 %v3111, 2
    %vm3113 = vcmp.gt.s32.totalorder 0, %v3112
    %v3114 = vsel %vm3113, 0, %v3112
    %v3115 = vsub.s32 32, %v3114
    %v3116 = vshll.u32 %v3107, %v3114
    %v3117 = vshrl.u32 %v3099, %v3115
    %v3118 = vor.u32 %v3116, %v3117
    %v3119 = vsub.s32 4294967266, %v3114
    %v3120 = vadd.s32 %v3119, 127
    %v3121 = vshll.u32 %v3120, 23
    %v3122 = vor.u32 4788187, %v3121
    %v3123 = vand.u32 2147483647, %v3122
    %v3125 = vcvt.s32.f32 %v3118
    %v3126 = vmul.f32 %v3125, %v3123
    %v3127 = vxor.u32 %v3126, 2147483648
    %v3128 = vsel %vm3045, %v3127, %v3126
    %v3129 = vsub.s32 4, %v3105
    %v3130 = vsel %vm3045, %v3129, %v3105
    %v3131 = vsel %vm3044, %v3019, %v3128
    %v3132 = vsel %vm3044, 0, %v3130
    %v3133 = vcosq.f32.pop %v3131
    %v3134 = vsinq.f32.pop %v3131
    %vm3135 = vweird.f32 %v3019
    %v3136 = vadd.s32 %v3132, 3
    %v3137 = vand.u32 %v3136, 3
    %vm3138 = vcmp.lt.s32.totalorder %v3137, 2
    %vm3139 = vcmp.eq.s32.totalorder %v3137, 0
    %v3140 = vxor.u32 %v3134, 2147483648
    %v3141 = vsel %vm3139, %v3133, %v3140
    %vm3142 = vcmp.eq.s32.totalorder %v3137, 2
    %v3143 = vxor.u32 %v3133, 2147483648
    %v3144 = vsel %vm3142, %v3143, %v3134
    %v3145 = vsel %vm3138, %v3141, %v3144
    %v3146 = vsel %vm3135, nan, %v3145
    %v3147 = vand.u32 2147483647, %v3020
    %vm3148 = vcmp.le.f32.partialorder %v3147, 0.7853982
    %vm3149 = vcmp.lt.s32.totalorder %v3020, 0
    %v3150 = vand.u32 %v3020, 2139095040
    %v3151 = vshrl.u32 %v3150, 23
    %v3152 = vsub.s32 %v3151, 127
    %v3153 = vand.u32 2147483647, %v3020
    %v3154 = vand.u32 %v3153, 8388607
    %v3155 = vor.u32 %v3154, 8388608
    %v3156 = vsub.s32 0, %v3155
    %v3157 = vadd.s32 %v3152, 1
    %vm3158 = vcmp.gt.s32.totalorder %v3157, 0
    %v3159 = vsel %vm3158, %v3157, 0
    %v3160 = vshrl.u32 %v3159, 5
    %v3161 = vand.u32 %v3159, 31
    %v3162 = vsub.s32 32, %v3161
    %v3163 = vshrl.u32 683565275, %v3162
    %v3164 = vshll.u32 683565275, %v3161
    %v3165 = vshrl.u32 2475754826, %v3162
    %v3166 = vor.u32 %v3164, %v3165
    %v3167 = vshll.u32 2475754826, %v3161
    %v3168 = vshrl.u32 2131351028, %v3162
    %v3169 = vor.u32 %v3167, %v3168
    %v3170 = vshll.u32 2131351028, %v3161
    %v3171 = vshrl.u32 2102212464, %v3162
    %v3172 = vor.u32 %v3170, %v3171
    %v3173 = vshll.u32 2102212464, %v3161
    %v3174 = vshrl.u32 920167782, %v3162
    %v3175 = vor.u32 %v3173, %v3174
    %v3176 = vshll.u32 920167782, %v3161
    %v3177 = vshrl.u32 1326507024, %v3162
    %v3178 = vor.u32 %v3176, %v3177
    %vm3179 = vcmp.lt.s32.totalorder %v3160, 1
    %vm3180 = vcmp.lt.s32.totalorder %v3160, 2
    %vm3181 = vcmp.lt.s32.totalorder %v3160, 3
    %vm3182 = vcmp.lt.s32.totalorder %v3160, 4
    %v3183 = vsel %vm3179, %v3163, %v3166
    %v3184 = vsel %vm3182, %v3172, 2102212464
    %v3185 = vsel %vm3181, %v3169, %v3184
    %v3186 = vsel %vm3180, %v3183, %v3185
    %v3187 = vsel %vm3179, %v3166, %v3169
    %v3188 = vsel %vm3182, %v3175, 920167782
    %v3189 = vsel %vm3181, %v3172, %v3188
    %v3190 = vsel %vm3180, %v3187, %v3189
    %v3191 = vsel %vm3179, %v3169, %v3172
    %v3192 = vsel %vm3182, %v3178, 1326507024
    %v3193 = vsel %vm3181, %v3175, %v3192
    %v3194 = vsel %vm3180, %v3191, %v3193
    %v3195 = vshll.u32 %v3155, 8
    %v3196 = vmul.u32.u64.compose %v3195, %v3194
    %v3197 = vextract.low.u32 %v3196
    %v3198 = vextract.high.u32 %v3196
    %v3199 = vmul.u32.u64.compose %v3195, %v3190
    %v3200 = vextract.low.u32 %v3199
    %v3201 = vextract.high.u32 %v3199
    %v3202 = vmul.u32 %v3195, %v3186
    %v3203 = vadd.s32 %v3198, %v3200
    %vm3204 = vc.u32 %v3198, %v3200
    %v3205 = vadd.s32 %v3201, 1
    %v3206 = vsel %vm3204, %v3205, %v3201
    %v3207 = vadd.s32 %v3202, %v3206
    %v3208 = vadd.s32 %v3207, 536870912
    %v3209 = vshrl.u32 %v3208, 30
    %v3210 = vshll.u32 %v3209, 30
    %v3211 = vsub.s32 %v3207, %v3210
    %vm3212 = vcmp.lt.s32.totalorder %v3211, 0
    %v3213 = vsub.s32 0, %v3211
    %v3214 = vsel %vm3212, %v3213, %v3211
    %v3215 = vclz %v3214
    %v3216 = vsub.s32 %v3215, 2
    %vm3217 = vcmp.gt.s32.totalorder 0, %v3216
    %v3218 = vsel %vm3217, 0, %v3216
    %v3219 = vsub.s32 32, %v3218
    %v3220 = vshll.u32 %v3211, %v3218
    %v3221 = vshrl.u32 %v3203, %v3219
    %v3222 = vor.u32 %v3220, %v3221
    %v3223 = vsub.s32 4294967266, %v3218
    %v3224 = vadd.s32 %v3223, 127
    %v3225 = vshll.u32 %v3224, 23
    %v3226 = vor.u32 4788187, %v3225
    %v3227 = vand.u32 2147483647, %v3226
    %v3229 = vcvt.s32.f32 %v3222
    %v3230 = vmul.f32 %v3229, %v3227
    %v3231 = vxor.u32 %v3230, 2147483648
    %v3232 = vsel %vm3149, %v3231, %v3230
    %v3233 = vsub.s32 4, %v3209
    %v3234 = vsel %vm3149, %v3233, %v3209
    %v3235 = vsel %vm3148, %v3020, %v3232
    %v3236 = vsel %vm3148, 0, %v3234
    %v3237 = vcosq.f32.pop %v3235
    %v3238 = vsinq.f32.pop %v3235
    %vm3239 = vweird.f32 %v3020
    %v3240 = vadd.s32 %v3236, 3
    %v3241 = vand.u32 %v3240, 3
    %vm3242 = vcmp.lt.s32.totalorder %v3241, 2
    %vm3243 = vcmp.eq.s32.totalorder %v3241, 0
    %v3244 = vxor.u32 %v3238, 2147483648
    %v3245 = vsel %vm3243, %v3237, %v3244
    %vm3246 = vcmp.eq.s32.totalorder %v3241, 2
    %v3247 = vxor.u32 %v3237, 2147483648
    %v3248 = vsel %vm3246, %v3247, %v3238
    %v3249 = vsel %vm3242, %v3245, %v3248
    %v3250 = vsel %vm3239, nan, %v3249
    %v3251 = vand.u32 2147483647, %v3021
    %vm3252 = vcmp.le.f32.partialorder %v3251, 0.7853982
    %vm3253 = vcmp.lt.s32.totalorder %v3021, 0
    %v3254 = vand.u32 %v3021, 2139095040
    %v3255 = vshrl.u32 %v3254, 23
    %v3256 = vsub.s32 %v3255, 127
    %v3257 = vand.u32 2147483647, %v3021
    %v3258 = vand.u32 %v3257, 8388607
    %v3259 = vor.u32 %v3258, 8388608
    %v3260 = vsub.s32 0, %v3259
    %v3261 = vadd.s32 %v3256, 1
    %vm3262 = vcmp.gt.s32.totalorder %v3261, 0
    %v3263 = vsel %vm3262, %v3261, 0
    %v3264 = vshrl.u32 %v3263, 5
    %v3265 = vand.u32 %v3263, 31
    %v3266 = vsub.s32 32, %v3265
    %v3267 = vshrl.u32 683565275, %v3266
    %v3268 = vshll.u32 683565275, %v3265
    %v3269 = vshrl.u32 2475754826, %v3266
    %v3270 = vor.u32 %v3268, %v3269
    %v3271 = vshll.u32 2475754826, %v3265
    %v3272 = vshrl.u32 2131351028, %v3266
    %v3273 = vor.u32 %v3271, %v3272
    %v3274 = vshll.u32 2131351028, %v3265
    %v3275 = vshrl.u32 2102212464, %v3266
    %v3276 = vor.u32 %v3274, %v3275
    %v3277 = vshll.u32 2102212464, %v3265
    %v3278 = vshrl.u32 920167782, %v3266
    %v3279 = vor.u32 %v3277, %v3278
    %v3280 = vshll.u32 920167782, %v3265
    %v3281 = vshrl.u32 1326507024, %v3266
    %v3282 = vor.u32 %v3280, %v3281
    %vm3283 = vcmp.lt.s32.totalorder %v3264, 1
    %vm3284 = vcmp.lt.s32.totalorder %v3264, 2
    %vm3285 = vcmp.lt.s32.totalorder %v3264, 3
    %vm3286 = vcmp.lt.s32.totalorder %v3264, 4
    %v3287 = vsel %vm3283, %v3267, %v3270
    %v3288 = vsel %vm3286, %v3276, 2102212464
    %v3289 = vsel %vm3285, %v3273, %v3288
    %v3290 = vsel %vm3284, %v3287, %v3289
    %v3291 = vsel %vm3283, %v3270, %v3273
    %v3292 = vsel %vm3286, %v3279, 920167782
    %v3293 = vsel %vm3285, %v3276, %v3292
    %v3294 = vsel %vm3284, %v3291, %v3293
    %v3295 = vsel %vm3283, %v3273, %v3276
    %v3296 = vsel %vm3286, %v3282, 1326507024
    %v3297 = vsel %vm3285, %v3279, %v3296
    %v3298 = vsel %vm3284, %v3295, %v3297
    %v3299 = vshll.u32 %v3259, 8
    %v3300 = vmul.u32.u64.compose %v3299, %v3298
    %v3301 = vextract.low.u32 %v3300
    %v3302 = vextract.high.u32 %v3300
    %v3303 = vmul.u32.u64.compose %v3299, %v3294
    %v3304 = vextract.low.u32 %v3303
    %v3305 = vextract.high.u32 %v3303
    %v3306 = vmul.u32 %v3299, %v3290
    %v3307 = vadd.s32 %v3302, %v3304
    %vm3308 = vc.u32 %v3302, %v3304
    %v3309 = vadd.s32 %v3305, 1
    %v3310 = vsel %vm3308, %v3309, %v3305
    %v3311 = vadd.s32 %v3306, %v3310
    %v3312 = vadd.s32 %v3311, 536870912
    %v3313 = vshrl.u32 %v3312, 30
    %v3314 = vshll.u32 %v3313, 30
    %v3315 = vsub.s32 %v3311, %v3314
    %vm3316 = vcmp.lt.s32.totalorder %v3315, 0
    %v3317 = vsub.s32 0, %v3315
    %v3318 = vsel %vm3316, %v3317, %v3315
    %v3319 = vclz %v3318
    %v3320 = vsub.s32 %v3319, 2
    %vm3321 = vcmp.gt.s32.totalorder 0, %v3320
    %v3322 = vsel %vm3321, 0, %v3320
    %v3323 = vsub.s32 32, %v3322
    %v3324 = vshll.u32 %v3315, %v3322
    %v3325 = vshrl.u32 %v3307, %v3323
    %v3326 = vor.u32 %v3324, %v3325
    %v3327 = vsub.s32 4294967266, %v3322
    %v3328 = vadd.s32 %v3327, 127
    %v3329 = vshll.u32 %v3328, 23
    %v3330 = vor.u32 4788187, %v3329
    %v3331 = vand.u32 2147483647, %v3330
    %v3333 = vcvt.s32.f32 %v3326
    %v3334 = vmul.f32 %v3333, %v3331
    %v3335 = vxor.u32 %v3334, 2147483648
    %v3336 = vsel %vm3253, %v3335, %v3334
    %v3337 = vsub.s32 4, %v3313
    %v3338 = vsel %vm3253, %v3337, %v3313
    %v3339 = vsel %vm3252, %v3021, %v3336
    %v3340 = vsel %vm3252, 0, %v3338
    %v3341 = vcosq.f32.pop %v3339
    %v3342 = vsinq.f32.pop %v3339
    %vm3343 = vweird.f32 %v3021
    %v3344 = vadd.s32 %v3340, 3
    %v3345 = vand.u32 %v3344, 3
    %vm3346 = vcmp.lt.s32.totalorder %v3345, 2
    %vm3347 = vcmp.eq.s32.totalorder %v3345, 0
    %v3348 = vxor.u32 %v3342, 2147483648
    %v3349 = vsel %vm3347, %v3341, %v3348
    %vm3350 = vcmp.eq.s32.totalorder %v3345, 2
    %v3351 = vxor.u32 %v3341, 2147483648
    %v3352 = vsel %vm3350, %v3351, %v3342
    %v3353 = vsel %vm3346, %v3349, %v3352
    %v3354 = vsel %vm3343, nan, %v3353
    %v3355 = vand.u32 2147483647, %v3022
    %vm3356 = vcmp.le.f32.partialorder %v3355, 0.7853982
    %vm3357 = vcmp.lt.s32.totalorder %v3022, 0
    %v3358 = vand.u32 %v3022, 2139095040
    %v3359 = vshrl.u32 %v3358, 23
    %v3360 = vsub.s32 %v3359, 127
    %v3361 = vand.u32 2147483647, %v3022
    %v3362 = vand.u32 %v3361, 8388607
    %v3363 = vor.u32 %v3362, 8388608
    %v3364 = vsub.s32 0, %v3363
    %v3365 = vadd.s32 %v3360, 1
    %vm3366 = vcmp.gt.s32.totalorder %v3365, 0
    %v3367 = vsel %vm3366, %v3365, 0
    %v3368 = vshrl.u32 %v3367, 5
    %v3369 = vand.u32 %v3367, 31
    %v3370 = vsub.s32 32, %v3369
    %v3371 = vshrl.u32 683565275, %v3370
    %v3372 = vshll.u32 683565275, %v3369
    %v3373 = vshrl.u32 2475754826, %v3370
    %v3374 = vor.u32 %v3372, %v3373
    %v3375 = vshll.u32 2475754826, %v3369
    %v3376 = vshrl.u32 2131351028, %v3370
    %v3377 = vor.u32 %v3375, %v3376
    %v3378 = vshll.u32 2131351028, %v3369
    %v3379 = vshrl.u32 2102212464, %v3370
    %v3380 = vor.u32 %v3378, %v3379
    %v3381 = vshll.u32 2102212464, %v3369
    %v3382 = vshrl.u32 920167782, %v3370
    %v3383 = vor.u32 %v3381, %v3382
    %v3384 = vshll.u32 920167782, %v3369
    %v3385 = vshrl.u32 1326507024, %v3370
    %v3386 = vor.u32 %v3384, %v3385
    %vm3387 = vcmp.lt.s32.totalorder %v3368, 1
    %vm3388 = vcmp.lt.s32.totalorder %v3368, 2
    %vm3389 = vcmp.lt.s32.totalorder %v3368, 3
    %vm3390 = vcmp.lt.s32.totalorder %v3368, 4
    %v3391 = vsel %vm3387, %v3371, %v3374
    %v3392 = vsel %vm3390, %v3380, 2102212464
    %v3393 = vsel %vm3389, %v3377, %v3392
    %v3394 = vsel %vm3388, %v3391, %v3393
    %v3395 = vsel %vm3387, %v3374, %v3377
    %v3396 = vsel %vm3390, %v3383, 920167782
    %v3397 = vsel %vm3389, %v3380, %v3396
    %v3398 = vsel %vm3388, %v3395, %v3397
    %v3399 = vsel %vm3387, %v3377, %v3380
    %v3400 = vsel %vm3390, %v3386, 1326507024
    %v3401 = vsel %vm3389, %v3383, %v3400
    %v3402 = vsel %vm3388, %v3399, %v3401
    %v3403 = vshll.u32 %v3363, 8
    %v3404 = vmul.u32.u64.compose %v3403, %v3402
    %v3405 = vextract.low.u32 %v3404
    %v3406 = vextract.high.u32 %v3404
    %v3407 = vmul.u32.u64.compose %v3403, %v3398
    %v3408 = vextract.low.u32 %v3407
    %v3409 = vextract.high.u32 %v3407
    %v3410 = vmul.u32 %v3403, %v3394
    %v3411 = vadd.s32 %v3406, %v3408
    %vm3412 = vc.u32 %v3406, %v3408
    %v3413 = vadd.s32 %v3409, 1
    %v3414 = vsel %vm3412, %v3413, %v3409
    %v3415 = vadd.s32 %v3410, %v3414
    %v3416 = vadd.s32 %v3415, 536870912
    %v3417 = vshrl.u32 %v3416, 30
    %v3418 = vshll.u32 %v3417, 30
    %v3419 = vsub.s32 %v3415, %v3418
    %vm3420 = vcmp.lt.s32.totalorder %v3419, 0
    %v3421 = vsub.s32 0, %v3419
    %v3422 = vsel %vm3420, %v3421, %v3419
    %v3423 = vclz %v3422
    %v3424 = vsub.s32 %v3423, 2
    %vm3425 = vcmp.gt.s32.totalorder 0, %v3424
    %v3426 = vsel %vm3425, 0, %v3424
    %v3427 = vsub.s32 32, %v3426
    %v3428 = vshll.u32 %v3419, %v3426
    %v3429 = vshrl.u32 %v3411, %v3427
    %v3430 = vor.u32 %v3428, %v3429
    %v3431 = vsub.s32 4294967266, %v3426
    %v3432 = vadd.s32 %v3431, 127
    %v3433 = vshll.u32 %v3432, 23
    %v3434 = vor.u32 4788187, %v3433
    %v3435 = vand.u32 2147483647, %v3434
    %v3437 = vcvt.s32.f32 %v3430
    %v3438 = vmul.f32 %v3437, %v3435
    %v3439 = vxor.u32 %v3438, 2147483648
    %v3440 = vsel %vm3357, %v3439, %v3438
    %v3441 = vsub.s32 4, %v3417
    %v3442 = vsel %vm3357, %v3441, %v3417
    %v3443 = vsel %vm3356, %v3022, %v3440
    %v3444 = vsel %vm3356, 0, %v3442
    %v3445 = vcosq.f32.pop %v3443
    %v3446 = vsinq.f32.pop %v3443
    %vm3447 = vweird.f32 %v3022
    %v3448 = vadd.s32 %v3444, 3
    %v3449 = vand.u32 %v3448, 3
    %vm3450 = vcmp.lt.s32.totalorder %v3449, 2
    %vm3451 = vcmp.eq.s32.totalorder %v3449, 0
    %v3452 = vxor.u32 %v3446, 2147483648
    %v3453 = vsel %vm3451, %v3445, %v3452
    %vm3454 = vcmp.eq.s32.totalorder %v3449, 2
    %v3455 = vxor.u32 %v3445, 2147483648
    %v3456 = vsel %vm3454, %v3455, %v3446
    %v3457 = vsel %vm3450, %v3453, %v3456
    %v3458 = vsel %vm3447, nan, %v3457
    %v3459 = vand.u32 2147483647, %v3023
    %vm3460 = vcmp.le.f32.partialorder %v3459, 0.7853982
    %vm3461 = vcmp.lt.s32.totalorder %v3023, 0
    %v3462 = vand.u32 %v3023, 2139095040
    %v3463 = vshrl.u32 %v3462, 23
    %v3464 = vsub.s32 %v3463, 127
    %v3465 = vand.u32 2147483647, %v3023
    %v3466 = vand.u32 %v3465, 8388607
    %v3467 = vor.u32 %v3466, 8388608
    %v3468 = vsub.s32 0, %v3467
    %v3469 = vadd.s32 %v3464, 1
    %vm3470 = vcmp.gt.s32.totalorder %v3469, 0
    %v3471 = vsel %vm3470, %v3469, 0
    %v3472 = vshrl.u32 %v3471, 5
    %v3473 = vand.u32 %v3471, 31
    %v3474 = vsub.s32 32, %v3473
    %v3475 = vshrl.u32 683565275, %v3474
    %v3476 = vshll.u32 683565275, %v3473
    %v3477 = vshrl.u32 2475754826, %v3474
    %v3478 = vor.u32 %v3476, %v3477
    %v3479 = vshll.u32 2475754826, %v3473
    %v3480 = vshrl.u32 2131351028, %v3474
    %v3481 = vor.u32 %v3479, %v3480
    %v3482 = vshll.u32 2131351028, %v3473
    %v3483 = vshrl.u32 2102212464, %v3474
    %v3484 = vor.u32 %v3482, %v3483
    %v3485 = vshll.u32 2102212464, %v3473
    %v3486 = vshrl.u32 920167782, %v3474
    %v3487 = vor.u32 %v3485, %v3486
    %v3488 = vshll.u32 920167782, %v3473
    %v3489 = vshrl.u32 1326507024, %v3474
    %v3490 = vor.u32 %v3488, %v3489
    %vm3491 = vcmp.lt.s32.totalorder %v3472, 1
    %vm3492 = vcmp.lt.s32.totalorder %v3472, 2
    %vm3493 = vcmp.lt.s32.totalorder %v3472, 3
    %vm3494 = vcmp.lt.s32.totalorder %v3472, 4
    %v3495 = vsel %vm3491, %v3475, %v3478
    %v3496 = vsel %vm3494, %v3484, 2102212464
    %v3497 = vsel %vm3493, %v3481, %v3496
    %v3498 = vsel %vm3492, %v3495, %v3497
    %v3499 = vsel %vm3491, %v3478, %v3481
    %v3500 = vsel %vm3494, %v3487, 920167782
    %v3501 = vsel %vm3493, %v3484, %v3500
    %v3502 = vsel %vm3492, %v3499, %v3501
    %v3503 = vsel %vm3491, %v3481, %v3484
    %v3504 = vsel %vm3494, %v3490, 1326507024
    %v3505 = vsel %vm3493, %v3487, %v3504
    %v3506 = vsel %vm3492, %v3503, %v3505
    %v3507 = vshll.u32 %v3467, 8
    %v3508 = vmul.u32.u64.compose %v3507, %v3506
    %v3509 = vextract.low.u32 %v3508
    %v3510 = vextract.high.u32 %v3508
    %v3511 = vmul.u32.u64.compose %v3507, %v3502
    %v3512 = vextract.low.u32 %v3511
    %v3513 = vextract.high.u32 %v3511
    %v3514 = vmul.u32 %v3507, %v3498
    %v3515 = vadd.s32 %v3510, %v3512
    %vm3516 = vc.u32 %v3510, %v3512
    %v3517 = vadd.s32 %v3513, 1
    %v3518 = vsel %vm3516, %v3517, %v3513
    %v3519 = vadd.s32 %v3514, %v3518
    %v3520 = vadd.s32 %v3519, 536870912
    %v3521 = vshrl.u32 %v3520, 30
    %v3522 = vshll.u32 %v3521, 30
    %v3523 = vsub.s32 %v3519, %v3522
    %vm3524 = vcmp.lt.s32.totalorder %v3523, 0
    %v3525 = vsub.s32 0, %v3523
    %v3526 = vsel %vm3524, %v3525, %v3523
    %v3527 = vclz %v3526
    %v3528 = vsub.s32 %v3527, 2
    %vm3529 = vcmp.gt.s32.totalorder 0, %v3528
    %v3530 = vsel %vm3529, 0, %v3528
    %v3531 = vsub.s32 32, %v3530
    %v3532 = vshll.u32 %v3523, %v3530
    %v3533 = vshrl.u32 %v3515, %v3531
    %v3534 = vor.u32 %v3532, %v3533
    %v3535 = vsub.s32 4294967266, %v3530
    %v3536 = vadd.s32 %v3535, 127
    %v3537 = vshll.u32 %v3536, 23
    %v3538 = vor.u32 4788187, %v3537
    %v3539 = vand.u32 2147483647, %v3538
    %v3541 = vcvt.s32.f32 %v3534
    %v3542 = vmul.f32 %v3541, %v3539
    %v3543 = vxor.u32 %v3542, 2147483648
    %v3544 = vsel %vm3461, %v3543, %v3542
    %v3545 = vsub.s32 4, %v3521
    %v3546 = vsel %vm3461, %v3545, %v3521
    %v3547 = vsel %vm3460, %v3023, %v3544
    %v3548 = vsel %vm3460, 0, %v3546
    %v3549 = vcosq.f32.pop %v3547
    %v3550 = vsinq.f32.pop %v3547
    %vm3551 = vweird.f32 %v3023
    %v3552 = vadd.s32 %v3548, 3
    %v3553 = vand.u32 %v3552, 3
    %vm3554 = vcmp.lt.s32.totalorder %v3553, 2
    %vm3555 = vcmp.eq.s32.totalorder %v3553, 0
    %v3556 = vxor.u32 %v3550, 2147483648
    %v3557 = vsel %vm3555, %v3549, %v3556
    %vm3558 = vcmp.eq.s32.totalorder %v3553, 2
    %v3559 = vxor.u32 %v3549, 2147483648
    %v3560 = vsel %vm3558, %v3559, %v3550
    %v3561 = vsel %vm3554, %v3557, %v3560
    %v3562 = vsel %vm3551, nan, %v3561
    %v3563 = vand.u32 2147483647, %v3024
    %vm3564 = vcmp.le.f32.partialorder %v3563, 0.7853982
    %vm3565 = vcmp.lt.s32.totalorder %v3024, 0
    %v3566 = vand.u32 %v3024, 2139095040
    %v3567 = vshrl.u32 %v3566, 23
    %v3568 = vsub.s32 %v3567, 127
    %v3569 = vand.u32 2147483647, %v3024
    %v3570 = vand.u32 %v3569, 8388607
    %v3571 = vor.u32 %v3570, 8388608
    %v3572 = vsub.s32 0, %v3571
    %v3573 = vadd.s32 %v3568, 1
    %vm3574 = vcmp.gt.s32.totalorder %v3573, 0
    %v3575 = vsel %vm3574, %v3573, 0
    %v3576 = vshrl.u32 %v3575, 5
    %v3577 = vand.u32 %v3575, 31
    %v3578 = vsub.s32 32, %v3577
    %v3579 = vshrl.u32 683565275, %v3578
    %v3580 = vshll.u32 683565275, %v3577
    %v3581 = vshrl.u32 2475754826, %v3578
    %v3582 = vor.u32 %v3580, %v3581
    %v3583 = vshll.u32 2475754826, %v3577
    %v3584 = vshrl.u32 2131351028, %v3578
    %v3585 = vor.u32 %v3583, %v3584
    %v3586 = vshll.u32 2131351028, %v3577
    %v3587 = vshrl.u32 2102212464, %v3578
    %v3588 = vor.u32 %v3586, %v3587
    %v3589 = vshll.u32 2102212464, %v3577
    %v3590 = vshrl.u32 920167782, %v3578
    %v3591 = vor.u32 %v3589, %v3590
    %v3592 = vshll.u32 920167782, %v3577
    %v3593 = vshrl.u32 1326507024, %v3578
    %v3594 = vor.u32 %v3592, %v3593
    %vm3595 = vcmp.lt.s32.totalorder %v3576, 1
    %vm3596 = vcmp.lt.s32.totalorder %v3576, 2
    %vm3597 = vcmp.lt.s32.totalorder %v3576, 3
    %vm3598 = vcmp.lt.s32.totalorder %v3576, 4
    %v3599 = vsel %vm3595, %v3579, %v3582
    %v3600 = vsel %vm3598, %v3588, 2102212464
    %v3601 = vsel %vm3597, %v3585, %v3600
    %v3602 = vsel %vm3596, %v3599, %v3601
    %v3603 = vsel %vm3595, %v3582, %v3585
    %v3604 = vsel %vm3598, %v3591, 920167782
    %v3605 = vsel %vm3597, %v3588, %v3604
    %v3606 = vsel %vm3596, %v3603, %v3605
    %v3607 = vsel %vm3595, %v3585, %v3588
    %v3608 = vsel %vm3598, %v3594, 1326507024
    %v3609 = vsel %vm3597, %v3591, %v3608
    %v3610 = vsel %vm3596, %v3607, %v3609
    %v3611 = vshll.u32 %v3571, 8
    %v3612 = vmul.u32.u64.compose %v3611, %v3610
    %v3613 = vextract.low.u32 %v3612
    %v3614 = vextract.high.u32 %v3612
    %v3615 = vmul.u32.u64.compose %v3611, %v3606
    %v3616 = vextract.low.u32 %v3615
    %v3617 = vextract.high.u32 %v3615
    %v3618 = vmul.u32 %v3611, %v3602
    %v3619 = vadd.s32 %v3614, %v3616
    %vm3620 = vc.u32 %v3614, %v3616
    %v3621 = vadd.s32 %v3617, 1
    %v3622 = vsel %vm3620, %v3621, %v3617
    %v3623 = vadd.s32 %v3618, %v3622
    %v3624 = vadd.s32 %v3623, 536870912
    %v3625 = vshrl.u32 %v3624, 30
    %v3626 = vshll.u32 %v3625, 30
    %v3627 = vsub.s32 %v3623, %v3626
    %vm3628 = vcmp.lt.s32.totalorder %v3627, 0
    %v3629 = vsub.s32 0, %v3627
    %v3630 = vsel %vm3628, %v3629, %v3627
    %v3631 = vclz %v3630
    %v3632 = vsub.s32 %v3631, 2
    %vm3633 = vcmp.gt.s32.totalorder 0, %v3632
    %v3634 = vsel %vm3633, 0, %v3632
    %v3635 = vsub.s32 32, %v3634
    %v3636 = vshll.u32 %v3627, %v3634
    %v3637 = vshrl.u32 %v3619, %v3635
    %v3638 = vor.u32 %v3636, %v3637
    %v3639 = vsub.s32 4294967266, %v3634
    %v3640 = vadd.s32 %v3639, 127
    %v3641 = vshll.u32 %v3640, 23
    %v3642 = vor.u32 4788187, %v3641
    %v3643 = vand.u32 2147483647, %v3642
    %v3645 = vcvt.s32.f32 %v3638
    %v3646 = vmul.f32 %v3645, %v3643
    %v3647 = vxor.u32 %v3646, 2147483648
    %v3648 = vsel %vm3565, %v3647, %v3646
    %v3649 = vsub.s32 4, %v3625
    %v3650 = vsel %vm3565, %v3649, %v3625
    %v3651 = vsel %vm3564, %v3024, %v3648
    %v3652 = vsel %vm3564, 0, %v3650
    %v3653 = vcosq.f32.pop %v3651
    %v3654 = vsinq.f32.pop %v3651
    %vm3655 = vweird.f32 %v3024
    %v3656 = vadd.s32 %v3652, 3
    %v3657 = vand.u32 %v3656, 3
    %vm3658 = vcmp.lt.s32.totalorder %v3657, 2
    %vm3659 = vcmp.eq.s32.totalorder %v3657, 0
    %v3660 = vxor.u32 %v3654, 2147483648
    %v3661 = vsel %vm3659, %v3653, %v3660
    %vm3662 = vcmp.eq.s32.totalorder %v3657, 2
    %v3663 = vxor.u32 %v3653, 2147483648
    %v3664 = vsel %vm3662, %v3663, %v3654
    %v3665 = vsel %vm3658, %v3661, %v3664
    %v3666 = vsel %vm3655, nan, %v3665
    %v3667 = vand.u32 2147483647, %v3025
    %vm3668 = vcmp.le.f32.partialorder %v3667, 0.7853982
    %vm3669 = vcmp.lt.s32.totalorder %v3025, 0
    %v3670 = vand.u32 %v3025, 2139095040
    %v3671 = vshrl.u32 %v3670, 23
    %v3672 = vsub.s32 %v3671, 127
    %v3673 = vand.u32 2147483647, %v3025
    %v3674 = vand.u32 %v3673, 8388607
    %v3675 = vor.u32 %v3674, 8388608
    %v3676 = vsub.s32 0, %v3675
    %v3677 = vadd.s32 %v3672, 1
    %vm3678 = vcmp.gt.s32.totalorder %v3677, 0
    %v3679 = vsel %vm3678, %v3677, 0
    %v3680 = vshrl.u32 %v3679, 5
    %v3681 = vand.u32 %v3679, 31
    %v3682 = vsub.s32 32, %v3681
    %v3683 = vshrl.u32 683565275, %v3682
    %v3684 = vshll.u32 683565275, %v3681
    %v3685 = vshrl.u32 2475754826, %v3682
    %v3686 = vor.u32 %v3684, %v3685
    %v3687 = vshll.u32 2475754826, %v3681
    %v3688 = vshrl.u32 2131351028, %v3682
    %v3689 = vor.u32 %v3687, %v3688
    %v3690 = vshll.u32 2131351028, %v3681
    %v3691 = vshrl.u32 2102212464, %v3682
    %v3692 = vor.u32 %v3690, %v3691
    %v3693 = vshll.u32 2102212464, %v3681
    %v3694 = vshrl.u32 920167782, %v3682
    %v3695 = vor.u32 %v3693, %v3694
    %v3696 = vshll.u32 920167782, %v3681
    %v3697 = vshrl.u32 1326507024, %v3682
    %v3698 = vor.u32 %v3696, %v3697
    %vm3699 = vcmp.lt.s32.totalorder %v3680, 1
    %vm3700 = vcmp.lt.s32.totalorder %v3680, 2
    %vm3701 = vcmp.lt.s32.totalorder %v3680, 3
    %vm3702 = vcmp.lt.s32.totalorder %v3680, 4
    %v3703 = vsel %vm3699, %v3683, %v3686
    %v3704 = vsel %vm3702, %v3692, 2102212464
    %v3705 = vsel %vm3701, %v3689, %v3704
    %v3706 = vsel %vm3700, %v3703, %v3705
    %v3707 = vsel %vm3699, %v3686, %v3689
    %v3708 = vsel %vm3702, %v3695, 920167782
    %v3709 = vsel %vm3701, %v3692, %v3708
    %v3710 = vsel %vm3700, %v3707, %v3709
    %v3711 = vsel %vm3699, %v3689, %v3692
    %v3712 = vsel %vm3702, %v3698, 1326507024
    %v3713 = vsel %vm3701, %v3695, %v3712
    %v3714 = vsel %vm3700, %v3711, %v3713
    %v3715 = vshll.u32 %v3675, 8
    %v3716 = vmul.u32.u64.compose %v3715, %v3714
    %v3717 = vextract.low.u32 %v3716
    %v3718 = vextract.high.u32 %v3716
    %v3719 = vmul.u32.u64.compose %v3715, %v3710
    %v3720 = vextract.low.u32 %v3719
    %v3721 = vextract.high.u32 %v3719
    %v3722 = vmul.u32 %v3715, %v3706
    %v3723 = vadd.s32 %v3718, %v3720
    %vm3724 = vc.u32 %v3718, %v3720
    %v3725 = vadd.s32 %v3721, 1
    %v3726 = vsel %vm3724, %v3725, %v3721
    %v3727 = vadd.s32 %v3722, %v3726
    %v3728 = vadd.s32 %v3727, 536870912
    %v3729 = vshrl.u32 %v3728, 30
    %v3730 = vshll.u32 %v3729, 30
    %v3731 = vsub.s32 %v3727, %v3730
    %vm3732 = vcmp.lt.s32.totalorder %v3731, 0
    %v3733 = vsub.s32 0, %v3731
    %v3734 = vsel %vm3732, %v3733, %v3731
    %v3735 = vclz %v3734
    %v3736 = vsub.s32 %v3735, 2
    %vm3737 = vcmp.gt.s32.totalorder 0, %v3736
    %v3738 = vsel %vm3737, 0, %v3736
    %v3739 = vsub.s32 32, %v3738
    %v3740 = vshll.u32 %v3731, %v3738
    %v3741 = vshrl.u32 %v3723, %v3739
    %v3742 = vor.u32 %v3740, %v3741
    %v3743 = vsub.s32 4294967266, %v3738
    %v3744 = vadd.s32 %v3743, 127
    %v3745 = vshll.u32 %v3744, 23
    %v3746 = vor.u32 4788187, %v3745
    %v3747 = vand.u32 2147483647, %v3746
    %v3749 = vcvt.s32.f32 %v3742
    %v3750 = vmul.f32 %v3749, %v3747
    %v3751 = vxor.u32 %v3750, 2147483648
    %v3752 = vsel %vm3669, %v3751, %v3750
    %v3753 = vsub.s32 4, %v3729
    %v3754 = vsel %vm3669, %v3753, %v3729
    %v3755 = vsel %vm3668, %v3025, %v3752
    %v3756 = vsel %vm3668, 0, %v3754
    %v3757 = vcosq.f32.pop %v3755
    %v3758 = vsinq.f32.pop %v3755
    %vm3759 = vweird.f32 %v3025
    %v3760 = vadd.s32 %v3756, 3
    %v3761 = vand.u32 %v3760, 3
    %vm3762 = vcmp.lt.s32.totalorder %v3761, 2
    %vm3763 = vcmp.eq.s32.totalorder %v3761, 0
    %v3764 = vxor.u32 %v3758, 2147483648
    %v3765 = vsel %vm3763, %v3757, %v3764
    %vm3766 = vcmp.eq.s32.totalorder %v3761, 2
    %v3767 = vxor.u32 %v3757, 2147483648
    %v3768 = vsel %vm3766, %v3767, %v3758
    %v3769 = vsel %vm3762, %v3765, %v3768
    %v3770 = vsel %vm3759, nan, %v3769
    %v3771 = vand.u32 2147483647, %v3026
    %vm3772 = vcmp.le.f32.partialorder %v3771, 0.7853982
    %vm3773 = vcmp.lt.s32.totalorder %v3026, 0
    %v3774 = vand.u32 %v3026, 2139095040
    %v3775 = vshrl.u32 %v3774, 23
    %v3776 = vsub.s32 %v3775, 127
    %v3777 = vand.u32 2147483647, %v3026
    %v3778 = vand.u32 %v3777, 8388607
    %v3779 = vor.u32 %v3778, 8388608
    %v3780 = vsub.s32 0, %v3779
    %v3781 = vadd.s32 %v3776, 1
    %vm3782 = vcmp.gt.s32.totalorder %v3781, 0
    %v3783 = vsel %vm3782, %v3781, 0
    %v3784 = vshrl.u32 %v3783, 5
    %v3785 = vand.u32 %v3783, 31
    %v3786 = vsub.s32 32, %v3785
    %v3787 = vshrl.u32 683565275, %v3786
    %v3788 = vshll.u32 683565275, %v3785
    %v3789 = vshrl.u32 2475754826, %v3786
    %v3790 = vor.u32 %v3788, %v3789
    %v3791 = vshll.u32 2475754826, %v3785
    %v3792 = vshrl.u32 2131351028, %v3786
    %v3793 = vor.u32 %v3791, %v3792
    %v3794 = vshll.u32 2131351028, %v3785
    %v3795 = vshrl.u32 2102212464, %v3786
    %v3796 = vor.u32 %v3794, %v3795
    %v3797 = vshll.u32 2102212464, %v3785
    %v3798 = vshrl.u32 920167782, %v3786
    %v3799 = vor.u32 %v3797, %v3798
    %v3800 = vshll.u32 920167782, %v3785
    %v3801 = vshrl.u32 1326507024, %v3786
    %v3802 = vor.u32 %v3800, %v3801
    %vm3803 = vcmp.lt.s32.totalorder %v3784, 1
    %vm3804 = vcmp.lt.s32.totalorder %v3784, 2
    %vm3805 = vcmp.lt.s32.totalorder %v3784, 3
    %vm3806 = vcmp.lt.s32.totalorder %v3784, 4
    %v3807 = vsel %vm3803, %v3787, %v3790
    %v3808 = vsel %vm3806, %v3796, 2102212464
    %v3809 = vsel %vm3805, %v3793, %v3808
    %v3810 = vsel %vm3804, %v3807, %v3809
    %v3811 = vsel %vm3803, %v3790, %v3793
    %v3812 = vsel %vm3806, %v3799, 920167782
    %v3813 = vsel %vm3805, %v3796, %v3812
    %v3814 = vsel %vm3804, %v3811, %v3813
    %v3815 = vsel %vm3803, %v3793, %v3796
    %v3816 = vsel %vm3806, %v3802, 1326507024
    %v3817 = vsel %vm3805, %v3799, %v3816
    %v3818 = vsel %vm3804, %v3815, %v3817
    %v3819 = vshll.u32 %v3779, 8
    %v3820 = vmul.u32.u64.compose %v3819, %v3818
    %v3821 = vextract.low.u32 %v3820
    %v3822 = vextract.high.u32 %v3820
    %v3823 = vmul.u32.u64.compose %v3819, %v3814
    %v3824 = vextract.low.u32 %v3823
    %v3825 = vextract.high.u32 %v3823
    %v3826 = vmul.u32 %v3819, %v3810
    %v3827 = vadd.s32 %v3822, %v3824
    %vm3828 = vc.u32 %v3822, %v3824
    %v3829 = vadd.s32 %v3825, 1
    %v3830 = vsel %vm3828, %v3829, %v3825
    %v3831 = vadd.s32 %v3826, %v3830
    %v3832 = vadd.s32 %v3831, 536870912
    %v3833 = vshrl.u32 %v3832, 30
    %v3834 = vshll.u32 %v3833, 30
    %v3835 = vsub.s32 %v3831, %v3834
    %vm3836 = vcmp.lt.s32.totalorder %v3835, 0
    %v3837 = vsub.s32 0, %v3835
    %v3838 = vsel %vm3836, %v3837, %v3835
    %v3839 = vclz %v3838
    %v3840 = vsub.s32 %v3839, 2
    %vm3841 = vcmp.gt.s32.totalorder 0, %v3840
    %v3842 = vsel %vm3841, 0, %v3840
    %v3843 = vsub.s32 32, %v3842
    %v3844 = vshll.u32 %v3835, %v3842
    %v3845 = vshrl.u32 %v3827, %v3843
    %v3846 = vor.u32 %v3844, %v3845
    %v3847 = vsub.s32 4294967266, %v3842
    %v3848 = vadd.s32 %v3847, 127
    %v3849 = vshll.u32 %v3848, 23
    %v3850 = vor.u32 4788187, %v3849
    %v3851 = vand.u32 2147483647, %v3850
    %v3853 = vcvt.s32.f32 %v3846
    %v3854 = vmul.f32 %v3853, %v3851
    %v3855 = vxor.u32 %v3854, 2147483648
    %v3856 = vsel %vm3773, %v3855, %v3854
    %v3857 = vsub.s32 4, %v3833
    %v3858 = vsel %vm3773, %v3857, %v3833
    %v3859 = vsel %vm3772, %v3026, %v3856
    %v3860 = vsel %vm3772, 0, %v3858
    %v3861 = vcosq.f32.pop %v3859
    %v3862 = vsinq.f32.pop %v3859
    %vm3863 = vweird.f32 %v3026
    %v3864 = vadd.s32 %v3860, 3
    %v3865 = vand.u32 %v3864, 3
    %vm3866 = vcmp.lt.s32.totalorder %v3865, 2
    %vm3867 = vcmp.eq.s32.totalorder %v3865, 0
    %v3868 = vxor.u32 %v3862, 2147483648
    %v3869 = vsel %vm3867, %v3861, %v3868
    %vm3870 = vcmp.eq.s32.totalorder %v3865, 2
    %v3871 = vxor.u32 %v3861, 2147483648
    %v3872 = vsel %vm3870, %v3871, %v3862
    %v3873 = vsel %vm3866, %v3869, %v3872
    %v3874 = vsel %vm3863, nan, %v3873
    %v3875 = vand.u32 2147483647, %v3027
    %vm3876 = vcmp.le.f32.partialorder %v3875, 0.7853982
    %vm3877 = vcmp.lt.s32.totalorder %v3027, 0
    %v3878 = vand.u32 %v3027, 2139095040
    %v3879 = vshrl.u32 %v3878, 23
    %v3880 = vsub.s32 %v3879, 127
    %v3881 = vand.u32 2147483647, %v3027
    %v3882 = vand.u32 %v3881, 8388607
    %v3883 = vor.u32 %v3882, 8388608
    %v3884 = vsub.s32 0, %v3883
    %v3885 = vadd.s32 %v3880, 1
    %vm3886 = vcmp.gt.s32.totalorder %v3885, 0
    %v3887 = vsel %vm3886, %v3885, 0
    %v3888 = vshrl.u32 %v3887, 5
    %v3889 = vand.u32 %v3887, 31
    %v3890 = vsub.s32 32, %v3889
    %v3891 = vshrl.u32 683565275, %v3890
    %v3892 = vshll.u32 683565275, %v3889
    %v3893 = vshrl.u32 2475754826, %v3890
    %v3894 = vor.u32 %v3892, %v3893
    %v3895 = vshll.u32 2475754826, %v3889
    %v3896 = vshrl.u32 2131351028, %v3890
    %v3897 = vor.u32 %v3895, %v3896
    %v3898 = vshll.u32 2131351028, %v3889
    %v3899 = vshrl.u32 2102212464, %v3890
    %v3900 = vor.u32 %v3898, %v3899
    %v3901 = vshll.u32 2102212464, %v3889
    %v3902 = vshrl.u32 920167782, %v3890
    %v3903 = vor.u32 %v3901, %v3902
    %v3904 = vshll.u32 920167782, %v3889
    %v3905 = vshrl.u32 1326507024, %v3890
    %v3906 = vor.u32 %v3904, %v3905
    %vm3907 = vcmp.lt.s32.totalorder %v3888, 1
    %vm3908 = vcmp.lt.s32.totalorder %v3888, 2
    %vm3909 = vcmp.lt.s32.totalorder %v3888, 3
    %vm3910 = vcmp.lt.s32.totalorder %v3888, 4
    %v3911 = vsel %vm3907, %v3891, %v3894
    %v3912 = vsel %vm3910, %v3900, 2102212464
    %v3913 = vsel %vm3909, %v3897, %v3912
    %v3914 = vsel %vm3908, %v3911, %v3913
    %v3915 = vsel %vm3907, %v3894, %v3897
    %v3916 = vsel %vm3910, %v3903, 920167782
    %v3917 = vsel %vm3909, %v3900, %v3916
    %v3918 = vsel %vm3908, %v3915, %v3917
    %v3919 = vsel %vm3907, %v3897, %v3900
    %v3920 = vsel %vm3910, %v3906, 1326507024
    %v3921 = vsel %vm3909, %v3903, %v3920
    %v3922 = vsel %vm3908, %v3919, %v3921
    %v3923 = vshll.u32 %v3883, 8
    %v3924 = vmul.u32.u64.compose %v3923, %v3922
    %v3925 = vextract.low.u32 %v3924
    %v3926 = vextract.high.u32 %v3924
    %v3927 = vmul.u32.u64.compose %v3923, %v3918
    %v3928 = vextract.low.u32 %v3927
    %v3929 = vextract.high.u32 %v3927
    %v3930 = vmul.u32 %v3923, %v3914
    %v3931 = vadd.s32 %v3926, %v3928
    %vm3932 = vc.u32 %v3926, %v3928
    %v3933 = vadd.s32 %v3929, 1
    %v3934 = vsel %vm3932, %v3933, %v3929
    %v3935 = vadd.s32 %v3930, %v3934
    %v3936 = vadd.s32 %v3935, 536870912
    %v3937 = vshrl.u32 %v3936, 30
    %v3938 = vshll.u32 %v3937, 30
    %v3939 = vsub.s32 %v3935, %v3938
    %vm3940 = vcmp.lt.s32.totalorder %v3939, 0
    %v3941 = vsub.s32 0, %v3939
    %v3942 = vsel %vm3940, %v3941, %v3939
    %v3943 = vclz %v3942
    %v3944 = vsub.s32 %v3943, 2
    %vm3945 = vcmp.gt.s32.totalorder 0, %v3944
    %v3946 = vsel %vm3945, 0, %v3944
    %v3947 = vsub.s32 32, %v3946
    %v3948 = vshll.u32 %v3939, %v3946
    %v3949 = vshrl.u32 %v3931, %v3947
    %v3950 = vor.u32 %v3948, %v3949
    %v3951 = vsub.s32 4294967266, %v3946
    %v3952 = vadd.s32 %v3951, 127
    %v3953 = vshll.u32 %v3952, 23
    %v3954 = vor.u32 4788187, %v3953
    %v3955 = vand.u32 2147483647, %v3954
    %v3957 = vcvt.s32.f32 %v3950
    %v3958 = vmul.f32 %v3957, %v3955
    %v3959 = vxor.u32 %v3958, 2147483648
    %v3960 = vsel %vm3877, %v3959, %v3958
    %v3961 = vsub.s32 4, %v3937
    %v3962 = vsel %vm3877, %v3961, %v3937
    %v3963 = vsel %vm3876, %v3027, %v3960
    %v3964 = vsel %vm3876, 0, %v3962
    %v3965 = vcosq.f32.pop %v3963
    %v3966 = vsinq.f32.pop %v3963
    %vm3967 = vweird.f32 %v3027
    %v3968 = vadd.s32 %v3964, 3
    %v3969 = vand.u32 %v3968, 3
    %vm3970 = vcmp.lt.s32.totalorder %v3969, 2
    %vm3971 = vcmp.eq.s32.totalorder %v3969, 0
    %v3972 = vxor.u32 %v3966, 2147483648
    %v3973 = vsel %vm3971, %v3965, %v3972
    %vm3974 = vcmp.eq.s32.totalorder %v3969, 2
    %v3975 = vxor.u32 %v3965, 2147483648
    %v3976 = vsel %vm3974, %v3975, %v3966
    %v3977 = vsel %vm3970, %v3973, %v3976
    %v3978 = vsel %vm3967, nan, %v3977
    %v3979 = vand.u32 2147483647, %v3028
    %vm3980 = vcmp.le.f32.partialorder %v3979, 0.7853982
    %vm3981 = vcmp.lt.s32.totalorder %v3028, 0
    %v3982 = vand.u32 %v3028, 2139095040
    %v3983 = vshrl.u32 %v3982, 23
    %v3984 = vsub.s32 %v3983, 127
    %v3985 = vand.u32 2147483647, %v3028
    %v3986 = vand.u32 %v3985, 8388607
    %v3987 = vor.u32 %v3986, 8388608
    %v3988 = vsub.s32 0, %v3987
    %v3989 = vadd.s32 %v3984, 1
    %vm3990 = vcmp.gt.s32.totalorder %v3989, 0
    %v3991 = vsel %vm3990, %v3989, 0
    %v3992 = vshrl.u32 %v3991, 5
    %v3993 = vand.u32 %v3991, 31
    %v3994 = vsub.s32 32, %v3993
    %v3995 = vshrl.u32 683565275, %v3994
    %v3996 = vshll.u32 683565275, %v3993
    %v3997 = vshrl.u32 2475754826, %v3994
    %v3998 = vor.u32 %v3996, %v3997
    %v3999 = vshll.u32 2475754826, %v3993
    %v4000 = vshrl.u32 2131351028, %v3994
    %v4001 = vor.u32 %v3999, %v4000
    %v4002 = vshll.u32 2131351028, %v3993
    %v4003 = vshrl.u32 2102212464, %v3994
    %v4004 = vor.u32 %v4002, %v4003
    %v4005 = vshll.u32 2102212464, %v3993
    %v4006 = vshrl.u32 920167782, %v3994
    %v4007 = vor.u32 %v4005, %v4006
    %v4008 = vshll.u32 920167782, %v3993
    %v4009 = vshrl.u32 1326507024, %v3994
    %v4010 = vor.u32 %v4008, %v4009
    %vm4011 = vcmp.lt.s32.totalorder %v3992, 1
    %vm4012 = vcmp.lt.s32.totalorder %v3992, 2
    %vm4013 = vcmp.lt.s32.totalorder %v3992, 3
    %vm4014 = vcmp.lt.s32.totalorder %v3992, 4
    %v4015 = vsel %vm4011, %v3995, %v3998
    %v4016 = vsel %vm4014, %v4004, 2102212464
    %v4017 = vsel %vm4013, %v4001, %v4016
    %v4018 = vsel %vm4012, %v4015, %v4017
    %v4019 = vsel %vm4011, %v3998, %v4001
    %v4020 = vsel %vm4014, %v4007, 920167782
    %v4021 = vsel %vm4013, %v4004, %v4020
    %v4022 = vsel %vm4012, %v4019, %v4021
    %v4023 = vsel %vm4011, %v4001, %v4004
    %v4024 = vsel %vm4014, %v4010, 1326507024
    %v4025 = vsel %vm4013, %v4007, %v4024
    %v4026 = vsel %vm4012, %v4023, %v4025
    %v4027 = vshll.u32 %v3987, 8
    %v4028 = vmul.u32.u64.compose %v4027, %v4026
    %v4029 = vextract.low.u32 %v4028
    %v4030 = vextract.high.u32 %v4028
    %v4031 = vmul.u32.u64.compose %v4027, %v4022
    %v4032 = vextract.low.u32 %v4031
    %v4033 = vextract.high.u32 %v4031
    %v4034 = vmul.u32 %v4027, %v4018
    %v4035 = vadd.s32 %v4030, %v4032
    %vm4036 = vc.u32 %v4030, %v4032
    %v4037 = vadd.s32 %v4033, 1
    %v4038 = vsel %vm4036, %v4037, %v4033
    %v4039 = vadd.s32 %v4034, %v4038
    %v4040 = vadd.s32 %v4039, 536870912
    %v4041 = vshrl.u32 %v4040, 30
    %v4042 = vshll.u32 %v4041, 30
    %v4043 = vsub.s32 %v4039, %v4042
    %vm4044 = vcmp.lt.s32.totalorder %v4043, 0
    %v4045 = vsub.s32 0, %v4043
    %v4046 = vsel %vm4044, %v4045, %v4043
    %v4047 = vclz %v4046
    %v4048 = vsub.s32 %v4047, 2
    %vm4049 = vcmp.gt.s32.totalorder 0, %v4048
    %v4050 = vsel %vm4049, 0, %v4048
    %v4051 = vsub.s32 32, %v4050
    %v4052 = vshll.u32 %v4043, %v4050
    %v4053 = vshrl.u32 %v4035, %v4051
    %v4054 = vor.u32 %v4052, %v4053
    %v4055 = vsub.s32 4294967266, %v4050
    %v4056 = vadd.s32 %v4055, 127
    %v4057 = vshll.u32 %v4056, 23
    %v4058 = vor.u32 4788187, %v4057
    %v4059 = vand.u32 2147483647, %v4058
    %v4061 = vcvt.s32.f32 %v4054
    %v4062 = vmul.f32 %v4061, %v4059
    %v4063 = vxor.u32 %v4062, 2147483648
    %v4064 = vsel %vm3981, %v4063, %v4062
    %v4065 = vsub.s32 4, %v4041
    %v4066 = vsel %vm3981, %v4065, %v4041
    %v4067 = vsel %vm3980, %v3028, %v4064
    %v4068 = vsel %vm3980, 0, %v4066
    %v4069 = vcosq.f32.pop %v4067
    %v4070 = vsinq.f32.pop %v4067
    %vm4071 = vweird.f32 %v3028
    %v4072 = vadd.s32 %v4068, 3
    %v4073 = vand.u32 %v4072, 3
    %vm4074 = vcmp.lt.s32.totalorder %v4073, 2
    %vm4075 = vcmp.eq.s32.totalorder %v4073, 0
    %v4076 = vxor.u32 %v4070, 2147483648
    %v4077 = vsel %vm4075, %v4069, %v4076
    %vm4078 = vcmp.eq.s32.totalorder %v4073, 2
    %v4079 = vxor.u32 %v4069, 2147483648
    %v4080 = vsel %vm4078, %v4079, %v4070
    %v4081 = vsel %vm4074, %v4077, %v4080
    %v4082 = vsel %vm4071, nan, %v4081
    %v4083 = vand.u32 2147483647, %v3029
    %vm4084 = vcmp.le.f32.partialorder %v4083, 0.7853982
    %vm4085 = vcmp.lt.s32.totalorder %v3029, 0
    %v4086 = vand.u32 %v3029, 2139095040
    %v4087 = vshrl.u32 %v4086, 23
    %v4088 = vsub.s32 %v4087, 127
    %v4089 = vand.u32 2147483647, %v3029
    %v4090 = vand.u32 %v4089, 8388607
    %v4091 = vor.u32 %v4090, 8388608
    %v4092 = vsub.s32 0, %v4091
    %v4093 = vadd.s32 %v4088, 1
    %vm4094 = vcmp.gt.s32.totalorder %v4093, 0
    %v4095 = vsel %vm4094, %v4093, 0
    %v4096 = vshrl.u32 %v4095, 5
    %v4097 = vand.u32 %v4095, 31
    %v4098 = vsub.s32 32, %v4097
    %v4099 = vshrl.u32 683565275, %v4098
    %v4100 = vshll.u32 683565275, %v4097
    %v4101 = vshrl.u32 2475754826, %v4098
    %v4102 = vor.u32 %v4100, %v4101
    %v4103 = vshll.u32 2475754826, %v4097
    %v4104 = vshrl.u32 2131351028, %v4098
    %v4105 = vor.u32 %v4103, %v4104
    %v4106 = vshll.u32 2131351028, %v4097
    %v4107 = vshrl.u32 2102212464, %v4098
    %v4108 = vor.u32 %v4106, %v4107
    %v4109 = vshll.u32 2102212464, %v4097
    %v4110 = vshrl.u32 920167782, %v4098
    %v4111 = vor.u32 %v4109, %v4110
    %v4112 = vshll.u32 920167782, %v4097
    %v4113 = vshrl.u32 1326507024, %v4098
    %v4114 = vor.u32 %v4112, %v4113
    %vm4115 = vcmp.lt.s32.totalorder %v4096, 1
    %vm4116 = vcmp.lt.s32.totalorder %v4096, 2
    %vm4117 = vcmp.lt.s32.totalorder %v4096, 3
    %vm4118 = vcmp.lt.s32.totalorder %v4096, 4
    %v4119 = vsel %vm4115, %v4099, %v4102
    %v4120 = vsel %vm4118, %v4108, 2102212464
    %v4121 = vsel %vm4117, %v4105, %v4120
    %v4122 = vsel %vm4116, %v4119, %v4121
    %v4123 = vsel %vm4115, %v4102, %v4105
    %v4124 = vsel %vm4118, %v4111, 920167782
    %v4125 = vsel %vm4117, %v4108, %v4124
    %v4126 = vsel %vm4116, %v4123, %v4125
    %v4127 = vsel %vm4115, %v4105, %v4108
    %v4128 = vsel %vm4118, %v4114, 1326507024
    %v4129 = vsel %vm4117, %v4111, %v4128
    %v4130 = vsel %vm4116, %v4127, %v4129
    %v4131 = vshll.u32 %v4091, 8
    %v4132 = vmul.u32.u64.compose %v4131, %v4130
    %v4133 = vextract.low.u32 %v4132
    %v4134 = vextract.high.u32 %v4132
    %v4135 = vmul.u32.u64.compose %v4131, %v4126
    %v4136 = vextract.low.u32 %v4135
    %v4137 = vextract.high.u32 %v4135
    %v4138 = vmul.u32 %v4131, %v4122
    %v4139 = vadd.s32 %v4134, %v4136
    %vm4140 = vc.u32 %v4134, %v4136
    %v4141 = vadd.s32 %v4137, 1
    %v4142 = vsel %vm4140, %v4141, %v4137
    %v4143 = vadd.s32 %v4138, %v4142
    %v4144 = vadd.s32 %v4143, 536870912
    %v4145 = vshrl.u32 %v4144, 30
    %v4146 = vshll.u32 %v4145, 30
    %v4147 = vsub.s32 %v4143, %v4146
    %vm4148 = vcmp.lt.s32.totalorder %v4147, 0
    %v4149 = vsub.s32 0, %v4147
    %v4150 = vsel %vm4148, %v4149, %v4147
    %v4151 = vclz %v4150
    %v4152 = vsub.s32 %v4151, 2
    %vm4153 = vcmp.gt.s32.totalorder 0, %v4152
    %v4154 = vsel %vm4153, 0, %v4152
    %v4155 = vsub.s32 32, %v4154
    %v4156 = vshll.u32 %v4147, %v4154
    %v4157 = vshrl.u32 %v4139, %v4155
    %v4158 = vor.u32 %v4156, %v4157
    %v4159 = vsub.s32 4294967266, %v4154
    %v4160 = vadd.s32 %v4159, 127
    %v4161 = vshll.u32 %v4160, 23
    %v4162 = vor.u32 4788187, %v4161
    %v4163 = vand.u32 2147483647, %v4162
    %v4165 = vcvt.s32.f32 %v4158
    %v4166 = vmul.f32 %v4165, %v4163
    %v4167 = vxor.u32 %v4166, 2147483648
    %v4168 = vsel %vm4085, %v4167, %v4166
    %v4169 = vsub.s32 4, %v4145
    %v4170 = vsel %vm4085, %v4169, %v4145
    %v4171 = vsel %vm4084, %v3029, %v4168
    %v4172 = vsel %vm4084, 0, %v4170
    %v4173 = vcosq.f32.pop %v4171
    %v4174 = vsinq.f32.pop %v4171
    %vm4175 = vweird.f32 %v3029
    %v4176 = vadd.s32 %v4172, 3
    %v4177 = vand.u32 %v4176, 3
    %vm4178 = vcmp.lt.s32.totalorder %v4177, 2
    %vm4179 = vcmp.eq.s32.totalorder %v4177, 0
    %v4180 = vxor.u32 %v4174, 2147483648
    %v4181 = vsel %vm4179, %v4173, %v4180
    %vm4182 = vcmp.eq.s32.totalorder %v4177, 2
    %v4183 = vxor.u32 %v4173, 2147483648
    %v4184 = vsel %vm4182, %v4183, %v4174
    %v4185 = vsel %vm4178, %v4181, %v4184
    %v4186 = vsel %vm4175, nan, %v4185
    %v4187 = vand.u32 2147483647, %v3030
    %vm4188 = vcmp.le.f32.partialorder %v4187, 0.7853982
    %vm4189 = vcmp.lt.s32.totalorder %v3030, 0
    %v4190 = vand.u32 %v3030, 2139095040
    %v4191 = vshrl.u32 %v4190, 23
    %v4192 = vsub.s32 %v4191, 127
    %v4193 = vand.u32 2147483647, %v3030
    %v4194 = vand.u32 %v4193, 8388607
    %v4195 = vor.u32 %v4194, 8388608
    %v4196 = vsub.s32 0, %v4195
    %v4197 = vadd.s32 %v4192, 1
    %vm4198 = vcmp.gt.s32.totalorder %v4197, 0
    %v4199 = vsel %vm4198, %v4197, 0
    %v4200 = vshrl.u32 %v4199, 5
    %v4201 = vand.u32 %v4199, 31
    %v4202 = vsub.s32 32, %v4201
    %v4203 = vshrl.u32 683565275, %v4202
    %v4204 = vshll.u32 683565275, %v4201
    %v4205 = vshrl.u32 2475754826, %v4202
    %v4206 = vor.u32 %v4204, %v4205
    %v4207 = vshll.u32 2475754826, %v4201
    %v4208 = vshrl.u32 2131351028, %v4202
    %v4209 = vor.u32 %v4207, %v4208
    %v4210 = vshll.u32 2131351028, %v4201
    %v4211 = vshrl.u32 2102212464, %v4202
    %v4212 = vor.u32 %v4210, %v4211
    %v4213 = vshll.u32 2102212464, %v4201
    %v4214 = vshrl.u32 920167782, %v4202
    %v4215 = vor.u32 %v4213, %v4214
    %v4216 = vshll.u32 920167782, %v4201
    %v4217 = vshrl.u32 1326507024, %v4202
    %v4218 = vor.u32 %v4216, %v4217
    %vm4219 = vcmp.lt.s32.totalorder %v4200, 1
    %vm4220 = vcmp.lt.s32.totalorder %v4200, 2
    %vm4221 = vcmp.lt.s32.totalorder %v4200, 3
    %vm4222 = vcmp.lt.s32.totalorder %v4200, 4
    %v4223 = vsel %vm4219, %v4203, %v4206
    %v4224 = vsel %vm4222, %v4212, 2102212464
    %v4225 = vsel %vm4221, %v4209, %v4224
    %v4226 = vsel %vm4220, %v4223, %v4225
    %v4227 = vsel %vm4219, %v4206, %v4209
    %v4228 = vsel %vm4222, %v4215, 920167782
    %v4229 = vsel %vm4221, %v4212, %v4228
    %v4230 = vsel %vm4220, %v4227, %v4229
    %v4231 = vsel %vm4219, %v4209, %v4212
    %v4232 = vsel %vm4222, %v4218, 1326507024
    %v4233 = vsel %vm4221, %v4215, %v4232
    %v4234 = vsel %vm4220, %v4231, %v4233
    %v4235 = vshll.u32 %v4195, 8
    %v4236 = vmul.u32.u64.compose %v4235, %v4234
    %v4237 = vextract.low.u32 %v4236
    %v4238 = vextract.high.u32 %v4236
    %v4239 = vmul.u32.u64.compose %v4235, %v4230
    %v4240 = vextract.low.u32 %v4239
    %v4241 = vextract.high.u32 %v4239
    %v4242 = vmul.u32 %v4235, %v4226
    %v4243 = vadd.s32 %v4238, %v4240
    %vm4244 = vc.u32 %v4238, %v4240
    %v4245 = vadd.s32 %v4241, 1
    %v4246 = vsel %vm4244, %v4245, %v4241
    %v4247 = vadd.s32 %v4242, %v4246
    %v4248 = vadd.s32 %v4247, 536870912
    %v4249 = vshrl.u32 %v4248, 30
    %v4250 = vshll.u32 %v4249, 30
    %v4251 = vsub.s32 %v4247, %v4250
    %vm4252 = vcmp.lt.s32.totalorder %v4251, 0
    %v4253 = vsub.s32 0, %v4251
    %v4254 = vsel %vm4252, %v4253, %v4251
    %v4255 = vclz %v4254
    %v4256 = vsub.s32 %v4255, 2
    %vm4257 = vcmp.gt.s32.totalorder 0, %v4256
    %v4258 = vsel %vm4257, 0, %v4256
    %v4259 = vsub.s32 32, %v4258
    %v4260 = vshll.u32 %v4251, %v4258
    %v4261 = vshrl.u32 %v4243, %v4259
    %v4262 = vor.u32 %v4260, %v4261
    %v4263 = vsub.s32 4294967266, %v4258
    %v4264 = vadd.s32 %v4263, 127
    %v4265 = vshll.u32 %v4264, 23
    %v4266 = vor.u32 4788187, %v4265
    %v4267 = vand.u32 2147483647, %v4266
    %v4269 = vcvt.s32.f32 %v4262
    %v4270 = vmul.f32 %v4269, %v4267
    %v4271 = vxor.u32 %v4270, 2147483648
    %v4272 = vsel %vm4189, %v4271, %v4270
    %v4273 = vsub.s32 4, %v4249
    %v4274 = vsel %vm4189, %v4273, %v4249
    %v4275 = vsel %vm4188, %v3030, %v4272
    %v4276 = vsel %vm4188, 0, %v4274
    %v4277 = vcosq.f32.pop %v4275
    %v4278 = vsinq.f32.pop %v4275
    %vm4279 = vweird.f32 %v3030
    %v4280 = vadd.s32 %v4276, 3
    %v4281 = vand.u32 %v4280, 3
    %vm4282 = vcmp.lt.s32.totalorder %v4281, 2
    %vm4283 = vcmp.eq.s32.totalorder %v4281, 0
    %v4284 = vxor.u32 %v4278, 2147483648
    %v4285 = vsel %vm4283, %v4277, %v4284
    %vm4286 = vcmp.eq.s32.totalorder %v4281, 2
    %v4287 = vxor.u32 %v4277, 2147483648
    %v4288 = vsel %vm4286, %v4287, %v4278
    %v4289 = vsel %vm4282, %v4285, %v4288
    %v4290 = vsel %vm4279, nan, %v4289
    %v4291 = vand.u32 2147483647, %v3031
    %vm4292 = vcmp.le.f32.partialorder %v4291, 0.7853982
    %vm4293 = vcmp.lt.s32.totalorder %v3031, 0
    %v4294 = vand.u32 %v3031, 2139095040
    %v4295 = vshrl.u32 %v4294, 23
    %v4296 = vsub.s32 %v4295, 127
    %v4297 = vand.u32 2147483647, %v3031
    %v4298 = vand.u32 %v4297, 8388607
    %v4299 = vor.u32 %v4298, 8388608
    %v4300 = vsub.s32 0, %v4299
    %v4301 = vadd.s32 %v4296, 1
    %vm4302 = vcmp.gt.s32.totalorder %v4301, 0
    %v4303 = vsel %vm4302, %v4301, 0
    %v4304 = vshrl.u32 %v4303, 5
    %v4305 = vand.u32 %v4303, 31
    %v4306 = vsub.s32 32, %v4305
    %v4307 = vshrl.u32 683565275, %v4306
    %v4308 = vshll.u32 683565275, %v4305
    %v4309 = vshrl.u32 2475754826, %v4306
    %v4310 = vor.u32 %v4308, %v4309
    %v4311 = vshll.u32 2475754826, %v4305
    %v4312 = vshrl.u32 2131351028, %v4306
    %v4313 = vor.u32 %v4311, %v4312
    %v4314 = vshll.u32 2131351028, %v4305
    %v4315 = vshrl.u32 2102212464, %v4306
    %v4316 = vor.u32 %v4314, %v4315
    %v4317 = vshll.u32 2102212464, %v4305
    %v4318 = vshrl.u32 920167782, %v4306
    %v4319 = vor.u32 %v4317, %v4318
    %v4320 = vshll.u32 920167782, %v4305
    %v4321 = vshrl.u32 1326507024, %v4306
    %v4322 = vor.u32 %v4320, %v4321
    %vm4323 = vcmp.lt.s32.totalorder %v4304, 1
    %vm4324 = vcmp.lt.s32.totalorder %v4304, 2
    %vm4325 = vcmp.lt.s32.totalorder %v4304, 3
    %vm4326 = vcmp.lt.s32.totalorder %v4304, 4
    %v4327 = vsel %vm4323, %v4307, %v4310
    %v4328 = vsel %vm4326, %v4316, 2102212464
    %v4329 = vsel %vm4325, %v4313, %v4328
    %v4330 = vsel %vm4324, %v4327, %v4329
    %v4331 = vsel %vm4323, %v4310, %v4313
    %v4332 = vsel %vm4326, %v4319, 920167782
    %v4333 = vsel %vm4325, %v4316, %v4332
    %v4334 = vsel %vm4324, %v4331, %v4333
    %v4335 = vsel %vm4323, %v4313, %v4316
    %v4336 = vsel %vm4326, %v4322, 1326507024
    %v4337 = vsel %vm4325, %v4319, %v4336
    %v4338 = vsel %vm4324, %v4335, %v4337
    %v4339 = vshll.u32 %v4299, 8
    %v4340 = vmul.u32.u64.compose %v4339, %v4338
    %v4341 = vextract.low.u32 %v4340
    %v4342 = vextract.high.u32 %v4340
    %v4343 = vmul.u32.u64.compose %v4339, %v4334
    %v4344 = vextract.low.u32 %v4343
    %v4345 = vextract.high.u32 %v4343
    %v4346 = vmul.u32 %v4339, %v4330
    %v4347 = vadd.s32 %v4342, %v4344
    %vm4348 = vc.u32 %v4342, %v4344
    %v4349 = vadd.s32 %v4345, 1
    %v4350 = vsel %vm4348, %v4349, %v4345
    %v4351 = vadd.s32 %v4346, %v4350
    %v4352 = vadd.s32 %v4351, 536870912
    %v4353 = vshrl.u32 %v4352, 30
    %v4354 = vshll.u32 %v4353, 30
    %v4355 = vsub.s32 %v4351, %v4354
    %vm4356 = vcmp.lt.s32.totalorder %v4355, 0
    %v4357 = vsub.s32 0, %v4355
    %v4358 = vsel %vm4356, %v4357, %v4355
    %v4359 = vclz %v4358
    %v4360 = vsub.s32 %v4359, 2
    %vm4361 = vcmp.gt.s32.totalorder 0, %v4360
    %v4362 = vsel %vm4361, 0, %v4360
    %v4363 = vsub.s32 32, %v4362
    %v4364 = vshll.u32 %v4355, %v4362
    %v4365 = vshrl.u32 %v4347, %v4363
    %v4366 = vor.u32 %v4364, %v4365
    %v4367 = vsub.s32 4294967266, %v4362
    %v4368 = vadd.s32 %v4367, 127
    %v4369 = vshll.u32 %v4368, 23
    %v4370 = vor.u32 4788187, %v4369
    %v4371 = vand.u32 2147483647, %v4370
    %v4373 = vcvt.s32.f32 %v4366
    %v4374 = vmul.f32 %v4373, %v4371
    %v4375 = vxor.u32 %v4374, 2147483648
    %v4376 = vsel %vm4293, %v4375, %v4374
    %v4377 = vsub.s32 4, %v4353
    %v4378 = vsel %vm4293, %v4377, %v4353
    %v4379 = vsel %vm4292, %v3031, %v4376
    %v4380 = vsel %vm4292, 0, %v4378
    %v4381 = vcosq.f32.pop %v4379
    %v4382 = vsinq.f32.pop %v4379
    %vm4383 = vweird.f32 %v3031
    %v4384 = vadd.s32 %v4380, 3
    %v4385 = vand.u32 %v4384, 3
    %vm4386 = vcmp.lt.s32.totalorder %v4385, 2
    %vm4387 = vcmp.eq.s32.totalorder %v4385, 0
    %v4388 = vxor.u32 %v4382, 2147483648
    %v4389 = vsel %vm4387, %v4381, %v4388
    %vm4390 = vcmp.eq.s32.totalorder %v4385, 2
    %v4391 = vxor.u32 %v4381, 2147483648
    %v4392 = vsel %vm4390, %v4391, %v4382
    %v4393 = vsel %vm4386, %v4389, %v4392
    %v4394 = vsel %vm4383, nan, %v4393
    %v4395 = vand.u32 2147483647, %v3032
    %vm4396 = vcmp.le.f32.partialorder %v4395, 0.7853982
    %vm4397 = vcmp.lt.s32.totalorder %v3032, 0
    %v4398 = vand.u32 %v3032, 2139095040
    %v4399 = vshrl.u32 %v4398, 23
    %v4400 = vsub.s32 %v4399, 127
    %v4401 = vand.u32 2147483647, %v3032
    %v4402 = vand.u32 %v4401, 8388607
    %v4403 = vor.u32 %v4402, 8388608
    %v4404 = vsub.s32 0, %v4403
    %v4405 = vadd.s32 %v4400, 1
    %vm4406 = vcmp.gt.s32.totalorder %v4405, 0
    %v4407 = vsel %vm4406, %v4405, 0
    %v4408 = vshrl.u32 %v4407, 5
    %v4409 = vand.u32 %v4407, 31
    %v4410 = vsub.s32 32, %v4409
    %v4411 = vshrl.u32 683565275, %v4410
    %v4412 = vshll.u32 683565275, %v4409
    %v4413 = vshrl.u32 2475754826, %v4410
    %v4414 = vor.u32 %v4412, %v4413
    %v4415 = vshll.u32 2475754826, %v4409
    %v4416 = vshrl.u32 2131351028, %v4410
    %v4417 = vor.u32 %v4415, %v4416
    %v4418 = vshll.u32 2131351028, %v4409
    %v4419 = vshrl.u32 2102212464, %v4410
    %v4420 = vor.u32 %v4418, %v4419
    %v4421 = vshll.u32 2102212464, %v4409
    %v4422 = vshrl.u32 920167782, %v4410
    %v4423 = vor.u32 %v4421, %v4422
    %v4424 = vshll.u32 920167782, %v4409
    %v4425 = vshrl.u32 1326507024, %v4410
    %v4426 = vor.u32 %v4424, %v4425
    %vm4427 = vcmp.lt.s32.totalorder %v4408, 1
    %vm4428 = vcmp.lt.s32.totalorder %v4408, 2
    %vm4429 = vcmp.lt.s32.totalorder %v4408, 3
    %vm4430 = vcmp.lt.s32.totalorder %v4408, 4
    %v4431 = vsel %vm4427, %v4411, %v4414
    %v4432 = vsel %vm4430, %v4420, 2102212464
    %v4433 = vsel %vm4429, %v4417, %v4432
    %v4434 = vsel %vm4428, %v4431, %v4433
    %v4435 = vsel %vm4427, %v4414, %v4417
    %v4436 = vsel %vm4430, %v4423, 920167782
    %v4437 = vsel %vm4429, %v4420, %v4436
    %v4438 = vsel %vm4428, %v4435, %v4437
    %v4439 = vsel %vm4427, %v4417, %v4420
    %v4440 = vsel %vm4430, %v4426, 1326507024
    %v4441 = vsel %vm4429, %v4423, %v4440
    %v4442 = vsel %vm4428, %v4439, %v4441
    %v4443 = vshll.u32 %v4403, 8
    %v4444 = vmul.u32.u64.compose %v4443, %v4442
    %v4445 = vextract.low.u32 %v4444
    %v4446 = vextract.high.u32 %v4444
    %v4447 = vmul.u32.u64.compose %v4443, %v4438
    %v4448 = vextract.low.u32 %v4447
    %v4449 = vextract.high.u32 %v4447
    %v4450 = vmul.u32 %v4443, %v4434
    %v4451 = vadd.s32 %v4446, %v4448
    %vm4452 = vc.u32 %v4446, %v4448
    %v4453 = vadd.s32 %v4449, 1
    %v4454 = vsel %vm4452, %v4453, %v4449
    %v4455 = vadd.s32 %v4450, %v4454
    %v4456 = vadd.s32 %v4455, 536870912
    %v4457 = vshrl.u32 %v4456, 30
    %v4458 = vshll.u32 %v4457, 30
    %v4459 = vsub.s32 %v4455, %v4458
    %vm4460 = vcmp.lt.s32.totalorder %v4459, 0
    %v4461 = vsub.s32 0, %v4459
    %v4462 = vsel %vm4460, %v4461, %v4459
    %v4463 = vclz %v4462
    %v4464 = vsub.s32 %v4463, 2
    %vm4465 = vcmp.gt.s32.totalorder 0, %v4464
    %v4466 = vsel %vm4465, 0, %v4464
    %v4467 = vsub.s32 32, %v4466
    %v4468 = vshll.u32 %v4459, %v4466
    %v4469 = vshrl.u32 %v4451, %v4467
    %v4470 = vor.u32 %v4468, %v4469
    %v4471 = vsub.s32 4294967266, %v4466
    %v4472 = vadd.s32 %v4471, 127
    %v4473 = vshll.u32 %v4472, 23
    %v4474 = vor.u32 4788187, %v4473
    %v4475 = vand.u32 2147483647, %v4474
    %v4477 = vcvt.s32.f32 %v4470
    %v4478 = vmul.f32 %v4477, %v4475
    %v4479 = vxor.u32 %v4478, 2147483648
    %v4480 = vsel %vm4397, %v4479, %v4478
    %v4481 = vsub.s32 4, %v4457
    %v4482 = vsel %vm4397, %v4481, %v4457
    %v4483 = vsel %vm4396, %v3032, %v4480
    %v4484 = vsel %vm4396, 0, %v4482
    %v4485 = vcosq.f32.pop %v4483
    %v4486 = vsinq.f32.pop %v4483
    %vm4487 = vweird.f32 %v3032
    %v4488 = vadd.s32 %v4484, 3
    %v4489 = vand.u32 %v4488, 3
    %vm4490 = vcmp.lt.s32.totalorder %v4489, 2
    %vm4491 = vcmp.eq.s32.totalorder %v4489, 0
    %v4492 = vxor.u32 %v4486, 2147483648
    %v4493 = vsel %vm4491, %v4485, %v4492
    %vm4494 = vcmp.eq.s32.totalorder %v4489, 2
    %v4495 = vxor.u32 %v4485, 2147483648
    %v4496 = vsel %vm4494, %v4495, %v4486
    %v4497 = vsel %vm4490, %v4493, %v4496
    %v4498 = vsel %vm4487, nan, %v4497
    %v4499 = vand.u32 2147483647, %v3033
    %vm4500 = vcmp.le.f32.partialorder %v4499, 0.7853982
    %vm4501 = vcmp.lt.s32.totalorder %v3033, 0
    %v4502 = vand.u32 %v3033, 2139095040
    %v4503 = vshrl.u32 %v4502, 23
    %v4504 = vsub.s32 %v4503, 127
    %v4505 = vand.u32 2147483647, %v3033
    %v4506 = vand.u32 %v4505, 8388607
    %v4507 = vor.u32 %v4506, 8388608
    %v4508 = vsub.s32 0, %v4507
    %v4509 = vadd.s32 %v4504, 1
    %vm4510 = vcmp.gt.s32.totalorder %v4509, 0
    %v4511 = vsel %vm4510, %v4509, 0
    %v4512 = vshrl.u32 %v4511, 5
    %v4513 = vand.u32 %v4511, 31
    %v4514 = vsub.s32 32, %v4513
    %v4515 = vshrl.u32 683565275, %v4514
    %v4516 = vshll.u32 683565275, %v4513
    %v4517 = vshrl.u32 2475754826, %v4514
    %v4518 = vor.u32 %v4516, %v4517
    %v4519 = vshll.u32 2475754826, %v4513
    %v4520 = vshrl.u32 2131351028, %v4514
    %v4521 = vor.u32 %v4519, %v4520
    %v4522 = vshll.u32 2131351028, %v4513
    %v4523 = vshrl.u32 2102212464, %v4514
    %v4524 = vor.u32 %v4522, %v4523
    %v4525 = vshll.u32 2102212464, %v4513
    %v4526 = vshrl.u32 920167782, %v4514
    %v4527 = vor.u32 %v4525, %v4526
    %v4528 = vshll.u32 920167782, %v4513
    %v4529 = vshrl.u32 1326507024, %v4514
    %v4530 = vor.u32 %v4528, %v4529
    %vm4531 = vcmp.lt.s32.totalorder %v4512, 1
    %vm4532 = vcmp.lt.s32.totalorder %v4512, 2
    %vm4533 = vcmp.lt.s32.totalorder %v4512, 3
    %vm4534 = vcmp.lt.s32.totalorder %v4512, 4
    %v4535 = vsel %vm4531, %v4515, %v4518
    %v4536 = vsel %vm4534, %v4524, 2102212464
    %v4537 = vsel %vm4533, %v4521, %v4536
    %v4538 = vsel %vm4532, %v4535, %v4537
    %v4539 = vsel %vm4531, %v4518, %v4521
    %v4540 = vsel %vm4534, %v4527, 920167782
    %v4541 = vsel %vm4533, %v4524, %v4540
    %v4542 = vsel %vm4532, %v4539, %v4541
    %v4543 = vsel %vm4531, %v4521, %v4524
    %v4544 = vsel %vm4534, %v4530, 1326507024
    %v4545 = vsel %vm4533, %v4527, %v4544
    %v4546 = vsel %vm4532, %v4543, %v4545
    %v4547 = vshll.u32 %v4507, 8
    %v4548 = vmul.u32.u64.compose %v4547, %v4546
    %v4549 = vextract.low.u32 %v4548
    %v4550 = vextract.high.u32 %v4548
    %v4551 = vmul.u32.u64.compose %v4547, %v4542
    %v4552 = vextract.low.u32 %v4551
    %v4553 = vextract.high.u32 %v4551
    %v4554 = vmul.u32 %v4547, %v4538
    %v4555 = vadd.s32 %v4550, %v4552
    %vm4556 = vc.u32 %v4550, %v4552
    %v4557 = vadd.s32 %v4553, 1
    %v4558 = vsel %vm4556, %v4557, %v4553
    %v4559 = vadd.s32 %v4554, %v4558
    %v4560 = vadd.s32 %v4559, 536870912
    %v4561 = vshrl.u32 %v4560, 30
    %v4562 = vshll.u32 %v4561, 30
    %v4563 = vsub.s32 %v4559, %v4562
    %vm4564 = vcmp.lt.s32.totalorder %v4563, 0
    %v4565 = vsub.s32 0, %v4563
    %v4566 = vsel %vm4564, %v4565, %v4563
    %v4567 = vclz %v4566
    %v4568 = vsub.s32 %v4567, 2
    %vm4569 = vcmp.gt.s32.totalorder 0, %v4568
    %v4570 = vsel %vm4569, 0, %v4568
    %v4571 = vsub.s32 32, %v4570
    %v4572 = vshll.u32 %v4563, %v4570
    %v4573 = vshrl.u32 %v4555, %v4571
    %v4574 = vor.u32 %v4572, %v4573
    %v4575 = vsub.s32 4294967266, %v4570
    %v4576 = vadd.s32 %v4575, 127
    %v4577 = vshll.u32 %v4576, 23
    %v4578 = vor.u32 4788187, %v4577
    %v4579 = vand.u32 2147483647, %v4578
    %v4581 = vcvt.s32.f32 %v4574
    %v4582 = vmul.f32 %v4581, %v4579
    %v4583 = vxor.u32 %v4582, 2147483648
    %v4584 = vsel %vm4501, %v4583, %v4582
    %v4585 = vsub.s32 4, %v4561
    %v4586 = vsel %vm4501, %v4585, %v4561
    %v4587 = vsel %vm4500, %v3033, %v4584
    %v4588 = vsel %vm4500, 0, %v4586
    %v4589 = vcosq.f32.pop %v4587
    %v4590 = vsinq.f32.pop %v4587
    %vm4591 = vweird.f32 %v3033
    %v4592 = vadd.s32 %v4588, 3
    %v4593 = vand.u32 %v4592, 3
    %vm4594 = vcmp.lt.s32.totalorder %v4593, 2
    %vm4595 = vcmp.eq.s32.totalorder %v4593, 0
    %v4596 = vxor.u32 %v4590, 2147483648
    %v4597 = vsel %vm4595, %v4589, %v4596
    %vm4598 = vcmp.eq.s32.totalorder %v4593, 2
    %v4599 = vxor.u32 %v4589, 2147483648
    %v4600 = vsel %vm4598, %v4599, %v4590
    %v4601 = vsel %vm4594, %v4597, %v4600
    %v4602 = vsel %vm4591, nan, %v4601
    %v4603 = vand.u32 2147483647, %v3034
    %vm4604 = vcmp.le.f32.partialorder %v4603, 0.7853982
    %vm4605 = vcmp.lt.s32.totalorder %v3034, 0
    %v4606 = vand.u32 %v3034, 2139095040
    %v4607 = vshrl.u32 %v4606, 23
    %v4608 = vsub.s32 %v4607, 127
    %v4609 = vand.u32 2147483647, %v3034
    %v4610 = vand.u32 %v4609, 8388607
    %v4611 = vor.u32 %v4610, 8388608
    %v4612 = vsub.s32 0, %v4611
    %v4613 = vadd.s32 %v4608, 1
    %vm4614 = vcmp.gt.s32.totalorder %v4613, 0
    %v4615 = vsel %vm4614, %v4613, 0
    %v4616 = vshrl.u32 %v4615, 5
    %v4617 = vand.u32 %v4615, 31
    %v4618 = vsub.s32 32, %v4617
    %v4619 = vshrl.u32 683565275, %v4618
    %v4620 = vshll.u32 683565275, %v4617
    %v4621 = vshrl.u32 2475754826, %v4618
    %v4622 = vor.u32 %v4620, %v4621
    %v4623 = vshll.u32 2475754826, %v4617
    %v4624 = vshrl.u32 2131351028, %v4618
    %v4625 = vor.u32 %v4623, %v4624
    %v4626 = vshll.u32 2131351028, %v4617
    %v4627 = vshrl.u32 2102212464, %v4618
    %v4628 = vor.u32 %v4626, %v4627
    %v4629 = vshll.u32 2102212464, %v4617
    %v4630 = vshrl.u32 920167782, %v4618
    %v4631 = vor.u32 %v4629, %v4630
    %v4632 = vshll.u32 920167782, %v4617
    %v4633 = vshrl.u32 1326507024, %v4618
    %v4634 = vor.u32 %v4632, %v4633
    %vm4635 = vcmp.lt.s32.totalorder %v4616, 1
    %vm4636 = vcmp.lt.s32.totalorder %v4616, 2
    %vm4637 = vcmp.lt.s32.totalorder %v4616, 3
    %vm4638 = vcmp.lt.s32.totalorder %v4616, 4
    %v4639 = vsel %vm4635, %v4619, %v4622
    %v4640 = vsel %vm4638, %v4628, 2102212464
    %v4641 = vsel %vm4637, %v4625, %v4640
    %v4642 = vsel %vm4636, %v4639, %v4641
    %v4643 = vsel %vm4635, %v4622, %v4625
    %v4644 = vsel %vm4638, %v4631, 920167782
    %v4645 = vsel %vm4637, %v4628, %v4644
    %v4646 = vsel %vm4636, %v4643, %v4645
    %v4647 = vsel %vm4635, %v4625, %v4628
    %v4648 = vsel %vm4638, %v4634, 1326507024
    %v4649 = vsel %vm4637, %v4631, %v4648
    %v4650 = vsel %vm4636, %v4647, %v4649
    %v4651 = vshll.u32 %v4611, 8
    %v4652 = vmul.u32.u64.compose %v4651, %v4650
    %v4653 = vextract.low.u32 %v4652
    %v4654 = vextract.high.u32 %v4652
    %v4655 = vmul.u32.u64.compose %v4651, %v4646
    %v4656 = vextract.low.u32 %v4655
    %v4657 = vextract.high.u32 %v4655
    %v4658 = vmul.u32 %v4651, %v4642
    %v4659 = vadd.s32 %v4654, %v4656
    %vm4660 = vc.u32 %v4654, %v4656
    %v4661 = vadd.s32 %v4657, 1
    %v4662 = vsel %vm4660, %v4661, %v4657
    %v4663 = vadd.s32 %v4658, %v4662
    %v4664 = vadd.s32 %v4663, 536870912
    %v4665 = vshrl.u32 %v4664, 30
    %v4666 = vshll.u32 %v4665, 30
    %v4667 = vsub.s32 %v4663, %v4666
    %vm4668 = vcmp.lt.s32.totalorder %v4667, 0
    %v4669 = vsub.s32 0, %v4667
    %v4670 = vsel %vm4668, %v4669, %v4667
    %v4671 = vclz %v4670
    %v4672 = vsub.s32 %v4671, 2
    %vm4673 = vcmp.gt.s32.totalorder 0, %v4672
    %v4674 = vsel %vm4673, 0, %v4672
    %v4675 = vsub.s32 32, %v4674
    %v4676 = vshll.u32 %v4667, %v4674
    %v4677 = vshrl.u32 %v4659, %v4675
    %v4678 = vor.u32 %v4676, %v4677
    %v4679 = vsub.s32 4294967266, %v4674
    %v4680 = vadd.s32 %v4679, 127
    %v4681 = vshll.u32 %v4680, 23
    %v4682 = vor.u32 4788187, %v4681
    %v4683 = vand.u32 2147483647, %v4682
    %v4685 = vcvt.s32.f32 %v4678
    %v4686 = vmul.f32 %v4685, %v4683
    %v4687 = vxor.u32 %v4686, 2147483648
    %v4688 = vsel %vm4605, %v4687, %v4686
    %v4689 = vsub.s32 4, %v4665
    %v4690 = vsel %vm4605, %v4689, %v4665
    %v4691 = vsel %vm4604, %v3034, %v4688
    %v4692 = vsel %vm4604, 0, %v4690
    %v4693 = vcosq.f32.pop %v4691
    %v4694 = vsinq.f32.pop %v4691
    %vm4695 = vweird.f32 %v3034
    %v4696 = vadd.s32 %v4692, 3
    %v4697 = vand.u32 %v4696, 3
    %vm4698 = vcmp.lt.s32.totalorder %v4697, 2
    %vm4699 = vcmp.eq.s32.totalorder %v4697, 0
    %v4700 = vxor.u32 %v4694, 2147483648
    %v4701 = vsel %vm4699, %v4693, %v4700
    %vm4702 = vcmp.eq.s32.totalorder %v4697, 2
    %v4703 = vxor.u32 %v4693, 2147483648
    %v4704 = vsel %vm4702, %v4703, %v4694
    %v4705 = vsel %vm4698, %v4701, %v4704
    %v4706 = vsel %vm4695, nan, %v4705
    %v4707 = vand.u32 2147483647, %v3035
    %vm4708 = vcmp.le.f32.partialorder %v4707, 0.7853982
    %vm4709 = vcmp.lt.s32.totalorder %v3035, 0
    %v4710 = vand.u32 %v3035, 2139095040
    %v4711 = vshrl.u32 %v4710, 23
    %v4712 = vsub.s32 %v4711, 127
    %v4713 = vand.u32 2147483647, %v3035
    %v4714 = vand.u32 %v4713, 8388607
    %v4715 = vor.u32 %v4714, 8388608
    %v4716 = vsub.s32 0, %v4715
    %v4717 = vadd.s32 %v4712, 1
    %vm4718 = vcmp.gt.s32.totalorder %v4717, 0
    %v4719 = vsel %vm4718, %v4717, 0
    %v4720 = vshrl.u32 %v4719, 5
    %v4721 = vand.u32 %v4719, 31
    %v4722 = vsub.s32 32, %v4721
    %v4723 = vshrl.u32 683565275, %v4722
    %v4724 = vshll.u32 683565275, %v4721
    %v4725 = vshrl.u32 2475754826, %v4722
    %v4726 = vor.u32 %v4724, %v4725
    %v4727 = vshll.u32 2475754826, %v4721
    %v4728 = vshrl.u32 2131351028, %v4722
    %v4729 = vor.u32 %v4727, %v4728
    %v4730 = vshll.u32 2131351028, %v4721
    %v4731 = vshrl.u32 2102212464, %v4722
    %v4732 = vor.u32 %v4730, %v4731
    %v4733 = vshll.u32 2102212464, %v4721
    %v4734 = vshrl.u32 920167782, %v4722
    %v4735 = vor.u32 %v4733, %v4734
    %v4736 = vshll.u32 920167782, %v4721
    %v4737 = vshrl.u32 1326507024, %v4722
    %v4738 = vor.u32 %v4736, %v4737
    %vm4739 = vcmp.lt.s32.totalorder %v4720, 1
    %vm4740 = vcmp.lt.s32.totalorder %v4720, 2
    %vm4741 = vcmp.lt.s32.totalorder %v4720, 3
    %vm4742 = vcmp.lt.s32.totalorder %v4720, 4
    %v4743 = vsel %vm4739, %v4723, %v4726
    %v4744 = vsel %vm4742, %v4732, 2102212464
    %v4745 = vsel %vm4741, %v4729, %v4744
    %v4746 = vsel %vm4740, %v4743, %v4745
    %v4747 = vsel %vm4739, %v4726, %v4729
    %v4748 = vsel %vm4742, %v4735, 920167782
    %v4749 = vsel %vm4741, %v4732, %v4748
    %v4750 = vsel %vm4740, %v4747, %v4749
    %v4751 = vsel %vm4739, %v4729, %v4732
    %v4752 = vsel %vm4742, %v4738, 1326507024
    %v4753 = vsel %vm4741, %v4735, %v4752
    %v4754 = vsel %vm4740, %v4751, %v4753
    %v4755 = vshll.u32 %v4715, 8
    %v4756 = vmul.u32.u64.compose %v4755, %v4754
    %v4757 = vextract.low.u32 %v4756
    %v4758 = vextract.high.u32 %v4756
    %v4759 = vmul.u32.u64.compose %v4755, %v4750
    %v4760 = vextract.low.u32 %v4759
    %v4761 = vextract.high.u32 %v4759
    %v4762 = vmul.u32 %v4755, %v4746
    %v4763 = vadd.s32 %v4758, %v4760
    %vm4764 = vc.u32 %v4758, %v4760
    %v4765 = vadd.s32 %v4761, 1
    %v4766 = vsel %vm4764, %v4765, %v4761
    %v4767 = vadd.s32 %v4762, %v4766
    %v4768 = vadd.s32 %v4767, 536870912
    %v4769 = vshrl.u32 %v4768, 30
    %v4770 = vshll.u32 %v4769, 30
    %v4771 = vsub.s32 %v4767, %v4770
    %vm4772 = vcmp.lt.s32.totalorder %v4771, 0
    %v4773 = vsub.s32 0, %v4771
    %v4774 = vsel %vm4772, %v4773, %v4771
    %v4775 = vclz %v4774
    %v4776 = vsub.s32 %v4775, 2
    %vm4777 = vcmp.gt.s32.totalorder 0, %v4776
    %v4778 = vsel %vm4777, 0, %v4776
    %v4779 = vsub.s32 32, %v4778
    %v4780 = vshll.u32 %v4771, %v4778
    %v4781 = vshrl.u32 %v4763, %v4779
    %v4782 = vor.u32 %v4780, %v4781
    %v4783 = vsub.s32 4294967266, %v4778
    %v4784 = vadd.s32 %v4783, 127
    %v4785 = vshll.u32 %v4784, 23
    %v4786 = vor.u32 4788187, %v4785
    %v4787 = vand.u32 2147483647, %v4786
    %v4789 = vcvt.s32.f32 %v4782
    %v4790 = vmul.f32 %v4789, %v4787
    %v4791 = vxor.u32 %v4790, 2147483648
    %v4792 = vsel %vm4709, %v4791, %v4790
    %v4793 = vsub.s32 4, %v4769
    %v4794 = vsel %vm4709, %v4793, %v4769
    %v4795 = vsel %vm4708, %v3035, %v4792
    %v4796 = vsel %vm4708, 0, %v4794
    %v4797 = vcosq.f32.pop %v4795
    %v4798 = vsinq.f32.pop %v4795
    %vm4799 = vweird.f32 %v3035
    %v4800 = vadd.s32 %v4796, 3
    %v4801 = vand.u32 %v4800, 3
    %vm4802 = vcmp.lt.s32.totalorder %v4801, 2
    %vm4803 = vcmp.eq.s32.totalorder %v4801, 0
    %v4804 = vxor.u32 %v4798, 2147483648
    %v4805 = vsel %vm4803, %v4797, %v4804
    %vm4806 = vcmp.eq.s32.totalorder %v4801, 2
    %v4807 = vxor.u32 %v4797, 2147483648
    %v4808 = vsel %vm4806, %v4807, %v4798
    %v4809 = vsel %vm4802, %v4805, %v4808
    %v4810 = vsel %vm4799, nan, %v4809
    %v4811 = vand.u32 2147483647, %v3036
    %vm4812 = vcmp.le.f32.partialorder %v4811, 0.7853982
    %vm4813 = vcmp.lt.s32.totalorder %v3036, 0
    %v4814 = vand.u32 %v3036, 2139095040
    %v4815 = vshrl.u32 %v4814, 23
    %v4816 = vsub.s32 %v4815, 127
    %v4817 = vand.u32 2147483647, %v3036
    %v4818 = vand.u32 %v4817, 8388607
    %v4819 = vor.u32 %v4818, 8388608
    %v4820 = vsub.s32 0, %v4819
    %v4821 = vadd.s32 %v4816, 1
    %vm4822 = vcmp.gt.s32.totalorder %v4821, 0
    %v4823 = vsel %vm4822, %v4821, 0
    %v4824 = vshrl.u32 %v4823, 5
    %v4825 = vand.u32 %v4823, 31
    %v4826 = vsub.s32 32, %v4825
    %v4827 = vshrl.u32 683565275, %v4826
    %v4828 = vshll.u32 683565275, %v4825
    %v4829 = vshrl.u32 2475754826, %v4826
    %v4830 = vor.u32 %v4828, %v4829
    %v4831 = vshll.u32 2475754826, %v4825
    %v4832 = vshrl.u32 2131351028, %v4826
    %v4833 = vor.u32 %v4831, %v4832
    %v4834 = vshll.u32 2131351028, %v4825
    %v4835 = vshrl.u32 2102212464, %v4826
    %v4836 = vor.u32 %v4834, %v4835
    %v4837 = vshll.u32 2102212464, %v4825
    %v4838 = vshrl.u32 920167782, %v4826
    %v4839 = vor.u32 %v4837, %v4838
    %v4840 = vshll.u32 920167782, %v4825
    %v4841 = vshrl.u32 1326507024, %v4826
    %v4842 = vor.u32 %v4840, %v4841
    %vm4843 = vcmp.lt.s32.totalorder %v4824, 1
    %vm4844 = vcmp.lt.s32.totalorder %v4824, 2
    %vm4845 = vcmp.lt.s32.totalorder %v4824, 3
    %vm4846 = vcmp.lt.s32.totalorder %v4824, 4
    %v4847 = vsel %vm4843, %v4827, %v4830
    %v4848 = vsel %vm4846, %v4836, 2102212464
    %v4849 = vsel %vm4845, %v4833, %v4848
    %v4850 = vsel %vm4844, %v4847, %v4849
    %v4851 = vsel %vm4843, %v4830, %v4833
    %v4852 = vsel %vm4846, %v4839, 920167782
    %v4853 = vsel %vm4845, %v4836, %v4852
    %v4854 = vsel %vm4844, %v4851, %v4853
    %v4855 = vsel %vm4843, %v4833, %v4836
    %v4856 = vsel %vm4846, %v4842, 1326507024
    %v4857 = vsel %vm4845, %v4839, %v4856
    %v4858 = vsel %vm4844, %v4855, %v4857
    %v4859 = vshll.u32 %v4819, 8
    %v4860 = vmul.u32.u64.compose %v4859, %v4858
    %v4861 = vextract.low.u32 %v4860
    %v4862 = vextract.high.u32 %v4860
    %v4863 = vmul.u32.u64.compose %v4859, %v4854
    %v4864 = vextract.low.u32 %v4863
    %v4865 = vextract.high.u32 %v4863
    %v4866 = vmul.u32 %v4859, %v4850
    %v4867 = vadd.s32 %v4862, %v4864
    %vm4868 = vc.u32 %v4862, %v4864
    %v4869 = vadd.s32 %v4865, 1
    %v4870 = vsel %vm4868, %v4869, %v4865
    %v4871 = vadd.s32 %v4866, %v4870
    %v4872 = vadd.s32 %v4871, 536870912
    %v4873 = vshrl.u32 %v4872, 30
    %v4874 = vshll.u32 %v4873, 30
    %v4875 = vsub.s32 %v4871, %v4874
    %vm4876 = vcmp.lt.s32.totalorder %v4875, 0
    %v4877 = vsub.s32 0, %v4875
    %v4878 = vsel %vm4876, %v4877, %v4875
    %v4879 = vclz %v4878
    %v4880 = vsub.s32 %v4879, 2
    %vm4881 = vcmp.gt.s32.totalorder 0, %v4880
    %v4882 = vsel %vm4881, 0, %v4880
    %v4883 = vsub.s32 32, %v4882
    %v4884 = vshll.u32 %v4875, %v4882
    %v4885 = vshrl.u32 %v4867, %v4883
    %v4886 = vor.u32 %v4884, %v4885
    %v4887 = vsub.s32 4294967266, %v4882
    %v4888 = vadd.s32 %v4887, 127
    %v4889 = vshll.u32 %v4888, 23
    %v4890 = vor.u32 4788187, %v4889
    %v4891 = vand.u32 2147483647, %v4890
    %v4893 = vcvt.s32.f32 %v4886
    %v4894 = vmul.f32 %v4893, %v4891
    %v4895 = vxor.u32 %v4894, 2147483648
    %v4896 = vsel %vm4813, %v4895, %v4894
    %v4897 = vsub.s32 4, %v4873
    %v4898 = vsel %vm4813, %v4897, %v4873
    %v4899 = vsel %vm4812, %v3036, %v4896
    %v4900 = vsel %vm4812, 0, %v4898
    %v4901 = vcosq.f32.pop %v4899
    %v4902 = vsinq.f32.pop %v4899
    %vm4903 = vweird.f32 %v3036
    %v4904 = vadd.s32 %v4900, 3
    %v4905 = vand.u32 %v4904, 3
    %vm4906 = vcmp.lt.s32.totalorder %v4905, 2
    %vm4907 = vcmp.eq.s32.totalorder %v4905, 0
    %v4908 = vxor.u32 %v4902, 2147483648
    %v4909 = vsel %vm4907, %v4901, %v4908
    %vm4910 = vcmp.eq.s32.totalorder %v4905, 2
    %v4911 = vxor.u32 %v4901, 2147483648
    %v4912 = vsel %vm4910, %v4911, %v4902
    %v4913 = vsel %vm4906, %v4909, %v4912
    %v4914 = vsel %vm4903, nan, %v4913
    %v4915 = vand.u32 2147483647, %v3037
    %vm4916 = vcmp.le.f32.partialorder %v4915, 0.7853982
    %vm4917 = vcmp.lt.s32.totalorder %v3037, 0
    %v4918 = vand.u32 %v3037, 2139095040
    %v4919 = vshrl.u32 %v4918, 23
    %v4920 = vsub.s32 %v4919, 127
    %v4921 = vand.u32 2147483647, %v3037
    %v4922 = vand.u32 %v4921, 8388607
    %v4923 = vor.u32 %v4922, 8388608
    %v4924 = vsub.s32 0, %v4923
    %v4925 = vadd.s32 %v4920, 1
    %vm4926 = vcmp.gt.s32.totalorder %v4925, 0
    %v4927 = vsel %vm4926, %v4925, 0
    %v4928 = vshrl.u32 %v4927, 5
    %v4929 = vand.u32 %v4927, 31
    %v4930 = vsub.s32 32, %v4929
    %v4931 = vshrl.u32 683565275, %v4930
    %v4932 = vshll.u32 683565275, %v4929
    %v4933 = vshrl.u32 2475754826, %v4930
    %v4934 = vor.u32 %v4932, %v4933
    %v4935 = vshll.u32 2475754826, %v4929
    %v4936 = vshrl.u32 2131351028, %v4930
    %v4937 = vor.u32 %v4935, %v4936
    %v4938 = vshll.u32 2131351028, %v4929
    %v4939 = vshrl.u32 2102212464, %v4930
    %v4940 = vor.u32 %v4938, %v4939
    %v4941 = vshll.u32 2102212464, %v4929
    %v4942 = vshrl.u32 920167782, %v4930
    %v4943 = vor.u32 %v4941, %v4942
    %v4944 = vshll.u32 920167782, %v4929
    %v4945 = vshrl.u32 1326507024, %v4930
    %v4946 = vor.u32 %v4944, %v4945
    %vm4947 = vcmp.lt.s32.totalorder %v4928, 1
    %vm4948 = vcmp.lt.s32.totalorder %v4928, 2
    %vm4949 = vcmp.lt.s32.totalorder %v4928, 3
    %vm4950 = vcmp.lt.s32.totalorder %v4928, 4
    %v4951 = vsel %vm4947, %v4931, %v4934
    %v4952 = vsel %vm4950, %v4940, 2102212464
    %v4953 = vsel %vm4949, %v4937, %v4952
    %v4954 = vsel %vm4948, %v4951, %v4953
    %v4955 = vsel %vm4947, %v4934, %v4937
    %v4956 = vsel %vm4950, %v4943, 920167782
    %v4957 = vsel %vm4949, %v4940, %v4956
    %v4958 = vsel %vm4948, %v4955, %v4957
    %v4959 = vsel %vm4947, %v4937, %v4940
    %v4960 = vsel %vm4950, %v4946, 1326507024
    %v4961 = vsel %vm4949, %v4943, %v4960
    %v4962 = vsel %vm4948, %v4959, %v4961
    %v4963 = vshll.u32 %v4923, 8
    %v4964 = vmul.u32.u64.compose %v4963, %v4962
    %v4965 = vextract.low.u32 %v4964
    %v4966 = vextract.high.u32 %v4964
    %v4967 = vmul.u32.u64.compose %v4963, %v4958
    %v4968 = vextract.low.u32 %v4967
    %v4969 = vextract.high.u32 %v4967
    %v4970 = vmul.u32 %v4963, %v4954
    %v4971 = vadd.s32 %v4966, %v4968
    %vm4972 = vc.u32 %v4966, %v4968
    %v4973 = vadd.s32 %v4969, 1
    %v4974 = vsel %vm4972, %v4973, %v4969
    %v4975 = vadd.s32 %v4970, %v4974
    %v4976 = vadd.s32 %v4975, 536870912
    %v4977 = vshrl.u32 %v4976, 30
    %v4978 = vshll.u32 %v4977, 30
    %v4979 = vsub.s32 %v4975, %v4978
    %vm4980 = vcmp.lt.s32.totalorder %v4979, 0
    %v4981 = vsub.s32 0, %v4979
    %v4982 = vsel %vm4980, %v4981, %v4979
    %v4983 = vclz %v4982
    %v4984 = vsub.s32 %v4983, 2
    %vm4985 = vcmp.gt.s32.totalorder 0, %v4984
    %v4986 = vsel %vm4985, 0, %v4984
    %v4987 = vsub.s32 32, %v4986
    %v4988 = vshll.u32 %v4979, %v4986
    %v4989 = vshrl.u32 %v4971, %v4987
    %v4990 = vor.u32 %v4988, %v4989
    %v4991 = vsub.s32 4294967266, %v4986
    %v4992 = vadd.s32 %v4991, 127
    %v4993 = vshll.u32 %v4992, 23
    %v4994 = vor.u32 4788187, %v4993
    %v4995 = vand.u32 2147483647, %v4994
    %v4997 = vcvt.s32.f32 %v4990
    %v4998 = vmul.f32 %v4997, %v4995
    %v4999 = vxor.u32 %v4998, 2147483648
    %v5000 = vsel %vm4917, %v4999, %v4998
    %v5001 = vsub.s32 4, %v4977
    %v5002 = vsel %vm4917, %v5001, %v4977
    %v5003 = vsel %vm4916, %v3037, %v5000
    %v5004 = vsel %vm4916, 0, %v5002
    %v5005 = vcosq.f32.pop %v5003
    %v5006 = vsinq.f32.pop %v5003
    %vm5007 = vweird.f32 %v3037
    %v5008 = vadd.s32 %v5004, 3
    %v5009 = vand.u32 %v5008, 3
    %vm5010 = vcmp.lt.s32.totalorder %v5009, 2
    %vm5011 = vcmp.eq.s32.totalorder %v5009, 0
    %v5012 = vxor.u32 %v5006, 2147483648
    %v5013 = vsel %vm5011, %v5005, %v5012
    %vm5014 = vcmp.eq.s32.totalorder %v5009, 2
    %v5015 = vxor.u32 %v5005, 2147483648
    %v5016 = vsel %vm5014, %v5015, %v5006
    %v5017 = vsel %vm5010, %v5013, %v5016
    %v5018 = vsel %vm5007, nan, %v5017
    %v5019 = vand.u32 2147483647, %v3038
    %vm5020 = vcmp.le.f32.partialorder %v5019, 0.7853982
    %vm5021 = vcmp.lt.s32.totalorder %v3038, 0
    %v5022 = vand.u32 %v3038, 2139095040
    %v5023 = vshrl.u32 %v5022, 23
    %v5024 = vsub.s32 %v5023, 127
    %v5025 = vand.u32 2147483647, %v3038
    %v5026 = vand.u32 %v5025, 8388607
    %v5027 = vor.u32 %v5026, 8388608
    %v5028 = vsub.s32 0, %v5027
    %v5029 = vadd.s32 %v5024, 1
    %vm5030 = vcmp.gt.s32.totalorder %v5029, 0
    %v5031 = vsel %vm5030, %v5029, 0
    %v5032 = vshrl.u32 %v5031, 5
    %v5033 = vand.u32 %v5031, 31
    %v5034 = vsub.s32 32, %v5033
    %v5035 = vshrl.u32 683565275, %v5034
    %v5036 = vshll.u32 683565275, %v5033
    %v5037 = vshrl.u32 2475754826, %v5034
    %v5038 = vor.u32 %v5036, %v5037
    %v5039 = vshll.u32 2475754826, %v5033
    %v5040 = vshrl.u32 2131351028, %v5034
    %v5041 = vor.u32 %v5039, %v5040
    %v5042 = vshll.u32 2131351028, %v5033
    %v5043 = vshrl.u32 2102212464, %v5034
    %v5044 = vor.u32 %v5042, %v5043
    %v5045 = vshll.u32 2102212464, %v5033
    %v5046 = vshrl.u32 920167782, %v5034
    %v5047 = vor.u32 %v5045, %v5046
    %v5048 = vshll.u32 920167782, %v5033
    %v5049 = vshrl.u32 1326507024, %v5034
    %v5050 = vor.u32 %v5048, %v5049
    %vm5051 = vcmp.lt.s32.totalorder %v5032, 1
    %vm5052 = vcmp.lt.s32.totalorder %v5032, 2
    %vm5053 = vcmp.lt.s32.totalorder %v5032, 3
    %vm5054 = vcmp.lt.s32.totalorder %v5032, 4
    %v5055 = vsel %vm5051, %v5035, %v5038
    %v5056 = vsel %vm5054, %v5044, 2102212464
    %v5057 = vsel %vm5053, %v5041, %v5056
    %v5058 = vsel %vm5052, %v5055, %v5057
    %v5059 = vsel %vm5051, %v5038, %v5041
    %v5060 = vsel %vm5054, %v5047, 920167782
    %v5061 = vsel %vm5053, %v5044, %v5060
    %v5062 = vsel %vm5052, %v5059, %v5061
    %v5063 = vsel %vm5051, %v5041, %v5044
    %v5064 = vsel %vm5054, %v5050, 1326507024
    %v5065 = vsel %vm5053, %v5047, %v5064
    %v5066 = vsel %vm5052, %v5063, %v5065
    %v5067 = vshll.u32 %v5027, 8
    %v5068 = vmul.u32.u64.compose %v5067, %v5066
    %v5069 = vextract.low.u32 %v5068
    %v5070 = vextract.high.u32 %v5068
    %v5071 = vmul.u32.u64.compose %v5067, %v5062
    %v5072 = vextract.low.u32 %v5071
    %v5073 = vextract.high.u32 %v5071
    %v5074 = vmul.u32 %v5067, %v5058
    %v5075 = vadd.s32 %v5070, %v5072
    %vm5076 = vc.u32 %v5070, %v5072
    %v5077 = vadd.s32 %v5073, 1
    %v5078 = vsel %vm5076, %v5077, %v5073
    %v5079 = vadd.s32 %v5074, %v5078
    %v5080 = vadd.s32 %v5079, 536870912
    %v5081 = vshrl.u32 %v5080, 30
    %v5082 = vshll.u32 %v5081, 30
    %v5083 = vsub.s32 %v5079, %v5082
    %vm5084 = vcmp.lt.s32.totalorder %v5083, 0
    %v5085 = vsub.s32 0, %v5083
    %v5086 = vsel %vm5084, %v5085, %v5083
    %v5087 = vclz %v5086
    %v5088 = vsub.s32 %v5087, 2
    %vm5089 = vcmp.gt.s32.totalorder 0, %v5088
    %v5090 = vsel %vm5089, 0, %v5088
    %v5091 = vsub.s32 32, %v5090
    %v5092 = vshll.u32 %v5083, %v5090
    %v5093 = vshrl.u32 %v5075, %v5091
    %v5094 = vor.u32 %v5092, %v5093
    %v5095 = vsub.s32 4294967266, %v5090
    %v5096 = vadd.s32 %v5095, 127
    %v5097 = vshll.u32 %v5096, 23
    %v5098 = vor.u32 4788187, %v5097
    %v5099 = vand.u32 2147483647, %v5098
    %v5101 = vcvt.s32.f32 %v5094
    %v5102 = vmul.f32 %v5101, %v5099
    %v5103 = vxor.u32 %v5102, 2147483648
    %v5104 = vsel %vm5021, %v5103, %v5102
    %v5105 = vsub.s32 4, %v5081
    %v5106 = vsel %vm5021, %v5105, %v5081
    %v5107 = vsel %vm5020, %v3038, %v5104
    %v5108 = vsel %vm5020, 0, %v5106
    %v5109 = vcosq.f32.pop %v5107
    %v5110 = vsinq.f32.pop %v5107
    %vm5111 = vweird.f32 %v3038
    %v5112 = vadd.s32 %v5108, 3
    %v5113 = vand.u32 %v5112, 3
    %vm5114 = vcmp.lt.s32.totalorder %v5113, 2
    %vm5115 = vcmp.eq.s32.totalorder %v5113, 0
    %v5116 = vxor.u32 %v5110, 2147483648
    %v5117 = vsel %vm5115, %v5109, %v5116
    %vm5118 = vcmp.eq.s32.totalorder %v5113, 2
    %v5119 = vxor.u32 %v5109, 2147483648
    %v5120 = vsel %vm5118, %v5119, %v5110
    %v5121 = vsel %vm5114, %v5117, %v5120
    %v5122 = vsel %vm5111, nan, %v5121
    %v5123 = vand.u32 2147483647, %v3039
    %vm5124 = vcmp.le.f32.partialorder %v5123, 0.7853982
    %vm5125 = vcmp.lt.s32.totalorder %v3039, 0
    %v5126 = vand.u32 %v3039, 2139095040
    %v5127 = vshrl.u32 %v5126, 23
    %v5128 = vsub.s32 %v5127, 127
    %v5129 = vand.u32 2147483647, %v3039
    %v5130 = vand.u32 %v5129, 8388607
    %v5131 = vor.u32 %v5130, 8388608
    %v5132 = vsub.s32 0, %v5131
    %v5133 = vadd.s32 %v5128, 1
    %vm5134 = vcmp.gt.s32.totalorder %v5133, 0
    %v5135 = vsel %vm5134, %v5133, 0
    %v5136 = vshrl.u32 %v5135, 5
    %v5137 = vand.u32 %v5135, 31
    %v5138 = vsub.s32 32, %v5137
    %v5139 = vshrl.u32 683565275, %v5138
    %v5140 = vshll.u32 683565275, %v5137
    %v5141 = vshrl.u32 2475754826, %v5138
    %v5142 = vor.u32 %v5140, %v5141
    %v5143 = vshll.u32 2475754826, %v5137
    %v5144 = vshrl.u32 2131351028, %v5138
    %v5145 = vor.u32 %v5143, %v5144
    %v5146 = vshll.u32 2131351028, %v5137
    %v5147 = vshrl.u32 2102212464, %v5138
    %v5148 = vor.u32 %v5146, %v5147
    %v5149 = vshll.u32 2102212464, %v5137
    %v5150 = vshrl.u32 920167782, %v5138
    %v5151 = vor.u32 %v5149, %v5150
    %v5152 = vshll.u32 920167782, %v5137
    %v5153 = vshrl.u32 1326507024, %v5138
    %v5154 = vor.u32 %v5152, %v5153
    %vm5155 = vcmp.lt.s32.totalorder %v5136, 1
    %vm5156 = vcmp.lt.s32.totalorder %v5136, 2
    %vm5157 = vcmp.lt.s32.totalorder %v5136, 3
    %vm5158 = vcmp.lt.s32.totalorder %v5136, 4
    %v5159 = vsel %vm5155, %v5139, %v5142
    %v5160 = vsel %vm5158, %v5148, 2102212464
    %v5161 = vsel %vm5157, %v5145, %v5160
    %v5162 = vsel %vm5156, %v5159, %v5161
    %v5163 = vsel %vm5155, %v5142, %v5145
    %v5164 = vsel %vm5158, %v5151, 920167782
    %v5165 = vsel %vm5157, %v5148, %v5164
    %v5166 = vsel %vm5156, %v5163, %v5165
    %v5167 = vsel %vm5155, %v5145, %v5148
    %v5168 = vsel %vm5158, %v5154, 1326507024
    %v5169 = vsel %vm5157, %v5151, %v5168
    %v5170 = vsel %vm5156, %v5167, %v5169
    %v5171 = vshll.u32 %v5131, 8
    %v5172 = vmul.u32.u64.compose %v5171, %v5170
    %v5173 = vextract.low.u32 %v5172
    %v5174 = vextract.high.u32 %v5172
    %v5175 = vmul.u32.u64.compose %v5171, %v5166
    %v5176 = vextract.low.u32 %v5175
    %v5177 = vextract.high.u32 %v5175
    %v5178 = vmul.u32 %v5171, %v5162
    %v5179 = vadd.s32 %v5174, %v5176
    %vm5180 = vc.u32 %v5174, %v5176
    %v5181 = vadd.s32 %v5177, 1
    %v5182 = vsel %vm5180, %v5181, %v5177
    %v5183 = vadd.s32 %v5178, %v5182
    %v5184 = vadd.s32 %v5183, 536870912
    %v5185 = vshrl.u32 %v5184, 30
    %v5186 = vshll.u32 %v5185, 30
    %v5187 = vsub.s32 %v5183, %v5186
    %vm5188 = vcmp.lt.s32.totalorder %v5187, 0
    %v5189 = vsub.s32 0, %v5187
    %v5190 = vsel %vm5188, %v5189, %v5187
    %v5191 = vclz %v5190
    %v5192 = vsub.s32 %v5191, 2
    %vm5193 = vcmp.gt.s32.totalorder 0, %v5192
    %v5194 = vsel %vm5193, 0, %v5192
    %v5195 = vsub.s32 32, %v5194
    %v5196 = vshll.u32 %v5187, %v5194
    %v5197 = vshrl.u32 %v5179, %v5195
    %v5198 = vor.u32 %v5196, %v5197
    %v5199 = vsub.s32 4294967266, %v5194
    %v5200 = vadd.s32 %v5199, 127
    %v5201 = vshll.u32 %v5200, 23
    %v5202 = vor.u32 4788187, %v5201
    %v5203 = vand.u32 2147483647, %v5202
    %v5205 = vcvt.s32.f32 %v5198
    %v5206 = vmul.f32 %v5205, %v5203
    %v5207 = vxor.u32 %v5206, 2147483648
    %v5208 = vsel %vm5125, %v5207, %v5206
    %v5209 = vsub.s32 4, %v5185
    %v5210 = vsel %vm5125, %v5209, %v5185
    %v5211 = vsel %vm5124, %v3039, %v5208
    %v5212 = vsel %vm5124, 0, %v5210
    %v5213 = vcosq.f32.pop %v5211
    %v5214 = vsinq.f32.pop %v5211
    %vm5215 = vweird.f32 %v3039
    %v5216 = vadd.s32 %v5212, 3
    %v5217 = vand.u32 %v5216, 3
    %vm5218 = vcmp.lt.s32.totalorder %v5217, 2
    %vm5219 = vcmp.eq.s32.totalorder %v5217, 0
    %v5220 = vxor.u32 %v5214, 2147483648
    %v5221 = vsel %vm5219, %v5213, %v5220
    %vm5222 = vcmp.eq.s32.totalorder %v5217, 2
    %v5223 = vxor.u32 %v5213, 2147483648
    %v5224 = vsel %vm5222, %v5223, %v5214
    %v5225 = vsel %vm5218, %v5221, %v5224
    %v5226 = vsel %vm5215, nan, %v5225
    %v5227 = vand.u32 2147483647, %v3040
    %vm5228 = vcmp.le.f32.partialorder %v5227, 0.7853982
    %vm5229 = vcmp.lt.s32.totalorder %v3040, 0
    %v5230 = vand.u32 %v3040, 2139095040
    %v5231 = vshrl.u32 %v5230, 23
    %v5232 = vsub.s32 %v5231, 127
    %v5233 = vand.u32 2147483647, %v3040
    %v5234 = vand.u32 %v5233, 8388607
    %v5235 = vor.u32 %v5234, 8388608
    %v5236 = vsub.s32 0, %v5235
    %v5237 = vadd.s32 %v5232, 1
    %vm5238 = vcmp.gt.s32.totalorder %v5237, 0
    %v5239 = vsel %vm5238, %v5237, 0
    %v5240 = vshrl.u32 %v5239, 5
    %v5241 = vand.u32 %v5239, 31
    %v5242 = vsub.s32 32, %v5241
    %v5243 = vshrl.u32 683565275, %v5242
    %v5244 = vshll.u32 683565275, %v5241
    %v5245 = vshrl.u32 2475754826, %v5242
    %v5246 = vor.u32 %v5244, %v5245
    %v5247 = vshll.u32 2475754826, %v5241
    %v5248 = vshrl.u32 2131351028, %v5242
    %v5249 = vor.u32 %v5247, %v5248
    %v5250 = vshll.u32 2131351028, %v5241
    %v5251 = vshrl.u32 2102212464, %v5242
    %v5252 = vor.u32 %v5250, %v5251
    %v5253 = vshll.u32 2102212464, %v5241
    %v5254 = vshrl.u32 920167782, %v5242
    %v5255 = vor.u32 %v5253, %v5254
    %v5256 = vshll.u32 920167782, %v5241
    %v5257 = vshrl.u32 1326507024, %v5242
    %v5258 = vor.u32 %v5256, %v5257
    %vm5259 = vcmp.lt.s32.totalorder %v5240, 1
    %vm5260 = vcmp.lt.s32.totalorder %v5240, 2
    %vm5261 = vcmp.lt.s32.totalorder %v5240, 3
    %vm5262 = vcmp.lt.s32.totalorder %v5240, 4
    %v5263 = vsel %vm5259, %v5243, %v5246
    %v5264 = vsel %vm5262, %v5252, 2102212464
    %v5265 = vsel %vm5261, %v5249, %v5264
    %v5266 = vsel %vm5260, %v5263, %v5265
    %v5267 = vsel %vm5259, %v5246, %v5249
    %v5268 = vsel %vm5262, %v5255, 920167782
    %v5269 = vsel %vm5261, %v5252, %v5268
    %v5270 = vsel %vm5260, %v5267, %v5269
    %v5271 = vsel %vm5259, %v5249, %v5252
    %v5272 = vsel %vm5262, %v5258, 1326507024
    %v5273 = vsel %vm5261, %v5255, %v5272
    %v5274 = vsel %vm5260, %v5271, %v5273
    %v5275 = vshll.u32 %v5235, 8
    %v5276 = vmul.u32.u64.compose %v5275, %v5274
    %v5277 = vextract.low.u32 %v5276
    %v5278 = vextract.high.u32 %v5276
    %v5279 = vmul.u32.u64.compose %v5275, %v5270
    %v5280 = vextract.low.u32 %v5279
    %v5281 = vextract.high.u32 %v5279
    %v5282 = vmul.u32 %v5275, %v5266
    %v5283 = vadd.s32 %v5278, %v5280
    %vm5284 = vc.u32 %v5278, %v5280
    %v5285 = vadd.s32 %v5281, 1
    %v5286 = vsel %vm5284, %v5285, %v5281
    %v5287 = vadd.s32 %v5282, %v5286
    %v5288 = vadd.s32 %v5287, 536870912
    %v5289 = vshrl.u32 %v5288, 30
    %v5290 = vshll.u32 %v5289, 30
    %v5291 = vsub.s32 %v5287, %v5290
    %vm5292 = vcmp.lt.s32.totalorder %v5291, 0
    %v5293 = vsub.s32 0, %v5291
    %v5294 = vsel %vm5292, %v5293, %v5291
    %v5295 = vclz %v5294
    %v5296 = vsub.s32 %v5295, 2
    %vm5297 = vcmp.gt.s32.totalorder 0, %v5296
    %v5298 = vsel %vm5297, 0, %v5296
    %v5299 = vsub.s32 32, %v5298
    %v5300 = vshll.u32 %v5291, %v5298
    %v5301 = vshrl.u32 %v5283, %v5299
    %v5302 = vor.u32 %v5300, %v5301
    %v5303 = vsub.s32 4294967266, %v5298
    %v5304 = vadd.s32 %v5303, 127
    %v5305 = vshll.u32 %v5304, 23
    %v5306 = vor.u32 4788187, %v5305
    %v5307 = vand.u32 2147483647, %v5306
    %v5309 = vcvt.s32.f32 %v5302
    %v5310 = vmul.f32 %v5309, %v5307
    %v5311 = vxor.u32 %v5310, 2147483648
    %v5312 = vsel %vm5229, %v5311, %v5310
    %v5313 = vsub.s32 4, %v5289
    %v5314 = vsel %vm5229, %v5313, %v5289
    %v5315 = vsel %vm5228, %v3040, %v5312
    %v5316 = vsel %vm5228, 0, %v5314
    %v5317 = vcosq.f32.pop %v5315
    %v5318 = vsinq.f32.pop %v5315
    %vm5319 = vweird.f32 %v3040
    %v5320 = vadd.s32 %v5316, 3
    %v5321 = vand.u32 %v5320, 3
    %vm5322 = vcmp.lt.s32.totalorder %v5321, 2
    %vm5323 = vcmp.eq.s32.totalorder %v5321, 0
    %v5324 = vxor.u32 %v5318, 2147483648
    %v5325 = vsel %vm5323, %v5317, %v5324
    %vm5326 = vcmp.eq.s32.totalorder %v5321, 2
    %v5327 = vxor.u32 %v5317, 2147483648
    %v5328 = vsel %vm5326, %v5327, %v5318
    %v5329 = vsel %vm5322, %v5325, %v5328
    %v5330 = vsel %vm5319, nan, %v5329
    %v5331 = vand.u32 2147483647, %v3041
    %vm5332 = vcmp.le.f32.partialorder %v5331, 0.7853982
    %vm5333 = vcmp.lt.s32.totalorder %v3041, 0
    %v5334 = vand.u32 %v3041, 2139095040
    %v5335 = vshrl.u32 %v5334, 23
    %v5336 = vsub.s32 %v5335, 127
    %v5337 = vand.u32 2147483647, %v3041
    %v5338 = vand.u32 %v5337, 8388607
    %v5339 = vor.u32 %v5338, 8388608
    %v5340 = vsub.s32 0, %v5339
    %v5341 = vadd.s32 %v5336, 1
    %vm5342 = vcmp.gt.s32.totalorder %v5341, 0
    %v5343 = vsel %vm5342, %v5341, 0
    %v5344 = vshrl.u32 %v5343, 5
    %v5345 = vand.u32 %v5343, 31
    %v5346 = vsub.s32 32, %v5345
    %v5347 = vshrl.u32 683565275, %v5346
    %v5348 = vshll.u32 683565275, %v5345
    %v5349 = vshrl.u32 2475754826, %v5346
    %v5350 = vor.u32 %v5348, %v5349
    %v5351 = vshll.u32 2475754826, %v5345
    %v5352 = vshrl.u32 2131351028, %v5346
    %v5353 = vor.u32 %v5351, %v5352
    %v5354 = vshll.u32 2131351028, %v5345
    %v5355 = vshrl.u32 2102212464, %v5346
    %v5356 = vor.u32 %v5354, %v5355
    %v5357 = vshll.u32 2102212464, %v5345
    %v5358 = vshrl.u32 920167782, %v5346
    %v5359 = vor.u32 %v5357, %v5358
    %v5360 = vshll.u32 920167782, %v5345
    %v5361 = vshrl.u32 1326507024, %v5346
    %v5362 = vor.u32 %v5360, %v5361
    %vm5363 = vcmp.lt.s32.totalorder %v5344, 1
    %vm5364 = vcmp.lt.s32.totalorder %v5344, 2
    %vm5365 = vcmp.lt.s32.totalorder %v5344, 3
    %vm5366 = vcmp.lt.s32.totalorder %v5344, 4
    %v5367 = vsel %vm5363, %v5347, %v5350
    %v5368 = vsel %vm5366, %v5356, 2102212464
    %v5369 = vsel %vm5365, %v5353, %v5368
    %v5370 = vsel %vm5364, %v5367, %v5369
    %v5371 = vsel %vm5363, %v5350, %v5353
    %v5372 = vsel %vm5366, %v5359, 920167782
    %v5373 = vsel %vm5365, %v5356, %v5372
    %v5374 = vsel %vm5364, %v5371, %v5373
    %v5375 = vsel %vm5363, %v5353, %v5356
    %v5376 = vsel %vm5366, %v5362, 1326507024
    %v5377 = vsel %vm5365, %v5359, %v5376
    %v5378 = vsel %vm5364, %v5375, %v5377
    %v5379 = vshll.u32 %v5339, 8
    %v5380 = vmul.u32.u64.compose %v5379, %v5378
    %v5381 = vextract.low.u32 %v5380
    %v5382 = vextract.high.u32 %v5380
    %v5383 = vmul.u32.u64.compose %v5379, %v5374
    %v5384 = vextract.low.u32 %v5383
    %v5385 = vextract.high.u32 %v5383
    %v5386 = vmul.u32 %v5379, %v5370
    %v5387 = vadd.s32 %v5382, %v5384
    %vm5388 = vc.u32 %v5382, %v5384
    %v5389 = vadd.s32 %v5385, 1
    %v5390 = vsel %vm5388, %v5389, %v5385
    %v5391 = vadd.s32 %v5386, %v5390
    %v5392 = vadd.s32 %v5391, 536870912
    %v5393 = vshrl.u32 %v5392, 30
    %v5394 = vshll.u32 %v5393, 30
    %v5395 = vsub.s32 %v5391, %v5394
    %vm5396 = vcmp.lt.s32.totalorder %v5395, 0
    %v5397 = vsub.s32 0, %v5395
    %v5398 = vsel %vm5396, %v5397, %v5395
    %v5399 = vclz %v5398
    %v5400 = vsub.s32 %v5399, 2
    %vm5401 = vcmp.gt.s32.totalorder 0, %v5400
    %v5402 = vsel %vm5401, 0, %v5400
    %v5403 = vsub.s32 32, %v5402
    %v5404 = vshll.u32 %v5395, %v5402
    %v5405 = vshrl.u32 %v5387, %v5403
    %v5406 = vor.u32 %v5404, %v5405
    %v5407 = vsub.s32 4294967266, %v5402
    %v5408 = vadd.s32 %v5407, 127
    %v5409 = vshll.u32 %v5408, 23
    %v5410 = vor.u32 4788187, %v5409
    %v5411 = vand.u32 2147483647, %v5410
    %v5413 = vcvt.s32.f32 %v5406
    %v5414 = vmul.f32 %v5413, %v5411
    %v5415 = vxor.u32 %v5414, 2147483648
    %v5416 = vsel %vm5333, %v5415, %v5414
    %v5417 = vsub.s32 4, %v5393
    %v5418 = vsel %vm5333, %v5417, %v5393
    %v5419 = vsel %vm5332, %v3041, %v5416
    %v5420 = vsel %vm5332, 0, %v5418
    %v5421 = vcosq.f32.pop %v5419
    %v5422 = vsinq.f32.pop %v5419
    %vm5423 = vweird.f32 %v3041
    %v5424 = vadd.s32 %v5420, 3
    %v5425 = vand.u32 %v5424, 3
    %vm5426 = vcmp.lt.s32.totalorder %v5425, 2
    %vm5427 = vcmp.eq.s32.totalorder %v5425, 0
    %v5428 = vxor.u32 %v5422, 2147483648
    %v5429 = vsel %vm5427, %v5421, %v5428
    %vm5430 = vcmp.eq.s32.totalorder %v5425, 2
    %v5431 = vxor.u32 %v5421, 2147483648
    %v5432 = vsel %vm5430, %v5431, %v5422
    %v5433 = vsel %vm5426, %v5429, %v5432
    %v5434 = vsel %vm5423, nan, %v5433
    %v5435 = vand.u32 2147483647, %v3042
    %vm5436 = vcmp.le.f32.partialorder %v5435, 0.7853982
    %vm5437 = vcmp.lt.s32.totalorder %v3042, 0
    %v5438 = vand.u32 %v3042, 2139095040
    %v5439 = vshrl.u32 %v5438, 23
    %v5440 = vsub.s32 %v5439, 127
    %v5441 = vand.u32 2147483647, %v3042
    %v5442 = vand.u32 %v5441, 8388607
    %v5443 = vor.u32 %v5442, 8388608
    %v5444 = vsub.s32 0, %v5443
    %v5445 = vadd.s32 %v5440, 1
    %vm5446 = vcmp.gt.s32.totalorder %v5445, 0
    %v5447 = vsel %vm5446, %v5445, 0
    %v5448 = vshrl.u32 %v5447, 5
    %v5449 = vand.u32 %v5447, 31
    %v5450 = vsub.s32 32, %v5449
    %v5451 = vshrl.u32 683565275, %v5450
    %v5452 = vshll.u32 683565275, %v5449
    %v5453 = vshrl.u32 2475754826, %v5450
    %v5454 = vor.u32 %v5452, %v5453
    %v5455 = vshll.u32 2475754826, %v5449
    %v5456 = vshrl.u32 2131351028, %v5450
    %v5457 = vor.u32 %v5455, %v5456
    %v5458 = vshll.u32 2131351028, %v5449
    %v5459 = vshrl.u32 2102212464, %v5450
    %v5460 = vor.u32 %v5458, %v5459
    %v5461 = vshll.u32 2102212464, %v5449
    %v5462 = vshrl.u32 920167782, %v5450
    %v5463 = vor.u32 %v5461, %v5462
    %v5464 = vshll.u32 920167782, %v5449
    %v5465 = vshrl.u32 1326507024, %v5450
    %v5466 = vor.u32 %v5464, %v5465
    %vm5467 = vcmp.lt.s32.totalorder %v5448, 1
    %vm5468 = vcmp.lt.s32.totalorder %v5448, 2
    %vm5469 = vcmp.lt.s32.totalorder %v5448, 3
    %vm5470 = vcmp.lt.s32.totalorder %v5448, 4
    %v5471 = vsel %vm5467, %v5451, %v5454
    %v5472 = vsel %vm5470, %v5460, 2102212464
    %v5473 = vsel %vm5469, %v5457, %v5472
    %v5474 = vsel %vm5468, %v5471, %v5473
    %v5475 = vsel %vm5467, %v5454, %v5457
    %v5476 = vsel %vm5470, %v5463, 920167782
    %v5477 = vsel %vm5469, %v5460, %v5476
    %v5478 = vsel %vm5468, %v5475, %v5477
    %v5479 = vsel %vm5467, %v5457, %v5460
    %v5480 = vsel %vm5470, %v5466, 1326507024
    %v5481 = vsel %vm5469, %v5463, %v5480
    %v5482 = vsel %vm5468, %v5479, %v5481
    %v5483 = vshll.u32 %v5443, 8
    %v5484 = vmul.u32.u64.compose %v5483, %v5482
    %v5485 = vextract.low.u32 %v5484
    %v5486 = vextract.high.u32 %v5484
    %v5487 = vmul.u32.u64.compose %v5483, %v5478
    %v5488 = vextract.low.u32 %v5487
    %v5489 = vextract.high.u32 %v5487
    %v5490 = vmul.u32 %v5483, %v5474
    %v5491 = vadd.s32 %v5486, %v5488
    %vm5492 = vc.u32 %v5486, %v5488
    %v5493 = vadd.s32 %v5489, 1
    %v5494 = vsel %vm5492, %v5493, %v5489
    %v5495 = vadd.s32 %v5490, %v5494
    %v5496 = vadd.s32 %v5495, 536870912
    %v5497 = vshrl.u32 %v5496, 30
    %v5498 = vshll.u32 %v5497, 30
    %v5499 = vsub.s32 %v5495, %v5498
    %vm5500 = vcmp.lt.s32.totalorder %v5499, 0
    %v5501 = vsub.s32 0, %v5499
    %v5502 = vsel %vm5500, %v5501, %v5499
    %v5503 = vclz %v5502
    %v5504 = vsub.s32 %v5503, 2
    %vm5505 = vcmp.gt.s32.totalorder 0, %v5504
    %v5506 = vsel %vm5505, 0, %v5504
    %v5507 = vsub.s32 32, %v5506
    %v5508 = vshll.u32 %v5499, %v5506
    %v5509 = vshrl.u32 %v5491, %v5507
    %v5510 = vor.u32 %v5508, %v5509
    %v5511 = vsub.s32 4294967266, %v5506
    %v5512 = vadd.s32 %v5511, 127
    %v5513 = vshll.u32 %v5512, 23
    %v5514 = vor.u32 4788187, %v5513
    %v5515 = vand.u32 2147483647, %v5514
    %v5517 = vcvt.s32.f32 %v5510
    %v5518 = vmul.f32 %v5517, %v5515
    %v5519 = vxor.u32 %v5518, 2147483648
    %v5520 = vsel %vm5437, %v5519, %v5518
    %v5521 = vsub.s32 4, %v5497
    %v5522 = vsel %vm5437, %v5521, %v5497
    %v5523 = vsel %vm5436, %v3042, %v5520
    %v5524 = vsel %vm5436, 0, %v5522
    %v5525 = vcosq.f32.pop %v5523
    %v5526 = vsinq.f32.pop %v5523
    %vm5527 = vweird.f32 %v3042
    %v5528 = vadd.s32 %v5524, 3
    %v5529 = vand.u32 %v5528, 3
    %vm5530 = vcmp.lt.s32.totalorder %v5529, 2
    %vm5531 = vcmp.eq.s32.totalorder %v5529, 0
    %v5532 = vxor.u32 %v5526, 2147483648
    %v5533 = vsel %vm5531, %v5525, %v5532
    %vm5534 = vcmp.eq.s32.totalorder %v5529, 2
    %v5535 = vxor.u32 %v5525, 2147483648
    %v5536 = vsel %vm5534, %v5535, %v5526
    %v5537 = vsel %vm5530, %v5533, %v5536
    %v5538 = vsel %vm5527, nan, %v5537
    %5540 = vset.pattern.permute.xlu0 0
    %5541 = vperm.xlu0 %5540, %v2989
    %v5542 = vpop.permute.xlu0 %5541
    %5545 = vset.pattern.permute.xlu0 0
    %5546 = vperm.xlu0 %5545, %v2990
    %v5547 = vpop.permute.xlu0 %5546
    %v5549 = vmul.f32 %v5542, %v3146
    %v5550 = vmul.f32 %v5547, %v3250
    %v5551 = vmul.f32 %v5542, %v3354
    %v5552 = vmul.f32 %v5547, %v3458
    %v5553 = vmul.f32 %v5542, %v3562
    %v5554 = vmul.f32 %v5547, %v3666
    %v5555 = vmul.f32 %v5542, %v3770
    %v5556 = vmul.f32 %v5547, %v3874
    %v5557 = vmul.f32 %v5542, %v3978
    %v5558 = vmul.f32 %v5547, %v4082
    %v5559 = vmul.f32 %v5542, %v4186
    %v5560 = vmul.f32 %v5547, %v4290
    %v5561 = vmul.f32 %v5542, %v4394
    %v5562 = vmul.f32 %v5547, %v4498
    %v5563 = vmul.f32 %v5542, %v4602
    %v5564 = vmul.f32 %v5547, %v4706
    %v5565 = vmul.f32 %v5542, %v4810
    %v5566 = vmul.f32 %v5547, %v4914
    %v5567 = vmul.f32 %v5542, %v5018
    %v5568 = vmul.f32 %v5547, %v5122
    %v5569 = vmul.f32 %v5542, %v5226
    %v5570 = vmul.f32 %v5547, %v5330
    %v5571 = vmul.f32 %v5542, %v5434
    %v5572 = vmul.f32 %v5547, %v5538
    %v5573 = vadd.f32 %v5549, %v5550
    %v5574 = vrot.slane %v5573, 4
    %v5575 = vadd.f32 %v5573, %v5574
    %v5576 = vrot.slane %v5575, 2
    %v5577 = vadd.f32 %v5575, %v5576
    %v5578 = vrot.slane %v5577, 1
    %v5579 = vadd.f32 %v5577, %v5578
    %v5580 = vadd.f32 %v5551, %v5552
    %v5581 = vrot.slane %v5580, 4
    %v5582 = vadd.f32 %v5580, %v5581
    %v5583 = vrot.slane %v5582, 2
    %v5584 = vadd.f32 %v5582, %v5583
    %v5585 = vrot.slane %v5584, 1
    %v5586 = vadd.f32 %v5584, %v5585
    %v5587 = vadd.f32 %v5553, %v5554
    %v5588 = vrot.slane %v5587, 4
    %v5589 = vadd.f32 %v5587, %v5588
    %v5590 = vrot.slane %v5589, 2
    %v5591 = vadd.f32 %v5589, %v5590
    %v5592 = vrot.slane %v5591, 1
    %v5593 = vadd.f32 %v5591, %v5592
    %v5594 = vadd.f32 %v5555, %v5556
    %v5595 = vrot.slane %v5594, 4
    %v5596 = vadd.f32 %v5594, %v5595
    %v5597 = vrot.slane %v5596, 2
    %v5598 = vadd.f32 %v5596, %v5597
    %v5599 = vrot.slane %v5598, 1
    %v5600 = vadd.f32 %v5598, %v5599
    %v5601 = vadd.f32 %v5557, %v5558
    %v5602 = vrot.slane %v5601, 4
    %v5603 = vadd.f32 %v5601, %v5602
    %v5604 = vrot.slane %v5603, 2
    %v5605 = vadd.f32 %v5603, %v5604
    %v5606 = vrot.slane %v5605, 1
    %v5607 = vadd.f32 %v5605, %v5606
    %v5608 = vadd.f32 %v5559, %v5560
    %v5609 = vrot.slane %v5608, 4
    %v5610 = vadd.f32 %v5608, %v5609
    %v5611 = vrot.slane %v5610, 2
    %v5612 = vadd.f32 %v5610, %v5611
    %v5613 = vrot.slane %v5612, 1
    %v5614 = vadd.f32 %v5612, %v5613
    %v5615 = vadd.f32 %v5561, %v5562
    %v5616 = vrot.slane %v5615, 4
    %v5617 = vadd.f32 %v5615, %v5616
    %v5618 = vrot.slane %v5617, 2
    %v5619 = vadd.f32 %v5617, %v5618
    %v5620 = vrot.slane %v5619, 1
    %v5621 = vadd.f32 %v5619, %v5620
    %v5622 = vadd.f32 %v5563, %v5564
    %v5623 = vrot.slane %v5622, 4
    %v5624 = vadd.f32 %v5622, %v5623
    %v5625 = vrot.slane %v5624, 2
    %v5626 = vadd.f32 %v5624, %v5625
    %v5627 = vrot.slane %v5626, 1
    %v5628 = vadd.f32 %v5626, %v5627
    %v5629 = vadd.f32 %v5565, %v5566
    %v5630 = vrot.slane %v5629, 4
    %v5631 = vadd.f32 %v5629, %v5630
    %v5632 = vrot.slane %v5631, 2
    %v5633 = vadd.f32 %v5631, %v5632
    %v5634 = vrot.slane %v5633, 1
    %v5635 = vadd.f32 %v5633, %v5634
    %v5636 = vadd.f32 %v5567, %v5568
    %v5637 = vrot.slane %v5636, 4
    %v5638 = vadd.f32 %v5636, %v5637
    %v5639 = vrot.slane %v5638, 2
    %v5640 = vadd.f32 %v5638, %v5639
    %v5641 = vrot.slane %v5640, 1
    %v5642 = vadd.f32 %v5640, %v5641
    %v5643 = vadd.f32 %v5569, %v5570
    %v5644 = vrot.slane %v5643, 4
    %v5645 = vadd.f32 %v5643, %v5644
    %v5646 = vrot.slane %v5645, 2
    %v5647 = vadd.f32 %v5645, %v5646
    %v5648 = vrot.slane %v5647, 1
    %v5649 = vadd.f32 %v5647, %v5648
    %v5650 = vadd.f32 %v5571, %v5572
    %v5651 = vrot.slane %v5650, 4
    %v5652 = vadd.f32 %v5650, %v5651
    %v5653 = vrot.slane %v5652, 2
    %v5654 = vadd.f32 %v5652, %v5653
    %v5655 = vrot.slane %v5654, 1
    %v5656 = vadd.f32 %v5654, %v5655
    %v5657 = vadd.f32 %v2975, %v5579
    %v5658 = vadd.f32 %v2976, %v5586
    %v5659 = vadd.f32 %v2977, %v5593
    %v5660 = vadd.f32 %v2978, %v5600
    %v5661 = vadd.f32 %v2979, %v5607
    %v5662 = vadd.f32 %v2980, %v5614
    %v5663 = vadd.f32 %v2981, %v5621
    %v5664 = vadd.f32 %v2982, %v5628
    %v5665 = vadd.f32 %v2983, %v5635
    %v5666 = vadd.f32 %v2984, %v5642
    %v5667 = vadd.f32 %v2985, %v5649
    %v5668 = vadd.f32 %v2986, %v5656
    %v5669 = vld [vmem:[%s0 + $0x2] sm:$0x1]
    %s5670 = scalar_lea.vmem %s3, 32
    %v5671 = vld [vmem:[%s5670] sm:$0xff]
    %v5672 = vld [vmem:[%s5670 + $0x8] sm:$0xff]
    %v5673 = vlaneseq
    %v5674 = vshrl.u32 %v5673, 7
    %v5675 = vsub.s32 0, %v5674
    %v5676 = vrot.slane %v5669, %v5675
    %v5677 = vmul.f32 %v5676, %v76
    %v5678 = vmul.f32 %v5676, %v81
    %v5679 = vmul.f32 %v5676, %v86
    %v5680 = vmul.f32 %v5676, %v91
    %v5681 = vmul.f32 %v5676, %v96
    %v5682 = vmul.f32 %v5676, %v101
    %v5683 = vmul.f32 %v5676, %v106
    %v5684 = vmul.f32 %v5676, %v111
    %v5685 = vmul.f32 %v5676, %v116
    %v5686 = vmul.f32 %v5676, %v121
    %v5687 = vmul.f32 %v5676, %v126
    %v5688 = vmul.f32 %v5676, %v131
    %v5689 = vmul.f32 %v5676, %v136
    %v5690 = vmul.f32 %v5676, %v141
    %v5691 = vmul.f32 %v5676, %v146
    %v5692 = vmul.f32 %v5676, %v151
    %v5693 = vmul.f32 %v5676, %v156
    %v5694 = vmul.f32 %v5676, %v161
    %v5695 = vmul.f32 %v5676, %v166
    %v5696 = vmul.f32 %v5676, %v171
    %v5697 = vmul.f32 %v5676, %v176
    %v5698 = vmul.f32 %v5676, %v181
    %v5699 = vmul.f32 %v5676, %v186
    %v5700 = vmul.f32 %v5676, %v191
    %v5701 = vadd.f32 %v5677, %v220
    %v5702 = vadd.f32 %v5678, %v225
    %v5703 = vadd.f32 %v5679, %v230
    %v5704 = vadd.f32 %v5680, %v235
    %v5705 = vadd.f32 %v5681, %v240
    %v5706 = vadd.f32 %v5682, %v245
    %v5707 = vadd.f32 %v5683, %v250
    %v5708 = vadd.f32 %v5684, %v255
    %v5709 = vadd.f32 %v5685, %v260
    %v5710 = vadd.f32 %v5686, %v265
    %v5711 = vadd.f32 %v5687, %v270
    %v5712 = vadd.f32 %v5688, %v275
    %v5713 = vadd.f32 %v5689, %v280
    %v5714 = vadd.f32 %v5690, %v285
    %v5715 = vadd.f32 %v5691, %v290
    %v5716 = vadd.f32 %v5692, %v295
    %v5717 = vadd.f32 %v5693, %v300
    %v5718 = vadd.f32 %v5694, %v305
    %v5719 = vadd.f32 %v5695, %v310
    %v5720 = vadd.f32 %v5696, %v315
    %v5721 = vadd.f32 %v5697, %v320
    %v5722 = vadd.f32 %v5698, %v325
    %v5723 = vadd.f32 %v5699, %v330
    %v5724 = vadd.f32 %v5700, %v335
    %v5725 = vand.u32 2147483647, %v5701
    %vm5726 = vcmp.le.f32.partialorder %v5725, 0.7853982
    %vm5727 = vcmp.lt.s32.totalorder %v5701, 0
    %v5728 = vand.u32 %v5701, 2139095040
    %v5729 = vshrl.u32 %v5728, 23
    %v5730 = vsub.s32 %v5729, 127
    %v5731 = vand.u32 2147483647, %v5701
    %v5732 = vand.u32 %v5731, 8388607
    %v5733 = vor.u32 %v5732, 8388608
    %v5734 = vsub.s32 0, %v5733
    %v5735 = vadd.s32 %v5730, 1
    %vm5736 = vcmp.gt.s32.totalorder %v5735, 0
    %v5737 = vsel %vm5736, %v5735, 0
    %v5738 = vshrl.u32 %v5737, 5
    %v5739 = vand.u32 %v5737, 31
    %v5740 = vsub.s32 32, %v5739
    %v5741 = vshrl.u32 683565275, %v5740
    %v5742 = vshll.u32 683565275, %v5739
    %v5743 = vshrl.u32 2475754826, %v5740
    %v5744 = vor.u32 %v5742, %v5743
    %v5745 = vshll.u32 2475754826, %v5739
    %v5746 = vshrl.u32 2131351028, %v5740
    %v5747 = vor.u32 %v5745, %v5746
    %v5748 = vshll.u32 2131351028, %v5739
    %v5749 = vshrl.u32 2102212464, %v5740
    %v5750 = vor.u32 %v5748, %v5749
    %v5751 = vshll.u32 2102212464, %v5739
    %v5752 = vshrl.u32 920167782, %v5740
    %v5753 = vor.u32 %v5751, %v5752
    %v5754 = vshll.u32 920167782, %v5739
    %v5755 = vshrl.u32 1326507024, %v5740
    %v5756 = vor.u32 %v5754, %v5755
    %vm5757 = vcmp.lt.s32.totalorder %v5738, 1
    %vm5758 = vcmp.lt.s32.totalorder %v5738, 2
    %vm5759 = vcmp.lt.s32.totalorder %v5738, 3
    %vm5760 = vcmp.lt.s32.totalorder %v5738, 4
    %v5761 = vsel %vm5757, %v5741, %v5744
    %v5762 = vsel %vm5760, %v5750, 2102212464
    %v5763 = vsel %vm5759, %v5747, %v5762
    %v5764 = vsel %vm5758, %v5761, %v5763
    %v5765 = vsel %vm5757, %v5744, %v5747
    %v5766 = vsel %vm5760, %v5753, 920167782
    %v5767 = vsel %vm5759, %v5750, %v5766
    %v5768 = vsel %vm5758, %v5765, %v5767
    %v5769 = vsel %vm5757, %v5747, %v5750
    %v5770 = vsel %vm5760, %v5756, 1326507024
    %v5771 = vsel %vm5759, %v5753, %v5770
    %v5772 = vsel %vm5758, %v5769, %v5771
    %v5773 = vshll.u32 %v5733, 8
    %v5774 = vmul.u32.u64.compose %v5773, %v5772
    %v5775 = vextract.low.u32 %v5774
    %v5776 = vextract.high.u32 %v5774
    %v5777 = vmul.u32.u64.compose %v5773, %v5768
    %v5778 = vextract.low.u32 %v5777
    %v5779 = vextract.high.u32 %v5777
    %v5780 = vmul.u32 %v5773, %v5764
    %v5781 = vadd.s32 %v5776, %v5778
    %vm5782 = vc.u32 %v5776, %v5778
    %v5783 = vadd.s32 %v5779, 1
    %v5784 = vsel %vm5782, %v5783, %v5779
    %v5785 = vadd.s32 %v5780, %v5784
    %v5786 = vadd.s32 %v5785, 536870912
    %v5787 = vshrl.u32 %v5786, 30
    %v5788 = vshll.u32 %v5787, 30
    %v5789 = vsub.s32 %v5785, %v5788
    %vm5790 = vcmp.lt.s32.totalorder %v5789, 0
    %v5791 = vsub.s32 0, %v5789
    %v5792 = vsel %vm5790, %v5791, %v5789
    %v5793 = vclz %v5792
    %v5794 = vsub.s32 %v5793, 2
    %vm5795 = vcmp.gt.s32.totalorder 0, %v5794
    %v5796 = vsel %vm5795, 0, %v5794
    %v5797 = vsub.s32 32, %v5796
    %v5798 = vshll.u32 %v5789, %v5796
    %v5799 = vshrl.u32 %v5781, %v5797
    %v5800 = vor.u32 %v5798, %v5799
    %v5801 = vsub.s32 4294967266, %v5796
    %v5802 = vadd.s32 %v5801, 127
    %v5803 = vshll.u32 %v5802, 23
    %v5804 = vor.u32 4788187, %v5803
    %v5805 = vand.u32 2147483647, %v5804
    %v5807 = vcvt.s32.f32 %v5800
    %v5808 = vmul.f32 %v5807, %v5805
    %v5809 = vxor.u32 %v5808, 2147483648
    %v5810 = vsel %vm5727, %v5809, %v5808
    %v5811 = vsub.s32 4, %v5787
    %v5812 = vsel %vm5727, %v5811, %v5787
    %v5813 = vsel %vm5726, %v5701, %v5810
    %v5814 = vsel %vm5726, 0, %v5812
    %v5815 = vcosq.f32.pop %v5813
    %v5816 = vsinq.f32.pop %v5813
    %vm5817 = vweird.f32 %v5701
    %v5818 = vadd.s32 %v5814, 3
    %v5819 = vand.u32 %v5818, 3
    %vm5820 = vcmp.lt.s32.totalorder %v5819, 2
    %vm5821 = vcmp.eq.s32.totalorder %v5819, 0
    %v5822 = vxor.u32 %v5816, 2147483648
    %v5823 = vsel %vm5821, %v5815, %v5822
    %vm5824 = vcmp.eq.s32.totalorder %v5819, 2
    %v5825 = vxor.u32 %v5815, 2147483648
    %v5826 = vsel %vm5824, %v5825, %v5816
    %v5827 = vsel %vm5820, %v5823, %v5826
    %v5828 = vsel %vm5817, nan, %v5827
    %v5829 = vand.u32 2147483647, %v5702
    %vm5830 = vcmp.le.f32.partialorder %v5829, 0.7853982
    %vm5831 = vcmp.lt.s32.totalorder %v5702, 0
    %v5832 = vand.u32 %v5702, 2139095040
    %v5833 = vshrl.u32 %v5832, 23
    %v5834 = vsub.s32 %v5833, 127
    %v5835 = vand.u32 2147483647, %v5702
    %v5836 = vand.u32 %v5835, 8388607
    %v5837 = vor.u32 %v5836, 8388608
    %v5838 = vsub.s32 0, %v5837
    %v5839 = vadd.s32 %v5834, 1
    %vm5840 = vcmp.gt.s32.totalorder %v5839, 0
    %v5841 = vsel %vm5840, %v5839, 0
    %v5842 = vshrl.u32 %v5841, 5
    %v5843 = vand.u32 %v5841, 31
    %v5844 = vsub.s32 32, %v5843
    %v5845 = vshrl.u32 683565275, %v5844
    %v5846 = vshll.u32 683565275, %v5843
    %v5847 = vshrl.u32 2475754826, %v5844
    %v5848 = vor.u32 %v5846, %v5847
    %v5849 = vshll.u32 2475754826, %v5843
    %v5850 = vshrl.u32 2131351028, %v5844
    %v5851 = vor.u32 %v5849, %v5850
    %v5852 = vshll.u32 2131351028, %v5843
    %v5853 = vshrl.u32 2102212464, %v5844
    %v5854 = vor.u32 %v5852, %v5853
    %v5855 = vshll.u32 2102212464, %v5843
    %v5856 = vshrl.u32 920167782, %v5844
    %v5857 = vor.u32 %v5855, %v5856
    %v5858 = vshll.u32 920167782, %v5843
    %v5859 = vshrl.u32 1326507024, %v5844
    %v5860 = vor.u32 %v5858, %v5859
    %vm5861 = vcmp.lt.s32.totalorder %v5842, 1
    %vm5862 = vcmp.lt.s32.totalorder %v5842, 2
    %vm5863 = vcmp.lt.s32.totalorder %v5842, 3
    %vm5864 = vcmp.lt.s32.totalorder %v5842, 4
    %v5865 = vsel %vm5861, %v5845, %v5848
    %v5866 = vsel %vm5864, %v5854, 2102212464
    %v5867 = vsel %vm5863, %v5851, %v5866
    %v5868 = vsel %vm5862, %v5865, %v5867
    %v5869 = vsel %vm5861, %v5848, %v5851
    %v5870 = vsel %vm5864, %v5857, 920167782
    %v5871 = vsel %vm5863, %v5854, %v5870
    %v5872 = vsel %vm5862, %v5869, %v5871
    %v5873 = vsel %vm5861, %v5851, %v5854
    %v5874 = vsel %vm5864, %v5860, 1326507024
    %v5875 = vsel %vm5863, %v5857, %v5874
    %v5876 = vsel %vm5862, %v5873, %v5875
    %v5877 = vshll.u32 %v5837, 8
    %v5878 = vmul.u32.u64.compose %v5877, %v5876
    %v5879 = vextract.low.u32 %v5878
    %v5880 = vextract.high.u32 %v5878
    %v5881 = vmul.u32.u64.compose %v5877, %v5872
    %v5882 = vextract.low.u32 %v5881
    %v5883 = vextract.high.u32 %v5881
    %v5884 = vmul.u32 %v5877, %v5868
    %v5885 = vadd.s32 %v5880, %v5882
    %vm5886 = vc.u32 %v5880, %v5882
    %v5887 = vadd.s32 %v5883, 1
    %v5888 = vsel %vm5886, %v5887, %v5883
    %v5889 = vadd.s32 %v5884, %v5888
    %v5890 = vadd.s32 %v5889, 536870912
    %v5891 = vshrl.u32 %v5890, 30
    %v5892 = vshll.u32 %v5891, 30
    %v5893 = vsub.s32 %v5889, %v5892
    %vm5894 = vcmp.lt.s32.totalorder %v5893, 0
    %v5895 = vsub.s32 0, %v5893
    %v5896 = vsel %vm5894, %v5895, %v5893
    %v5897 = vclz %v5896
    %v5898 = vsub.s32 %v5897, 2
    %vm5899 = vcmp.gt.s32.totalorder 0, %v5898
    %v5900 = vsel %vm5899, 0, %v5898
    %v5901 = vsub.s32 32, %v5900
    %v5902 = vshll.u32 %v5893, %v5900
    %v5903 = vshrl.u32 %v5885, %v5901
    %v5904 = vor.u32 %v5902, %v5903
    %v5905 = vsub.s32 4294967266, %v5900
    %v5906 = vadd.s32 %v5905, 127
    %v5907 = vshll.u32 %v5906, 23
    %v5908 = vor.u32 4788187, %v5907
    %v5909 = vand.u32 2147483647, %v5908
    %v5911 = vcvt.s32.f32 %v5904
    %v5912 = vmul.f32 %v5911, %v5909
    %v5913 = vxor.u32 %v5912, 2147483648
    %v5914 = vsel %vm5831, %v5913, %v5912
    %v5915 = vsub.s32 4, %v5891
    %v5916 = vsel %vm5831, %v5915, %v5891
    %v5917 = vsel %vm5830, %v5702, %v5914
    %v5918 = vsel %vm5830, 0, %v5916
    %v5919 = vcosq.f32.pop %v5917
    %v5920 = vsinq.f32.pop %v5917
    %vm5921 = vweird.f32 %v5702
    %v5922 = vadd.s32 %v5918, 3
    %v5923 = vand.u32 %v5922, 3
    %vm5924 = vcmp.lt.s32.totalorder %v5923, 2
    %vm5925 = vcmp.eq.s32.totalorder %v5923, 0
    %v5926 = vxor.u32 %v5920, 2147483648
    %v5927 = vsel %vm5925, %v5919, %v5926
    %vm5928 = vcmp.eq.s32.totalorder %v5923, 2
    %v5929 = vxor.u32 %v5919, 2147483648
    %v5930 = vsel %vm5928, %v5929, %v5920
    %v5931 = vsel %vm5924, %v5927, %v5930
    %v5932 = vsel %vm5921, nan, %v5931
    %v5933 = vand.u32 2147483647, %v5703
    %vm5934 = vcmp.le.f32.partialorder %v5933, 0.7853982
    %vm5935 = vcmp.lt.s32.totalorder %v5703, 0
    %v5936 = vand.u32 %v5703, 2139095040
    %v5937 = vshrl.u32 %v5936, 23
    %v5938 = vsub.s32 %v5937, 127
    %v5939 = vand.u32 2147483647, %v5703
    %v5940 = vand.u32 %v5939, 8388607
    %v5941 = vor.u32 %v5940, 8388608
    %v5942 = vsub.s32 0, %v5941
    %v5943 = vadd.s32 %v5938, 1
    %vm5944 = vcmp.gt.s32.totalorder %v5943, 0
    %v5945 = vsel %vm5944, %v5943, 0
    %v5946 = vshrl.u32 %v5945, 5
    %v5947 = vand.u32 %v5945, 31
    %v5948 = vsub.s32 32, %v5947
    %v5949 = vshrl.u32 683565275, %v5948
    %v5950 = vshll.u32 683565275, %v5947
    %v5951 = vshrl.u32 2475754826, %v5948
    %v5952 = vor.u32 %v5950, %v5951
    %v5953 = vshll.u32 2475754826, %v5947
    %v5954 = vshrl.u32 2131351028, %v5948
    %v5955 = vor.u32 %v5953, %v5954
    %v5956 = vshll.u32 2131351028, %v5947
    %v5957 = vshrl.u32 2102212464, %v5948
    %v5958 = vor.u32 %v5956, %v5957
    %v5959 = vshll.u32 2102212464, %v5947
    %v5960 = vshrl.u32 920167782, %v5948
    %v5961 = vor.u32 %v5959, %v5960
    %v5962 = vshll.u32 920167782, %v5947
    %v5963 = vshrl.u32 1326507024, %v5948
    %v5964 = vor.u32 %v5962, %v5963
    %vm5965 = vcmp.lt.s32.totalorder %v5946, 1
    %vm5966 = vcmp.lt.s32.totalorder %v5946, 2
    %vm5967 = vcmp.lt.s32.totalorder %v5946, 3
    %vm5968 = vcmp.lt.s32.totalorder %v5946, 4
    %v5969 = vsel %vm5965, %v5949, %v5952
    %v5970 = vsel %vm5968, %v5958, 2102212464
    %v5971 = vsel %vm5967, %v5955, %v5970
    %v5972 = vsel %vm5966, %v5969, %v5971
    %v5973 = vsel %vm5965, %v5952, %v5955
    %v5974 = vsel %vm5968, %v5961, 920167782
    %v5975 = vsel %vm5967, %v5958, %v5974
    %v5976 = vsel %vm5966, %v5973, %v5975
    %v5977 = vsel %vm5965, %v5955, %v5958
    %v5978 = vsel %vm5968, %v5964, 1326507024
    %v5979 = vsel %vm5967, %v5961, %v5978
    %v5980 = vsel %vm5966, %v5977, %v5979
    %v5981 = vshll.u32 %v5941, 8
    %v5982 = vmul.u32.u64.compose %v5981, %v5980
    %v5983 = vextract.low.u32 %v5982
    %v5984 = vextract.high.u32 %v5982
    %v5985 = vmul.u32.u64.compose %v5981, %v5976
    %v5986 = vextract.low.u32 %v5985
    %v5987 = vextract.high.u32 %v5985
    %v5988 = vmul.u32 %v5981, %v5972
    %v5989 = vadd.s32 %v5984, %v5986
    %vm5990 = vc.u32 %v5984, %v5986
    %v5991 = vadd.s32 %v5987, 1
    %v5992 = vsel %vm5990, %v5991, %v5987
    %v5993 = vadd.s32 %v5988, %v5992
    %v5994 = vadd.s32 %v5993, 536870912
    %v5995 = vshrl.u32 %v5994, 30
    %v5996 = vshll.u32 %v5995, 30
    %v5997 = vsub.s32 %v5993, %v5996
    %vm5998 = vcmp.lt.s32.totalorder %v5997, 0
    %v5999 = vsub.s32 0, %v5997
    %v6000 = vsel %vm5998, %v5999, %v5997
    %v6001 = vclz %v6000
    %v6002 = vsub.s32 %v6001, 2
    %vm6003 = vcmp.gt.s32.totalorder 0, %v6002
    %v6004 = vsel %vm6003, 0, %v6002
    %v6005 = vsub.s32 32, %v6004
    %v6006 = vshll.u32 %v5997, %v6004
    %v6007 = vshrl.u32 %v5989, %v6005
    %v6008 = vor.u32 %v6006, %v6007
    %v6009 = vsub.s32 4294967266, %v6004
    %v6010 = vadd.s32 %v6009, 127
    %v6011 = vshll.u32 %v6010, 23
    %v6012 = vor.u32 4788187, %v6011
    %v6013 = vand.u32 2147483647, %v6012
    %v6015 = vcvt.s32.f32 %v6008
    %v6016 = vmul.f32 %v6015, %v6013
    %v6017 = vxor.u32 %v6016, 2147483648
    %v6018 = vsel %vm5935, %v6017, %v6016
    %v6019 = vsub.s32 4, %v5995
    %v6020 = vsel %vm5935, %v6019, %v5995
    %v6021 = vsel %vm5934, %v5703, %v6018
    %v6022 = vsel %vm5934, 0, %v6020
    %v6023 = vcosq.f32.pop %v6021
    %v6024 = vsinq.f32.pop %v6021
    %vm6025 = vweird.f32 %v5703
    %v6026 = vadd.s32 %v6022, 3
    %v6027 = vand.u32 %v6026, 3
    %vm6028 = vcmp.lt.s32.totalorder %v6027, 2
    %vm6029 = vcmp.eq.s32.totalorder %v6027, 0
    %v6030 = vxor.u32 %v6024, 2147483648
    %v6031 = vsel %vm6029, %v6023, %v6030
    %vm6032 = vcmp.eq.s32.totalorder %v6027, 2
    %v6033 = vxor.u32 %v6023, 2147483648
    %v6034 = vsel %vm6032, %v6033, %v6024
    %v6035 = vsel %vm6028, %v6031, %v6034
    %v6036 = vsel %vm6025, nan, %v6035
    %v6037 = vand.u32 2147483647, %v5704
    %vm6038 = vcmp.le.f32.partialorder %v6037, 0.7853982
    %vm6039 = vcmp.lt.s32.totalorder %v5704, 0
    %v6040 = vand.u32 %v5704, 2139095040
    %v6041 = vshrl.u32 %v6040, 23
    %v6042 = vsub.s32 %v6041, 127
    %v6043 = vand.u32 2147483647, %v5704
    %v6044 = vand.u32 %v6043, 8388607
    %v6045 = vor.u32 %v6044, 8388608
    %v6046 = vsub.s32 0, %v6045
    %v6047 = vadd.s32 %v6042, 1
    %vm6048 = vcmp.gt.s32.totalorder %v6047, 0
    %v6049 = vsel %vm6048, %v6047, 0
    %v6050 = vshrl.u32 %v6049, 5
    %v6051 = vand.u32 %v6049, 31
    %v6052 = vsub.s32 32, %v6051
    %v6053 = vshrl.u32 683565275, %v6052
    %v6054 = vshll.u32 683565275, %v6051
    %v6055 = vshrl.u32 2475754826, %v6052
    %v6056 = vor.u32 %v6054, %v6055
    %v6057 = vshll.u32 2475754826, %v6051
    %v6058 = vshrl.u32 2131351028, %v6052
    %v6059 = vor.u32 %v6057, %v6058
    %v6060 = vshll.u32 2131351028, %v6051
    %v6061 = vshrl.u32 2102212464, %v6052
    %v6062 = vor.u32 %v6060, %v6061
    %v6063 = vshll.u32 2102212464, %v6051
    %v6064 = vshrl.u32 920167782, %v6052
    %v6065 = vor.u32 %v6063, %v6064
    %v6066 = vshll.u32 920167782, %v6051
    %v6067 = vshrl.u32 1326507024, %v6052
    %v6068 = vor.u32 %v6066, %v6067
    %vm6069 = vcmp.lt.s32.totalorder %v6050, 1
    %vm6070 = vcmp.lt.s32.totalorder %v6050, 2
    %vm6071 = vcmp.lt.s32.totalorder %v6050, 3
    %vm6072 = vcmp.lt.s32.totalorder %v6050, 4
    %v6073 = vsel %vm6069, %v6053, %v6056
    %v6074 = vsel %vm6072, %v6062, 2102212464
    %v6075 = vsel %vm6071, %v6059, %v6074
    %v6076 = vsel %vm6070, %v6073, %v6075
    %v6077 = vsel %vm6069, %v6056, %v6059
    %v6078 = vsel %vm6072, %v6065, 920167782
    %v6079 = vsel %vm6071, %v6062, %v6078
    %v6080 = vsel %vm6070, %v6077, %v6079
    %v6081 = vsel %vm6069, %v6059, %v6062
    %v6082 = vsel %vm6072, %v6068, 1326507024
    %v6083 = vsel %vm6071, %v6065, %v6082
    %v6084 = vsel %vm6070, %v6081, %v6083
    %v6085 = vshll.u32 %v6045, 8
    %v6086 = vmul.u32.u64.compose %v6085, %v6084
    %v6087 = vextract.low.u32 %v6086
    %v6088 = vextract.high.u32 %v6086
    %v6089 = vmul.u32.u64.compose %v6085, %v6080
    %v6090 = vextract.low.u32 %v6089
    %v6091 = vextract.high.u32 %v6089
    %v6092 = vmul.u32 %v6085, %v6076
    %v6093 = vadd.s32 %v6088, %v6090
    %vm6094 = vc.u32 %v6088, %v6090
    %v6095 = vadd.s32 %v6091, 1
    %v6096 = vsel %vm6094, %v6095, %v6091
    %v6097 = vadd.s32 %v6092, %v6096
    %v6098 = vadd.s32 %v6097, 536870912
    %v6099 = vshrl.u32 %v6098, 30
    %v6100 = vshll.u32 %v6099, 30
    %v6101 = vsub.s32 %v6097, %v6100
    %vm6102 = vcmp.lt.s32.totalorder %v6101, 0
    %v6103 = vsub.s32 0, %v6101
    %v6104 = vsel %vm6102, %v6103, %v6101
    %v6105 = vclz %v6104
    %v6106 = vsub.s32 %v6105, 2
    %vm6107 = vcmp.gt.s32.totalorder 0, %v6106
    %v6108 = vsel %vm6107, 0, %v6106
    %v6109 = vsub.s32 32, %v6108
    %v6110 = vshll.u32 %v6101, %v6108
    %v6111 = vshrl.u32 %v6093, %v6109
    %v6112 = vor.u32 %v6110, %v6111
    %v6113 = vsub.s32 4294967266, %v6108
    %v6114 = vadd.s32 %v6113, 127
    %v6115 = vshll.u32 %v6114, 23
    %v6116 = vor.u32 4788187, %v6115
    %v6117 = vand.u32 2147483647, %v6116
    %v6119 = vcvt.s32.f32 %v6112
    %v6120 = vmul.f32 %v6119, %v6117
    %v6121 = vxor.u32 %v6120, 2147483648
    %v6122 = vsel %vm6039, %v6121, %v6120
    %v6123 = vsub.s32 4, %v6099
    %v6124 = vsel %vm6039, %v6123, %v6099
    %v6125 = vsel %vm6038, %v5704, %v6122
    %v6126 = vsel %vm6038, 0, %v6124
    %v6127 = vcosq.f32.pop %v6125
    %v6128 = vsinq.f32.pop %v6125
    %vm6129 = vweird.f32 %v5704
    %v6130 = vadd.s32 %v6126, 3
    %v6131 = vand.u32 %v6130, 3
    %vm6132 = vcmp.lt.s32.totalorder %v6131, 2
    %vm6133 = vcmp.eq.s32.totalorder %v6131, 0
    %v6134 = vxor.u32 %v6128, 2147483648
    %v6135 = vsel %vm6133, %v6127, %v6134
    %vm6136 = vcmp.eq.s32.totalorder %v6131, 2
    %v6137 = vxor.u32 %v6127, 2147483648
    %v6138 = vsel %vm6136, %v6137, %v6128
    %v6139 = vsel %vm6132, %v6135, %v6138
    %v6140 = vsel %vm6129, nan, %v6139
    %v6141 = vand.u32 2147483647, %v5705
    %vm6142 = vcmp.le.f32.partialorder %v6141, 0.7853982
    %vm6143 = vcmp.lt.s32.totalorder %v5705, 0
    %v6144 = vand.u32 %v5705, 2139095040
    %v6145 = vshrl.u32 %v6144, 23
    %v6146 = vsub.s32 %v6145, 127
    %v6147 = vand.u32 2147483647, %v5705
    %v6148 = vand.u32 %v6147, 8388607
    %v6149 = vor.u32 %v6148, 8388608
    %v6150 = vsub.s32 0, %v6149
    %v6151 = vadd.s32 %v6146, 1
    %vm6152 = vcmp.gt.s32.totalorder %v6151, 0
    %v6153 = vsel %vm6152, %v6151, 0
    %v6154 = vshrl.u32 %v6153, 5
    %v6155 = vand.u32 %v6153, 31
    %v6156 = vsub.s32 32, %v6155
    %v6157 = vshrl.u32 683565275, %v6156
    %v6158 = vshll.u32 683565275, %v6155
    %v6159 = vshrl.u32 2475754826, %v6156
    %v6160 = vor.u32 %v6158, %v6159
    %v6161 = vshll.u32 2475754826, %v6155
    %v6162 = vshrl.u32 2131351028, %v6156
    %v6163 = vor.u32 %v6161, %v6162
    %v6164 = vshll.u32 2131351028, %v6155
    %v6165 = vshrl.u32 2102212464, %v6156
    %v6166 = vor.u32 %v6164, %v6165
    %v6167 = vshll.u32 2102212464, %v6155
    %v6168 = vshrl.u32 920167782, %v6156
    %v6169 = vor.u32 %v6167, %v6168
    %v6170 = vshll.u32 920167782, %v6155
    %v6171 = vshrl.u32 1326507024, %v6156
    %v6172 = vor.u32 %v6170, %v6171
    %vm6173 = vcmp.lt.s32.totalorder %v6154, 1
    %vm6174 = vcmp.lt.s32.totalorder %v6154, 2
    %vm6175 = vcmp.lt.s32.totalorder %v6154, 3
    %vm6176 = vcmp.lt.s32.totalorder %v6154, 4
    %v6177 = vsel %vm6173, %v6157, %v6160
    %v6178 = vsel %vm6176, %v6166, 2102212464
    %v6179 = vsel %vm6175, %v6163, %v6178
    %v6180 = vsel %vm6174, %v6177, %v6179
    %v6181 = vsel %vm6173, %v6160, %v6163
    %v6182 = vsel %vm6176, %v6169, 920167782
    %v6183 = vsel %vm6175, %v6166, %v6182
    %v6184 = vsel %vm6174, %v6181, %v6183
    %v6185 = vsel %vm6173, %v6163, %v6166
    %v6186 = vsel %vm6176, %v6172, 1326507024
    %v6187 = vsel %vm6175, %v6169, %v6186
    %v6188 = vsel %vm6174, %v6185, %v6187
    %v6189 = vshll.u32 %v6149, 8
    %v6190 = vmul.u32.u64.compose %v6189, %v6188
    %v6191 = vextract.low.u32 %v6190
    %v6192 = vextract.high.u32 %v6190
    %v6193 = vmul.u32.u64.compose %v6189, %v6184
    %v6194 = vextract.low.u32 %v6193
    %v6195 = vextract.high.u32 %v6193
    %v6196 = vmul.u32 %v6189, %v6180
    %v6197 = vadd.s32 %v6192, %v6194
    %vm6198 = vc.u32 %v6192, %v6194
    %v6199 = vadd.s32 %v6195, 1
    %v6200 = vsel %vm6198, %v6199, %v6195
    %v6201 = vadd.s32 %v6196, %v6200
    %v6202 = vadd.s32 %v6201, 536870912
    %v6203 = vshrl.u32 %v6202, 30
    %v6204 = vshll.u32 %v6203, 30
    %v6205 = vsub.s32 %v6201, %v6204
    %vm6206 = vcmp.lt.s32.totalorder %v6205, 0
    %v6207 = vsub.s32 0, %v6205
    %v6208 = vsel %vm6206, %v6207, %v6205
    %v6209 = vclz %v6208
    %v6210 = vsub.s32 %v6209, 2
    %vm6211 = vcmp.gt.s32.totalorder 0, %v6210
    %v6212 = vsel %vm6211, 0, %v6210
    %v6213 = vsub.s32 32, %v6212
    %v6214 = vshll.u32 %v6205, %v6212
    %v6215 = vshrl.u32 %v6197, %v6213
    %v6216 = vor.u32 %v6214, %v6215
    %v6217 = vsub.s32 4294967266, %v6212
    %v6218 = vadd.s32 %v6217, 127
    %v6219 = vshll.u32 %v6218, 23
    %v6220 = vor.u32 4788187, %v6219
    %v6221 = vand.u32 2147483647, %v6220
    %v6223 = vcvt.s32.f32 %v6216
    %v6224 = vmul.f32 %v6223, %v6221
    %v6225 = vxor.u32 %v6224, 2147483648
    %v6226 = vsel %vm6143, %v6225, %v6224
    %v6227 = vsub.s32 4, %v6203
    %v6228 = vsel %vm6143, %v6227, %v6203
    %v6229 = vsel %vm6142, %v5705, %v6226
    %v6230 = vsel %vm6142, 0, %v6228
    %v6231 = vcosq.f32.pop %v6229
    %v6232 = vsinq.f32.pop %v6229
    %vm6233 = vweird.f32 %v5705
    %v6234 = vadd.s32 %v6230, 3
    %v6235 = vand.u32 %v6234, 3
    %vm6236 = vcmp.lt.s32.totalorder %v6235, 2
    %vm6237 = vcmp.eq.s32.totalorder %v6235, 0
    %v6238 = vxor.u32 %v6232, 2147483648
    %v6239 = vsel %vm6237, %v6231, %v6238
    %vm6240 = vcmp.eq.s32.totalorder %v6235, 2
    %v6241 = vxor.u32 %v6231, 2147483648
    %v6242 = vsel %vm6240, %v6241, %v6232
    %v6243 = vsel %vm6236, %v6239, %v6242
    %v6244 = vsel %vm6233, nan, %v6243
    %v6245 = vand.u32 2147483647, %v5706
    %vm6246 = vcmp.le.f32.partialorder %v6245, 0.7853982
    %vm6247 = vcmp.lt.s32.totalorder %v5706, 0
    %v6248 = vand.u32 %v5706, 2139095040
    %v6249 = vshrl.u32 %v6248, 23
    %v6250 = vsub.s32 %v6249, 127
    %v6251 = vand.u32 2147483647, %v5706
    %v6252 = vand.u32 %v6251, 8388607
    %v6253 = vor.u32 %v6252, 8388608
    %v6254 = vsub.s32 0, %v6253
    %v6255 = vadd.s32 %v6250, 1
    %vm6256 = vcmp.gt.s32.totalorder %v6255, 0
    %v6257 = vsel %vm6256, %v6255, 0
    %v6258 = vshrl.u32 %v6257, 5
    %v6259 = vand.u32 %v6257, 31
    %v6260 = vsub.s32 32, %v6259
    %v6261 = vshrl.u32 683565275, %v6260
    %v6262 = vshll.u32 683565275, %v6259
    %v6263 = vshrl.u32 2475754826, %v6260
    %v6264 = vor.u32 %v6262, %v6263
    %v6265 = vshll.u32 2475754826, %v6259
    %v6266 = vshrl.u32 2131351028, %v6260
    %v6267 = vor.u32 %v6265, %v6266
    %v6268 = vshll.u32 2131351028, %v6259
    %v6269 = vshrl.u32 2102212464, %v6260
    %v6270 = vor.u32 %v6268, %v6269
    %v6271 = vshll.u32 2102212464, %v6259
    %v6272 = vshrl.u32 920167782, %v6260
    %v6273 = vor.u32 %v6271, %v6272
    %v6274 = vshll.u32 920167782, %v6259
    %v6275 = vshrl.u32 1326507024, %v6260
    %v6276 = vor.u32 %v6274, %v6275
    %vm6277 = vcmp.lt.s32.totalorder %v6258, 1
    %vm6278 = vcmp.lt.s32.totalorder %v6258, 2
    %vm6279 = vcmp.lt.s32.totalorder %v6258, 3
    %vm6280 = vcmp.lt.s32.totalorder %v6258, 4
    %v6281 = vsel %vm6277, %v6261, %v6264
    %v6282 = vsel %vm6280, %v6270, 2102212464
    %v6283 = vsel %vm6279, %v6267, %v6282
    %v6284 = vsel %vm6278, %v6281, %v6283
    %v6285 = vsel %vm6277, %v6264, %v6267
    %v6286 = vsel %vm6280, %v6273, 920167782
    %v6287 = vsel %vm6279, %v6270, %v6286
    %v6288 = vsel %vm6278, %v6285, %v6287
    %v6289 = vsel %vm6277, %v6267, %v6270
    %v6290 = vsel %vm6280, %v6276, 1326507024
    %v6291 = vsel %vm6279, %v6273, %v6290
    %v6292 = vsel %vm6278, %v6289, %v6291
    %v6293 = vshll.u32 %v6253, 8
    %v6294 = vmul.u32.u64.compose %v6293, %v6292
    %v6295 = vextract.low.u32 %v6294
    %v6296 = vextract.high.u32 %v6294
    %v6297 = vmul.u32.u64.compose %v6293, %v6288
    %v6298 = vextract.low.u32 %v6297
    %v6299 = vextract.high.u32 %v6297
    %v6300 = vmul.u32 %v6293, %v6284
    %v6301 = vadd.s32 %v6296, %v6298
    %vm6302 = vc.u32 %v6296, %v6298
    %v6303 = vadd.s32 %v6299, 1
    %v6304 = vsel %vm6302, %v6303, %v6299
    %v6305 = vadd.s32 %v6300, %v6304
    %v6306 = vadd.s32 %v6305, 536870912
    %v6307 = vshrl.u32 %v6306, 30
    %v6308 = vshll.u32 %v6307, 30
    %v6309 = vsub.s32 %v6305, %v6308
    %vm6310 = vcmp.lt.s32.totalorder %v6309, 0
    %v6311 = vsub.s32 0, %v6309
    %v6312 = vsel %vm6310, %v6311, %v6309
    %v6313 = vclz %v6312
    %v6314 = vsub.s32 %v6313, 2
    %vm6315 = vcmp.gt.s32.totalorder 0, %v6314
    %v6316 = vsel %vm6315, 0, %v6314
    %v6317 = vsub.s32 32, %v6316
    %v6318 = vshll.u32 %v6309, %v6316
    %v6319 = vshrl.u32 %v6301, %v6317
    %v6320 = vor.u32 %v6318, %v6319
    %v6321 = vsub.s32 4294967266, %v6316
    %v6322 = vadd.s32 %v6321, 127
    %v6323 = vshll.u32 %v6322, 23
    %v6324 = vor.u32 4788187, %v6323
    %v6325 = vand.u32 2147483647, %v6324
    %v6327 = vcvt.s32.f32 %v6320
    %v6328 = vmul.f32 %v6327, %v6325
    %v6329 = vxor.u32 %v6328, 2147483648
    %v6330 = vsel %vm6247, %v6329, %v6328
    %v6331 = vsub.s32 4, %v6307
    %v6332 = vsel %vm6247, %v6331, %v6307
    %v6333 = vsel %vm6246, %v5706, %v6330
    %v6334 = vsel %vm6246, 0, %v6332
    %v6335 = vcosq.f32.pop %v6333
    %v6336 = vsinq.f32.pop %v6333
    %vm6337 = vweird.f32 %v5706
    %v6338 = vadd.s32 %v6334, 3
    %v6339 = vand.u32 %v6338, 3
    %vm6340 = vcmp.lt.s32.totalorder %v6339, 2
    %vm6341 = vcmp.eq.s32.totalorder %v6339, 0
    %v6342 = vxor.u32 %v6336, 2147483648
    %v6343 = vsel %vm6341, %v6335, %v6342
    %vm6344 = vcmp.eq.s32.totalorder %v6339, 2
    %v6345 = vxor.u32 %v6335, 2147483648
    %v6346 = vsel %vm6344, %v6345, %v6336
    %v6347 = vsel %vm6340, %v6343, %v6346
    %v6348 = vsel %vm6337, nan, %v6347
    %v6349 = vand.u32 2147483647, %v5707
    %vm6350 = vcmp.le.f32.partialorder %v6349, 0.7853982
    %vm6351 = vcmp.lt.s32.totalorder %v5707, 0
    %v6352 = vand.u32 %v5707, 2139095040
    %v6353 = vshrl.u32 %v6352, 23
    %v6354 = vsub.s32 %v6353, 127
    %v6355 = vand.u32 2147483647, %v5707
    %v6356 = vand.u32 %v6355, 8388607
    %v6357 = vor.u32 %v6356, 8388608
    %v6358 = vsub.s32 0, %v6357
    %v6359 = vadd.s32 %v6354, 1
    %vm6360 = vcmp.gt.s32.totalorder %v6359, 0
    %v6361 = vsel %vm6360, %v6359, 0
    %v6362 = vshrl.u32 %v6361, 5
    %v6363 = vand.u32 %v6361, 31
    %v6364 = vsub.s32 32, %v6363
    %v6365 = vshrl.u32 683565275, %v6364
    %v6366 = vshll.u32 683565275, %v6363
    %v6367 = vshrl.u32 2475754826, %v6364
    %v6368 = vor.u32 %v6366, %v6367
    %v6369 = vshll.u32 2475754826, %v6363
    %v6370 = vshrl.u32 2131351028, %v6364
    %v6371 = vor.u32 %v6369, %v6370
    %v6372 = vshll.u32 2131351028, %v6363
    %v6373 = vshrl.u32 2102212464, %v6364
    %v6374 = vor.u32 %v6372, %v6373
    %v6375 = vshll.u32 2102212464, %v6363
    %v6376 = vshrl.u32 920167782, %v6364
    %v6377 = vor.u32 %v6375, %v6376
    %v6378 = vshll.u32 920167782, %v6363
    %v6379 = vshrl.u32 1326507024, %v6364
    %v6380 = vor.u32 %v6378, %v6379
    %vm6381 = vcmp.lt.s32.totalorder %v6362, 1
    %vm6382 = vcmp.lt.s32.totalorder %v6362, 2
    %vm6383 = vcmp.lt.s32.totalorder %v6362, 3
    %vm6384 = vcmp.lt.s32.totalorder %v6362, 4
    %v6385 = vsel %vm6381, %v6365, %v6368
    %v6386 = vsel %vm6384, %v6374, 2102212464
    %v6387 = vsel %vm6383, %v6371, %v6386
    %v6388 = vsel %vm6382, %v6385, %v6387
    %v6389 = vsel %vm6381, %v6368, %v6371
    %v6390 = vsel %vm6384, %v6377, 920167782
    %v6391 = vsel %vm6383, %v6374, %v6390
    %v6392 = vsel %vm6382, %v6389, %v6391
    %v6393 = vsel %vm6381, %v6371, %v6374
    %v6394 = vsel %vm6384, %v6380, 1326507024
    %v6395 = vsel %vm6383, %v6377, %v6394
    %v6396 = vsel %vm6382, %v6393, %v6395
    %v6397 = vshll.u32 %v6357, 8
    %v6398 = vmul.u32.u64.compose %v6397, %v6396
    %v6399 = vextract.low.u32 %v6398
    %v6400 = vextract.high.u32 %v6398
    %v6401 = vmul.u32.u64.compose %v6397, %v6392
    %v6402 = vextract.low.u32 %v6401
    %v6403 = vextract.high.u32 %v6401
    %v6404 = vmul.u32 %v6397, %v6388
    %v6405 = vadd.s32 %v6400, %v6402
    %vm6406 = vc.u32 %v6400, %v6402
    %v6407 = vadd.s32 %v6403, 1
    %v6408 = vsel %vm6406, %v6407, %v6403
    %v6409 = vadd.s32 %v6404, %v6408
    %v6410 = vadd.s32 %v6409, 536870912
    %v6411 = vshrl.u32 %v6410, 30
    %v6412 = vshll.u32 %v6411, 30
    %v6413 = vsub.s32 %v6409, %v6412
    %vm6414 = vcmp.lt.s32.totalorder %v6413, 0
    %v6415 = vsub.s32 0, %v6413
    %v6416 = vsel %vm6414, %v6415, %v6413
    %v6417 = vclz %v6416
    %v6418 = vsub.s32 %v6417, 2
    %vm6419 = vcmp.gt.s32.totalorder 0, %v6418
    %v6420 = vsel %vm6419, 0, %v6418
    %v6421 = vsub.s32 32, %v6420
    %v6422 = vshll.u32 %v6413, %v6420
    %v6423 = vshrl.u32 %v6405, %v6421
    %v6424 = vor.u32 %v6422, %v6423
    %v6425 = vsub.s32 4294967266, %v6420
    %v6426 = vadd.s32 %v6425, 127
    %v6427 = vshll.u32 %v6426, 23
    %v6428 = vor.u32 4788187, %v6427
    %v6429 = vand.u32 2147483647, %v6428
    %v6431 = vcvt.s32.f32 %v6424
    %v6432 = vmul.f32 %v6431, %v6429
    %v6433 = vxor.u32 %v6432, 2147483648
    %v6434 = vsel %vm6351, %v6433, %v6432
    %v6435 = vsub.s32 4, %v6411
    %v6436 = vsel %vm6351, %v6435, %v6411
    %v6437 = vsel %vm6350, %v5707, %v6434
    %v6438 = vsel %vm6350, 0, %v6436
    %v6439 = vcosq.f32.pop %v6437
    %v6440 = vsinq.f32.pop %v6437
    %vm6441 = vweird.f32 %v5707
    %v6442 = vadd.s32 %v6438, 3
    %v6443 = vand.u32 %v6442, 3
    %vm6444 = vcmp.lt.s32.totalorder %v6443, 2
    %vm6445 = vcmp.eq.s32.totalorder %v6443, 0
    %v6446 = vxor.u32 %v6440, 2147483648
    %v6447 = vsel %vm6445, %v6439, %v6446
    %vm6448 = vcmp.eq.s32.totalorder %v6443, 2
    %v6449 = vxor.u32 %v6439, 2147483648
    %v6450 = vsel %vm6448, %v6449, %v6440
    %v6451 = vsel %vm6444, %v6447, %v6450
    %v6452 = vsel %vm6441, nan, %v6451
    %v6453 = vand.u32 2147483647, %v5708
    %vm6454 = vcmp.le.f32.partialorder %v6453, 0.7853982
    %vm6455 = vcmp.lt.s32.totalorder %v5708, 0
    %v6456 = vand.u32 %v5708, 2139095040
    %v6457 = vshrl.u32 %v6456, 23
    %v6458 = vsub.s32 %v6457, 127
    %v6459 = vand.u32 2147483647, %v5708
    %v6460 = vand.u32 %v6459, 8388607
    %v6461 = vor.u32 %v6460, 8388608
    %v6462 = vsub.s32 0, %v6461
    %v6463 = vadd.s32 %v6458, 1
    %vm6464 = vcmp.gt.s32.totalorder %v6463, 0
    %v6465 = vsel %vm6464, %v6463, 0
    %v6466 = vshrl.u32 %v6465, 5
    %v6467 = vand.u32 %v6465, 31
    %v6468 = vsub.s32 32, %v6467
    %v6469 = vshrl.u32 683565275, %v6468
    %v6470 = vshll.u32 683565275, %v6467
    %v6471 = vshrl.u32 2475754826, %v6468
    %v6472 = vor.u32 %v6470, %v6471
    %v6473 = vshll.u32 2475754826, %v6467
    %v6474 = vshrl.u32 2131351028, %v6468
    %v6475 = vor.u32 %v6473, %v6474
    %v6476 = vshll.u32 2131351028, %v6467
    %v6477 = vshrl.u32 2102212464, %v6468
    %v6478 = vor.u32 %v6476, %v6477
    %v6479 = vshll.u32 2102212464, %v6467
    %v6480 = vshrl.u32 920167782, %v6468
    %v6481 = vor.u32 %v6479, %v6480
    %v6482 = vshll.u32 920167782, %v6467
    %v6483 = vshrl.u32 1326507024, %v6468
    %v6484 = vor.u32 %v6482, %v6483
    %vm6485 = vcmp.lt.s32.totalorder %v6466, 1
    %vm6486 = vcmp.lt.s32.totalorder %v6466, 2
    %vm6487 = vcmp.lt.s32.totalorder %v6466, 3
    %vm6488 = vcmp.lt.s32.totalorder %v6466, 4
    %v6489 = vsel %vm6485, %v6469, %v6472
    %v6490 = vsel %vm6488, %v6478, 2102212464
    %v6491 = vsel %vm6487, %v6475, %v6490
    %v6492 = vsel %vm6486, %v6489, %v6491
    %v6493 = vsel %vm6485, %v6472, %v6475
    %v6494 = vsel %vm6488, %v6481, 920167782
    %v6495 = vsel %vm6487, %v6478, %v6494
    %v6496 = vsel %vm6486, %v6493, %v6495
    %v6497 = vsel %vm6485, %v6475, %v6478
    %v6498 = vsel %vm6488, %v6484, 1326507024
    %v6499 = vsel %vm6487, %v6481, %v6498
    %v6500 = vsel %vm6486, %v6497, %v6499
    %v6501 = vshll.u32 %v6461, 8
    %v6502 = vmul.u32.u64.compose %v6501, %v6500
    %v6503 = vextract.low.u32 %v6502
    %v6504 = vextract.high.u32 %v6502
    %v6505 = vmul.u32.u64.compose %v6501, %v6496
    %v6506 = vextract.low.u32 %v6505
    %v6507 = vextract.high.u32 %v6505
    %v6508 = vmul.u32 %v6501, %v6492
    %v6509 = vadd.s32 %v6504, %v6506
    %vm6510 = vc.u32 %v6504, %v6506
    %v6511 = vadd.s32 %v6507, 1
    %v6512 = vsel %vm6510, %v6511, %v6507
    %v6513 = vadd.s32 %v6508, %v6512
    %v6514 = vadd.s32 %v6513, 536870912
    %v6515 = vshrl.u32 %v6514, 30
    %v6516 = vshll.u32 %v6515, 30
    %v6517 = vsub.s32 %v6513, %v6516
    %vm6518 = vcmp.lt.s32.totalorder %v6517, 0
    %v6519 = vsub.s32 0, %v6517
    %v6520 = vsel %vm6518, %v6519, %v6517
    %v6521 = vclz %v6520
    %v6522 = vsub.s32 %v6521, 2
    %vm6523 = vcmp.gt.s32.totalorder 0, %v6522
    %v6524 = vsel %vm6523, 0, %v6522
    %v6525 = vsub.s32 32, %v6524
    %v6526 = vshll.u32 %v6517, %v6524
    %v6527 = vshrl.u32 %v6509, %v6525
    %v6528 = vor.u32 %v6526, %v6527
    %v6529 = vsub.s32 4294967266, %v6524
    %v6530 = vadd.s32 %v6529, 127
    %v6531 = vshll.u32 %v6530, 23
    %v6532 = vor.u32 4788187, %v6531
    %v6533 = vand.u32 2147483647, %v6532
    %v6535 = vcvt.s32.f32 %v6528
    %v6536 = vmul.f32 %v6535, %v6533
    %v6537 = vxor.u32 %v6536, 2147483648
    %v6538 = vsel %vm6455, %v6537, %v6536
    %v6539 = vsub.s32 4, %v6515
    %v6540 = vsel %vm6455, %v6539, %v6515
    %v6541 = vsel %vm6454, %v5708, %v6538
    %v6542 = vsel %vm6454, 0, %v6540
    %v6543 = vcosq.f32.pop %v6541
    %v6544 = vsinq.f32.pop %v6541
    %vm6545 = vweird.f32 %v5708
    %v6546 = vadd.s32 %v6542, 3
    %v6547 = vand.u32 %v6546, 3
    %vm6548 = vcmp.lt.s32.totalorder %v6547, 2
    %vm6549 = vcmp.eq.s32.totalorder %v6547, 0
    %v6550 = vxor.u32 %v6544, 2147483648
    %v6551 = vsel %vm6549, %v6543, %v6550
    %vm6552 = vcmp.eq.s32.totalorder %v6547, 2
    %v6553 = vxor.u32 %v6543, 2147483648
    %v6554 = vsel %vm6552, %v6553, %v6544
    %v6555 = vsel %vm6548, %v6551, %v6554
    %v6556 = vsel %vm6545, nan, %v6555
    %v6557 = vand.u32 2147483647, %v5709
    %vm6558 = vcmp.le.f32.partialorder %v6557, 0.7853982
    %vm6559 = vcmp.lt.s32.totalorder %v5709, 0
    %v6560 = vand.u32 %v5709, 2139095040
    %v6561 = vshrl.u32 %v6560, 23
    %v6562 = vsub.s32 %v6561, 127
    %v6563 = vand.u32 2147483647, %v5709
    %v6564 = vand.u32 %v6563, 8388607
    %v6565 = vor.u32 %v6564, 8388608
    %v6566 = vsub.s32 0, %v6565
    %v6567 = vadd.s32 %v6562, 1
    %vm6568 = vcmp.gt.s32.totalorder %v6567, 0
    %v6569 = vsel %vm6568, %v6567, 0
    %v6570 = vshrl.u32 %v6569, 5
    %v6571 = vand.u32 %v6569, 31
    %v6572 = vsub.s32 32, %v6571
    %v6573 = vshrl.u32 683565275, %v6572
    %v6574 = vshll.u32 683565275, %v6571
    %v6575 = vshrl.u32 2475754826, %v6572
    %v6576 = vor.u32 %v6574, %v6575
    %v6577 = vshll.u32 2475754826, %v6571
    %v6578 = vshrl.u32 2131351028, %v6572
    %v6579 = vor.u32 %v6577, %v6578
    %v6580 = vshll.u32 2131351028, %v6571
    %v6581 = vshrl.u32 2102212464, %v6572
    %v6582 = vor.u32 %v6580, %v6581
    %v6583 = vshll.u32 2102212464, %v6571
    %v6584 = vshrl.u32 920167782, %v6572
    %v6585 = vor.u32 %v6583, %v6584
    %v6586 = vshll.u32 920167782, %v6571
    %v6587 = vshrl.u32 1326507024, %v6572
    %v6588 = vor.u32 %v6586, %v6587
    %vm6589 = vcmp.lt.s32.totalorder %v6570, 1
    %vm6590 = vcmp.lt.s32.totalorder %v6570, 2
    %vm6591 = vcmp.lt.s32.totalorder %v6570, 3
    %vm6592 = vcmp.lt.s32.totalorder %v6570, 4
    %v6593 = vsel %vm6589, %v6573, %v6576
    %v6594 = vsel %vm6592, %v6582, 2102212464
    %v6595 = vsel %vm6591, %v6579, %v6594
    %v6596 = vsel %vm6590, %v6593, %v6595
    %v6597 = vsel %vm6589, %v6576, %v6579
    %v6598 = vsel %vm6592, %v6585, 920167782
    %v6599 = vsel %vm6591, %v6582, %v6598
    %v6600 = vsel %vm6590, %v6597, %v6599
    %v6601 = vsel %vm6589, %v6579, %v6582
    %v6602 = vsel %vm6592, %v6588, 1326507024
    %v6603 = vsel %vm6591, %v6585, %v6602
    %v6604 = vsel %vm6590, %v6601, %v6603
    %v6605 = vshll.u32 %v6565, 8
    %v6606 = vmul.u32.u64.compose %v6605, %v6604
    %v6607 = vextract.low.u32 %v6606
    %v6608 = vextract.high.u32 %v6606
    %v6609 = vmul.u32.u64.compose %v6605, %v6600
    %v6610 = vextract.low.u32 %v6609
    %v6611 = vextract.high.u32 %v6609
    %v6612 = vmul.u32 %v6605, %v6596
    %v6613 = vadd.s32 %v6608, %v6610
    %vm6614 = vc.u32 %v6608, %v6610
    %v6615 = vadd.s32 %v6611, 1
    %v6616 = vsel %vm6614, %v6615, %v6611
    %v6617 = vadd.s32 %v6612, %v6616
    %v6618 = vadd.s32 %v6617, 536870912
    %v6619 = vshrl.u32 %v6618, 30
    %v6620 = vshll.u32 %v6619, 30
    %v6621 = vsub.s32 %v6617, %v6620
    %vm6622 = vcmp.lt.s32.totalorder %v6621, 0
    %v6623 = vsub.s32 0, %v6621
    %v6624 = vsel %vm6622, %v6623, %v6621
    %v6625 = vclz %v6624
    %v6626 = vsub.s32 %v6625, 2
    %vm6627 = vcmp.gt.s32.totalorder 0, %v6626
    %v6628 = vsel %vm6627, 0, %v6626
    %v6629 = vsub.s32 32, %v6628
    %v6630 = vshll.u32 %v6621, %v6628
    %v6631 = vshrl.u32 %v6613, %v6629
    %v6632 = vor.u32 %v6630, %v6631
    %v6633 = vsub.s32 4294967266, %v6628
    %v6634 = vadd.s32 %v6633, 127
    %v6635 = vshll.u32 %v6634, 23
    %v6636 = vor.u32 4788187, %v6635
    %v6637 = vand.u32 2147483647, %v6636
    %v6639 = vcvt.s32.f32 %v6632
    %v6640 = vmul.f32 %v6639, %v6637
    %v6641 = vxor.u32 %v6640, 2147483648
    %v6642 = vsel %vm6559, %v6641, %v6640
    %v6643 = vsub.s32 4, %v6619
    %v6644 = vsel %vm6559, %v6643, %v6619
    %v6645 = vsel %vm6558, %v5709, %v6642
    %v6646 = vsel %vm6558, 0, %v6644
    %v6647 = vcosq.f32.pop %v6645
    %v6648 = vsinq.f32.pop %v6645
    %vm6649 = vweird.f32 %v5709
    %v6650 = vadd.s32 %v6646, 3
    %v6651 = vand.u32 %v6650, 3
    %vm6652 = vcmp.lt.s32.totalorder %v6651, 2
    %vm6653 = vcmp.eq.s32.totalorder %v6651, 0
    %v6654 = vxor.u32 %v6648, 2147483648
    %v6655 = vsel %vm6653, %v6647, %v6654
    %vm6656 = vcmp.eq.s32.totalorder %v6651, 2
    %v6657 = vxor.u32 %v6647, 2147483648
    %v6658 = vsel %vm6656, %v6657, %v6648
    %v6659 = vsel %vm6652, %v6655, %v6658
    %v6660 = vsel %vm6649, nan, %v6659
    %v6661 = vand.u32 2147483647, %v5710
    %vm6662 = vcmp.le.f32.partialorder %v6661, 0.7853982
    %vm6663 = vcmp.lt.s32.totalorder %v5710, 0
    %v6664 = vand.u32 %v5710, 2139095040
    %v6665 = vshrl.u32 %v6664, 23
    %v6666 = vsub.s32 %v6665, 127
    %v6667 = vand.u32 2147483647, %v5710
    %v6668 = vand.u32 %v6667, 8388607
    %v6669 = vor.u32 %v6668, 8388608
    %v6670 = vsub.s32 0, %v6669
    %v6671 = vadd.s32 %v6666, 1
    %vm6672 = vcmp.gt.s32.totalorder %v6671, 0
    %v6673 = vsel %vm6672, %v6671, 0
    %v6674 = vshrl.u32 %v6673, 5
    %v6675 = vand.u32 %v6673, 31
    %v6676 = vsub.s32 32, %v6675
    %v6677 = vshrl.u32 683565275, %v6676
    %v6678 = vshll.u32 683565275, %v6675
    %v6679 = vshrl.u32 2475754826, %v6676
    %v6680 = vor.u32 %v6678, %v6679
    %v6681 = vshll.u32 2475754826, %v6675
    %v6682 = vshrl.u32 2131351028, %v6676
    %v6683 = vor.u32 %v6681, %v6682
    %v6684 = vshll.u32 2131351028, %v6675
    %v6685 = vshrl.u32 2102212464, %v6676
    %v6686 = vor.u32 %v6684, %v6685
    %v6687 = vshll.u32 2102212464, %v6675
    %v6688 = vshrl.u32 920167782, %v6676
    %v6689 = vor.u32 %v6687, %v6688
    %v6690 = vshll.u32 920167782, %v6675
    %v6691 = vshrl.u32 1326507024, %v6676
    %v6692 = vor.u32 %v6690, %v6691
    %vm6693 = vcmp.lt.s32.totalorder %v6674, 1
    %vm6694 = vcmp.lt.s32.totalorder %v6674, 2
    %vm6695 = vcmp.lt.s32.totalorder %v6674, 3
    %vm6696 = vcmp.lt.s32.totalorder %v6674, 4
    %v6697 = vsel %vm6693, %v6677, %v6680
    %v6698 = vsel %vm6696, %v6686, 2102212464
    %v6699 = vsel %vm6695, %v6683, %v6698
    %v6700 = vsel %vm6694, %v6697, %v6699
    %v6701 = vsel %vm6693, %v6680, %v6683
    %v6702 = vsel %vm6696, %v6689, 920167782
    %v6703 = vsel %vm6695, %v6686, %v6702
    %v6704 = vsel %vm6694, %v6701, %v6703
    %v6705 = vsel %vm6693, %v6683, %v6686
    %v6706 = vsel %vm6696, %v6692, 1326507024
    %v6707 = vsel %vm6695, %v6689, %v6706
    %v6708 = vsel %vm6694, %v6705, %v6707
    %v6709 = vshll.u32 %v6669, 8
    %v6710 = vmul.u32.u64.compose %v6709, %v6708
    %v6711 = vextract.low.u32 %v6710
    %v6712 = vextract.high.u32 %v6710
    %v6713 = vmul.u32.u64.compose %v6709, %v6704
    %v6714 = vextract.low.u32 %v6713
    %v6715 = vextract.high.u32 %v6713
    %v6716 = vmul.u32 %v6709, %v6700
    %v6717 = vadd.s32 %v6712, %v6714
    %vm6718 = vc.u32 %v6712, %v6714
    %v6719 = vadd.s32 %v6715, 1
    %v6720 = vsel %vm6718, %v6719, %v6715
    %v6721 = vadd.s32 %v6716, %v6720
    %v6722 = vadd.s32 %v6721, 536870912
    %v6723 = vshrl.u32 %v6722, 30
    %v6724 = vshll.u32 %v6723, 30
    %v6725 = vsub.s32 %v6721, %v6724
    %vm6726 = vcmp.lt.s32.totalorder %v6725, 0
    %v6727 = vsub.s32 0, %v6725
    %v6728 = vsel %vm6726, %v6727, %v6725
    %v6729 = vclz %v6728
    %v6730 = vsub.s32 %v6729, 2
    %vm6731 = vcmp.gt.s32.totalorder 0, %v6730
    %v6732 = vsel %vm6731, 0, %v6730
    %v6733 = vsub.s32 32, %v6732
    %v6734 = vshll.u32 %v6725, %v6732
    %v6735 = vshrl.u32 %v6717, %v6733
    %v6736 = vor.u32 %v6734, %v6735
    %v6737 = vsub.s32 4294967266, %v6732
    %v6738 = vadd.s32 %v6737, 127
    %v6739 = vshll.u32 %v6738, 23
    %v6740 = vor.u32 4788187, %v6739
    %v6741 = vand.u32 2147483647, %v6740
    %v6743 = vcvt.s32.f32 %v6736
    %v6744 = vmul.f32 %v6743, %v6741
    %v6745 = vxor.u32 %v6744, 2147483648
    %v6746 = vsel %vm6663, %v6745, %v6744
    %v6747 = vsub.s32 4, %v6723
    %v6748 = vsel %vm6663, %v6747, %v6723
    %v6749 = vsel %vm6662, %v5710, %v6746
    %v6750 = vsel %vm6662, 0, %v6748
    %v6751 = vcosq.f32.pop %v6749
    %v6752 = vsinq.f32.pop %v6749
    %vm6753 = vweird.f32 %v5710
    %v6754 = vadd.s32 %v6750, 3
    %v6755 = vand.u32 %v6754, 3
    %vm6756 = vcmp.lt.s32.totalorder %v6755, 2
    %vm6757 = vcmp.eq.s32.totalorder %v6755, 0
    %v6758 = vxor.u32 %v6752, 2147483648
    %v6759 = vsel %vm6757, %v6751, %v6758
    %vm6760 = vcmp.eq.s32.totalorder %v6755, 2
    %v6761 = vxor.u32 %v6751, 2147483648
    %v6762 = vsel %vm6760, %v6761, %v6752
    %v6763 = vsel %vm6756, %v6759, %v6762
    %v6764 = vsel %vm6753, nan, %v6763
    %v6765 = vand.u32 2147483647, %v5711
    %vm6766 = vcmp.le.f32.partialorder %v6765, 0.7853982
    %vm6767 = vcmp.lt.s32.totalorder %v5711, 0
    %v6768 = vand.u32 %v5711, 2139095040
    %v6769 = vshrl.u32 %v6768, 23
    %v6770 = vsub.s32 %v6769, 127
    %v6771 = vand.u32 2147483647, %v5711
    %v6772 = vand.u32 %v6771, 8388607
    %v6773 = vor.u32 %v6772, 8388608
    %v6774 = vsub.s32 0, %v6773
    %v6775 = vadd.s32 %v6770, 1
    %vm6776 = vcmp.gt.s32.totalorder %v6775, 0
    %v6777 = vsel %vm6776, %v6775, 0
    %v6778 = vshrl.u32 %v6777, 5
    %v6779 = vand.u32 %v6777, 31
    %v6780 = vsub.s32 32, %v6779
    %v6781 = vshrl.u32 683565275, %v6780
    %v6782 = vshll.u32 683565275, %v6779
    %v6783 = vshrl.u32 2475754826, %v6780
    %v6784 = vor.u32 %v6782, %v6783
    %v6785 = vshll.u32 2475754826, %v6779
    %v6786 = vshrl.u32 2131351028, %v6780
    %v6787 = vor.u32 %v6785, %v6786
    %v6788 = vshll.u32 2131351028, %v6779
    %v6789 = vshrl.u32 2102212464, %v6780
    %v6790 = vor.u32 %v6788, %v6789
    %v6791 = vshll.u32 2102212464, %v6779
    %v6792 = vshrl.u32 920167782, %v6780
    %v6793 = vor.u32 %v6791, %v6792
    %v6794 = vshll.u32 920167782, %v6779
    %v6795 = vshrl.u32 1326507024, %v6780
    %v6796 = vor.u32 %v6794, %v6795
    %vm6797 = vcmp.lt.s32.totalorder %v6778, 1
    %vm6798 = vcmp.lt.s32.totalorder %v6778, 2
    %vm6799 = vcmp.lt.s32.totalorder %v6778, 3
    %vm6800 = vcmp.lt.s32.totalorder %v6778, 4
    %v6801 = vsel %vm6797, %v6781, %v6784
    %v6802 = vsel %vm6800, %v6790, 2102212464
    %v6803 = vsel %vm6799, %v6787, %v6802
    %v6804 = vsel %vm6798, %v6801, %v6803
    %v6805 = vsel %vm6797, %v6784, %v6787
    %v6806 = vsel %vm6800, %v6793, 920167782
    %v6807 = vsel %vm6799, %v6790, %v6806
    %v6808 = vsel %vm6798, %v6805, %v6807
    %v6809 = vsel %vm6797, %v6787, %v6790
    %v6810 = vsel %vm6800, %v6796, 1326507024
    %v6811 = vsel %vm6799, %v6793, %v6810
    %v6812 = vsel %vm6798, %v6809, %v6811
    %v6813 = vshll.u32 %v6773, 8
    %v6814 = vmul.u32.u64.compose %v6813, %v6812
    %v6815 = vextract.low.u32 %v6814
    %v6816 = vextract.high.u32 %v6814
    %v6817 = vmul.u32.u64.compose %v6813, %v6808
    %v6818 = vextract.low.u32 %v6817
    %v6819 = vextract.high.u32 %v6817
    %v6820 = vmul.u32 %v6813, %v6804
    %v6821 = vadd.s32 %v6816, %v6818
    %vm6822 = vc.u32 %v6816, %v6818
    %v6823 = vadd.s32 %v6819, 1
    %v6824 = vsel %vm6822, %v6823, %v6819
    %v6825 = vadd.s32 %v6820, %v6824
    %v6826 = vadd.s32 %v6825, 536870912
    %v6827 = vshrl.u32 %v6826, 30
    %v6828 = vshll.u32 %v6827, 30
    %v6829 = vsub.s32 %v6825, %v6828
    %vm6830 = vcmp.lt.s32.totalorder %v6829, 0
    %v6831 = vsub.s32 0, %v6829
    %v6832 = vsel %vm6830, %v6831, %v6829
    %v6833 = vclz %v6832
    %v6834 = vsub.s32 %v6833, 2
    %vm6835 = vcmp.gt.s32.totalorder 0, %v6834
    %v6836 = vsel %vm6835, 0, %v6834
    %v6837 = vsub.s32 32, %v6836
    %v6838 = vshll.u32 %v6829, %v6836
    %v6839 = vshrl.u32 %v6821, %v6837
    %v6840 = vor.u32 %v6838, %v6839
    %v6841 = vsub.s32 4294967266, %v6836
    %v6842 = vadd.s32 %v6841, 127
    %v6843 = vshll.u32 %v6842, 23
    %v6844 = vor.u32 4788187, %v6843
    %v6845 = vand.u32 2147483647, %v6844
    %v6847 = vcvt.s32.f32 %v6840
    %v6848 = vmul.f32 %v6847, %v6845
    %v6849 = vxor.u32 %v6848, 2147483648
    %v6850 = vsel %vm6767, %v6849, %v6848
    %v6851 = vsub.s32 4, %v6827
    %v6852 = vsel %vm6767, %v6851, %v6827
    %v6853 = vsel %vm6766, %v5711, %v6850
    %v6854 = vsel %vm6766, 0, %v6852
    %v6855 = vcosq.f32.pop %v6853
    %v6856 = vsinq.f32.pop %v6853
    %vm6857 = vweird.f32 %v5711
    %v6858 = vadd.s32 %v6854, 3
    %v6859 = vand.u32 %v6858, 3
    %vm6860 = vcmp.lt.s32.totalorder %v6859, 2
    %vm6861 = vcmp.eq.s32.totalorder %v6859, 0
    %v6862 = vxor.u32 %v6856, 2147483648
    %v6863 = vsel %vm6861, %v6855, %v6862
    %vm6864 = vcmp.eq.s32.totalorder %v6859, 2
    %v6865 = vxor.u32 %v6855, 2147483648
    %v6866 = vsel %vm6864, %v6865, %v6856
    %v6867 = vsel %vm6860, %v6863, %v6866
    %v6868 = vsel %vm6857, nan, %v6867
    %v6869 = vand.u32 2147483647, %v5712
    %vm6870 = vcmp.le.f32.partialorder %v6869, 0.7853982
    %vm6871 = vcmp.lt.s32.totalorder %v5712, 0
    %v6872 = vand.u32 %v5712, 2139095040
    %v6873 = vshrl.u32 %v6872, 23
    %v6874 = vsub.s32 %v6873, 127
    %v6875 = vand.u32 2147483647, %v5712
    %v6876 = vand.u32 %v6875, 8388607
    %v6877 = vor.u32 %v6876, 8388608
    %v6878 = vsub.s32 0, %v6877
    %v6879 = vadd.s32 %v6874, 1
    %vm6880 = vcmp.gt.s32.totalorder %v6879, 0
    %v6881 = vsel %vm6880, %v6879, 0
    %v6882 = vshrl.u32 %v6881, 5
    %v6883 = vand.u32 %v6881, 31
    %v6884 = vsub.s32 32, %v6883
    %v6885 = vshrl.u32 683565275, %v6884
    %v6886 = vshll.u32 683565275, %v6883
    %v6887 = vshrl.u32 2475754826, %v6884
    %v6888 = vor.u32 %v6886, %v6887
    %v6889 = vshll.u32 2475754826, %v6883
    %v6890 = vshrl.u32 2131351028, %v6884
    %v6891 = vor.u32 %v6889, %v6890
    %v6892 = vshll.u32 2131351028, %v6883
    %v6893 = vshrl.u32 2102212464, %v6884
    %v6894 = vor.u32 %v6892, %v6893
    %v6895 = vshll.u32 2102212464, %v6883
    %v6896 = vshrl.u32 920167782, %v6884
    %v6897 = vor.u32 %v6895, %v6896
    %v6898 = vshll.u32 920167782, %v6883
    %v6899 = vshrl.u32 1326507024, %v6884
    %v6900 = vor.u32 %v6898, %v6899
    %vm6901 = vcmp.lt.s32.totalorder %v6882, 1
    %vm6902 = vcmp.lt.s32.totalorder %v6882, 2
    %vm6903 = vcmp.lt.s32.totalorder %v6882, 3
    %vm6904 = vcmp.lt.s32.totalorder %v6882, 4
    %v6905 = vsel %vm6901, %v6885, %v6888
    %v6906 = vsel %vm6904, %v6894, 2102212464
    %v6907 = vsel %vm6903, %v6891, %v6906
    %v6908 = vsel %vm6902, %v6905, %v6907
    %v6909 = vsel %vm6901, %v6888, %v6891
    %v6910 = vsel %vm6904, %v6897, 920167782
    %v6911 = vsel %vm6903, %v6894, %v6910
    %v6912 = vsel %vm6902, %v6909, %v6911
    %v6913 = vsel %vm6901, %v6891, %v6894
    %v6914 = vsel %vm6904, %v6900, 1326507024
    %v6915 = vsel %vm6903, %v6897, %v6914
    %v6916 = vsel %vm6902, %v6913, %v6915
    %v6917 = vshll.u32 %v6877, 8
    %v6918 = vmul.u32.u64.compose %v6917, %v6916
    %v6919 = vextract.low.u32 %v6918
    %v6920 = vextract.high.u32 %v6918
    %v6921 = vmul.u32.u64.compose %v6917, %v6912
    %v6922 = vextract.low.u32 %v6921
    %v6923 = vextract.high.u32 %v6921
    %v6924 = vmul.u32 %v6917, %v6908
    %v6925 = vadd.s32 %v6920, %v6922
    %vm6926 = vc.u32 %v6920, %v6922
    %v6927 = vadd.s32 %v6923, 1
    %v6928 = vsel %vm6926, %v6927, %v6923
    %v6929 = vadd.s32 %v6924, %v6928
    %v6930 = vadd.s32 %v6929, 536870912
    %v6931 = vshrl.u32 %v6930, 30
    %v6932 = vshll.u32 %v6931, 30
    %v6933 = vsub.s32 %v6929, %v6932
    %vm6934 = vcmp.lt.s32.totalorder %v6933, 0
    %v6935 = vsub.s32 0, %v6933
    %v6936 = vsel %vm6934, %v6935, %v6933
    %v6937 = vclz %v6936
    %v6938 = vsub.s32 %v6937, 2
    %vm6939 = vcmp.gt.s32.totalorder 0, %v6938
    %v6940 = vsel %vm6939, 0, %v6938
    %v6941 = vsub.s32 32, %v6940
    %v6942 = vshll.u32 %v6933, %v6940
    %v6943 = vshrl.u32 %v6925, %v6941
    %v6944 = vor.u32 %v6942, %v6943
    %v6945 = vsub.s32 4294967266, %v6940
    %v6946 = vadd.s32 %v6945, 127
    %v6947 = vshll.u32 %v6946, 23
    %v6948 = vor.u32 4788187, %v6947
    %v6949 = vand.u32 2147483647, %v6948
    %v6951 = vcvt.s32.f32 %v6944
    %v6952 = vmul.f32 %v6951, %v6949
    %v6953 = vxor.u32 %v6952, 2147483648
    %v6954 = vsel %vm6871, %v6953, %v6952
    %v6955 = vsub.s32 4, %v6931
    %v6956 = vsel %vm6871, %v6955, %v6931
    %v6957 = vsel %vm6870, %v5712, %v6954
    %v6958 = vsel %vm6870, 0, %v6956
    %v6959 = vcosq.f32.pop %v6957
    %v6960 = vsinq.f32.pop %v6957
    %vm6961 = vweird.f32 %v5712
    %v6962 = vadd.s32 %v6958, 3
    %v6963 = vand.u32 %v6962, 3
    %vm6964 = vcmp.lt.s32.totalorder %v6963, 2
    %vm6965 = vcmp.eq.s32.totalorder %v6963, 0
    %v6966 = vxor.u32 %v6960, 2147483648
    %v6967 = vsel %vm6965, %v6959, %v6966
    %vm6968 = vcmp.eq.s32.totalorder %v6963, 2
    %v6969 = vxor.u32 %v6959, 2147483648
    %v6970 = vsel %vm6968, %v6969, %v6960
    %v6971 = vsel %vm6964, %v6967, %v6970
    %v6972 = vsel %vm6961, nan, %v6971
    %v6973 = vand.u32 2147483647, %v5713
    %vm6974 = vcmp.le.f32.partialorder %v6973, 0.7853982
    %vm6975 = vcmp.lt.s32.totalorder %v5713, 0
    %v6976 = vand.u32 %v5713, 2139095040
    %v6977 = vshrl.u32 %v6976, 23
    %v6978 = vsub.s32 %v6977, 127
    %v6979 = vand.u32 2147483647, %v5713
    %v6980 = vand.u32 %v6979, 8388607
    %v6981 = vor.u32 %v6980, 8388608
    %v6982 = vsub.s32 0, %v6981
    %v6983 = vadd.s32 %v6978, 1
    %vm6984 = vcmp.gt.s32.totalorder %v6983, 0
    %v6985 = vsel %vm6984, %v6983, 0
    %v6986 = vshrl.u32 %v6985, 5
    %v6987 = vand.u32 %v6985, 31
    %v6988 = vsub.s32 32, %v6987
    %v6989 = vshrl.u32 683565275, %v6988
    %v6990 = vshll.u32 683565275, %v6987
    %v6991 = vshrl.u32 2475754826, %v6988
    %v6992 = vor.u32 %v6990, %v6991
    %v6993 = vshll.u32 2475754826, %v6987
    %v6994 = vshrl.u32 2131351028, %v6988
    %v6995 = vor.u32 %v6993, %v6994
    %v6996 = vshll.u32 2131351028, %v6987
    %v6997 = vshrl.u32 2102212464, %v6988
    %v6998 = vor.u32 %v6996, %v6997
    %v6999 = vshll.u32 2102212464, %v6987
    %v7000 = vshrl.u32 920167782, %v6988
    %v7001 = vor.u32 %v6999, %v7000
    %v7002 = vshll.u32 920167782, %v6987
    %v7003 = vshrl.u32 1326507024, %v6988
    %v7004 = vor.u32 %v7002, %v7003
    %vm7005 = vcmp.lt.s32.totalorder %v6986, 1
    %vm7006 = vcmp.lt.s32.totalorder %v6986, 2
    %vm7007 = vcmp.lt.s32.totalorder %v6986, 3
    %vm7008 = vcmp.lt.s32.totalorder %v6986, 4
    %v7009 = vsel %vm7005, %v6989, %v6992
    %v7010 = vsel %vm7008, %v6998, 2102212464
    %v7011 = vsel %vm7007, %v6995, %v7010
    %v7012 = vsel %vm7006, %v7009, %v7011
    %v7013 = vsel %vm7005, %v6992, %v6995
    %v7014 = vsel %vm7008, %v7001, 920167782
    %v7015 = vsel %vm7007, %v6998, %v7014
    %v7016 = vsel %vm7006, %v7013, %v7015
    %v7017 = vsel %vm7005, %v6995, %v6998
    %v7018 = vsel %vm7008, %v7004, 1326507024
    %v7019 = vsel %vm7007, %v7001, %v7018
    %v7020 = vsel %vm7006, %v7017, %v7019
    %v7021 = vshll.u32 %v6981, 8
    %v7022 = vmul.u32.u64.compose %v7021, %v7020
    %v7023 = vextract.low.u32 %v7022
    %v7024 = vextract.high.u32 %v7022
    %v7025 = vmul.u32.u64.compose %v7021, %v7016
    %v7026 = vextract.low.u32 %v7025
    %v7027 = vextract.high.u32 %v7025
    %v7028 = vmul.u32 %v7021, %v7012
    %v7029 = vadd.s32 %v7024, %v7026
    %vm7030 = vc.u32 %v7024, %v7026
    %v7031 = vadd.s32 %v7027, 1
    %v7032 = vsel %vm7030, %v7031, %v7027
    %v7033 = vadd.s32 %v7028, %v7032
    %v7034 = vadd.s32 %v7033, 536870912
    %v7035 = vshrl.u32 %v7034, 30
    %v7036 = vshll.u32 %v7035, 30
    %v7037 = vsub.s32 %v7033, %v7036
    %vm7038 = vcmp.lt.s32.totalorder %v7037, 0
    %v7039 = vsub.s32 0, %v7037
    %v7040 = vsel %vm7038, %v7039, %v7037
    %v7041 = vclz %v7040
    %v7042 = vsub.s32 %v7041, 2
    %vm7043 = vcmp.gt.s32.totalorder 0, %v7042
    %v7044 = vsel %vm7043, 0, %v7042
    %v7045 = vsub.s32 32, %v7044
    %v7046 = vshll.u32 %v7037, %v7044
    %v7047 = vshrl.u32 %v7029, %v7045
    %v7048 = vor.u32 %v7046, %v7047
    %v7049 = vsub.s32 4294967266, %v7044
    %v7050 = vadd.s32 %v7049, 127
    %v7051 = vshll.u32 %v7050, 23
    %v7052 = vor.u32 4788187, %v7051
    %v7053 = vand.u32 2147483647, %v7052
    %v7055 = vcvt.s32.f32 %v7048
    %v7056 = vmul.f32 %v7055, %v7053
    %v7057 = vxor.u32 %v7056, 2147483648
    %v7058 = vsel %vm6975, %v7057, %v7056
    %v7059 = vsub.s32 4, %v7035
    %v7060 = vsel %vm6975, %v7059, %v7035
    %v7061 = vsel %vm6974, %v5713, %v7058
    %v7062 = vsel %vm6974, 0, %v7060
    %v7063 = vcosq.f32.pop %v7061
    %v7064 = vsinq.f32.pop %v7061
    %vm7065 = vweird.f32 %v5713
    %v7066 = vadd.s32 %v7062, 3
    %v7067 = vand.u32 %v7066, 3
    %vm7068 = vcmp.lt.s32.totalorder %v7067, 2
    %vm7069 = vcmp.eq.s32.totalorder %v7067, 0
    %v7070 = vxor.u32 %v7064, 2147483648
    %v7071 = vsel %vm7069, %v7063, %v7070
    %vm7072 = vcmp.eq.s32.totalorder %v7067, 2
    %v7073 = vxor.u32 %v7063, 2147483648
    %v7074 = vsel %vm7072, %v7073, %v7064
    %v7075 = vsel %vm7068, %v7071, %v7074
    %v7076 = vsel %vm7065, nan, %v7075
    %v7077 = vand.u32 2147483647, %v5714
    %vm7078 = vcmp.le.f32.partialorder %v7077, 0.7853982
    %vm7079 = vcmp.lt.s32.totalorder %v5714, 0
    %v7080 = vand.u32 %v5714, 2139095040
    %v7081 = vshrl.u32 %v7080, 23
    %v7082 = vsub.s32 %v7081, 127
    %v7083 = vand.u32 2147483647, %v5714
    %v7084 = vand.u32 %v7083, 8388607
    %v7085 = vor.u32 %v7084, 8388608
    %v7086 = vsub.s32 0, %v7085
    %v7087 = vadd.s32 %v7082, 1
    %vm7088 = vcmp.gt.s32.totalorder %v7087, 0
    %v7089 = vsel %vm7088, %v7087, 0
    %v7090 = vshrl.u32 %v7089, 5
    %v7091 = vand.u32 %v7089, 31
    %v7092 = vsub.s32 32, %v7091
    %v7093 = vshrl.u32 683565275, %v7092
    %v7094 = vshll.u32 683565275, %v7091
    %v7095 = vshrl.u32 2475754826, %v7092
    %v7096 = vor.u32 %v7094, %v7095
    %v7097 = vshll.u32 2475754826, %v7091
    %v7098 = vshrl.u32 2131351028, %v7092
    %v7099 = vor.u32 %v7097, %v7098
    %v7100 = vshll.u32 2131351028, %v7091
    %v7101 = vshrl.u32 2102212464, %v7092
    %v7102 = vor.u32 %v7100, %v7101
    %v7103 = vshll.u32 2102212464, %v7091
    %v7104 = vshrl.u32 920167782, %v7092
    %v7105 = vor.u32 %v7103, %v7104
    %v7106 = vshll.u32 920167782, %v7091
    %v7107 = vshrl.u32 1326507024, %v7092
    %v7108 = vor.u32 %v7106, %v7107
    %vm7109 = vcmp.lt.s32.totalorder %v7090, 1
    %vm7110 = vcmp.lt.s32.totalorder %v7090, 2
    %vm7111 = vcmp.lt.s32.totalorder %v7090, 3
    %vm7112 = vcmp.lt.s32.totalorder %v7090, 4
    %v7113 = vsel %vm7109, %v7093, %v7096
    %v7114 = vsel %vm7112, %v7102, 2102212464
    %v7115 = vsel %vm7111, %v7099, %v7114
    %v7116 = vsel %vm7110, %v7113, %v7115
    %v7117 = vsel %vm7109, %v7096, %v7099
    %v7118 = vsel %vm7112, %v7105, 920167782
    %v7119 = vsel %vm7111, %v7102, %v7118
    %v7120 = vsel %vm7110, %v7117, %v7119
    %v7121 = vsel %vm7109, %v7099, %v7102
    %v7122 = vsel %vm7112, %v7108, 1326507024
    %v7123 = vsel %vm7111, %v7105, %v7122
    %v7124 = vsel %vm7110, %v7121, %v7123
    %v7125 = vshll.u32 %v7085, 8
    %v7126 = vmul.u32.u64.compose %v7125, %v7124
    %v7127 = vextract.low.u32 %v7126
    %v7128 = vextract.high.u32 %v7126
    %v7129 = vmul.u32.u64.compose %v7125, %v7120
    %v7130 = vextract.low.u32 %v7129
    %v7131 = vextract.high.u32 %v7129
    %v7132 = vmul.u32 %v7125, %v7116
    %v7133 = vadd.s32 %v7128, %v7130
    %vm7134 = vc.u32 %v7128, %v7130
    %v7135 = vadd.s32 %v7131, 1
    %v7136 = vsel %vm7134, %v7135, %v7131
    %v7137 = vadd.s32 %v7132, %v7136
    %v7138 = vadd.s32 %v7137, 536870912
    %v7139 = vshrl.u32 %v7138, 30
    %v7140 = vshll.u32 %v7139, 30
    %v7141 = vsub.s32 %v7137, %v7140
    %vm7142 = vcmp.lt.s32.totalorder %v7141, 0
    %v7143 = vsub.s32 0, %v7141
    %v7144 = vsel %vm7142, %v7143, %v7141
    %v7145 = vclz %v7144
    %v7146 = vsub.s32 %v7145, 2
    %vm7147 = vcmp.gt.s32.totalorder 0, %v7146
    %v7148 = vsel %vm7147, 0, %v7146
    %v7149 = vsub.s32 32, %v7148
    %v7150 = vshll.u32 %v7141, %v7148
    %v7151 = vshrl.u32 %v7133, %v7149
    %v7152 = vor.u32 %v7150, %v7151
    %v7153 = vsub.s32 4294967266, %v7148
    %v7154 = vadd.s32 %v7153, 127
    %v7155 = vshll.u32 %v7154, 23
    %v7156 = vor.u32 4788187, %v7155
    %v7157 = vand.u32 2147483647, %v7156
    %v7159 = vcvt.s32.f32 %v7152
    %v7160 = vmul.f32 %v7159, %v7157
    %v7161 = vxor.u32 %v7160, 2147483648
    %v7162 = vsel %vm7079, %v7161, %v7160
    %v7163 = vsub.s32 4, %v7139
    %v7164 = vsel %vm7079, %v7163, %v7139
    %v7165 = vsel %vm7078, %v5714, %v7162
    %v7166 = vsel %vm7078, 0, %v7164
    %v7167 = vcosq.f32.pop %v7165
    %v7168 = vsinq.f32.pop %v7165
    %vm7169 = vweird.f32 %v5714
    %v7170 = vadd.s32 %v7166, 3
    %v7171 = vand.u32 %v7170, 3
    %vm7172 = vcmp.lt.s32.totalorder %v7171, 2
    %vm7173 = vcmp.eq.s32.totalorder %v7171, 0
    %v7174 = vxor.u32 %v7168, 2147483648
    %v7175 = vsel %vm7173, %v7167, %v7174
    %vm7176 = vcmp.eq.s32.totalorder %v7171, 2
    %v7177 = vxor.u32 %v7167, 2147483648
    %v7178 = vsel %vm7176, %v7177, %v7168
    %v7179 = vsel %vm7172, %v7175, %v7178
    %v7180 = vsel %vm7169, nan, %v7179
    %v7181 = vand.u32 2147483647, %v5715
    %vm7182 = vcmp.le.f32.partialorder %v7181, 0.7853982
    %vm7183 = vcmp.lt.s32.totalorder %v5715, 0
    %v7184 = vand.u32 %v5715, 2139095040
    %v7185 = vshrl.u32 %v7184, 23
    %v7186 = vsub.s32 %v7185, 127
    %v7187 = vand.u32 2147483647, %v5715
    %v7188 = vand.u32 %v7187, 8388607
    %v7189 = vor.u32 %v7188, 8388608
    %v7190 = vsub.s32 0, %v7189
    %v7191 = vadd.s32 %v7186, 1
    %vm7192 = vcmp.gt.s32.totalorder %v7191, 0
    %v7193 = vsel %vm7192, %v7191, 0
    %v7194 = vshrl.u32 %v7193, 5
    %v7195 = vand.u32 %v7193, 31
    %v7196 = vsub.s32 32, %v7195
    %v7197 = vshrl.u32 683565275, %v7196
    %v7198 = vshll.u32 683565275, %v7195
    %v7199 = vshrl.u32 2475754826, %v7196
    %v7200 = vor.u32 %v7198, %v7199
    %v7201 = vshll.u32 2475754826, %v7195
    %v7202 = vshrl.u32 2131351028, %v7196
    %v7203 = vor.u32 %v7201, %v7202
    %v7204 = vshll.u32 2131351028, %v7195
    %v7205 = vshrl.u32 2102212464, %v7196
    %v7206 = vor.u32 %v7204, %v7205
    %v7207 = vshll.u32 2102212464, %v7195
    %v7208 = vshrl.u32 920167782, %v7196
    %v7209 = vor.u32 %v7207, %v7208
    %v7210 = vshll.u32 920167782, %v7195
    %v7211 = vshrl.u32 1326507024, %v7196
    %v7212 = vor.u32 %v7210, %v7211
    %vm7213 = vcmp.lt.s32.totalorder %v7194, 1
    %vm7214 = vcmp.lt.s32.totalorder %v7194, 2
    %vm7215 = vcmp.lt.s32.totalorder %v7194, 3
    %vm7216 = vcmp.lt.s32.totalorder %v7194, 4
    %v7217 = vsel %vm7213, %v7197, %v7200
    %v7218 = vsel %vm7216, %v7206, 2102212464
    %v7219 = vsel %vm7215, %v7203, %v7218
    %v7220 = vsel %vm7214, %v7217, %v7219
    %v7221 = vsel %vm7213, %v7200, %v7203
    %v7222 = vsel %vm7216, %v7209, 920167782
    %v7223 = vsel %vm7215, %v7206, %v7222
    %v7224 = vsel %vm7214, %v7221, %v7223
    %v7225 = vsel %vm7213, %v7203, %v7206
    %v7226 = vsel %vm7216, %v7212, 1326507024
    %v7227 = vsel %vm7215, %v7209, %v7226
    %v7228 = vsel %vm7214, %v7225, %v7227
    %v7229 = vshll.u32 %v7189, 8
    %v7230 = vmul.u32.u64.compose %v7229, %v7228
    %v7231 = vextract.low.u32 %v7230
    %v7232 = vextract.high.u32 %v7230
    %v7233 = vmul.u32.u64.compose %v7229, %v7224
    %v7234 = vextract.low.u32 %v7233
    %v7235 = vextract.high.u32 %v7233
    %v7236 = vmul.u32 %v7229, %v7220
    %v7237 = vadd.s32 %v7232, %v7234
    %vm7238 = vc.u32 %v7232, %v7234
    %v7239 = vadd.s32 %v7235, 1
    %v7240 = vsel %vm7238, %v7239, %v7235
    %v7241 = vadd.s32 %v7236, %v7240
    %v7242 = vadd.s32 %v7241, 536870912
    %v7243 = vshrl.u32 %v7242, 30
    %v7244 = vshll.u32 %v7243, 30
    %v7245 = vsub.s32 %v7241, %v7244
    %vm7246 = vcmp.lt.s32.totalorder %v7245, 0
    %v7247 = vsub.s32 0, %v7245
    %v7248 = vsel %vm7246, %v7247, %v7245
    %v7249 = vclz %v7248
    %v7250 = vsub.s32 %v7249, 2
    %vm7251 = vcmp.gt.s32.totalorder 0, %v7250
    %v7252 = vsel %vm7251, 0, %v7250
    %v7253 = vsub.s32 32, %v7252
    %v7254 = vshll.u32 %v7245, %v7252
    %v7255 = vshrl.u32 %v7237, %v7253
    %v7256 = vor.u32 %v7254, %v7255
    %v7257 = vsub.s32 4294967266, %v7252
    %v7258 = vadd.s32 %v7257, 127
    %v7259 = vshll.u32 %v7258, 23
    %v7260 = vor.u32 4788187, %v7259
    %v7261 = vand.u32 2147483647, %v7260
    %v7263 = vcvt.s32.f32 %v7256
    %v7264 = vmul.f32 %v7263, %v7261
    %v7265 = vxor.u32 %v7264, 2147483648
    %v7266 = vsel %vm7183, %v7265, %v7264
    %v7267 = vsub.s32 4, %v7243
    %v7268 = vsel %vm7183, %v7267, %v7243
    %v7269 = vsel %vm7182, %v5715, %v7266
    %v7270 = vsel %vm7182, 0, %v7268
    %v7271 = vcosq.f32.pop %v7269
    %v7272 = vsinq.f32.pop %v7269
    %vm7273 = vweird.f32 %v5715
    %v7274 = vadd.s32 %v7270, 3
    %v7275 = vand.u32 %v7274, 3
    %vm7276 = vcmp.lt.s32.totalorder %v7275, 2
    %vm7277 = vcmp.eq.s32.totalorder %v7275, 0
    %v7278 = vxor.u32 %v7272, 2147483648
    %v7279 = vsel %vm7277, %v7271, %v7278
    %vm7280 = vcmp.eq.s32.totalorder %v7275, 2
    %v7281 = vxor.u32 %v7271, 2147483648
    %v7282 = vsel %vm7280, %v7281, %v7272
    %v7283 = vsel %vm7276, %v7279, %v7282
    %v7284 = vsel %vm7273, nan, %v7283
    %v7285 = vand.u32 2147483647, %v5716
    %vm7286 = vcmp.le.f32.partialorder %v7285, 0.7853982
    %vm7287 = vcmp.lt.s32.totalorder %v5716, 0
    %v7288 = vand.u32 %v5716, 2139095040
    %v7289 = vshrl.u32 %v7288, 23
    %v7290 = vsub.s32 %v7289, 127
    %v7291 = vand.u32 2147483647, %v5716
    %v7292 = vand.u32 %v7291, 8388607
    %v7293 = vor.u32 %v7292, 8388608
    %v7294 = vsub.s32 0, %v7293
    %v7295 = vadd.s32 %v7290, 1
    %vm7296 = vcmp.gt.s32.totalorder %v7295, 0
    %v7297 = vsel %vm7296, %v7295, 0
    %v7298 = vshrl.u32 %v7297, 5
    %v7299 = vand.u32 %v7297, 31
    %v7300 = vsub.s32 32, %v7299
    %v7301 = vshrl.u32 683565275, %v7300
    %v7302 = vshll.u32 683565275, %v7299
    %v7303 = vshrl.u32 2475754826, %v7300
    %v7304 = vor.u32 %v7302, %v7303
    %v7305 = vshll.u32 2475754826, %v7299
    %v7306 = vshrl.u32 2131351028, %v7300
    %v7307 = vor.u32 %v7305, %v7306
    %v7308 = vshll.u32 2131351028, %v7299
    %v7309 = vshrl.u32 2102212464, %v7300
    %v7310 = vor.u32 %v7308, %v7309
    %v7311 = vshll.u32 2102212464, %v7299
    %v7312 = vshrl.u32 920167782, %v7300
    %v7313 = vor.u32 %v7311, %v7312
    %v7314 = vshll.u32 920167782, %v7299
    %v7315 = vshrl.u32 1326507024, %v7300
    %v7316 = vor.u32 %v7314, %v7315
    %vm7317 = vcmp.lt.s32.totalorder %v7298, 1
    %vm7318 = vcmp.lt.s32.totalorder %v7298, 2
    %vm7319 = vcmp.lt.s32.totalorder %v7298, 3
    %vm7320 = vcmp.lt.s32.totalorder %v7298, 4
    %v7321 = vsel %vm7317, %v7301, %v7304
    %v7322 = vsel %vm7320, %v7310, 2102212464
    %v7323 = vsel %vm7319, %v7307, %v7322
    %v7324 = vsel %vm7318, %v7321, %v7323
    %v7325 = vsel %vm7317, %v7304, %v7307
    %v7326 = vsel %vm7320, %v7313, 920167782
    %v7327 = vsel %vm7319, %v7310, %v7326
    %v7328 = vsel %vm7318, %v7325, %v7327
    %v7329 = vsel %vm7317, %v7307, %v7310
    %v7330 = vsel %vm7320, %v7316, 1326507024
    %v7331 = vsel %vm7319, %v7313, %v7330
    %v7332 = vsel %vm7318, %v7329, %v7331
    %v7333 = vshll.u32 %v7293, 8
    %v7334 = vmul.u32.u64.compose %v7333, %v7332
    %v7335 = vextract.low.u32 %v7334
    %v7336 = vextract.high.u32 %v7334
    %v7337 = vmul.u32.u64.compose %v7333, %v7328
    %v7338 = vextract.low.u32 %v7337
    %v7339 = vextract.high.u32 %v7337
    %v7340 = vmul.u32 %v7333, %v7324
    %v7341 = vadd.s32 %v7336, %v7338
    %vm7342 = vc.u32 %v7336, %v7338
    %v7343 = vadd.s32 %v7339, 1
    %v7344 = vsel %vm7342, %v7343, %v7339
    %v7345 = vadd.s32 %v7340, %v7344
    %v7346 = vadd.s32 %v7345, 536870912
    %v7347 = vshrl.u32 %v7346, 30
    %v7348 = vshll.u32 %v7347, 30
    %v7349 = vsub.s32 %v7345, %v7348
    %vm7350 = vcmp.lt.s32.totalorder %v7349, 0
    %v7351 = vsub.s32 0, %v7349
    %v7352 = vsel %vm7350, %v7351, %v7349
    %v7353 = vclz %v7352
    %v7354 = vsub.s32 %v7353, 2
    %vm7355 = vcmp.gt.s32.totalorder 0, %v7354
    %v7356 = vsel %vm7355, 0, %v7354
    %v7357 = vsub.s32 32, %v7356
    %v7358 = vshll.u32 %v7349, %v7356
    %v7359 = vshrl.u32 %v7341, %v7357
    %v7360 = vor.u32 %v7358, %v7359
    %v7361 = vsub.s32 4294967266, %v7356
    %v7362 = vadd.s32 %v7361, 127
    %v7363 = vshll.u32 %v7362, 23
    %v7364 = vor.u32 4788187, %v7363
    %v7365 = vand.u32 2147483647, %v7364
    %v7367 = vcvt.s32.f32 %v7360
    %v7368 = vmul.f32 %v7367, %v7365
    %v7369 = vxor.u32 %v7368, 2147483648
    %v7370 = vsel %vm7287, %v7369, %v7368
    %v7371 = vsub.s32 4, %v7347
    %v7372 = vsel %vm7287, %v7371, %v7347
    %v7373 = vsel %vm7286, %v5716, %v7370
    %v7374 = vsel %vm7286, 0, %v7372
    %v7375 = vcosq.f32.pop %v7373
    %v7376 = vsinq.f32.pop %v7373
    %vm7377 = vweird.f32 %v5716
    %v7378 = vadd.s32 %v7374, 3
    %v7379 = vand.u32 %v7378, 3
    %vm7380 = vcmp.lt.s32.totalorder %v7379, 2
    %vm7381 = vcmp.eq.s32.totalorder %v7379, 0
    %v7382 = vxor.u32 %v7376, 2147483648
    %v7383 = vsel %vm7381, %v7375, %v7382
    %vm7384 = vcmp.eq.s32.totalorder %v7379, 2
    %v7385 = vxor.u32 %v7375, 2147483648
    %v7386 = vsel %vm7384, %v7385, %v7376
    %v7387 = vsel %vm7380, %v7383, %v7386
    %v7388 = vsel %vm7377, nan, %v7387
    %v7389 = vand.u32 2147483647, %v5717
    %vm7390 = vcmp.le.f32.partialorder %v7389, 0.7853982
    %vm7391 = vcmp.lt.s32.totalorder %v5717, 0
    %v7392 = vand.u32 %v5717, 2139095040
    %v7393 = vshrl.u32 %v7392, 23
    %v7394 = vsub.s32 %v7393, 127
    %v7395 = vand.u32 2147483647, %v5717
    %v7396 = vand.u32 %v7395, 8388607
    %v7397 = vor.u32 %v7396, 8388608
    %v7398 = vsub.s32 0, %v7397
    %v7399 = vadd.s32 %v7394, 1
    %vm7400 = vcmp.gt.s32.totalorder %v7399, 0
    %v7401 = vsel %vm7400, %v7399, 0
    %v7402 = vshrl.u32 %v7401, 5
    %v7403 = vand.u32 %v7401, 31
    %v7404 = vsub.s32 32, %v7403
    %v7405 = vshrl.u32 683565275, %v7404
    %v7406 = vshll.u32 683565275, %v7403
    %v7407 = vshrl.u32 2475754826, %v7404
    %v7408 = vor.u32 %v7406, %v7407
    %v7409 = vshll.u32 2475754826, %v7403
    %v7410 = vshrl.u32 2131351028, %v7404
    %v7411 = vor.u32 %v7409, %v7410
    %v7412 = vshll.u32 2131351028, %v7403
    %v7413 = vshrl.u32 2102212464, %v7404
    %v7414 = vor.u32 %v7412, %v7413
    %v7415 = vshll.u32 2102212464, %v7403
    %v7416 = vshrl.u32 920167782, %v7404
    %v7417 = vor.u32 %v7415, %v7416
    %v7418 = vshll.u32 920167782, %v7403
    %v7419 = vshrl.u32 1326507024, %v7404
    %v7420 = vor.u32 %v7418, %v7419
    %vm7421 = vcmp.lt.s32.totalorder %v7402, 1
    %vm7422 = vcmp.lt.s32.totalorder %v7402, 2
    %vm7423 = vcmp.lt.s32.totalorder %v7402, 3
    %vm7424 = vcmp.lt.s32.totalorder %v7402, 4
    %v7425 = vsel %vm7421, %v7405, %v7408
    %v7426 = vsel %vm7424, %v7414, 2102212464
    %v7427 = vsel %vm7423, %v7411, %v7426
    %v7428 = vsel %vm7422, %v7425, %v7427
    %v7429 = vsel %vm7421, %v7408, %v7411
    %v7430 = vsel %vm7424, %v7417, 920167782
    %v7431 = vsel %vm7423, %v7414, %v7430
    %v7432 = vsel %vm7422, %v7429, %v7431
    %v7433 = vsel %vm7421, %v7411, %v7414
    %v7434 = vsel %vm7424, %v7420, 1326507024
    %v7435 = vsel %vm7423, %v7417, %v7434
    %v7436 = vsel %vm7422, %v7433, %v7435
    %v7437 = vshll.u32 %v7397, 8
    %v7438 = vmul.u32.u64.compose %v7437, %v7436
    %v7439 = vextract.low.u32 %v7438
    %v7440 = vextract.high.u32 %v7438
    %v7441 = vmul.u32.u64.compose %v7437, %v7432
    %v7442 = vextract.low.u32 %v7441
    %v7443 = vextract.high.u32 %v7441
    %v7444 = vmul.u32 %v7437, %v7428
    %v7445 = vadd.s32 %v7440, %v7442
    %vm7446 = vc.u32 %v7440, %v7442
    %v7447 = vadd.s32 %v7443, 1
    %v7448 = vsel %vm7446, %v7447, %v7443
    %v7449 = vadd.s32 %v7444, %v7448
    %v7450 = vadd.s32 %v7449, 536870912
    %v7451 = vshrl.u32 %v7450, 30
    %v7452 = vshll.u32 %v7451, 30
    %v7453 = vsub.s32 %v7449, %v7452
    %vm7454 = vcmp.lt.s32.totalorder %v7453, 0
    %v7455 = vsub.s32 0, %v7453
    %v7456 = vsel %vm7454, %v7455, %v7453
    %v7457 = vclz %v7456
    %v7458 = vsub.s32 %v7457, 2
    %vm7459 = vcmp.gt.s32.totalorder 0, %v7458
    %v7460 = vsel %vm7459, 0, %v7458
    %v7461 = vsub.s32 32, %v7460
    %v7462 = vshll.u32 %v7453, %v7460
    %v7463 = vshrl.u32 %v7445, %v7461
    %v7464 = vor.u32 %v7462, %v7463
    %v7465 = vsub.s32 4294967266, %v7460
    %v7466 = vadd.s32 %v7465, 127
    %v7467 = vshll.u32 %v7466, 23
    %v7468 = vor.u32 4788187, %v7467
    %v7469 = vand.u32 2147483647, %v7468
    %v7471 = vcvt.s32.f32 %v7464
    %v7472 = vmul.f32 %v7471, %v7469
    %v7473 = vxor.u32 %v7472, 2147483648
    %v7474 = vsel %vm7391, %v7473, %v7472
    %v7475 = vsub.s32 4, %v7451
    %v7476 = vsel %vm7391, %v7475, %v7451
    %v7477 = vsel %vm7390, %v5717, %v7474
    %v7478 = vsel %vm7390, 0, %v7476
    %v7479 = vcosq.f32.pop %v7477
    %v7480 = vsinq.f32.pop %v7477
    %vm7481 = vweird.f32 %v5717
    %v7482 = vadd.s32 %v7478, 3
    %v7483 = vand.u32 %v7482, 3
    %vm7484 = vcmp.lt.s32.totalorder %v7483, 2
    %vm7485 = vcmp.eq.s32.totalorder %v7483, 0
    %v7486 = vxor.u32 %v7480, 2147483648
    %v7487 = vsel %vm7485, %v7479, %v7486
    %vm7488 = vcmp.eq.s32.totalorder %v7483, 2
    %v7489 = vxor.u32 %v7479, 2147483648
    %v7490 = vsel %vm7488, %v7489, %v7480
    %v7491 = vsel %vm7484, %v7487, %v7490
    %v7492 = vsel %vm7481, nan, %v7491
    %v7493 = vand.u32 2147483647, %v5718
    %vm7494 = vcmp.le.f32.partialorder %v7493, 0.7853982
    %vm7495 = vcmp.lt.s32.totalorder %v5718, 0
    %v7496 = vand.u32 %v5718, 2139095040
    %v7497 = vshrl.u32 %v7496, 23
    %v7498 = vsub.s32 %v7497, 127
    %v7499 = vand.u32 2147483647, %v5718
    %v7500 = vand.u32 %v7499, 8388607
    %v7501 = vor.u32 %v7500, 8388608
    %v7502 = vsub.s32 0, %v7501
    %v7503 = vadd.s32 %v7498, 1
    %vm7504 = vcmp.gt.s32.totalorder %v7503, 0
    %v7505 = vsel %vm7504, %v7503, 0
    %v7506 = vshrl.u32 %v7505, 5
    %v7507 = vand.u32 %v7505, 31
    %v7508 = vsub.s32 32, %v7507
    %v7509 = vshrl.u32 683565275, %v7508
    %v7510 = vshll.u32 683565275, %v7507
    %v7511 = vshrl.u32 2475754826, %v7508
    %v7512 = vor.u32 %v7510, %v7511
    %v7513 = vshll.u32 2475754826, %v7507
    %v7514 = vshrl.u32 2131351028, %v7508
    %v7515 = vor.u32 %v7513, %v7514
    %v7516 = vshll.u32 2131351028, %v7507
    %v7517 = vshrl.u32 2102212464, %v7508
    %v7518 = vor.u32 %v7516, %v7517
    %v7519 = vshll.u32 2102212464, %v7507
    %v7520 = vshrl.u32 920167782, %v7508
    %v7521 = vor.u32 %v7519, %v7520
    %v7522 = vshll.u32 920167782, %v7507
    %v7523 = vshrl.u32 1326507024, %v7508
    %v7524 = vor.u32 %v7522, %v7523
    %vm7525 = vcmp.lt.s32.totalorder %v7506, 1
    %vm7526 = vcmp.lt.s32.totalorder %v7506, 2
    %vm7527 = vcmp.lt.s32.totalorder %v7506, 3
    %vm7528 = vcmp.lt.s32.totalorder %v7506, 4
    %v7529 = vsel %vm7525, %v7509, %v7512
    %v7530 = vsel %vm7528, %v7518, 2102212464
    %v7531 = vsel %vm7527, %v7515, %v7530
    %v7532 = vsel %vm7526, %v7529, %v7531
    %v7533 = vsel %vm7525, %v7512, %v7515
    %v7534 = vsel %vm7528, %v7521, 920167782
    %v7535 = vsel %vm7527, %v7518, %v7534
    %v7536 = vsel %vm7526, %v7533, %v7535
    %v7537 = vsel %vm7525, %v7515, %v7518
    %v7538 = vsel %vm7528, %v7524, 1326507024
    %v7539 = vsel %vm7527, %v7521, %v7538
    %v7540 = vsel %vm7526, %v7537, %v7539
    %v7541 = vshll.u32 %v7501, 8
    %v7542 = vmul.u32.u64.compose %v7541, %v7540
    %v7543 = vextract.low.u32 %v7542
    %v7544 = vextract.high.u32 %v7542
    %v7545 = vmul.u32.u64.compose %v7541, %v7536
    %v7546 = vextract.low.u32 %v7545
    %v7547 = vextract.high.u32 %v7545
    %v7548 = vmul.u32 %v7541, %v7532
    %v7549 = vadd.s32 %v7544, %v7546
    %vm7550 = vc.u32 %v7544, %v7546
    %v7551 = vadd.s32 %v7547, 1
    %v7552 = vsel %vm7550, %v7551, %v7547
    %v7553 = vadd.s32 %v7548, %v7552
    %v7554 = vadd.s32 %v7553, 536870912
    %v7555 = vshrl.u32 %v7554, 30
    %v7556 = vshll.u32 %v7555, 30
    %v7557 = vsub.s32 %v7553, %v7556
    %vm7558 = vcmp.lt.s32.totalorder %v7557, 0
    %v7559 = vsub.s32 0, %v7557
    %v7560 = vsel %vm7558, %v7559, %v7557
    %v7561 = vclz %v7560
    %v7562 = vsub.s32 %v7561, 2
    %vm7563 = vcmp.gt.s32.totalorder 0, %v7562
    %v7564 = vsel %vm7563, 0, %v7562
    %v7565 = vsub.s32 32, %v7564
    %v7566 = vshll.u32 %v7557, %v7564
    %v7567 = vshrl.u32 %v7549, %v7565
    %v7568 = vor.u32 %v7566, %v7567
    %v7569 = vsub.s32 4294967266, %v7564
    %v7570 = vadd.s32 %v7569, 127
    %v7571 = vshll.u32 %v7570, 23
    %v7572 = vor.u32 4788187, %v7571
    %v7573 = vand.u32 2147483647, %v7572
    %v7575 = vcvt.s32.f32 %v7568
    %v7576 = vmul.f32 %v7575, %v7573
    %v7577 = vxor.u32 %v7576, 2147483648
    %v7578 = vsel %vm7495, %v7577, %v7576
    %v7579 = vsub.s32 4, %v7555
    %v7580 = vsel %vm7495, %v7579, %v7555
    %v7581 = vsel %vm7494, %v5718, %v7578
    %v7582 = vsel %vm7494, 0, %v7580
    %v7583 = vcosq.f32.pop %v7581
    %v7584 = vsinq.f32.pop %v7581
    %vm7585 = vweird.f32 %v5718
    %v7586 = vadd.s32 %v7582, 3
    %v7587 = vand.u32 %v7586, 3
    %vm7588 = vcmp.lt.s32.totalorder %v7587, 2
    %vm7589 = vcmp.eq.s32.totalorder %v7587, 0
    %v7590 = vxor.u32 %v7584, 2147483648
    %v7591 = vsel %vm7589, %v7583, %v7590
    %vm7592 = vcmp.eq.s32.totalorder %v7587, 2
    %v7593 = vxor.u32 %v7583, 2147483648
    %v7594 = vsel %vm7592, %v7593, %v7584
    %v7595 = vsel %vm7588, %v7591, %v7594
    %v7596 = vsel %vm7585, nan, %v7595
    %v7597 = vand.u32 2147483647, %v5719
    %vm7598 = vcmp.le.f32.partialorder %v7597, 0.7853982
    %vm7599 = vcmp.lt.s32.totalorder %v5719, 0
    %v7600 = vand.u32 %v5719, 2139095040
    %v7601 = vshrl.u32 %v7600, 23
    %v7602 = vsub.s32 %v7601, 127
    %v7603 = vand.u32 2147483647, %v5719
    %v7604 = vand.u32 %v7603, 8388607
    %v7605 = vor.u32 %v7604, 8388608
    %v7606 = vsub.s32 0, %v7605
    %v7607 = vadd.s32 %v7602, 1
    %vm7608 = vcmp.gt.s32.totalorder %v7607, 0
    %v7609 = vsel %vm7608, %v7607, 0
    %v7610 = vshrl.u32 %v7609, 5
    %v7611 = vand.u32 %v7609, 31
    %v7612 = vsub.s32 32, %v7611
    %v7613 = vshrl.u32 683565275, %v7612
    %v7614 = vshll.u32 683565275, %v7611
    %v7615 = vshrl.u32 2475754826, %v7612
    %v7616 = vor.u32 %v7614, %v7615
    %v7617 = vshll.u32 2475754826, %v7611
    %v7618 = vshrl.u32 2131351028, %v7612
    %v7619 = vor.u32 %v7617, %v7618
    %v7620 = vshll.u32 2131351028, %v7611
    %v7621 = vshrl.u32 2102212464, %v7612
    %v7622 = vor.u32 %v7620, %v7621
    %v7623 = vshll.u32 2102212464, %v7611
    %v7624 = vshrl.u32 920167782, %v7612
    %v7625 = vor.u32 %v7623, %v7624
    %v7626 = vshll.u32 920167782, %v7611
    %v7627 = vshrl.u32 1326507024, %v7612
    %v7628 = vor.u32 %v7626, %v7627
    %vm7629 = vcmp.lt.s32.totalorder %v7610, 1
    %vm7630 = vcmp.lt.s32.totalorder %v7610, 2
    %vm7631 = vcmp.lt.s32.totalorder %v7610, 3
    %vm7632 = vcmp.lt.s32.totalorder %v7610, 4
    %v7633 = vsel %vm7629, %v7613, %v7616
    %v7634 = vsel %vm7632, %v7622, 2102212464
    %v7635 = vsel %vm7631, %v7619, %v7634
    %v7636 = vsel %vm7630, %v7633, %v7635
    %v7637 = vsel %vm7629, %v7616, %v7619
    %v7638 = vsel %vm7632, %v7625, 920167782
    %v7639 = vsel %vm7631, %v7622, %v7638
    %v7640 = vsel %vm7630, %v7637, %v7639
    %v7641 = vsel %vm7629, %v7619, %v7622
    %v7642 = vsel %vm7632, %v7628, 1326507024
    %v7643 = vsel %vm7631, %v7625, %v7642
    %v7644 = vsel %vm7630, %v7641, %v7643
    %v7645 = vshll.u32 %v7605, 8
    %v7646 = vmul.u32.u64.compose %v7645, %v7644
    %v7647 = vextract.low.u32 %v7646
    %v7648 = vextract.high.u32 %v7646
    %v7649 = vmul.u32.u64.compose %v7645, %v7640
    %v7650 = vextract.low.u32 %v7649
    %v7651 = vextract.high.u32 %v7649
    %v7652 = vmul.u32 %v7645, %v7636
    %v7653 = vadd.s32 %v7648, %v7650
    %vm7654 = vc.u32 %v7648, %v7650
    %v7655 = vadd.s32 %v7651, 1
    %v7656 = vsel %vm7654, %v7655, %v7651
    %v7657 = vadd.s32 %v7652, %v7656
    %v7658 = vadd.s32 %v7657, 536870912
    %v7659 = vshrl.u32 %v7658, 30
    %v7660 = vshll.u32 %v7659, 30
    %v7661 = vsub.s32 %v7657, %v7660
    %vm7662 = vcmp.lt.s32.totalorder %v7661, 0
    %v7663 = vsub.s32 0, %v7661
    %v7664 = vsel %vm7662, %v7663, %v7661
    %v7665 = vclz %v7664
    %v7666 = vsub.s32 %v7665, 2
    %vm7667 = vcmp.gt.s32.totalorder 0, %v7666
    %v7668 = vsel %vm7667, 0, %v7666
    %v7669 = vsub.s32 32, %v7668
    %v7670 = vshll.u32 %v7661, %v7668
    %v7671 = vshrl.u32 %v7653, %v7669
    %v7672 = vor.u32 %v7670, %v7671
    %v7673 = vsub.s32 4294967266, %v7668
    %v7674 = vadd.s32 %v7673, 127
    %v7675 = vshll.u32 %v7674, 23
    %v7676 = vor.u32 4788187, %v7675
    %v7677 = vand.u32 2147483647, %v7676
    %v7679 = vcvt.s32.f32 %v7672
    %v7680 = vmul.f32 %v7679, %v7677
    %v7681 = vxor.u32 %v7680, 2147483648
    %v7682 = vsel %vm7599, %v7681, %v7680
    %v7683 = vsub.s32 4, %v7659
    %v7684 = vsel %vm7599, %v7683, %v7659
    %v7685 = vsel %vm7598, %v5719, %v7682
    %v7686 = vsel %vm7598, 0, %v7684
    %v7687 = vcosq.f32.pop %v7685
    %v7688 = vsinq.f32.pop %v7685
    %vm7689 = vweird.f32 %v5719
    %v7690 = vadd.s32 %v7686, 3
    %v7691 = vand.u32 %v7690, 3
    %vm7692 = vcmp.lt.s32.totalorder %v7691, 2
    %vm7693 = vcmp.eq.s32.totalorder %v7691, 0
    %v7694 = vxor.u32 %v7688, 2147483648
    %v7695 = vsel %vm7693, %v7687, %v7694
    %vm7696 = vcmp.eq.s32.totalorder %v7691, 2
    %v7697 = vxor.u32 %v7687, 2147483648
    %v7698 = vsel %vm7696, %v7697, %v7688
    %v7699 = vsel %vm7692, %v7695, %v7698
    %v7700 = vsel %vm7689, nan, %v7699
    %v7701 = vand.u32 2147483647, %v5720
    %vm7702 = vcmp.le.f32.partialorder %v7701, 0.7853982
    %vm7703 = vcmp.lt.s32.totalorder %v5720, 0
    %v7704 = vand.u32 %v5720, 2139095040
    %v7705 = vshrl.u32 %v7704, 23
    %v7706 = vsub.s32 %v7705, 127
    %v7707 = vand.u32 2147483647, %v5720
    %v7708 = vand.u32 %v7707, 8388607
    %v7709 = vor.u32 %v7708, 8388608
    %v7710 = vsub.s32 0, %v7709
    %v7711 = vadd.s32 %v7706, 1
    %vm7712 = vcmp.gt.s32.totalorder %v7711, 0
    %v7713 = vsel %vm7712, %v7711, 0
    %v7714 = vshrl.u32 %v7713, 5
    %v7715 = vand.u32 %v7713, 31
    %v7716 = vsub.s32 32, %v7715
    %v7717 = vshrl.u32 683565275, %v7716
    %v7718 = vshll.u32 683565275, %v7715
    %v7719 = vshrl.u32 2475754826, %v7716
    %v7720 = vor.u32 %v7718, %v7719
    %v7721 = vshll.u32 2475754826, %v7715
    %v7722 = vshrl.u32 2131351028, %v7716
    %v7723 = vor.u32 %v7721, %v7722
    %v7724 = vshll.u32 2131351028, %v7715
    %v7725 = vshrl.u32 2102212464, %v7716
    %v7726 = vor.u32 %v7724, %v7725
    %v7727 = vshll.u32 2102212464, %v7715
    %v7728 = vshrl.u32 920167782, %v7716
    %v7729 = vor.u32 %v7727, %v7728
    %v7730 = vshll.u32 920167782, %v7715
    %v7731 = vshrl.u32 1326507024, %v7716
    %v7732 = vor.u32 %v7730, %v7731
    %vm7733 = vcmp.lt.s32.totalorder %v7714, 1
    %vm7734 = vcmp.lt.s32.totalorder %v7714, 2
    %vm7735 = vcmp.lt.s32.totalorder %v7714, 3
    %vm7736 = vcmp.lt.s32.totalorder %v7714, 4
    %v7737 = vsel %vm7733, %v7717, %v7720
    %v7738 = vsel %vm7736, %v7726, 2102212464
    %v7739 = vsel %vm7735, %v7723, %v7738
    %v7740 = vsel %vm7734, %v7737, %v7739
    %v7741 = vsel %vm7733, %v7720, %v7723
    %v7742 = vsel %vm7736, %v7729, 920167782
    %v7743 = vsel %vm7735, %v7726, %v7742
    %v7744 = vsel %vm7734, %v7741, %v7743
    %v7745 = vsel %vm7733, %v7723, %v7726
    %v7746 = vsel %vm7736, %v7732, 1326507024
    %v7747 = vsel %vm7735, %v7729, %v7746
    %v7748 = vsel %vm7734, %v7745, %v7747
    %v7749 = vshll.u32 %v7709, 8
    %v7750 = vmul.u32.u64.compose %v7749, %v7748
    %v7751 = vextract.low.u32 %v7750
    %v7752 = vextract.high.u32 %v7750
    %v7753 = vmul.u32.u64.compose %v7749, %v7744
    %v7754 = vextract.low.u32 %v7753
    %v7755 = vextract.high.u32 %v7753
    %v7756 = vmul.u32 %v7749, %v7740
    %v7757 = vadd.s32 %v7752, %v7754
    %vm7758 = vc.u32 %v7752, %v7754
    %v7759 = vadd.s32 %v7755, 1
    %v7760 = vsel %vm7758, %v7759, %v7755
    %v7761 = vadd.s32 %v7756, %v7760
    %v7762 = vadd.s32 %v7761, 536870912
    %v7763 = vshrl.u32 %v7762, 30
    %v7764 = vshll.u32 %v7763, 30
    %v7765 = vsub.s32 %v7761, %v7764
    %vm7766 = vcmp.lt.s32.totalorder %v7765, 0
    %v7767 = vsub.s32 0, %v7765
    %v7768 = vsel %vm7766, %v7767, %v7765
    %v7769 = vclz %v7768
    %v7770 = vsub.s32 %v7769, 2
    %vm7771 = vcmp.gt.s32.totalorder 0, %v7770
    %v7772 = vsel %vm7771, 0, %v7770
    %v7773 = vsub.s32 32, %v7772
    %v7774 = vshll.u32 %v7765, %v7772
    %v7775 = vshrl.u32 %v7757, %v7773
    %v7776 = vor.u32 %v7774, %v7775
    %v7777 = vsub.s32 4294967266, %v7772
    %v7778 = vadd.s32 %v7777, 127
    %v7779 = vshll.u32 %v7778, 23
    %v7780 = vor.u32 4788187, %v7779
    %v7781 = vand.u32 2147483647, %v7780
    %v7783 = vcvt.s32.f32 %v7776
    %v7784 = vmul.f32 %v7783, %v7781
    %v7785 = vxor.u32 %v7784, 2147483648
    %v7786 = vsel %vm7703, %v7785, %v7784
    %v7787 = vsub.s32 4, %v7763
    %v7788 = vsel %vm7703, %v7787, %v7763
    %v7789 = vsel %vm7702, %v5720, %v7786
    %v7790 = vsel %vm7702, 0, %v7788
    %v7791 = vcosq.f32.pop %v7789
    %v7792 = vsinq.f32.pop %v7789
    %vm7793 = vweird.f32 %v5720
    %v7794 = vadd.s32 %v7790, 3
    %v7795 = vand.u32 %v7794, 3
    %vm7796 = vcmp.lt.s32.totalorder %v7795, 2
    %vm7797 = vcmp.eq.s32.totalorder %v7795, 0
    %v7798 = vxor.u32 %v7792, 2147483648
    %v7799 = vsel %vm7797, %v7791, %v7798
    %vm7800 = vcmp.eq.s32.totalorder %v7795, 2
    %v7801 = vxor.u32 %v7791, 2147483648
    %v7802 = vsel %vm7800, %v7801, %v7792
    %v7803 = vsel %vm7796, %v7799, %v7802
    %v7804 = vsel %vm7793, nan, %v7803
    %v7805 = vand.u32 2147483647, %v5721
    %vm7806 = vcmp.le.f32.partialorder %v7805, 0.7853982
    %vm7807 = vcmp.lt.s32.totalorder %v5721, 0
    %v7808 = vand.u32 %v5721, 2139095040
    %v7809 = vshrl.u32 %v7808, 23
    %v7810 = vsub.s32 %v7809, 127
    %v7811 = vand.u32 2147483647, %v5721
    %v7812 = vand.u32 %v7811, 8388607
    %v7813 = vor.u32 %v7812, 8388608
    %v7814 = vsub.s32 0, %v7813
    %v7815 = vadd.s32 %v7810, 1
    %vm7816 = vcmp.gt.s32.totalorder %v7815, 0
    %v7817 = vsel %vm7816, %v7815, 0
    %v7818 = vshrl.u32 %v7817, 5
    %v7819 = vand.u32 %v7817, 31
    %v7820 = vsub.s32 32, %v7819
    %v7821 = vshrl.u32 683565275, %v7820
    %v7822 = vshll.u32 683565275, %v7819
    %v7823 = vshrl.u32 2475754826, %v7820
    %v7824 = vor.u32 %v7822, %v7823
    %v7825 = vshll.u32 2475754826, %v7819
    %v7826 = vshrl.u32 2131351028, %v7820
    %v7827 = vor.u32 %v7825, %v7826
    %v7828 = vshll.u32 2131351028, %v7819
    %v7829 = vshrl.u32 2102212464, %v7820
    %v7830 = vor.u32 %v7828, %v7829
    %v7831 = vshll.u32 2102212464, %v7819
    %v7832 = vshrl.u32 920167782, %v7820
    %v7833 = vor.u32 %v7831, %v7832
    %v7834 = vshll.u32 920167782, %v7819
    %v7835 = vshrl.u32 1326507024, %v7820
    %v7836 = vor.u32 %v7834, %v7835
    %vm7837 = vcmp.lt.s32.totalorder %v7818, 1
    %vm7838 = vcmp.lt.s32.totalorder %v7818, 2
    %vm7839 = vcmp.lt.s32.totalorder %v7818, 3
    %vm7840 = vcmp.lt.s32.totalorder %v7818, 4
    %v7841 = vsel %vm7837, %v7821, %v7824
    %v7842 = vsel %vm7840, %v7830, 2102212464
    %v7843 = vsel %vm7839, %v7827, %v7842
    %v7844 = vsel %vm7838, %v7841, %v7843
    %v7845 = vsel %vm7837, %v7824, %v7827
    %v7846 = vsel %vm7840, %v7833, 920167782
    %v7847 = vsel %vm7839, %v7830, %v7846
    %v7848 = vsel %vm7838, %v7845, %v7847
    %v7849 = vsel %vm7837, %v7827, %v7830
    %v7850 = vsel %vm7840, %v7836, 1326507024
    %v7851 = vsel %vm7839, %v7833, %v7850
    %v7852 = vsel %vm7838, %v7849, %v7851
    %v7853 = vshll.u32 %v7813, 8
    %v7854 = vmul.u32.u64.compose %v7853, %v7852
    %v7855 = vextract.low.u32 %v7854
    %v7856 = vextract.high.u32 %v7854
    %v7857 = vmul.u32.u64.compose %v7853, %v7848
    %v7858 = vextract.low.u32 %v7857
    %v7859 = vextract.high.u32 %v7857
    %v7860 = vmul.u32 %v7853, %v7844
    %v7861 = vadd.s32 %v7856, %v7858
    %vm7862 = vc.u32 %v7856, %v7858
    %v7863 = vadd.s32 %v7859, 1
    %v7864 = vsel %vm7862, %v7863, %v7859
    %v7865 = vadd.s32 %v7860, %v7864
    %v7866 = vadd.s32 %v7865, 536870912
    %v7867 = vshrl.u32 %v7866, 30
    %v7868 = vshll.u32 %v7867, 30
    %v7869 = vsub.s32 %v7865, %v7868
    %vm7870 = vcmp.lt.s32.totalorder %v7869, 0
    %v7871 = vsub.s32 0, %v7869
    %v7872 = vsel %vm7870, %v7871, %v7869
    %v7873 = vclz %v7872
    %v7874 = vsub.s32 %v7873, 2
    %vm7875 = vcmp.gt.s32.totalorder 0, %v7874
    %v7876 = vsel %vm7875, 0, %v7874
    %v7877 = vsub.s32 32, %v7876
    %v7878 = vshll.u32 %v7869, %v7876
    %v7879 = vshrl.u32 %v7861, %v7877
    %v7880 = vor.u32 %v7878, %v7879
    %v7881 = vsub.s32 4294967266, %v7876
    %v7882 = vadd.s32 %v7881, 127
    %v7883 = vshll.u32 %v7882, 23
    %v7884 = vor.u32 4788187, %v7883
    %v7885 = vand.u32 2147483647, %v7884
    %v7887 = vcvt.s32.f32 %v7880
    %v7888 = vmul.f32 %v7887, %v7885
    %v7889 = vxor.u32 %v7888, 2147483648
    %v7890 = vsel %vm7807, %v7889, %v7888
    %v7891 = vsub.s32 4, %v7867
    %v7892 = vsel %vm7807, %v7891, %v7867
    %v7893 = vsel %vm7806, %v5721, %v7890
    %v7894 = vsel %vm7806, 0, %v7892
    %v7895 = vcosq.f32.pop %v7893
    %v7896 = vsinq.f32.pop %v7893
    %vm7897 = vweird.f32 %v5721
    %v7898 = vadd.s32 %v7894, 3
    %v7899 = vand.u32 %v7898, 3
    %vm7900 = vcmp.lt.s32.totalorder %v7899, 2
    %vm7901 = vcmp.eq.s32.totalorder %v7899, 0
    %v7902 = vxor.u32 %v7896, 2147483648
    %v7903 = vsel %vm7901, %v7895, %v7902
    %vm7904 = vcmp.eq.s32.totalorder %v7899, 2
    %v7905 = vxor.u32 %v7895, 2147483648
    %v7906 = vsel %vm7904, %v7905, %v7896
    %v7907 = vsel %vm7900, %v7903, %v7906
    %v7908 = vsel %vm7897, nan, %v7907
    %v7909 = vand.u32 2147483647, %v5722
    %vm7910 = vcmp.le.f32.partialorder %v7909, 0.7853982
    %vm7911 = vcmp.lt.s32.totalorder %v5722, 0
    %v7912 = vand.u32 %v5722, 2139095040
    %v7913 = vshrl.u32 %v7912, 23
    %v7914 = vsub.s32 %v7913, 127
    %v7915 = vand.u32 2147483647, %v5722
    %v7916 = vand.u32 %v7915, 8388607
    %v7917 = vor.u32 %v7916, 8388608
    %v7918 = vsub.s32 0, %v7917
    %v7919 = vadd.s32 %v7914, 1
    %vm7920 = vcmp.gt.s32.totalorder %v7919, 0
    %v7921 = vsel %vm7920, %v7919, 0
    %v7922 = vshrl.u32 %v7921, 5
    %v7923 = vand.u32 %v7921, 31
    %v7924 = vsub.s32 32, %v7923
    %v7925 = vshrl.u32 683565275, %v7924
    %v7926 = vshll.u32 683565275, %v7923
    %v7927 = vshrl.u32 2475754826, %v7924
    %v7928 = vor.u32 %v7926, %v7927
    %v7929 = vshll.u32 2475754826, %v7923
    %v7930 = vshrl.u32 2131351028, %v7924
    %v7931 = vor.u32 %v7929, %v7930
    %v7932 = vshll.u32 2131351028, %v7923
    %v7933 = vshrl.u32 2102212464, %v7924
    %v7934 = vor.u32 %v7932, %v7933
    %v7935 = vshll.u32 2102212464, %v7923
    %v7936 = vshrl.u32 920167782, %v7924
    %v7937 = vor.u32 %v7935, %v7936
    %v7938 = vshll.u32 920167782, %v7923
    %v7939 = vshrl.u32 1326507024, %v7924
    %v7940 = vor.u32 %v7938, %v7939
    %vm7941 = vcmp.lt.s32.totalorder %v7922, 1
    %vm7942 = vcmp.lt.s32.totalorder %v7922, 2
    %vm7943 = vcmp.lt.s32.totalorder %v7922, 3
    %vm7944 = vcmp.lt.s32.totalorder %v7922, 4
    %v7945 = vsel %vm7941, %v7925, %v7928
    %v7946 = vsel %vm7944, %v7934, 2102212464
    %v7947 = vsel %vm7943, %v7931, %v7946
    %v7948 = vsel %vm7942, %v7945, %v7947
    %v7949 = vsel %vm7941, %v7928, %v7931
    %v7950 = vsel %vm7944, %v7937, 920167782
    %v7951 = vsel %vm7943, %v7934, %v7950
    %v7952 = vsel %vm7942, %v7949, %v7951
    %v7953 = vsel %vm7941, %v7931, %v7934
    %v7954 = vsel %vm7944, %v7940, 1326507024
    %v7955 = vsel %vm7943, %v7937, %v7954
    %v7956 = vsel %vm7942, %v7953, %v7955
    %v7957 = vshll.u32 %v7917, 8
    %v7958 = vmul.u32.u64.compose %v7957, %v7956
    %v7959 = vextract.low.u32 %v7958
    %v7960 = vextract.high.u32 %v7958
    %v7961 = vmul.u32.u64.compose %v7957, %v7952
    %v7962 = vextract.low.u32 %v7961
    %v7963 = vextract.high.u32 %v7961
    %v7964 = vmul.u32 %v7957, %v7948
    %v7965 = vadd.s32 %v7960, %v7962
    %vm7966 = vc.u32 %v7960, %v7962
    %v7967 = vadd.s32 %v7963, 1
    %v7968 = vsel %vm7966, %v7967, %v7963
    %v7969 = vadd.s32 %v7964, %v7968
    %v7970 = vadd.s32 %v7969, 536870912
    %v7971 = vshrl.u32 %v7970, 30
    %v7972 = vshll.u32 %v7971, 30
    %v7973 = vsub.s32 %v7969, %v7972
    %vm7974 = vcmp.lt.s32.totalorder %v7973, 0
    %v7975 = vsub.s32 0, %v7973
    %v7976 = vsel %vm7974, %v7975, %v7973
    %v7977 = vclz %v7976
    %v7978 = vsub.s32 %v7977, 2
    %vm7979 = vcmp.gt.s32.totalorder 0, %v7978
    %v7980 = vsel %vm7979, 0, %v7978
    %v7981 = vsub.s32 32, %v7980
    %v7982 = vshll.u32 %v7973, %v7980
    %v7983 = vshrl.u32 %v7965, %v7981
    %v7984 = vor.u32 %v7982, %v7983
    %v7985 = vsub.s32 4294967266, %v7980
    %v7986 = vadd.s32 %v7985, 127
    %v7987 = vshll.u32 %v7986, 23
    %v7988 = vor.u32 4788187, %v7987
    %v7989 = vand.u32 2147483647, %v7988
    %v7991 = vcvt.s32.f32 %v7984
    %v7992 = vmul.f32 %v7991, %v7989
    %v7993 = vxor.u32 %v7992, 2147483648
    %v7994 = vsel %vm7911, %v7993, %v7992
    %v7995 = vsub.s32 4, %v7971
    %v7996 = vsel %vm7911, %v7995, %v7971
    %v7997 = vsel %vm7910, %v5722, %v7994
    %v7998 = vsel %vm7910, 0, %v7996
    %v7999 = vcosq.f32.pop %v7997
    %v8000 = vsinq.f32.pop %v7997
    %vm8001 = vweird.f32 %v5722
    %v8002 = vadd.s32 %v7998, 3
    %v8003 = vand.u32 %v8002, 3
    %vm8004 = vcmp.lt.s32.totalorder %v8003, 2
    %vm8005 = vcmp.eq.s32.totalorder %v8003, 0
    %v8006 = vxor.u32 %v8000, 2147483648
    %v8007 = vsel %vm8005, %v7999, %v8006
    %vm8008 = vcmp.eq.s32.totalorder %v8003, 2
    %v8009 = vxor.u32 %v7999, 2147483648
    %v8010 = vsel %vm8008, %v8009, %v8000
    %v8011 = vsel %vm8004, %v8007, %v8010
    %v8012 = vsel %vm8001, nan, %v8011
    %v8013 = vand.u32 2147483647, %v5723
    %vm8014 = vcmp.le.f32.partialorder %v8013, 0.7853982
    %vm8015 = vcmp.lt.s32.totalorder %v5723, 0
    %v8016 = vand.u32 %v5723, 2139095040
    %v8017 = vshrl.u32 %v8016, 23
    %v8018 = vsub.s32 %v8017, 127
    %v8019 = vand.u32 2147483647, %v5723
    %v8020 = vand.u32 %v8019, 8388607
    %v8021 = vor.u32 %v8020, 8388608
    %v8022 = vsub.s32 0, %v8021
    %v8023 = vadd.s32 %v8018, 1
    %vm8024 = vcmp.gt.s32.totalorder %v8023, 0
    %v8025 = vsel %vm8024, %v8023, 0
    %v8026 = vshrl.u32 %v8025, 5
    %v8027 = vand.u32 %v8025, 31
    %v8028 = vsub.s32 32, %v8027
    %v8029 = vshrl.u32 683565275, %v8028
    %v8030 = vshll.u32 683565275, %v8027
    %v8031 = vshrl.u32 2475754826, %v8028
    %v8032 = vor.u32 %v8030, %v8031
    %v8033 = vshll.u32 2475754826, %v8027
    %v8034 = vshrl.u32 2131351028, %v8028
    %v8035 = vor.u32 %v8033, %v8034
    %v8036 = vshll.u32 2131351028, %v8027
    %v8037 = vshrl.u32 2102212464, %v8028
    %v8038 = vor.u32 %v8036, %v8037
    %v8039 = vshll.u32 2102212464, %v8027
    %v8040 = vshrl.u32 920167782, %v8028
    %v8041 = vor.u32 %v8039, %v8040
    %v8042 = vshll.u32 920167782, %v8027
    %v8043 = vshrl.u32 1326507024, %v8028
    %v8044 = vor.u32 %v8042, %v8043
    %vm8045 = vcmp.lt.s32.totalorder %v8026, 1
    %vm8046 = vcmp.lt.s32.totalorder %v8026, 2
    %vm8047 = vcmp.lt.s32.totalorder %v8026, 3
    %vm8048 = vcmp.lt.s32.totalorder %v8026, 4
    %v8049 = vsel %vm8045, %v8029, %v8032
    %v8050 = vsel %vm8048, %v8038, 2102212464
    %v8051 = vsel %vm8047, %v8035, %v8050
    %v8052 = vsel %vm8046, %v8049, %v8051
    %v8053 = vsel %vm8045, %v8032, %v8035
    %v8054 = vsel %vm8048, %v8041, 920167782
    %v8055 = vsel %vm8047, %v8038, %v8054
    %v8056 = vsel %vm8046, %v8053, %v8055
    %v8057 = vsel %vm8045, %v8035, %v8038
    %v8058 = vsel %vm8048, %v8044, 1326507024
    %v8059 = vsel %vm8047, %v8041, %v8058
    %v8060 = vsel %vm8046, %v8057, %v8059
    %v8061 = vshll.u32 %v8021, 8
    %v8062 = vmul.u32.u64.compose %v8061, %v8060
    %v8063 = vextract.low.u32 %v8062
    %v8064 = vextract.high.u32 %v8062
    %v8065 = vmul.u32.u64.compose %v8061, %v8056
    %v8066 = vextract.low.u32 %v8065
    %v8067 = vextract.high.u32 %v8065
    %v8068 = vmul.u32 %v8061, %v8052
    %v8069 = vadd.s32 %v8064, %v8066
    %vm8070 = vc.u32 %v8064, %v8066
    %v8071 = vadd.s32 %v8067, 1
    %v8072 = vsel %vm8070, %v8071, %v8067
    %v8073 = vadd.s32 %v8068, %v8072
    %v8074 = vadd.s32 %v8073, 536870912
    %v8075 = vshrl.u32 %v8074, 30
    %v8076 = vshll.u32 %v8075, 30
    %v8077 = vsub.s32 %v8073, %v8076
    %vm8078 = vcmp.lt.s32.totalorder %v8077, 0
    %v8079 = vsub.s32 0, %v8077
    %v8080 = vsel %vm8078, %v8079, %v8077
    %v8081 = vclz %v8080
    %v8082 = vsub.s32 %v8081, 2
    %vm8083 = vcmp.gt.s32.totalorder 0, %v8082
    %v8084 = vsel %vm8083, 0, %v8082
    %v8085 = vsub.s32 32, %v8084
    %v8086 = vshll.u32 %v8077, %v8084
    %v8087 = vshrl.u32 %v8069, %v8085
    %v8088 = vor.u32 %v8086, %v8087
    %v8089 = vsub.s32 4294967266, %v8084
    %v8090 = vadd.s32 %v8089, 127
    %v8091 = vshll.u32 %v8090, 23
    %v8092 = vor.u32 4788187, %v8091
    %v8093 = vand.u32 2147483647, %v8092
    %v8095 = vcvt.s32.f32 %v8088
    %v8096 = vmul.f32 %v8095, %v8093
    %v8097 = vxor.u32 %v8096, 2147483648
    %v8098 = vsel %vm8015, %v8097, %v8096
    %v8099 = vsub.s32 4, %v8075
    %v8100 = vsel %vm8015, %v8099, %v8075
    %v8101 = vsel %vm8014, %v5723, %v8098
    %v8102 = vsel %vm8014, 0, %v8100
    %v8103 = vcosq.f32.pop %v8101
    %v8104 = vsinq.f32.pop %v8101
    %vm8105 = vweird.f32 %v5723
    %v8106 = vadd.s32 %v8102, 3
    %v8107 = vand.u32 %v8106, 3
    %vm8108 = vcmp.lt.s32.totalorder %v8107, 2
    %vm8109 = vcmp.eq.s32.totalorder %v8107, 0
    %v8110 = vxor.u32 %v8104, 2147483648
    %v8111 = vsel %vm8109, %v8103, %v8110
    %vm8112 = vcmp.eq.s32.totalorder %v8107, 2
    %v8113 = vxor.u32 %v8103, 2147483648
    %v8114 = vsel %vm8112, %v8113, %v8104
    %v8115 = vsel %vm8108, %v8111, %v8114
    %v8116 = vsel %vm8105, nan, %v8115
    %v8117 = vand.u32 2147483647, %v5724
    %vm8118 = vcmp.le.f32.partialorder %v8117, 0.7853982
    %vm8119 = vcmp.lt.s32.totalorder %v5724, 0
    %v8120 = vand.u32 %v5724, 2139095040
    %v8121 = vshrl.u32 %v8120, 23
    %v8122 = vsub.s32 %v8121, 127
    %v8123 = vand.u32 2147483647, %v5724
    %v8124 = vand.u32 %v8123, 8388607
    %v8125 = vor.u32 %v8124, 8388608
    %v8126 = vsub.s32 0, %v8125
    %v8127 = vadd.s32 %v8122, 1
    %vm8128 = vcmp.gt.s32.totalorder %v8127, 0
    %v8129 = vsel %vm8128, %v8127, 0
    %v8130 = vshrl.u32 %v8129, 5
    %v8131 = vand.u32 %v8129, 31
    %v8132 = vsub.s32 32, %v8131
    %v8133 = vshrl.u32 683565275, %v8132
    %v8134 = vshll.u32 683565275, %v8131
    %v8135 = vshrl.u32 2475754826, %v8132
    %v8136 = vor.u32 %v8134, %v8135
    %v8137 = vshll.u32 2475754826, %v8131
    %v8138 = vshrl.u32 2131351028, %v8132
    %v8139 = vor.u32 %v8137, %v8138
    %v8140 = vshll.u32 2131351028, %v8131
    %v8141 = vshrl.u32 2102212464, %v8132
    %v8142 = vor.u32 %v8140, %v8141
    %v8143 = vshll.u32 2102212464, %v8131
    %v8144 = vshrl.u32 920167782, %v8132
    %v8145 = vor.u32 %v8143, %v8144
    %v8146 = vshll.u32 920167782, %v8131
    %v8147 = vshrl.u32 1326507024, %v8132
    %v8148 = vor.u32 %v8146, %v8147
    %vm8149 = vcmp.lt.s32.totalorder %v8130, 1
    %vm8150 = vcmp.lt.s32.totalorder %v8130, 2
    %vm8151 = vcmp.lt.s32.totalorder %v8130, 3
    %vm8152 = vcmp.lt.s32.totalorder %v8130, 4
    %v8153 = vsel %vm8149, %v8133, %v8136
    %v8154 = vsel %vm8152, %v8142, 2102212464
    %v8155 = vsel %vm8151, %v8139, %v8154
    %v8156 = vsel %vm8150, %v8153, %v8155
    %v8157 = vsel %vm8149, %v8136, %v8139
    %v8158 = vsel %vm8152, %v8145, 920167782
    %v8159 = vsel %vm8151, %v8142, %v8158
    %v8160 = vsel %vm8150, %v8157, %v8159
    %v8161 = vsel %vm8149, %v8139, %v8142
    %v8162 = vsel %vm8152, %v8148, 1326507024
    %v8163 = vsel %vm8151, %v8145, %v8162
    %v8164 = vsel %vm8150, %v8161, %v8163
    %v8165 = vshll.u32 %v8125, 8
    %v8166 = vmul.u32.u64.compose %v8165, %v8164
    %v8167 = vextract.low.u32 %v8166
    %v8168 = vextract.high.u32 %v8166
    %v8169 = vmul.u32.u64.compose %v8165, %v8160
    %v8170 = vextract.low.u32 %v8169
    %v8171 = vextract.high.u32 %v8169
    %v8172 = vmul.u32 %v8165, %v8156
    %v8173 = vadd.s32 %v8168, %v8170
    %vm8174 = vc.u32 %v8168, %v8170
    %v8175 = vadd.s32 %v8171, 1
    %v8176 = vsel %vm8174, %v8175, %v8171
    %v8177 = vadd.s32 %v8172, %v8176
    %v8178 = vadd.s32 %v8177, 536870912
    %v8179 = vshrl.u32 %v8178, 30
    %v8180 = vshll.u32 %v8179, 30
    %v8181 = vsub.s32 %v8177, %v8180
    %vm8182 = vcmp.lt.s32.totalorder %v8181, 0
    %v8183 = vsub.s32 0, %v8181
    %v8184 = vsel %vm8182, %v8183, %v8181
    %v8185 = vclz %v8184
    %v8186 = vsub.s32 %v8185, 2
    %vm8187 = vcmp.gt.s32.totalorder 0, %v8186
    %v8188 = vsel %vm8187, 0, %v8186
    %v8189 = vsub.s32 32, %v8188
    %v8190 = vshll.u32 %v8181, %v8188
    %v8191 = vshrl.u32 %v8173, %v8189
    %v8192 = vor.u32 %v8190, %v8191
    %v8193 = vsub.s32 4294967266, %v8188
    %v8194 = vadd.s32 %v8193, 127
    %v8195 = vshll.u32 %v8194, 23
    %v8196 = vor.u32 4788187, %v8195
    %v8197 = vand.u32 2147483647, %v8196
    %v8199 = vcvt.s32.f32 %v8192
    %v8200 = vmul.f32 %v8199, %v8197
    %v8201 = vxor.u32 %v8200, 2147483648
    %v8202 = vsel %vm8119, %v8201, %v8200
    %v8203 = vsub.s32 4, %v8179
    %v8204 = vsel %vm8119, %v8203, %v8179
    %v8205 = vsel %vm8118, %v5724, %v8202
    %v8206 = vsel %vm8118, 0, %v8204
    %v8207 = vcosq.f32.pop %v8205
    %v8208 = vsinq.f32.pop %v8205
    %vm8209 = vweird.f32 %v5724
    %v8210 = vadd.s32 %v8206, 3
    %v8211 = vand.u32 %v8210, 3
    %vm8212 = vcmp.lt.s32.totalorder %v8211, 2
    %vm8213 = vcmp.eq.s32.totalorder %v8211, 0
    %v8214 = vxor.u32 %v8208, 2147483648
    %v8215 = vsel %vm8213, %v8207, %v8214
    %vm8216 = vcmp.eq.s32.totalorder %v8211, 2
    %v8217 = vxor.u32 %v8207, 2147483648
    %v8218 = vsel %vm8216, %v8217, %v8208
    %v8219 = vsel %vm8212, %v8215, %v8218
    %v8220 = vsel %vm8209, nan, %v8219
    %8222 = vset.pattern.permute.xlu0 0
    %8223 = vperm.xlu0 %8222, %v5671
    %v8224 = vpop.permute.xlu0 %8223
    %8227 = vset.pattern.permute.xlu0 0
    %8228 = vperm.xlu0 %8227, %v5672
    %v8229 = vpop.permute.xlu0 %8228
    %v8231 = vmul.f32 %v8224, %v5828
    %v8232 = vmul.f32 %v8229, %v5932
    %v8233 = vmul.f32 %v8224, %v6036
    %v8234 = vmul.f32 %v8229, %v6140
    %v8235 = vmul.f32 %v8224, %v6244
    %v8236 = vmul.f32 %v8229, %v6348
    %v8237 = vmul.f32 %v8224, %v6452
    %v8238 = vmul.f32 %v8229, %v6556
    %v8239 = vmul.f32 %v8224, %v6660
    %v8240 = vmul.f32 %v8229, %v6764
    %v8241 = vmul.f32 %v8224, %v6868
    %v8242 = vmul.f32 %v8229, %v6972
    %v8243 = vmul.f32 %v8224, %v7076
    %v8244 = vmul.f32 %v8229, %v7180
    %v8245 = vmul.f32 %v8224, %v7284
    %v8246 = vmul.f32 %v8229, %v7388
    %v8247 = vmul.f32 %v8224, %v7492
    %v8248 = vmul.f32 %v8229, %v7596
    %v8249 = vmul.f32 %v8224, %v7700
    %v8250 = vmul.f32 %v8229, %v7804
    %v8251 = vmul.f32 %v8224, %v7908
    %v8252 = vmul.f32 %v8229, %v8012
    %v8253 = vmul.f32 %v8224, %v8116
    %v8254 = vmul.f32 %v8229, %v8220
    %v8255 = vadd.f32 %v8231, %v8232
    %v8256 = vrot.slane %v8255, 4
    %v8257 = vadd.f32 %v8255, %v8256
    %v8258 = vrot.slane %v8257, 2
    %v8259 = vadd.f32 %v8257, %v8258
    %v8260 = vrot.slane %v8259, 1
    %v8261 = vadd.f32 %v8259, %v8260
    %v8262 = vadd.f32 %v8233, %v8234
    %v8263 = vrot.slane %v8262, 4
    %v8264 = vadd.f32 %v8262, %v8263
    %v8265 = vrot.slane %v8264, 2
    %v8266 = vadd.f32 %v8264, %v8265
    %v8267 = vrot.slane %v8266, 1
    %v8268 = vadd.f32 %v8266, %v8267
    %v8269 = vadd.f32 %v8235, %v8236
    %v8270 = vrot.slane %v8269, 4
    %v8271 = vadd.f32 %v8269, %v8270
    %v8272 = vrot.slane %v8271, 2
    %v8273 = vadd.f32 %v8271, %v8272
    %v8274 = vrot.slane %v8273, 1
    %v8275 = vadd.f32 %v8273, %v8274
    %v8276 = vadd.f32 %v8237, %v8238
    %v8277 = vrot.slane %v8276, 4
    %v8278 = vadd.f32 %v8276, %v8277
    %v8279 = vrot.slane %v8278, 2
    %v8280 = vadd.f32 %v8278, %v8279
    %v8281 = vrot.slane %v8280, 1
    %v8282 = vadd.f32 %v8280, %v8281
    %v8283 = vadd.f32 %v8239, %v8240
    %v8284 = vrot.slane %v8283, 4
    %v8285 = vadd.f32 %v8283, %v8284
    %v8286 = vrot.slane %v8285, 2
    %v8287 = vadd.f32 %v8285, %v8286
    %v8288 = vrot.slane %v8287, 1
    %v8289 = vadd.f32 %v8287, %v8288
    %v8290 = vadd.f32 %v8241, %v8242
    %v8291 = vrot.slane %v8290, 4
    %v8292 = vadd.f32 %v8290, %v8291
    %v8293 = vrot.slane %v8292, 2
    %v8294 = vadd.f32 %v8292, %v8293
    %v8295 = vrot.slane %v8294, 1
    %v8296 = vadd.f32 %v8294, %v8295
    %v8297 = vadd.f32 %v8243, %v8244
    %v8298 = vrot.slane %v8297, 4
    %v8299 = vadd.f32 %v8297, %v8298
    %v8300 = vrot.slane %v8299, 2
    %v8301 = vadd.f32 %v8299, %v8300
    %v8302 = vrot.slane %v8301, 1
    %v8303 = vadd.f32 %v8301, %v8302
    %v8304 = vadd.f32 %v8245, %v8246
    %v8305 = vrot.slane %v8304, 4
    %v8306 = vadd.f32 %v8304, %v8305
    %v8307 = vrot.slane %v8306, 2
    %v8308 = vadd.f32 %v8306, %v8307
    %v8309 = vrot.slane %v8308, 1
    %v8310 = vadd.f32 %v8308, %v8309
    %v8311 = vadd.f32 %v8247, %v8248
    %v8312 = vrot.slane %v8311, 4
    %v8313 = vadd.f32 %v8311, %v8312
    %v8314 = vrot.slane %v8313, 2
    %v8315 = vadd.f32 %v8313, %v8314
    %v8316 = vrot.slane %v8315, 1
    %v8317 = vadd.f32 %v8315, %v8316
    %v8318 = vadd.f32 %v8249, %v8250
    %v8319 = vrot.slane %v8318, 4
    %v8320 = vadd.f32 %v8318, %v8319
    %v8321 = vrot.slane %v8320, 2
    %v8322 = vadd.f32 %v8320, %v8321
    %v8323 = vrot.slane %v8322, 1
    %v8324 = vadd.f32 %v8322, %v8323
    %v8325 = vadd.f32 %v8251, %v8252
    %v8326 = vrot.slane %v8325, 4
    %v8327 = vadd.f32 %v8325, %v8326
    %v8328 = vrot.slane %v8327, 2
    %v8329 = vadd.f32 %v8327, %v8328
    %v8330 = vrot.slane %v8329, 1
    %v8331 = vadd.f32 %v8329, %v8330
    %v8332 = vadd.f32 %v8253, %v8254
    %v8333 = vrot.slane %v8332, 4
    %v8334 = vadd.f32 %v8332, %v8333
    %v8335 = vrot.slane %v8334, 2
    %v8336 = vadd.f32 %v8334, %v8335
    %v8337 = vrot.slane %v8336, 1
    %v8338 = vadd.f32 %v8336, %v8337
    %v8339 = vadd.f32 %v5657, %v8261
    %v8340 = vadd.f32 %v5658, %v8268
    %v8341 = vadd.f32 %v5659, %v8275
    %v8342 = vadd.f32 %v5660, %v8282
    %v8343 = vadd.f32 %v5661, %v8289
    %v8344 = vadd.f32 %v5662, %v8296
    %v8345 = vadd.f32 %v5663, %v8303
    %v8346 = vadd.f32 %v5664, %v8310
    %v8347 = vadd.f32 %v5665, %v8317
    %v8348 = vadd.f32 %v5666, %v8324
    %v8349 = vadd.f32 %v5667, %v8331
    %v8350 = vadd.f32 %v5668, %v8338
    %v8351 = vld [vmem:[%s0 + $0x3] sm:$0x1]
    %s8352 = scalar_lea.vmem %s3, 48
    %v8353 = vld [vmem:[%s8352] sm:$0xff]
    %v8354 = vld [vmem:[%s8352 + $0x8] sm:$0xff]
    %v8355 = vlaneseq
    %v8356 = vshrl.u32 %v8355, 7
    %v8357 = vsub.s32 0, %v8356
    %v8358 = vrot.slane %v8351, %v8357
    %v8359 = vmul.f32 %v8358, %v76
    %v8360 = vmul.f32 %v8358, %v81
    %v8361 = vmul.f32 %v8358, %v86
    %v8362 = vmul.f32 %v8358, %v91
    %v8363 = vmul.f32 %v8358, %v96
    %v8364 = vmul.f32 %v8358, %v101
    %v8365 = vmul.f32 %v8358, %v106
    %v8366 = vmul.f32 %v8358, %v111
    %v8367 = vmul.f32 %v8358, %v116
    %v8368 = vmul.f32 %v8358, %v121
    %v8369 = vmul.f32 %v8358, %v126
    %v8370 = vmul.f32 %v8358, %v131
    %v8371 = vmul.f32 %v8358, %v136
    %v8372 = vmul.f32 %v8358, %v141
    %v8373 = vmul.f32 %v8358, %v146
    %v8374 = vmul.f32 %v8358, %v151
    %v8375 = vmul.f32 %v8358, %v156
    %v8376 = vmul.f32 %v8358, %v161
    %v8377 = vmul.f32 %v8358, %v166
    %v8378 = vmul.f32 %v8358, %v171
    %v8379 = vmul.f32 %v8358, %v176
    %v8380 = vmul.f32 %v8358, %v181
    %v8381 = vmul.f32 %v8358, %v186
    %v8382 = vmul.f32 %v8358, %v191
    %v8383 = vadd.f32 %v8359, %v220
    %v8384 = vadd.f32 %v8360, %v225
    %v8385 = vadd.f32 %v8361, %v230
    %v8386 = vadd.f32 %v8362, %v235
    %v8387 = vadd.f32 %v8363, %v240
    %v8388 = vadd.f32 %v8364, %v245
    %v8389 = vadd.f32 %v8365, %v250
    %v8390 = vadd.f32 %v8366, %v255
    %v8391 = vadd.f32 %v8367, %v260
    %v8392 = vadd.f32 %v8368, %v265
    %v8393 = vadd.f32 %v8369, %v270
    %v8394 = vadd.f32 %v8370, %v275
    %v8395 = vadd.f32 %v8371, %v280
    %v8396 = vadd.f32 %v8372, %v285
    %v8397 = vadd.f32 %v8373, %v290
    %v8398 = vadd.f32 %v8374, %v295
    %v8399 = vadd.f32 %v8375, %v300
    %v8400 = vadd.f32 %v8376, %v305
    %v8401 = vadd.f32 %v8377, %v310
    %v8402 = vadd.f32 %v8378, %v315
    %v8403 = vadd.f32 %v8379, %v320
    %v8404 = vadd.f32 %v8380, %v325
    %v8405 = vadd.f32 %v8381, %v330
    %v8406 = vadd.f32 %v8382, %v335
    %v8407 = vand.u32 2147483647, %v8383
    %vm8408 = vcmp.le.f32.partialorder %v8407, 0.7853982
    %vm8409 = vcmp.lt.s32.totalorder %v8383, 0
    %v8410 = vand.u32 %v8383, 2139095040
    %v8411 = vshrl.u32 %v8410, 23
    %v8412 = vsub.s32 %v8411, 127
    %v8413 = vand.u32 2147483647, %v8383
    %v8414 = vand.u32 %v8413, 8388607
    %v8415 = vor.u32 %v8414, 8388608
    %v8416 = vsub.s32 0, %v8415
    %v8417 = vadd.s32 %v8412, 1
    %vm8418 = vcmp.gt.s32.totalorder %v8417, 0
    %v8419 = vsel %vm8418, %v8417, 0
    %v8420 = vshrl.u32 %v8419, 5
    %v8421 = vand.u32 %v8419, 31
    %v8422 = vsub.s32 32, %v8421
    %v8423 = vshrl.u32 683565275, %v8422
    %v8424 = vshll.u32 683565275, %v8421
    %v8425 = vshrl.u32 2475754826, %v8422
    %v8426 = vor.u32 %v8424, %v8425
    %v8427 = vshll.u32 2475754826, %v8421
    %v8428 = vshrl.u32 2131351028, %v8422
    %v8429 = vor.u32 %v8427, %v8428
    %v8430 = vshll.u32 2131351028, %v8421
    %v8431 = vshrl.u32 2102212464, %v8422
    %v8432 = vor.u32 %v8430, %v8431
    %v8433 = vshll.u32 2102212464, %v8421
    %v8434 = vshrl.u32 920167782, %v8422
    %v8435 = vor.u32 %v8433, %v8434
    %v8436 = vshll.u32 920167782, %v8421
    %v8437 = vshrl.u32 1326507024, %v8422
    %v8438 = vor.u32 %v8436, %v8437
    %vm8439 = vcmp.lt.s32.totalorder %v8420, 1
    %vm8440 = vcmp.lt.s32.totalorder %v8420, 2
    %vm8441 = vcmp.lt.s32.totalorder %v8420, 3
    %vm8442 = vcmp.lt.s32.totalorder %v8420, 4
    %v8443 = vsel %vm8439, %v8423, %v8426
    %v8444 = vsel %vm8442, %v8432, 2102212464
    %v8445 = vsel %vm8441, %v8429, %v8444
    %v8446 = vsel %vm8440, %v8443, %v8445
    %v8447 = vsel %vm8439, %v8426, %v8429
    %v8448 = vsel %vm8442, %v8435, 920167782
    %v8449 = vsel %vm8441, %v8432, %v8448
    %v8450 = vsel %vm8440, %v8447, %v8449
    %v8451 = vsel %vm8439, %v8429, %v8432
    %v8452 = vsel %vm8442, %v8438, 1326507024
    %v8453 = vsel %vm8441, %v8435, %v8452
    %v8454 = vsel %vm8440, %v8451, %v8453
    %v8455 = vshll.u32 %v8415, 8
    %v8456 = vmul.u32.u64.compose %v8455, %v8454
    %v8457 = vextract.low.u32 %v8456
    %v8458 = vextract.high.u32 %v8456
    %v8459 = vmul.u32.u64.compose %v8455, %v8450
    %v8460 = vextract.low.u32 %v8459
    %v8461 = vextract.high.u32 %v8459
    %v8462 = vmul.u32 %v8455, %v8446
    %v8463 = vadd.s32 %v8458, %v8460
    %vm8464 = vc.u32 %v8458, %v8460
    %v8465 = vadd.s32 %v8461, 1
    %v8466 = vsel %vm8464, %v8465, %v8461
    %v8467 = vadd.s32 %v8462, %v8466
    %v8468 = vadd.s32 %v8467, 536870912
    %v8469 = vshrl.u32 %v8468, 30
    %v8470 = vshll.u32 %v8469, 30
    %v8471 = vsub.s32 %v8467, %v8470
    %vm8472 = vcmp.lt.s32.totalorder %v8471, 0
    %v8473 = vsub.s32 0, %v8471
    %v8474 = vsel %vm8472, %v8473, %v8471
    %v8475 = vclz %v8474
    %v8476 = vsub.s32 %v8475, 2
    %vm8477 = vcmp.gt.s32.totalorder 0, %v8476
    %v8478 = vsel %vm8477, 0, %v8476
    %v8479 = vsub.s32 32, %v8478
    %v8480 = vshll.u32 %v8471, %v8478
    %v8481 = vshrl.u32 %v8463, %v8479
    %v8482 = vor.u32 %v8480, %v8481
    %v8483 = vsub.s32 4294967266, %v8478
    %v8484 = vadd.s32 %v8483, 127
    %v8485 = vshll.u32 %v8484, 23
    %v8486 = vor.u32 4788187, %v8485
    %v8487 = vand.u32 2147483647, %v8486
    %v8489 = vcvt.s32.f32 %v8482
    %v8490 = vmul.f32 %v8489, %v8487
    %v8491 = vxor.u32 %v8490, 2147483648
    %v8492 = vsel %vm8409, %v8491, %v8490
    %v8493 = vsub.s32 4, %v8469
    %v8494 = vsel %vm8409, %v8493, %v8469
    %v8495 = vsel %vm8408, %v8383, %v8492
    %v8496 = vsel %vm8408, 0, %v8494
    %v8497 = vcosq.f32.pop %v8495
    %v8498 = vsinq.f32.pop %v8495
    %vm8499 = vweird.f32 %v8383
    %v8500 = vadd.s32 %v8496, 3
    %v8501 = vand.u32 %v8500, 3
    %vm8502 = vcmp.lt.s32.totalorder %v8501, 2
    %vm8503 = vcmp.eq.s32.totalorder %v8501, 0
    %v8504 = vxor.u32 %v8498, 2147483648
    %v8505 = vsel %vm8503, %v8497, %v8504
    %vm8506 = vcmp.eq.s32.totalorder %v8501, 2
    %v8507 = vxor.u32 %v8497, 2147483648
    %v8508 = vsel %vm8506, %v8507, %v8498
    %v8509 = vsel %vm8502, %v8505, %v8508
    %v8510 = vsel %vm8499, nan, %v8509
    %v8511 = vand.u32 2147483647, %v8384
    %vm8512 = vcmp.le.f32.partialorder %v8511, 0.7853982
    %vm8513 = vcmp.lt.s32.totalorder %v8384, 0
    %v8514 = vand.u32 %v8384, 2139095040
    %v8515 = vshrl.u32 %v8514, 23
    %v8516 = vsub.s32 %v8515, 127
    %v8517 = vand.u32 2147483647, %v8384
    %v8518 = vand.u32 %v8517, 8388607
    %v8519 = vor.u32 %v8518, 8388608
    %v8520 = vsub.s32 0, %v8519
    %v8521 = vadd.s32 %v8516, 1
    %vm8522 = vcmp.gt.s32.totalorder %v8521, 0
    %v8523 = vsel %vm8522, %v8521, 0
    %v8524 = vshrl.u32 %v8523, 5
    %v8525 = vand.u32 %v8523, 31
    %v8526 = vsub.s32 32, %v8525
    %v8527 = vshrl.u32 683565275, %v8526
    %v8528 = vshll.u32 683565275, %v8525
    %v8529 = vshrl.u32 2475754826, %v8526
    %v8530 = vor.u32 %v8528, %v8529
    %v8531 = vshll.u32 2475754826, %v8525
    %v8532 = vshrl.u32 2131351028, %v8526
    %v8533 = vor.u32 %v8531, %v8532
    %v8534 = vshll.u32 2131351028, %v8525
    %v8535 = vshrl.u32 2102212464, %v8526
    %v8536 = vor.u32 %v8534, %v8535
    %v8537 = vshll.u32 2102212464, %v8525
    %v8538 = vshrl.u32 920167782, %v8526
    %v8539 = vor.u32 %v8537, %v8538
    %v8540 = vshll.u32 920167782, %v8525
    %v8541 = vshrl.u32 1326507024, %v8526
    %v8542 = vor.u32 %v8540, %v8541
    %vm8543 = vcmp.lt.s32.totalorder %v8524, 1
    %vm8544 = vcmp.lt.s32.totalorder %v8524, 2
    %vm8545 = vcmp.lt.s32.totalorder %v8524, 3
    %vm8546 = vcmp.lt.s32.totalorder %v8524, 4
    %v8547 = vsel %vm8543, %v8527, %v8530
    %v8548 = vsel %vm8546, %v8536, 2102212464
    %v8549 = vsel %vm8545, %v8533, %v8548
    %v8550 = vsel %vm8544, %v8547, %v8549
    %v8551 = vsel %vm8543, %v8530, %v8533
    %v8552 = vsel %vm8546, %v8539, 920167782
    %v8553 = vsel %vm8545, %v8536, %v8552
    %v8554 = vsel %vm8544, %v8551, %v8553
    %v8555 = vsel %vm8543, %v8533, %v8536
    %v8556 = vsel %vm8546, %v8542, 1326507024
    %v8557 = vsel %vm8545, %v8539, %v8556
    %v8558 = vsel %vm8544, %v8555, %v8557
    %v8559 = vshll.u32 %v8519, 8
    %v8560 = vmul.u32.u64.compose %v8559, %v8558
    %v8561 = vextract.low.u32 %v8560
    %v8562 = vextract.high.u32 %v8560
    %v8563 = vmul.u32.u64.compose %v8559, %v8554
    %v8564 = vextract.low.u32 %v8563
    %v8565 = vextract.high.u32 %v8563
    %v8566 = vmul.u32 %v8559, %v8550
    %v8567 = vadd.s32 %v8562, %v8564
    %vm8568 = vc.u32 %v8562, %v8564
    %v8569 = vadd.s32 %v8565, 1
    %v8570 = vsel %vm8568, %v8569, %v8565
    %v8571 = vadd.s32 %v8566, %v8570
    %v8572 = vadd.s32 %v8571, 536870912
    %v8573 = vshrl.u32 %v8572, 30
    %v8574 = vshll.u32 %v8573, 30
    %v8575 = vsub.s32 %v8571, %v8574
    %vm8576 = vcmp.lt.s32.totalorder %v8575, 0
    %v8577 = vsub.s32 0, %v8575
    %v8578 = vsel %vm8576, %v8577, %v8575
    %v8579 = vclz %v8578
    %v8580 = vsub.s32 %v8579, 2
    %vm8581 = vcmp.gt.s32.totalorder 0, %v8580
    %v8582 = vsel %vm8581, 0, %v8580
    %v8583 = vsub.s32 32, %v8582
    %v8584 = vshll.u32 %v8575, %v8582
    %v8585 = vshrl.u32 %v8567, %v8583
    %v8586 = vor.u32 %v8584, %v8585
    %v8587 = vsub.s32 4294967266, %v8582
    %v8588 = vadd.s32 %v8587, 127
    %v8589 = vshll.u32 %v8588, 23
    %v8590 = vor.u32 4788187, %v8589
    %v8591 = vand.u32 2147483647, %v8590
    %v8593 = vcvt.s32.f32 %v8586
    %v8594 = vmul.f32 %v8593, %v8591
    %v8595 = vxor.u32 %v8594, 2147483648
    %v8596 = vsel %vm8513, %v8595, %v8594
    %v8597 = vsub.s32 4, %v8573
    %v8598 = vsel %vm8513, %v8597, %v8573
    %v8599 = vsel %vm8512, %v8384, %v8596
    %v8600 = vsel %vm8512, 0, %v8598
    %v8601 = vcosq.f32.pop %v8599
    %v8602 = vsinq.f32.pop %v8599
    %vm8603 = vweird.f32 %v8384
    %v8604 = vadd.s32 %v8600, 3
    %v8605 = vand.u32 %v8604, 3
    %vm8606 = vcmp.lt.s32.totalorder %v8605, 2
    %vm8607 = vcmp.eq.s32.totalorder %v8605, 0
    %v8608 = vxor.u32 %v8602, 2147483648
    %v8609 = vsel %vm8607, %v8601, %v8608
    %vm8610 = vcmp.eq.s32.totalorder %v8605, 2
    %v8611 = vxor.u32 %v8601, 2147483648
    %v8612 = vsel %vm8610, %v8611, %v8602
    %v8613 = vsel %vm8606, %v8609, %v8612
    %v8614 = vsel %vm8603, nan, %v8613
    %v8615 = vand.u32 2147483647, %v8385
    %vm8616 = vcmp.le.f32.partialorder %v8615, 0.7853982
    %vm8617 = vcmp.lt.s32.totalorder %v8385, 0
    %v8618 = vand.u32 %v8385, 2139095040
    %v8619 = vshrl.u32 %v8618, 23
    %v8620 = vsub.s32 %v8619, 127
    %v8621 = vand.u32 2147483647, %v8385
    %v8622 = vand.u32 %v8621, 8388607
    %v8623 = vor.u32 %v8622, 8388608
    %v8624 = vsub.s32 0, %v8623
    %v8625 = vadd.s32 %v8620, 1
    %vm8626 = vcmp.gt.s32.totalorder %v8625, 0
    %v8627 = vsel %vm8626, %v8625, 0
    %v8628 = vshrl.u32 %v8627, 5
    %v8629 = vand.u32 %v8627, 31
    %v8630 = vsub.s32 32, %v8629
    %v8631 = vshrl.u32 683565275, %v8630
    %v8632 = vshll.u32 683565275, %v8629
    %v8633 = vshrl.u32 2475754826, %v8630
    %v8634 = vor.u32 %v8632, %v8633
    %v8635 = vshll.u32 2475754826, %v8629
    %v8636 = vshrl.u32 2131351028, %v8630
    %v8637 = vor.u32 %v8635, %v8636
    %v8638 = vshll.u32 2131351028, %v8629
    %v8639 = vshrl.u32 2102212464, %v8630
    %v8640 = vor.u32 %v8638, %v8639
    %v8641 = vshll.u32 2102212464, %v8629
    %v8642 = vshrl.u32 920167782, %v8630
    %v8643 = vor.u32 %v8641, %v8642
    %v8644 = vshll.u32 920167782, %v8629
    %v8645 = vshrl.u32 1326507024, %v8630
    %v8646 = vor.u32 %v8644, %v8645
    %vm8647 = vcmp.lt.s32.totalorder %v8628, 1
    %vm8648 = vcmp.lt.s32.totalorder %v8628, 2
    %vm8649 = vcmp.lt.s32.totalorder %v8628, 3
    %vm8650 = vcmp.lt.s32.totalorder %v8628, 4
    %v8651 = vsel %vm8647, %v8631, %v8634
    %v8652 = vsel %vm8650, %v8640, 2102212464
    %v8653 = vsel %vm8649, %v8637, %v8652
    %v8654 = vsel %vm8648, %v8651, %v8653
    %v8655 = vsel %vm8647, %v8634, %v8637
    %v8656 = vsel %vm8650, %v8643, 920167782
    %v8657 = vsel %vm8649, %v8640, %v8656
    %v8658 = vsel %vm8648, %v8655, %v8657
    %v8659 = vsel %vm8647, %v8637, %v8640
    %v8660 = vsel %vm8650, %v8646, 1326507024
    %v8661 = vsel %vm8649, %v8643, %v8660
    %v8662 = vsel %vm8648, %v8659, %v8661
    %v8663 = vshll.u32 %v8623, 8
    %v8664 = vmul.u32.u64.compose %v8663, %v8662
    %v8665 = vextract.low.u32 %v8664
    %v8666 = vextract.high.u32 %v8664
    %v8667 = vmul.u32.u64.compose %v8663, %v8658
    %v8668 = vextract.low.u32 %v8667
    %v8669 = vextract.high.u32 %v8667
    %v8670 = vmul.u32 %v8663, %v8654
    %v8671 = vadd.s32 %v8666, %v8668
    %vm8672 = vc.u32 %v8666, %v8668
    %v8673 = vadd.s32 %v8669, 1
    %v8674 = vsel %vm8672, %v8673, %v8669
    %v8675 = vadd.s32 %v8670, %v8674
    %v8676 = vadd.s32 %v8675, 536870912
    %v8677 = vshrl.u32 %v8676, 30
    %v8678 = vshll.u32 %v8677, 30
    %v8679 = vsub.s32 %v8675, %v8678
    %vm8680 = vcmp.lt.s32.totalorder %v8679, 0
    %v8681 = vsub.s32 0, %v8679
    %v8682 = vsel %vm8680, %v8681, %v8679
    %v8683 = vclz %v8682
    %v8684 = vsub.s32 %v8683, 2
    %vm8685 = vcmp.gt.s32.totalorder 0, %v8684
    %v8686 = vsel %vm8685, 0, %v8684
    %v8687 = vsub.s32 32, %v8686
    %v8688 = vshll.u32 %v8679, %v8686
    %v8689 = vshrl.u32 %v8671, %v8687
    %v8690 = vor.u32 %v8688, %v8689
    %v8691 = vsub.s32 4294967266, %v8686
    %v8692 = vadd.s32 %v8691, 127
    %v8693 = vshll.u32 %v8692, 23
    %v8694 = vor.u32 4788187, %v8693
    %v8695 = vand.u32 2147483647, %v8694
    %v8697 = vcvt.s32.f32 %v8690
    %v8698 = vmul.f32 %v8697, %v8695
    %v8699 = vxor.u32 %v8698, 2147483648
    %v8700 = vsel %vm8617, %v8699, %v8698
    %v8701 = vsub.s32 4, %v8677
    %v8702 = vsel %vm8617, %v8701, %v8677
    %v8703 = vsel %vm8616, %v8385, %v8700
    %v8704 = vsel %vm8616, 0, %v8702
    %v8705 = vcosq.f32.pop %v8703
    %v8706 = vsinq.f32.pop %v8703
    %vm8707 = vweird.f32 %v8385
    %v8708 = vadd.s32 %v8704, 3
    %v8709 = vand.u32 %v8708, 3
    %vm8710 = vcmp.lt.s32.totalorder %v8709, 2
    %vm8711 = vcmp.eq.s32.totalorder %v8709, 0
    %v8712 = vxor.u32 %v8706, 2147483648
    %v8713 = vsel %vm8711, %v8705, %v8712
    %vm8714 = vcmp.eq.s32.totalorder %v8709, 2
    %v8715 = vxor.u32 %v8705, 2147483648
    %v8716 = vsel %vm8714, %v8715, %v8706
    %v8717 = vsel %vm8710, %v8713, %v8716
    %v8718 = vsel %vm8707, nan, %v8717
    %v8719 = vand.u32 2147483647, %v8386
    %vm8720 = vcmp.le.f32.partialorder %v8719, 0.7853982
    %vm8721 = vcmp.lt.s32.totalorder %v8386, 0
    %v8722 = vand.u32 %v8386, 2139095040
    %v8723 = vshrl.u32 %v8722, 23
    %v8724 = vsub.s32 %v8723, 127
    %v8725 = vand.u32 2147483647, %v8386
    %v8726 = vand.u32 %v8725, 8388607
    %v8727 = vor.u32 %v8726, 8388608
    %v8728 = vsub.s32 0, %v8727
    %v8729 = vadd.s32 %v8724, 1
    %vm8730 = vcmp.gt.s32.totalorder %v8729, 0
    %v8731 = vsel %vm8730, %v8729, 0
    %v8732 = vshrl.u32 %v8731, 5
    %v8733 = vand.u32 %v8731, 31
    %v8734 = vsub.s32 32, %v8733
    %v8735 = vshrl.u32 683565275, %v8734
    %v8736 = vshll.u32 683565275, %v8733
    %v8737 = vshrl.u32 2475754826, %v8734
    %v8738 = vor.u32 %v8736, %v8737
    %v8739 = vshll.u32 2475754826, %v8733
    %v8740 = vshrl.u32 2131351028, %v8734
    %v8741 = vor.u32 %v8739, %v8740
    %v8742 = vshll.u32 2131351028, %v8733
    %v8743 = vshrl.u32 2102212464, %v8734
    %v8744 = vor.u32 %v8742, %v8743
    %v8745 = vshll.u32 2102212464, %v8733
    %v8746 = vshrl.u32 920167782, %v8734
    %v8747 = vor.u32 %v8745, %v8746
    %v8748 = vshll.u32 920167782, %v8733
    %v8749 = vshrl.u32 1326507024, %v8734
    %v8750 = vor.u32 %v8748, %v8749
    %vm8751 = vcmp.lt.s32.totalorder %v8732, 1
    %vm8752 = vcmp.lt.s32.totalorder %v8732, 2
    %vm8753 = vcmp.lt.s32.totalorder %v8732, 3
    %vm8754 = vcmp.lt.s32.totalorder %v8732, 4
    %v8755 = vsel %vm8751, %v8735, %v8738
    %v8756 = vsel %vm8754, %v8744, 2102212464
    %v8757 = vsel %vm8753, %v8741, %v8756
    %v8758 = vsel %vm8752, %v8755, %v8757
    %v8759 = vsel %vm8751, %v8738, %v8741
    %v8760 = vsel %vm8754, %v8747, 920167782
    %v8761 = vsel %vm8753, %v8744, %v8760
    %v8762 = vsel %vm8752, %v8759, %v8761
    %v8763 = vsel %vm8751, %v8741, %v8744
    %v8764 = vsel %vm8754, %v8750, 1326507024
    %v8765 = vsel %vm8753, %v8747, %v8764
    %v8766 = vsel %vm8752, %v8763, %v8765
    %v8767 = vshll.u32 %v8727, 8
    %v8768 = vmul.u32.u64.compose %v8767, %v8766
    %v8769 = vextract.low.u32 %v8768
    %v8770 = vextract.high.u32 %v8768
    %v8771 = vmul.u32.u64.compose %v8767, %v8762
    %v8772 = vextract.low.u32 %v8771
    %v8773 = vextract.high.u32 %v8771
    %v8774 = vmul.u32 %v8767, %v8758
    %v8775 = vadd.s32 %v8770, %v8772
    %vm8776 = vc.u32 %v8770, %v8772
    %v8777 = vadd.s32 %v8773, 1
    %v8778 = vsel %vm8776, %v8777, %v8773
    %v8779 = vadd.s32 %v8774, %v8778
    %v8780 = vadd.s32 %v8779, 536870912
    %v8781 = vshrl.u32 %v8780, 30
    %v8782 = vshll.u32 %v8781, 30
    %v8783 = vsub.s32 %v8779, %v8782
    %vm8784 = vcmp.lt.s32.totalorder %v8783, 0
    %v8785 = vsub.s32 0, %v8783
    %v8786 = vsel %vm8784, %v8785, %v8783
    %v8787 = vclz %v8786
    %v8788 = vsub.s32 %v8787, 2
    %vm8789 = vcmp.gt.s32.totalorder 0, %v8788
    %v8790 = vsel %vm8789, 0, %v8788
    %v8791 = vsub.s32 32, %v8790
    %v8792 = vshll.u32 %v8783, %v8790
    %v8793 = vshrl.u32 %v8775, %v8791
    %v8794 = vor.u32 %v8792, %v8793
    %v8795 = vsub.s32 4294967266, %v8790
    %v8796 = vadd.s32 %v8795, 127
    %v8797 = vshll.u32 %v8796, 23
    %v8798 = vor.u32 4788187, %v8797
    %v8799 = vand.u32 2147483647, %v8798
    %v8801 = vcvt.s32.f32 %v8794
    %v8802 = vmul.f32 %v8801, %v8799
    %v8803 = vxor.u32 %v8802, 2147483648
    %v8804 = vsel %vm8721, %v8803, %v8802
    %v8805 = vsub.s32 4, %v8781
    %v8806 = vsel %vm8721, %v8805, %v8781
    %v8807 = vsel %vm8720, %v8386, %v8804
    %v8808 = vsel %vm8720, 0, %v8806
    %v8809 = vcosq.f32.pop %v8807
    %v8810 = vsinq.f32.pop %v8807
    %vm8811 = vweird.f32 %v8386
    %v8812 = vadd.s32 %v8808, 3
    %v8813 = vand.u32 %v8812, 3
    %vm8814 = vcmp.lt.s32.totalorder %v8813, 2
    %vm8815 = vcmp.eq.s32.totalorder %v8813, 0
    %v8816 = vxor.u32 %v8810, 2147483648
    %v8817 = vsel %vm8815, %v8809, %v8816
    %vm8818 = vcmp.eq.s32.totalorder %v8813, 2
    %v8819 = vxor.u32 %v8809, 2147483648
    %v8820 = vsel %vm8818, %v8819, %v8810
    %v8821 = vsel %vm8814, %v8817, %v8820
    %v8822 = vsel %vm8811, nan, %v8821
    %v8823 = vand.u32 2147483647, %v8387
    %vm8824 = vcmp.le.f32.partialorder %v8823, 0.7853982
    %vm8825 = vcmp.lt.s32.totalorder %v8387, 0
    %v8826 = vand.u32 %v8387, 2139095040
    %v8827 = vshrl.u32 %v8826, 23
    %v8828 = vsub.s32 %v8827, 127
    %v8829 = vand.u32 2147483647, %v8387
    %v8830 = vand.u32 %v8829, 8388607
    %v8831 = vor.u32 %v8830, 8388608
    %v8832 = vsub.s32 0, %v8831
    %v8833 = vadd.s32 %v8828, 1
    %vm8834 = vcmp.gt.s32.totalorder %v8833, 0
    %v8835 = vsel %vm8834, %v8833, 0
    %v8836 = vshrl.u32 %v8835, 5
    %v8837 = vand.u32 %v8835, 31
    %v8838 = vsub.s32 32, %v8837
    %v8839 = vshrl.u32 683565275, %v8838
    %v8840 = vshll.u32 683565275, %v8837
    %v8841 = vshrl.u32 2475754826, %v8838
    %v8842 = vor.u32 %v8840, %v8841
    %v8843 = vshll.u32 2475754826, %v8837
    %v8844 = vshrl.u32 2131351028, %v8838
    %v8845 = vor.u32 %v8843, %v8844
    %v8846 = vshll.u32 2131351028, %v8837
    %v8847 = vshrl.u32 2102212464, %v8838
    %v8848 = vor.u32 %v8846, %v8847
    %v8849 = vshll.u32 2102212464, %v8837
    %v8850 = vshrl.u32 920167782, %v8838
    %v8851 = vor.u32 %v8849, %v8850
    %v8852 = vshll.u32 920167782, %v8837
    %v8853 = vshrl.u32 1326507024, %v8838
    %v8854 = vor.u32 %v8852, %v8853
    %vm8855 = vcmp.lt.s32.totalorder %v8836, 1
    %vm8856 = vcmp.lt.s32.totalorder %v8836, 2
    %vm8857 = vcmp.lt.s32.totalorder %v8836, 3
    %vm8858 = vcmp.lt.s32.totalorder %v8836, 4
    %v8859 = vsel %vm8855, %v8839, %v8842
    %v8860 = vsel %vm8858, %v8848, 2102212464
    %v8861 = vsel %vm8857, %v8845, %v8860
    %v8862 = vsel %vm8856, %v8859, %v8861
    %v8863 = vsel %vm8855, %v8842, %v8845
    %v8864 = vsel %vm8858, %v8851, 920167782
    %v8865 = vsel %vm8857, %v8848, %v8864
    %v8866 = vsel %vm8856, %v8863, %v8865
    %v8867 = vsel %vm8855, %v8845, %v8848
    %v8868 = vsel %vm8858, %v8854, 1326507024
    %v8869 = vsel %vm8857, %v8851, %v8868
    %v8870 = vsel %vm8856, %v8867, %v8869
    %v8871 = vshll.u32 %v8831, 8
    %v8872 = vmul.u32.u64.compose %v8871, %v8870
    %v8873 = vextract.low.u32 %v8872
    %v8874 = vextract.high.u32 %v8872
    %v8875 = vmul.u32.u64.compose %v8871, %v8866
    %v8876 = vextract.low.u32 %v8875
    %v8877 = vextract.high.u32 %v8875
    %v8878 = vmul.u32 %v8871, %v8862
    %v8879 = vadd.s32 %v8874, %v8876
    %vm8880 = vc.u32 %v8874, %v8876
    %v8881 = vadd.s32 %v8877, 1
    %v8882 = vsel %vm8880, %v8881, %v8877
    %v8883 = vadd.s32 %v8878, %v8882
    %v8884 = vadd.s32 %v8883, 536870912
    %v8885 = vshrl.u32 %v8884, 30
    %v8886 = vshll.u32 %v8885, 30
    %v8887 = vsub.s32 %v8883, %v8886
    %vm8888 = vcmp.lt.s32.totalorder %v8887, 0
    %v8889 = vsub.s32 0, %v8887
    %v8890 = vsel %vm8888, %v8889, %v8887
    %v8891 = vclz %v8890
    %v8892 = vsub.s32 %v8891, 2
    %vm8893 = vcmp.gt.s32.totalorder 0, %v8892
    %v8894 = vsel %vm8893, 0, %v8892
    %v8895 = vsub.s32 32, %v8894
    %v8896 = vshll.u32 %v8887, %v8894
    %v8897 = vshrl.u32 %v8879, %v8895
    %v8898 = vor.u32 %v8896, %v8897
    %v8899 = vsub.s32 4294967266, %v8894
    %v8900 = vadd.s32 %v8899, 127
    %v8901 = vshll.u32 %v8900, 23
    %v8902 = vor.u32 4788187, %v8901
    %v8903 = vand.u32 2147483647, %v8902
    %v8905 = vcvt.s32.f32 %v8898
    %v8906 = vmul.f32 %v8905, %v8903
    %v8907 = vxor.u32 %v8906, 2147483648
    %v8908 = vsel %vm8825, %v8907, %v8906
    %v8909 = vsub.s32 4, %v8885
    %v8910 = vsel %vm8825, %v8909, %v8885
    %v8911 = vsel %vm8824, %v8387, %v8908
    %v8912 = vsel %vm8824, 0, %v8910
    %v8913 = vcosq.f32.pop %v8911
    %v8914 = vsinq.f32.pop %v8911
    %vm8915 = vweird.f32 %v8387
    %v8916 = vadd.s32 %v8912, 3
    %v8917 = vand.u32 %v8916, 3
    %vm8918 = vcmp.lt.s32.totalorder %v8917, 2
    %vm8919 = vcmp.eq.s32.totalorder %v8917, 0
    %v8920 = vxor.u32 %v8914, 2147483648
    %v8921 = vsel %vm8919, %v8913, %v8920
    %vm8922 = vcmp.eq.s32.totalorder %v8917, 2
    %v8923 = vxor.u32 %v8913, 2147483648
    %v8924 = vsel %vm8922, %v8923, %v8914
    %v8925 = vsel %vm8918, %v8921, %v8924
    %v8926 = vsel %vm8915, nan, %v8925
    %v8927 = vand.u32 2147483647, %v8388
    %vm8928 = vcmp.le.f32.partialorder %v8927, 0.7853982
    %vm8929 = vcmp.lt.s32.totalorder %v8388, 0
    %v8930 = vand.u32 %v8388, 2139095040
    %v8931 = vshrl.u32 %v8930, 23
    %v8932 = vsub.s32 %v8931, 127
    %v8933 = vand.u32 2147483647, %v8388
    %v8934 = vand.u32 %v8933, 8388607
    %v8935 = vor.u32 %v8934, 8388608
    %v8936 = vsub.s32 0, %v8935
    %v8937 = vadd.s32 %v8932, 1
    %vm8938 = vcmp.gt.s32.totalorder %v8937, 0
    %v8939 = vsel %vm8938, %v8937, 0
    %v8940 = vshrl.u32 %v8939, 5
    %v8941 = vand.u32 %v8939, 31
    %v8942 = vsub.s32 32, %v8941
    %v8943 = vshrl.u32 683565275, %v8942
    %v8944 = vshll.u32 683565275, %v8941
    %v8945 = vshrl.u32 2475754826, %v8942
    %v8946 = vor.u32 %v8944, %v8945
    %v8947 = vshll.u32 2475754826, %v8941
    %v8948 = vshrl.u32 2131351028, %v8942
    %v8949 = vor.u32 %v8947, %v8948
    %v8950 = vshll.u32 2131351028, %v8941
    %v8951 = vshrl.u32 2102212464, %v8942
    %v8952 = vor.u32 %v8950, %v8951
    %v8953 = vshll.u32 2102212464, %v8941
    %v8954 = vshrl.u32 920167782, %v8942
    %v8955 = vor.u32 %v8953, %v8954
    %v8956 = vshll.u32 920167782, %v8941
    %v8957 = vshrl.u32 1326507024, %v8942
    %v8958 = vor.u32 %v8956, %v8957
    %vm8959 = vcmp.lt.s32.totalorder %v8940, 1
    %vm8960 = vcmp.lt.s32.totalorder %v8940, 2
    %vm8961 = vcmp.lt.s32.totalorder %v8940, 3
    %vm8962 = vcmp.lt.s32.totalorder %v8940, 4
    %v8963 = vsel %vm8959, %v8943, %v8946
    %v8964 = vsel %vm8962, %v8952, 2102212464
    %v8965 = vsel %vm8961, %v8949, %v8964
    %v8966 = vsel %vm8960, %v8963, %v8965
    %v8967 = vsel %vm8959, %v8946, %v8949
    %v8968 = vsel %vm8962, %v8955, 920167782
    %v8969 = vsel %vm8961, %v8952, %v8968
    %v8970 = vsel %vm8960, %v8967, %v8969
    %v8971 = vsel %vm8959, %v8949, %v8952
    %v8972 = vsel %vm8962, %v8958, 1326507024
    %v8973 = vsel %vm8961, %v8955, %v8972
    %v8974 = vsel %vm8960, %v8971, %v8973
    %v8975 = vshll.u32 %v8935, 8
    %v8976 = vmul.u32.u64.compose %v8975, %v8974
    %v8977 = vextract.low.u32 %v8976
    %v8978 = vextract.high.u32 %v8976
    %v8979 = vmul.u32.u64.compose %v8975, %v8970
    %v8980 = vextract.low.u32 %v8979
    %v8981 = vextract.high.u32 %v8979
    %v8982 = vmul.u32 %v8975, %v8966
    %v8983 = vadd.s32 %v8978, %v8980
    %vm8984 = vc.u32 %v8978, %v8980
    %v8985 = vadd.s32 %v8981, 1
    %v8986 = vsel %vm8984, %v8985, %v8981
    %v8987 = vadd.s32 %v8982, %v8986
    %v8988 = vadd.s32 %v8987, 536870912
    %v8989 = vshrl.u32 %v8988, 30
    %v8990 = vshll.u32 %v8989, 30
    %v8991 = vsub.s32 %v8987, %v8990
    %vm8992 = vcmp.lt.s32.totalorder %v8991, 0
    %v8993 = vsub.s32 0, %v8991
    %v8994 = vsel %vm8992, %v8993, %v8991
    %v8995 = vclz %v8994
    %v8996 = vsub.s32 %v8995, 2
    %vm8997 = vcmp.gt.s32.totalorder 0, %v8996
    %v8998 = vsel %vm8997, 0, %v8996
    %v8999 = vsub.s32 32, %v8998
    %v9000 = vshll.u32 %v8991, %v8998
    %v9001 = vshrl.u32 %v8983, %v8999
    %v9002 = vor.u32 %v9000, %v9001
    %v9003 = vsub.s32 4294967266, %v8998
    %v9004 = vadd.s32 %v9003, 127
    %v9005 = vshll.u32 %v9004, 23
    %v9006 = vor.u32 4788187, %v9005
    %v9007 = vand.u32 2147483647, %v9006
    %v9009 = vcvt.s32.f32 %v9002
    %v9010 = vmul.f32 %v9009, %v9007
    %v9011 = vxor.u32 %v9010, 2147483648
    %v9012 = vsel %vm8929, %v9011, %v9010
    %v9013 = vsub.s32 4, %v8989
    %v9014 = vsel %vm8929, %v9013, %v8989
    %v9015 = vsel %vm8928, %v8388, %v9012
    %v9016 = vsel %vm8928, 0, %v9014
    %v9017 = vcosq.f32.pop %v9015
    %v9018 = vsinq.f32.pop %v9015
    %vm9019 = vweird.f32 %v8388
    %v9020 = vadd.s32 %v9016, 3
    %v9021 = vand.u32 %v9020, 3
    %vm9022 = vcmp.lt.s32.totalorder %v9021, 2
    %vm9023 = vcmp.eq.s32.totalorder %v9021, 0
    %v9024 = vxor.u32 %v9018, 2147483648
    %v9025 = vsel %vm9023, %v9017, %v9024
    %vm9026 = vcmp.eq.s32.totalorder %v9021, 2
    %v9027 = vxor.u32 %v9017, 2147483648
    %v9028 = vsel %vm9026, %v9027, %v9018
    %v9029 = vsel %vm9022, %v9025, %v9028
    %v9030 = vsel %vm9019, nan, %v9029
    %v9031 = vand.u32 2147483647, %v8389
    %vm9032 = vcmp.le.f32.partialorder %v9031, 0.7853982
    %vm9033 = vcmp.lt.s32.totalorder %v8389, 0
    %v9034 = vand.u32 %v8389, 2139095040
    %v9035 = vshrl.u32 %v9034, 23
    %v9036 = vsub.s32 %v9035, 127
    %v9037 = vand.u32 2147483647, %v8389
    %v9038 = vand.u32 %v9037, 8388607
    %v9039 = vor.u32 %v9038, 8388608
    %v9040 = vsub.s32 0, %v9039
    %v9041 = vadd.s32 %v9036, 1
    %vm9042 = vcmp.gt.s32.totalorder %v9041, 0
    %v9043 = vsel %vm9042, %v9041, 0
    %v9044 = vshrl.u32 %v9043, 5
    %v9045 = vand.u32 %v9043, 31
    %v9046 = vsub.s32 32, %v9045
    %v9047 = vshrl.u32 683565275, %v9046
    %v9048 = vshll.u32 683565275, %v9045
    %v9049 = vshrl.u32 2475754826, %v9046
    %v9050 = vor.u32 %v9048, %v9049
    %v9051 = vshll.u32 2475754826, %v9045
    %v9052 = vshrl.u32 2131351028, %v9046
    %v9053 = vor.u32 %v9051, %v9052
    %v9054 = vshll.u32 2131351028, %v9045
    %v9055 = vshrl.u32 2102212464, %v9046
    %v9056 = vor.u32 %v9054, %v9055
    %v9057 = vshll.u32 2102212464, %v9045
    %v9058 = vshrl.u32 920167782, %v9046
    %v9059 = vor.u32 %v9057, %v9058
    %v9060 = vshll.u32 920167782, %v9045
    %v9061 = vshrl.u32 1326507024, %v9046
    %v9062 = vor.u32 %v9060, %v9061
    %vm9063 = vcmp.lt.s32.totalorder %v9044, 1
    %vm9064 = vcmp.lt.s32.totalorder %v9044, 2
    %vm9065 = vcmp.lt.s32.totalorder %v9044, 3
    %vm9066 = vcmp.lt.s32.totalorder %v9044, 4
    %v9067 = vsel %vm9063, %v9047, %v9050
    %v9068 = vsel %vm9066, %v9056, 2102212464
    %v9069 = vsel %vm9065, %v9053, %v9068
    %v9070 = vsel %vm9064, %v9067, %v9069
    %v9071 = vsel %vm9063, %v9050, %v9053
    %v9072 = vsel %vm9066, %v9059, 920167782
    %v9073 = vsel %vm9065, %v9056, %v9072
    %v9074 = vsel %vm9064, %v9071, %v9073
    %v9075 = vsel %vm9063, %v9053, %v9056
    %v9076 = vsel %vm9066, %v9062, 1326507024
    %v9077 = vsel %vm9065, %v9059, %v9076
    %v9078 = vsel %vm9064, %v9075, %v9077
    %v9079 = vshll.u32 %v9039, 8
    %v9080 = vmul.u32.u64.compose %v9079, %v9078
    %v9081 = vextract.low.u32 %v9080
    %v9082 = vextract.high.u32 %v9080
    %v9083 = vmul.u32.u64.compose %v9079, %v9074
    %v9084 = vextract.low.u32 %v9083
    %v9085 = vextract.high.u32 %v9083
    %v9086 = vmul.u32 %v9079, %v9070
    %v9087 = vadd.s32 %v9082, %v9084
    %vm9088 = vc.u32 %v9082, %v9084
    %v9089 = vadd.s32 %v9085, 1
    %v9090 = vsel %vm9088, %v9089, %v9085
    %v9091 = vadd.s32 %v9086, %v9090
    %v9092 = vadd.s32 %v9091, 536870912
    %v9093 = vshrl.u32 %v9092, 30
    %v9094 = vshll.u32 %v9093, 30
    %v9095 = vsub.s32 %v9091, %v9094
    %vm9096 = vcmp.lt.s32.totalorder %v9095, 0
    %v9097 = vsub.s32 0, %v9095
    %v9098 = vsel %vm9096, %v9097, %v9095
    %v9099 = vclz %v9098
    %v9100 = vsub.s32 %v9099, 2
    %vm9101 = vcmp.gt.s32.totalorder 0, %v9100
    %v9102 = vsel %vm9101, 0, %v9100
    %v9103 = vsub.s32 32, %v9102
    %v9104 = vshll.u32 %v9095, %v9102
    %v9105 = vshrl.u32 %v9087, %v9103
    %v9106 = vor.u32 %v9104, %v9105
    %v9107 = vsub.s32 4294967266, %v9102
    %v9108 = vadd.s32 %v9107, 127
    %v9109 = vshll.u32 %v9108, 23
    %v9110 = vor.u32 4788187, %v9109
    %v9111 = vand.u32 2147483647, %v9110
    %v9113 = vcvt.s32.f32 %v9106
    %v9114 = vmul.f32 %v9113, %v9111
    %v9115 = vxor.u32 %v9114, 2147483648
    %v9116 = vsel %vm9033, %v9115, %v9114
    %v9117 = vsub.s32 4, %v9093
    %v9118 = vsel %vm9033, %v9117, %v9093
    %v9119 = vsel %vm9032, %v8389, %v9116
    %v9120 = vsel %vm9032, 0, %v9118
    %v9121 = vcosq.f32.pop %v9119
    %v9122 = vsinq.f32.pop %v9119
    %vm9123 = vweird.f32 %v8389
    %v9124 = vadd.s32 %v9120, 3
    %v9125 = vand.u32 %v9124, 3
    %vm9126 = vcmp.lt.s32.totalorder %v9125, 2
    %vm9127 = vcmp.eq.s32.totalorder %v9125, 0
    %v9128 = vxor.u32 %v9122, 2147483648
    %v9129 = vsel %vm9127, %v9121, %v9128
    %vm9130 = vcmp.eq.s32.totalorder %v9125, 2
    %v9131 = vxor.u32 %v9121, 2147483648
    %v9132 = vsel %vm9130, %v9131, %v9122
    %v9133 = vsel %vm9126, %v9129, %v9132
    %v9134 = vsel %vm9123, nan, %v9133
    %v9135 = vand.u32 2147483647, %v8390
    %vm9136 = vcmp.le.f32.partialorder %v9135, 0.7853982
    %vm9137 = vcmp.lt.s32.totalorder %v8390, 0
    %v9138 = vand.u32 %v8390, 2139095040
    %v9139 = vshrl.u32 %v9138, 23
    %v9140 = vsub.s32 %v9139, 127
    %v9141 = vand.u32 2147483647, %v8390
    %v9142 = vand.u32 %v9141, 8388607
    %v9143 = vor.u32 %v9142, 8388608
    %v9144 = vsub.s32 0, %v9143
    %v9145 = vadd.s32 %v9140, 1
    %vm9146 = vcmp.gt.s32.totalorder %v9145, 0
    %v9147 = vsel %vm9146, %v9145, 0
    %v9148 = vshrl.u32 %v9147, 5
    %v9149 = vand.u32 %v9147, 31
    %v9150 = vsub.s32 32, %v9149
    %v9151 = vshrl.u32 683565275, %v9150
    %v9152 = vshll.u32 683565275, %v9149
    %v9153 = vshrl.u32 2475754826, %v9150
    %v9154 = vor.u32 %v9152, %v9153
    %v9155 = vshll.u32 2475754826, %v9149
    %v9156 = vshrl.u32 2131351028, %v9150
    %v9157 = vor.u32 %v9155, %v9156
    %v9158 = vshll.u32 2131351028, %v9149
    %v9159 = vshrl.u32 2102212464, %v9150
    %v9160 = vor.u32 %v9158, %v9159
    %v9161 = vshll.u32 2102212464, %v9149
    %v9162 = vshrl.u32 920167782, %v9150
    %v9163 = vor.u32 %v9161, %v9162
    %v9164 = vshll.u32 920167782, %v9149
    %v9165 = vshrl.u32 1326507024, %v9150
    %v9166 = vor.u32 %v9164, %v9165
    %vm9167 = vcmp.lt.s32.totalorder %v9148, 1
    %vm9168 = vcmp.lt.s32.totalorder %v9148, 2
    %vm9169 = vcmp.lt.s32.totalorder %v9148, 3
    %vm9170 = vcmp.lt.s32.totalorder %v9148, 4
    %v9171 = vsel %vm9167, %v9151, %v9154
    %v9172 = vsel %vm9170, %v9160, 2102212464
    %v9173 = vsel %vm9169, %v9157, %v9172
    %v9174 = vsel %vm9168, %v9171, %v9173
    %v9175 = vsel %vm9167, %v9154, %v9157
    %v9176 = vsel %vm9170, %v9163, 920167782
    %v9177 = vsel %vm9169, %v9160, %v9176
    %v9178 = vsel %vm9168, %v9175, %v9177
    %v9179 = vsel %vm9167, %v9157, %v9160
    %v9180 = vsel %vm9170, %v9166, 1326507024
    %v9181 = vsel %vm9169, %v9163, %v9180
    %v9182 = vsel %vm9168, %v9179, %v9181
    %v9183 = vshll.u32 %v9143, 8
    %v9184 = vmul.u32.u64.compose %v9183, %v9182
    %v9185 = vextract.low.u32 %v9184
    %v9186 = vextract.high.u32 %v9184
    %v9187 = vmul.u32.u64.compose %v9183, %v9178
    %v9188 = vextract.low.u32 %v9187
    %v9189 = vextract.high.u32 %v9187
    %v9190 = vmul.u32 %v9183, %v9174
    %v9191 = vadd.s32 %v9186, %v9188
    %vm9192 = vc.u32 %v9186, %v9188
    %v9193 = vadd.s32 %v9189, 1
    %v9194 = vsel %vm9192, %v9193, %v9189
    %v9195 = vadd.s32 %v9190, %v9194
    %v9196 = vadd.s32 %v9195, 536870912
    %v9197 = vshrl.u32 %v9196, 30
    %v9198 = vshll.u32 %v9197, 30
    %v9199 = vsub.s32 %v9195, %v9198
    %vm9200 = vcmp.lt.s32.totalorder %v9199, 0
    %v9201 = vsub.s32 0, %v9199
    %v9202 = vsel %vm9200, %v9201, %v9199
    %v9203 = vclz %v9202
    %v9204 = vsub.s32 %v9203, 2
    %vm9205 = vcmp.gt.s32.totalorder 0, %v9204
    %v9206 = vsel %vm9205, 0, %v9204
    %v9207 = vsub.s32 32, %v9206
    %v9208 = vshll.u32 %v9199, %v9206
    %v9209 = vshrl.u32 %v9191, %v9207
    %v9210 = vor.u32 %v9208, %v9209
    %v9211 = vsub.s32 4294967266, %v9206
    %v9212 = vadd.s32 %v9211, 127
    %v9213 = vshll.u32 %v9212, 23
    %v9214 = vor.u32 4788187, %v9213
    %v9215 = vand.u32 2147483647, %v9214
    %v9217 = vcvt.s32.f32 %v9210
    %v9218 = vmul.f32 %v9217, %v9215
    %v9219 = vxor.u32 %v9218, 2147483648
    %v9220 = vsel %vm9137, %v9219, %v9218
    %v9221 = vsub.s32 4, %v9197
    %v9222 = vsel %vm9137, %v9221, %v9197
    %v9223 = vsel %vm9136, %v8390, %v9220
    %v9224 = vsel %vm9136, 0, %v9222
    %v9225 = vcosq.f32.pop %v9223
    %v9226 = vsinq.f32.pop %v9223
    %vm9227 = vweird.f32 %v8390
    %v9228 = vadd.s32 %v9224, 3
    %v9229 = vand.u32 %v9228, 3
    %vm9230 = vcmp.lt.s32.totalorder %v9229, 2
    %vm9231 = vcmp.eq.s32.totalorder %v9229, 0
    %v9232 = vxor.u32 %v9226, 2147483648
    %v9233 = vsel %vm9231, %v9225, %v9232
    %vm9234 = vcmp.eq.s32.totalorder %v9229, 2
    %v9235 = vxor.u32 %v9225, 2147483648
    %v9236 = vsel %vm9234, %v9235, %v9226
    %v9237 = vsel %vm9230, %v9233, %v9236
    %v9238 = vsel %vm9227, nan, %v9237
    %v9239 = vand.u32 2147483647, %v8391
    %vm9240 = vcmp.le.f32.partialorder %v9239, 0.7853982
    %vm9241 = vcmp.lt.s32.totalorder %v8391, 0
    %v9242 = vand.u32 %v8391, 2139095040
    %v9243 = vshrl.u32 %v9242, 23
    %v9244 = vsub.s32 %v9243, 127
    %v9245 = vand.u32 2147483647, %v8391
    %v9246 = vand.u32 %v9245, 8388607
    %v9247 = vor.u32 %v9246, 8388608
    %v9248 = vsub.s32 0, %v9247
    %v9249 = vadd.s32 %v9244, 1
    %vm9250 = vcmp.gt.s32.totalorder %v9249, 0
    %v9251 = vsel %vm9250, %v9249, 0
    %v9252 = vshrl.u32 %v9251, 5
    %v9253 = vand.u32 %v9251, 31
    %v9254 = vsub.s32 32, %v9253
    %v9255 = vshrl.u32 683565275, %v9254
    %v9256 = vshll.u32 683565275, %v9253
    %v9257 = vshrl.u32 2475754826, %v9254
    %v9258 = vor.u32 %v9256, %v9257
    %v9259 = vshll.u32 2475754826, %v9253
    %v9260 = vshrl.u32 2131351028, %v9254
    %v9261 = vor.u32 %v9259, %v9260
    %v9262 = vshll.u32 2131351028, %v9253
    %v9263 = vshrl.u32 2102212464, %v9254
    %v9264 = vor.u32 %v9262, %v9263
    %v9265 = vshll.u32 2102212464, %v9253
    %v9266 = vshrl.u32 920167782, %v9254
    %v9267 = vor.u32 %v9265, %v9266
    %v9268 = vshll.u32 920167782, %v9253
    %v9269 = vshrl.u32 1326507024, %v9254
    %v9270 = vor.u32 %v9268, %v9269
    %vm9271 = vcmp.lt.s32.totalorder %v9252, 1
    %vm9272 = vcmp.lt.s32.totalorder %v9252, 2
    %vm9273 = vcmp.lt.s32.totalorder %v9252, 3
    %vm9274 = vcmp.lt.s32.totalorder %v9252, 4
    %v9275 = vsel %vm9271, %v9255, %v9258
    %v9276 = vsel %vm9274, %v9264, 2102212464
    %v9277 = vsel %vm9273, %v9261, %v9276
    %v9278 = vsel %vm9272, %v9275, %v9277
    %v9279 = vsel %vm9271, %v9258, %v9261
    %v9280 = vsel %vm9274, %v9267, 920167782
    %v9281 = vsel %vm9273, %v9264, %v9280
    %v9282 = vsel %vm9272, %v9279, %v9281
    %v9283 = vsel %vm9271, %v9261, %v9264
    %v9284 = vsel %vm9274, %v9270, 1326507024
    %v9285 = vsel %vm9273, %v9267, %v9284
    %v9286 = vsel %vm9272, %v9283, %v9285
    %v9287 = vshll.u32 %v9247, 8
    %v9288 = vmul.u32.u64.compose %v9287, %v9286
    %v9289 = vextract.low.u32 %v9288
    %v9290 = vextract.high.u32 %v9288
    %v9291 = vmul.u32.u64.compose %v9287, %v9282
    %v9292 = vextract.low.u32 %v9291
    %v9293 = vextract.high.u32 %v9291
    %v9294 = vmul.u32 %v9287, %v9278
    %v9295 = vadd.s32 %v9290, %v9292
    %vm9296 = vc.u32 %v9290, %v9292
    %v9297 = vadd.s32 %v9293, 1
    %v9298 = vsel %vm9296, %v9297, %v9293
    %v9299 = vadd.s32 %v9294, %v9298
    %v9300 = vadd.s32 %v9299, 536870912
    %v9301 = vshrl.u32 %v9300, 30
    %v9302 = vshll.u32 %v9301, 30
    %v9303 = vsub.s32 %v9299, %v9302
    %vm9304 = vcmp.lt.s32.totalorder %v9303, 0
    %v9305 = vsub.s32 0, %v9303
    %v9306 = vsel %vm9304, %v9305, %v9303
    %v9307 = vclz %v9306
    %v9308 = vsub.s32 %v9307, 2
    %vm9309 = vcmp.gt.s32.totalorder 0, %v9308
    %v9310 = vsel %vm9309, 0, %v9308
    %v9311 = vsub.s32 32, %v9310
    %v9312 = vshll.u32 %v9303, %v9310
    %v9313 = vshrl.u32 %v9295, %v9311
    %v9314 = vor.u32 %v9312, %v9313
    %v9315 = vsub.s32 4294967266, %v9310
    %v9316 = vadd.s32 %v9315, 127
    %v9317 = vshll.u32 %v9316, 23
    %v9318 = vor.u32 4788187, %v9317
    %v9319 = vand.u32 2147483647, %v9318
    %v9321 = vcvt.s32.f32 %v9314
    %v9322 = vmul.f32 %v9321, %v9319
    %v9323 = vxor.u32 %v9322, 2147483648
    %v9324 = vsel %vm9241, %v9323, %v9322
    %v9325 = vsub.s32 4, %v9301
    %v9326 = vsel %vm9241, %v9325, %v9301
    %v9327 = vsel %vm9240, %v8391, %v9324
    %v9328 = vsel %vm9240, 0, %v9326
    %v9329 = vcosq.f32.pop %v9327
    %v9330 = vsinq.f32.pop %v9327
    %vm9331 = vweird.f32 %v8391
    %v9332 = vadd.s32 %v9328, 3
    %v9333 = vand.u32 %v9332, 3
    %vm9334 = vcmp.lt.s32.totalorder %v9333, 2
    %vm9335 = vcmp.eq.s32.totalorder %v9333, 0
    %v9336 = vxor.u32 %v9330, 2147483648
    %v9337 = vsel %vm9335, %v9329, %v9336
    %vm9338 = vcmp.eq.s32.totalorder %v9333, 2
    %v9339 = vxor.u32 %v9329, 2147483648
    %v9340 = vsel %vm9338, %v9339, %v9330
    %v9341 = vsel %vm9334, %v9337, %v9340
    %v9342 = vsel %vm9331, nan, %v9341
    %v9343 = vand.u32 2147483647, %v8392
    %vm9344 = vcmp.le.f32.partialorder %v9343, 0.7853982
    %vm9345 = vcmp.lt.s32.totalorder %v8392, 0
    %v9346 = vand.u32 %v8392, 2139095040
    %v9347 = vshrl.u32 %v9346, 23
    %v9348 = vsub.s32 %v9347, 127
    %v9349 = vand.u32 2147483647, %v8392
    %v9350 = vand.u32 %v9349, 8388607
    %v9351 = vor.u32 %v9350, 8388608
    %v9352 = vsub.s32 0, %v9351
    %v9353 = vadd.s32 %v9348, 1
    %vm9354 = vcmp.gt.s32.totalorder %v9353, 0
    %v9355 = vsel %vm9354, %v9353, 0
    %v9356 = vshrl.u32 %v9355, 5
    %v9357 = vand.u32 %v9355, 31
    %v9358 = vsub.s32 32, %v9357
    %v9359 = vshrl.u32 683565275, %v9358
    %v9360 = vshll.u32 683565275, %v9357
    %v9361 = vshrl.u32 2475754826, %v9358
    %v9362 = vor.u32 %v9360, %v9361
    %v9363 = vshll.u32 2475754826, %v9357
    %v9364 = vshrl.u32 2131351028, %v9358
    %v9365 = vor.u32 %v9363, %v9364
    %v9366 = vshll.u32 2131351028, %v9357
    %v9367 = vshrl.u32 2102212464, %v9358
    %v9368 = vor.u32 %v9366, %v9367
    %v9369 = vshll.u32 2102212464, %v9357
    %v9370 = vshrl.u32 920167782, %v9358
    %v9371 = vor.u32 %v9369, %v9370
    %v9372 = vshll.u32 920167782, %v9357
    %v9373 = vshrl.u32 1326507024, %v9358
    %v9374 = vor.u32 %v9372, %v9373
    %vm9375 = vcmp.lt.s32.totalorder %v9356, 1
    %vm9376 = vcmp.lt.s32.totalorder %v9356, 2
    %vm9377 = vcmp.lt.s32.totalorder %v9356, 3
    %vm9378 = vcmp.lt.s32.totalorder %v9356, 4
    %v9379 = vsel %vm9375, %v9359, %v9362
    %v9380 = vsel %vm9378, %v9368, 2102212464
    %v9381 = vsel %vm9377, %v9365, %v9380
    %v9382 = vsel %vm9376, %v9379, %v9381
    %v9383 = vsel %vm9375, %v9362, %v9365
    %v9384 = vsel %vm9378, %v9371, 920167782
    %v9385 = vsel %vm9377, %v9368, %v9384
    %v9386 = vsel %vm9376, %v9383, %v9385
    %v9387 = vsel %vm9375, %v9365, %v9368
    %v9388 = vsel %vm9378, %v9374, 1326507024
    %v9389 = vsel %vm9377, %v9371, %v9388
    %v9390 = vsel %vm9376, %v9387, %v9389
    %v9391 = vshll.u32 %v9351, 8
    %v9392 = vmul.u32.u64.compose %v9391, %v9390
    %v9393 = vextract.low.u32 %v9392
    %v9394 = vextract.high.u32 %v9392
    %v9395 = vmul.u32.u64.compose %v9391, %v9386
    %v9396 = vextract.low.u32 %v9395
    %v9397 = vextract.high.u32 %v9395
    %v9398 = vmul.u32 %v9391, %v9382
    %v9399 = vadd.s32 %v9394, %v9396
    %vm9400 = vc.u32 %v9394, %v9396
    %v9401 = vadd.s32 %v9397, 1
    %v9402 = vsel %vm9400, %v9401, %v9397
    %v9403 = vadd.s32 %v9398, %v9402
    %v9404 = vadd.s32 %v9403, 536870912
    %v9405 = vshrl.u32 %v9404, 30
    %v9406 = vshll.u32 %v9405, 30
    %v9407 = vsub.s32 %v9403, %v9406
    %vm9408 = vcmp.lt.s32.totalorder %v9407, 0
    %v9409 = vsub.s32 0, %v9407
    %v9410 = vsel %vm9408, %v9409, %v9407
    %v9411 = vclz %v9410
    %v9412 = vsub.s32 %v9411, 2
    %vm9413 = vcmp.gt.s32.totalorder 0, %v9412
    %v9414 = vsel %vm9413, 0, %v9412
    %v9415 = vsub.s32 32, %v9414
    %v9416 = vshll.u32 %v9407, %v9414
    %v9417 = vshrl.u32 %v9399, %v9415
    %v9418 = vor.u32 %v9416, %v9417
    %v9419 = vsub.s32 4294967266, %v9414
    %v9420 = vadd.s32 %v9419, 127
    %v9421 = vshll.u32 %v9420, 23
    %v9422 = vor.u32 4788187, %v9421
    %v9423 = vand.u32 2147483647, %v9422
    %v9425 = vcvt.s32.f32 %v9418
    %v9426 = vmul.f32 %v9425, %v9423
    %v9427 = vxor.u32 %v9426, 2147483648
    %v9428 = vsel %vm9345, %v9427, %v9426
    %v9429 = vsub.s32 4, %v9405
    %v9430 = vsel %vm9345, %v9429, %v9405
    %v9431 = vsel %vm9344, %v8392, %v9428
    %v9432 = vsel %vm9344, 0, %v9430
    %v9433 = vcosq.f32.pop %v9431
    %v9434 = vsinq.f32.pop %v9431
    %vm9435 = vweird.f32 %v8392
    %v9436 = vadd.s32 %v9432, 3
    %v9437 = vand.u32 %v9436, 3
    %vm9438 = vcmp.lt.s32.totalorder %v9437, 2
    %vm9439 = vcmp.eq.s32.totalorder %v9437, 0
    %v9440 = vxor.u32 %v9434, 2147483648
    %v9441 = vsel %vm9439, %v9433, %v9440
    %vm9442 = vcmp.eq.s32.totalorder %v9437, 2
    %v9443 = vxor.u32 %v9433, 2147483648
    %v9444 = vsel %vm9442, %v9443, %v9434
    %v9445 = vsel %vm9438, %v9441, %v9444
    %v9446 = vsel %vm9435, nan, %v9445
    %v9447 = vand.u32 2147483647, %v8393
    %vm9448 = vcmp.le.f32.partialorder %v9447, 0.7853982
    %vm9449 = vcmp.lt.s32.totalorder %v8393, 0
    %v9450 = vand.u32 %v8393, 2139095040
    %v9451 = vshrl.u32 %v9450, 23
    %v9452 = vsub.s32 %v9451, 127
    %v9453 = vand.u32 2147483647, %v8393
    %v9454 = vand.u32 %v9453, 8388607
    %v9455 = vor.u32 %v9454, 8388608
    %v9456 = vsub.s32 0, %v9455
    %v9457 = vadd.s32 %v9452, 1
    %vm9458 = vcmp.gt.s32.totalorder %v9457, 0
    %v9459 = vsel %vm9458, %v9457, 0
    %v9460 = vshrl.u32 %v9459, 5
    %v9461 = vand.u32 %v9459, 31
    %v9462 = vsub.s32 32, %v9461
    %v9463 = vshrl.u32 683565275, %v9462
    %v9464 = vshll.u32 683565275, %v9461
    %v9465 = vshrl.u32 2475754826, %v9462
    %v9466 = vor.u32 %v9464, %v9465
    %v9467 = vshll.u32 2475754826, %v9461
    %v9468 = vshrl.u32 2131351028, %v9462
    %v9469 = vor.u32 %v9467, %v9468
    %v9470 = vshll.u32 2131351028, %v9461
    %v9471 = vshrl.u32 2102212464, %v9462
    %v9472 = vor.u32 %v9470, %v9471
    %v9473 = vshll.u32 2102212464, %v9461
    %v9474 = vshrl.u32 920167782, %v9462
    %v9475 = vor.u32 %v9473, %v9474
    %v9476 = vshll.u32 920167782, %v9461
    %v9477 = vshrl.u32 1326507024, %v9462
    %v9478 = vor.u32 %v9476, %v9477
    %vm9479 = vcmp.lt.s32.totalorder %v9460, 1
    %vm9480 = vcmp.lt.s32.totalorder %v9460, 2
    %vm9481 = vcmp.lt.s32.totalorder %v9460, 3
    %vm9482 = vcmp.lt.s32.totalorder %v9460, 4
    %v9483 = vsel %vm9479, %v9463, %v9466
    %v9484 = vsel %vm9482, %v9472, 2102212464
    %v9485 = vsel %vm9481, %v9469, %v9484
    %v9486 = vsel %vm9480, %v9483, %v9485
    %v9487 = vsel %vm9479, %v9466, %v9469
    %v9488 = vsel %vm9482, %v9475, 920167782
    %v9489 = vsel %vm9481, %v9472, %v9488
    %v9490 = vsel %vm9480, %v9487, %v9489
    %v9491 = vsel %vm9479, %v9469, %v9472
    %v9492 = vsel %vm9482, %v9478, 1326507024
    %v9493 = vsel %vm9481, %v9475, %v9492
    %v9494 = vsel %vm9480, %v9491, %v9493
    %v9495 = vshll.u32 %v9455, 8
    %v9496 = vmul.u32.u64.compose %v9495, %v9494
    %v9497 = vextract.low.u32 %v9496
    %v9498 = vextract.high.u32 %v9496
    %v9499 = vmul.u32.u64.compose %v9495, %v9490
    %v9500 = vextract.low.u32 %v9499
    %v9501 = vextract.high.u32 %v9499
    %v9502 = vmul.u32 %v9495, %v9486
    %v9503 = vadd.s32 %v9498, %v9500
    %vm9504 = vc.u32 %v9498, %v9500
    %v9505 = vadd.s32 %v9501, 1
    %v9506 = vsel %vm9504, %v9505, %v9501
    %v9507 = vadd.s32 %v9502, %v9506
    %v9508 = vadd.s32 %v9507, 536870912
    %v9509 = vshrl.u32 %v9508, 30
    %v9510 = vshll.u32 %v9509, 30
    %v9511 = vsub.s32 %v9507, %v9510
    %vm9512 = vcmp.lt.s32.totalorder %v9511, 0
    %v9513 = vsub.s32 0, %v9511
    %v9514 = vsel %vm9512, %v9513, %v9511
    %v9515 = vclz %v9514
    %v9516 = vsub.s32 %v9515, 2
    %vm9517 = vcmp.gt.s32.totalorder 0, %v9516
    %v9518 = vsel %vm9517, 0, %v9516
    %v9519 = vsub.s32 32, %v9518
    %v9520 = vshll.u32 %v9511, %v9518
    %v9521 = vshrl.u32 %v9503, %v9519
    %v9522 = vor.u32 %v9520, %v9521
    %v9523 = vsub.s32 4294967266, %v9518
    %v9524 = vadd.s32 %v9523, 127
    %v9525 = vshll.u32 %v9524, 23
    %v9526 = vor.u32 4788187, %v9525
    %v9527 = vand.u32 2147483647, %v9526
    %v9529 = vcvt.s32.f32 %v9522
    %v9530 = vmul.f32 %v9529, %v9527
    %v9531 = vxor.u32 %v9530, 2147483648
    %v9532 = vsel %vm9449, %v9531, %v9530
    %v9533 = vsub.s32 4, %v9509
    %v9534 = vsel %vm9449, %v9533, %v9509
    %v9535 = vsel %vm9448, %v8393, %v9532
    %v9536 = vsel %vm9448, 0, %v9534
    %v9537 = vcosq.f32.pop %v9535
    %v9538 = vsinq.f32.pop %v9535
    %vm9539 = vweird.f32 %v8393
    %v9540 = vadd.s32 %v9536, 3
    %v9541 = vand.u32 %v9540, 3
    %vm9542 = vcmp.lt.s32.totalorder %v9541, 2
    %vm9543 = vcmp.eq.s32.totalorder %v9541, 0
    %v9544 = vxor.u32 %v9538, 2147483648
    %v9545 = vsel %vm9543, %v9537, %v9544
    %vm9546 = vcmp.eq.s32.totalorder %v9541, 2
    %v9547 = vxor.u32 %v9537, 2147483648
    %v9548 = vsel %vm9546, %v9547, %v9538
    %v9549 = vsel %vm9542, %v9545, %v9548
    %v9550 = vsel %vm9539, nan, %v9549
    %v9551 = vand.u32 2147483647, %v8394
    %vm9552 = vcmp.le.f32.partialorder %v9551, 0.7853982
    %vm9553 = vcmp.lt.s32.totalorder %v8394, 0
    %v9554 = vand.u32 %v8394, 2139095040
    %v9555 = vshrl.u32 %v9554, 23
    %v9556 = vsub.s32 %v9555, 127
    %v9557 = vand.u32 2147483647, %v8394
    %v9558 = vand.u32 %v9557, 8388607
    %v9559 = vor.u32 %v9558, 8388608
    %v9560 = vsub.s32 0, %v9559
    %v9561 = vadd.s32 %v9556, 1
    %vm9562 = vcmp.gt.s32.totalorder %v9561, 0
    %v9563 = vsel %vm9562, %v9561, 0
    %v9564 = vshrl.u32 %v9563, 5
    %v9565 = vand.u32 %v9563, 31
    %v9566 = vsub.s32 32, %v9565
    %v9567 = vshrl.u32 683565275, %v9566
    %v9568 = vshll.u32 683565275, %v9565
    %v9569 = vshrl.u32 2475754826, %v9566
    %v9570 = vor.u32 %v9568, %v9569
    %v9571 = vshll.u32 2475754826, %v9565
    %v9572 = vshrl.u32 2131351028, %v9566
    %v9573 = vor.u32 %v9571, %v9572
    %v9574 = vshll.u32 2131351028, %v9565
    %v9575 = vshrl.u32 2102212464, %v9566
    %v9576 = vor.u32 %v9574, %v9575
    %v9577 = vshll.u32 2102212464, %v9565
    %v9578 = vshrl.u32 920167782, %v9566
    %v9579 = vor.u32 %v9577, %v9578
    %v9580 = vshll.u32 920167782, %v9565
    %v9581 = vshrl.u32 1326507024, %v9566
    %v9582 = vor.u32 %v9580, %v9581
    %vm9583 = vcmp.lt.s32.totalorder %v9564, 1
    %vm9584 = vcmp.lt.s32.totalorder %v9564, 2
    %vm9585 = vcmp.lt.s32.totalorder %v9564, 3
    %vm9586 = vcmp.lt.s32.totalorder %v9564, 4
    %v9587 = vsel %vm9583, %v9567, %v9570
    %v9588 = vsel %vm9586, %v9576, 2102212464
    %v9589 = vsel %vm9585, %v9573, %v9588
    %v9590 = vsel %vm9584, %v9587, %v9589
    %v9591 = vsel %vm9583, %v9570, %v9573
    %v9592 = vsel %vm9586, %v9579, 920167782
    %v9593 = vsel %vm9585, %v9576, %v9592
    %v9594 = vsel %vm9584, %v9591, %v9593
    %v9595 = vsel %vm9583, %v9573, %v9576
    %v9596 = vsel %vm9586, %v9582, 1326507024
    %v9597 = vsel %vm9585, %v9579, %v9596
    %v9598 = vsel %vm9584, %v9595, %v9597
    %v9599 = vshll.u32 %v9559, 8
    %v9600 = vmul.u32.u64.compose %v9599, %v9598
    %v9601 = vextract.low.u32 %v9600
    %v9602 = vextract.high.u32 %v9600
    %v9603 = vmul.u32.u64.compose %v9599, %v9594
    %v9604 = vextract.low.u32 %v9603
    %v9605 = vextract.high.u32 %v9603
    %v9606 = vmul.u32 %v9599, %v9590
    %v9607 = vadd.s32 %v9602, %v9604
    %vm9608 = vc.u32 %v9602, %v9604
    %v9609 = vadd.s32 %v9605, 1
    %v9610 = vsel %vm9608, %v9609, %v9605
    %v9611 = vadd.s32 %v9606, %v9610
    %v9612 = vadd.s32 %v9611, 536870912
    %v9613 = vshrl.u32 %v9612, 30
    %v9614 = vshll.u32 %v9613, 30
    %v9615 = vsub.s32 %v9611, %v9614
    %vm9616 = vcmp.lt.s32.totalorder %v9615, 0
    %v9617 = vsub.s32 0, %v9615
    %v9618 = vsel %vm9616, %v9617, %v9615
    %v9619 = vclz %v9618
    %v9620 = vsub.s32 %v9619, 2
    %vm9621 = vcmp.gt.s32.totalorder 0, %v9620
    %v9622 = vsel %vm9621, 0, %v9620
    %v9623 = vsub.s32 32, %v9622
    %v9624 = vshll.u32 %v9615, %v9622
    %v9625 = vshrl.u32 %v9607, %v9623
    %v9626 = vor.u32 %v9624, %v9625
    %v9627 = vsub.s32 4294967266, %v9622
    %v9628 = vadd.s32 %v9627, 127
    %v9629 = vshll.u32 %v9628, 23
    %v9630 = vor.u32 4788187, %v9629
    %v9631 = vand.u32 2147483647, %v9630
    %v9633 = vcvt.s32.f32 %v9626
    %v9634 = vmul.f32 %v9633, %v9631
    %v9635 = vxor.u32 %v9634, 2147483648
    %v9636 = vsel %vm9553, %v9635, %v9634
    %v9637 = vsub.s32 4, %v9613
    %v9638 = vsel %vm9553, %v9637, %v9613
    %v9639 = vsel %vm9552, %v8394, %v9636
    %v9640 = vsel %vm9552, 0, %v9638
    %v9641 = vcosq.f32.pop %v9639
    %v9642 = vsinq.f32.pop %v9639
    %vm9643 = vweird.f32 %v8394
    %v9644 = vadd.s32 %v9640, 3
    %v9645 = vand.u32 %v9644, 3
    %vm9646 = vcmp.lt.s32.totalorder %v9645, 2
    %vm9647 = vcmp.eq.s32.totalorder %v9645, 0
    %v9648 = vxor.u32 %v9642, 2147483648
    %v9649 = vsel %vm9647, %v9641, %v9648
    %vm9650 = vcmp.eq.s32.totalorder %v9645, 2
    %v9651 = vxor.u32 %v9641, 2147483648
    %v9652 = vsel %vm9650, %v9651, %v9642
    %v9653 = vsel %vm9646, %v9649, %v9652
    %v9654 = vsel %vm9643, nan, %v9653
    %v9655 = vand.u32 2147483647, %v8395
    %vm9656 = vcmp.le.f32.partialorder %v9655, 0.7853982
    %vm9657 = vcmp.lt.s32.totalorder %v8395, 0
    %v9658 = vand.u32 %v8395, 2139095040
    %v9659 = vshrl.u32 %v9658, 23
    %v9660 = vsub.s32 %v9659, 127
    %v9661 = vand.u32 2147483647, %v8395
    %v9662 = vand.u32 %v9661, 8388607
    %v9663 = vor.u32 %v9662, 8388608
    %v9664 = vsub.s32 0, %v9663
    %v9665 = vadd.s32 %v9660, 1
    %vm9666 = vcmp.gt.s32.totalorder %v9665, 0
    %v9667 = vsel %vm9666, %v9665, 0
    %v9668 = vshrl.u32 %v9667, 5
    %v9669 = vand.u32 %v9667, 31
    %v9670 = vsub.s32 32, %v9669
    %v9671 = vshrl.u32 683565275, %v9670
    %v9672 = vshll.u32 683565275, %v9669
    %v9673 = vshrl.u32 2475754826, %v9670
    %v9674 = vor.u32 %v9672, %v9673
    %v9675 = vshll.u32 2475754826, %v9669
    %v9676 = vshrl.u32 2131351028, %v9670
    %v9677 = vor.u32 %v9675, %v9676
    %v9678 = vshll.u32 2131351028, %v9669
    %v9679 = vshrl.u32 2102212464, %v9670
    %v9680 = vor.u32 %v9678, %v9679
    %v9681 = vshll.u32 2102212464, %v9669
    %v9682 = vshrl.u32 920167782, %v9670
    %v9683 = vor.u32 %v9681, %v9682
    %v9684 = vshll.u32 920167782, %v9669
    %v9685 = vshrl.u32 1326507024, %v9670
    %v9686 = vor.u32 %v9684, %v9685
    %vm9687 = vcmp.lt.s32.totalorder %v9668, 1
    %vm9688 = vcmp.lt.s32.totalorder %v9668, 2
    %vm9689 = vcmp.lt.s32.totalorder %v9668, 3
    %vm9690 = vcmp.lt.s32.totalorder %v9668, 4
    %v9691 = vsel %vm9687, %v9671, %v9674
    %v9692 = vsel %vm9690, %v9680, 2102212464
    %v9693 = vsel %vm9689, %v9677, %v9692
    %v9694 = vsel %vm9688, %v9691, %v9693
    %v9695 = vsel %vm9687, %v9674, %v9677
    %v9696 = vsel %vm9690, %v9683, 920167782
    %v9697 = vsel %vm9689, %v9680, %v9696
    %v9698 = vsel %vm9688, %v9695, %v9697
    %v9699 = vsel %vm9687, %v9677, %v9680
    %v9700 = vsel %vm9690, %v9686, 1326507024
    %v9701 = vsel %vm9689, %v9683, %v9700
    %v9702 = vsel %vm9688, %v9699, %v9701
    %v9703 = vshll.u32 %v9663, 8
    %v9704 = vmul.u32.u64.compose %v9703, %v9702
    %v9705 = vextract.low.u32 %v9704
    %v9706 = vextract.high.u32 %v9704
    %v9707 = vmul.u32.u64.compose %v9703, %v9698
    %v9708 = vextract.low.u32 %v9707
    %v9709 = vextract.high.u32 %v9707
    %v9710 = vmul.u32 %v9703, %v9694
    %v9711 = vadd.s32 %v9706, %v9708
    %vm9712 = vc.u32 %v9706, %v9708
    %v9713 = vadd.s32 %v9709, 1
    %v9714 = vsel %vm9712, %v9713, %v9709
    %v9715 = vadd.s32 %v9710, %v9714
    %v9716 = vadd.s32 %v9715, 536870912
    %v9717 = vshrl.u32 %v9716, 30
    %v9718 = vshll.u32 %v9717, 30
    %v9719 = vsub.s32 %v9715, %v9718
    %vm9720 = vcmp.lt.s32.totalorder %v9719, 0
    %v9721 = vsub.s32 0, %v9719
    %v9722 = vsel %vm9720, %v9721, %v9719
    %v9723 = vclz %v9722
    %v9724 = vsub.s32 %v9723, 2
    %vm9725 = vcmp.gt.s32.totalorder 0, %v9724
    %v9726 = vsel %vm9725, 0, %v9724
    %v9727 = vsub.s32 32, %v9726
    %v9728 = vshll.u32 %v9719, %v9726
    %v9729 = vshrl.u32 %v9711, %v9727
    %v9730 = vor.u32 %v9728, %v9729
    %v9731 = vsub.s32 4294967266, %v9726
    %v9732 = vadd.s32 %v9731, 127
    %v9733 = vshll.u32 %v9732, 23
    %v9734 = vor.u32 4788187, %v9733
    %v9735 = vand.u32 2147483647, %v9734
    %v9737 = vcvt.s32.f32 %v9730
    %v9738 = vmul.f32 %v9737, %v9735
    %v9739 = vxor.u32 %v9738, 2147483648
    %v9740 = vsel %vm9657, %v9739, %v9738
    %v9741 = vsub.s32 4, %v9717
    %v9742 = vsel %vm9657, %v9741, %v9717
    %v9743 = vsel %vm9656, %v8395, %v9740
    %v9744 = vsel %vm9656, 0, %v9742
    %v9745 = vcosq.f32.pop %v9743
    %v9746 = vsinq.f32.pop %v9743
    %vm9747 = vweird.f32 %v8395
    %v9748 = vadd.s32 %v9744, 3
    %v9749 = vand.u32 %v9748, 3
    %vm9750 = vcmp.lt.s32.totalorder %v9749, 2
    %vm9751 = vcmp.eq.s32.totalorder %v9749, 0
    %v9752 = vxor.u32 %v9746, 2147483648
    %v9753 = vsel %vm9751, %v9745, %v9752
    %vm9754 = vcmp.eq.s32.totalorder %v9749, 2
    %v9755 = vxor.u32 %v9745, 2147483648
    %v9756 = vsel %vm9754, %v9755, %v9746
    %v9757 = vsel %vm9750, %v9753, %v9756
    %v9758 = vsel %vm9747, nan, %v9757
    %v9759 = vand.u32 2147483647, %v8396
    %vm9760 = vcmp.le.f32.partialorder %v9759, 0.7853982
    %vm9761 = vcmp.lt.s32.totalorder %v8396, 0
    %v9762 = vand.u32 %v8396, 2139095040
    %v9763 = vshrl.u32 %v9762, 23
    %v9764 = vsub.s32 %v9763, 127
    %v9765 = vand.u32 2147483647, %v8396
    %v9766 = vand.u32 %v9765, 8388607
    %v9767 = vor.u32 %v9766, 8388608
    %v9768 = vsub.s32 0, %v9767
    %v9769 = vadd.s32 %v9764, 1
    %vm9770 = vcmp.gt.s32.totalorder %v9769, 0
    %v9771 = vsel %vm9770, %v9769, 0
    %v9772 = vshrl.u32 %v9771, 5
    %v9773 = vand.u32 %v9771, 31
    %v9774 = vsub.s32 32, %v9773
    %v9775 = vshrl.u32 683565275, %v9774
    %v9776 = vshll.u32 683565275, %v9773
    %v9777 = vshrl.u32 2475754826, %v9774
    %v9778 = vor.u32 %v9776, %v9777
    %v9779 = vshll.u32 2475754826, %v9773
    %v9780 = vshrl.u32 2131351028, %v9774
    %v9781 = vor.u32 %v9779, %v9780
    %v9782 = vshll.u32 2131351028, %v9773
    %v9783 = vshrl.u32 2102212464, %v9774
    %v9784 = vor.u32 %v9782, %v9783
    %v9785 = vshll.u32 2102212464, %v9773
    %v9786 = vshrl.u32 920167782, %v9774
    %v9787 = vor.u32 %v9785, %v9786
    %v9788 = vshll.u32 920167782, %v9773
    %v9789 = vshrl.u32 1326507024, %v9774
    %v9790 = vor.u32 %v9788, %v9789
    %vm9791 = vcmp.lt.s32.totalorder %v9772, 1
    %vm9792 = vcmp.lt.s32.totalorder %v9772, 2
    %vm9793 = vcmp.lt.s32.totalorder %v9772, 3
    %vm9794 = vcmp.lt.s32.totalorder %v9772, 4
    %v9795 = vsel %vm9791, %v9775, %v9778
    %v9796 = vsel %vm9794, %v9784, 2102212464
    %v9797 = vsel %vm9793, %v9781, %v9796
    %v9798 = vsel %vm9792, %v9795, %v9797
    %v9799 = vsel %vm9791, %v9778, %v9781
    %v9800 = vsel %vm9794, %v9787, 920167782
    %v9801 = vsel %vm9793, %v9784, %v9800
    %v9802 = vsel %vm9792, %v9799, %v9801
    %v9803 = vsel %vm9791, %v9781, %v9784
    %v9804 = vsel %vm9794, %v9790, 1326507024
    %v9805 = vsel %vm9793, %v9787, %v9804
    %v9806 = vsel %vm9792, %v9803, %v9805
    %v9807 = vshll.u32 %v9767, 8
    %v9808 = vmul.u32.u64.compose %v9807, %v9806
    %v9809 = vextract.low.u32 %v9808
    %v9810 = vextract.high.u32 %v9808
    %v9811 = vmul.u32.u64.compose %v9807, %v9802
    %v9812 = vextract.low.u32 %v9811
    %v9813 = vextract.high.u32 %v9811
    %v9814 = vmul.u32 %v9807, %v9798
    %v9815 = vadd.s32 %v9810, %v9812
    %vm9816 = vc.u32 %v9810, %v9812
    %v9817 = vadd.s32 %v9813, 1
    %v9818 = vsel %vm9816, %v9817, %v9813
    %v9819 = vadd.s32 %v9814, %v9818
    %v9820 = vadd.s32 %v9819, 536870912
    %v9821 = vshrl.u32 %v9820, 30
    %v9822 = vshll.u32 %v9821, 30
    %v9823 = vsub.s32 %v9819, %v9822
    %vm9824 = vcmp.lt.s32.totalorder %v9823, 0
    %v9825 = vsub.s32 0, %v9823
    %v9826 = vsel %vm9824, %v9825, %v9823
    %v9827 = vclz %v9826
    %v9828 = vsub.s32 %v9827, 2
    %vm9829 = vcmp.gt.s32.totalorder 0, %v9828
    %v9830 = vsel %vm9829, 0, %v9828
    %v9831 = vsub.s32 32, %v9830
    %v9832 = vshll.u32 %v9823, %v9830
    %v9833 = vshrl.u32 %v9815, %v9831
    %v9834 = vor.u32 %v9832, %v9833
    %v9835 = vsub.s32 4294967266, %v9830
    %v9836 = vadd.s32 %v9835, 127
    %v9837 = vshll.u32 %v9836, 23
    %v9838 = vor.u32 4788187, %v9837
    %v9839 = vand.u32 2147483647, %v9838
    %v9841 = vcvt.s32.f32 %v9834
    %v9842 = vmul.f32 %v9841, %v9839
    %v9843 = vxor.u32 %v9842, 2147483648
    %v9844 = vsel %vm9761, %v9843, %v9842
    %v9845 = vsub.s32 4, %v9821
    %v9846 = vsel %vm9761, %v9845, %v9821
    %v9847 = vsel %vm9760, %v8396, %v9844
    %v9848 = vsel %vm9760, 0, %v9846
    %v9849 = vcosq.f32.pop %v9847
    %v9850 = vsinq.f32.pop %v9847
    %vm9851 = vweird.f32 %v8396
    %v9852 = vadd.s32 %v9848, 3
    %v9853 = vand.u32 %v9852, 3
    %vm9854 = vcmp.lt.s32.totalorder %v9853, 2
    %vm9855 = vcmp.eq.s32.totalorder %v9853, 0
    %v9856 = vxor.u32 %v9850, 2147483648
    %v9857 = vsel %vm9855, %v9849, %v9856
    %vm9858 = vcmp.eq.s32.totalorder %v9853, 2
    %v9859 = vxor.u32 %v9849, 2147483648
    %v9860 = vsel %vm9858, %v9859, %v9850
    %v9861 = vsel %vm9854, %v9857, %v9860
    %v9862 = vsel %vm9851, nan, %v9861
    %v9863 = vand.u32 2147483647, %v8397
    %vm9864 = vcmp.le.f32.partialorder %v9863, 0.7853982
    %vm9865 = vcmp.lt.s32.totalorder %v8397, 0
    %v9866 = vand.u32 %v8397, 2139095040
    %v9867 = vshrl.u32 %v9866, 23
    %v9868 = vsub.s32 %v9867, 127
    %v9869 = vand.u32 2147483647, %v8397
    %v9870 = vand.u32 %v9869, 8388607
    %v9871 = vor.u32 %v9870, 8388608
    %v9872 = vsub.s32 0, %v9871
    %v9873 = vadd.s32 %v9868, 1
    %vm9874 = vcmp.gt.s32.totalorder %v9873, 0
    %v9875 = vsel %vm9874, %v9873, 0
    %v9876 = vshrl.u32 %v9875, 5
    %v9877 = vand.u32 %v9875, 31
    %v9878 = vsub.s32 32, %v9877
    %v9879 = vshrl.u32 683565275, %v9878
    %v9880 = vshll.u32 683565275, %v9877
    %v9881 = vshrl.u32 2475754826, %v9878
    %v9882 = vor.u32 %v9880, %v9881
    %v9883 = vshll.u32 2475754826, %v9877
    %v9884 = vshrl.u32 2131351028, %v9878
    %v9885 = vor.u32 %v9883, %v9884
    %v9886 = vshll.u32 2131351028, %v9877
    %v9887 = vshrl.u32 2102212464, %v9878
    %v9888 = vor.u32 %v9886, %v9887
    %v9889 = vshll.u32 2102212464, %v9877
    %v9890 = vshrl.u32 920167782, %v9878
    %v9891 = vor.u32 %v9889, %v9890
    %v9892 = vshll.u32 920167782, %v9877
    %v9893 = vshrl.u32 1326507024, %v9878
    %v9894 = vor.u32 %v9892, %v9893
    %vm9895 = vcmp.lt.s32.totalorder %v9876, 1
    %vm9896 = vcmp.lt.s32.totalorder %v9876, 2
    %vm9897 = vcmp.lt.s32.totalorder %v9876, 3
    %vm9898 = vcmp.lt.s32.totalorder %v9876, 4
    %v9899 = vsel %vm9895, %v9879, %v9882
    %v9900 = vsel %vm9898, %v9888, 2102212464
    %v9901 = vsel %vm9897, %v9885, %v9900
    %v9902 = vsel %vm9896, %v9899, %v9901
    %v9903 = vsel %vm9895, %v9882, %v9885
    %v9904 = vsel %vm9898, %v9891, 920167782
    %v9905 = vsel %vm9897, %v9888, %v9904
    %v9906 = vsel %vm9896, %v9903, %v9905
    %v9907 = vsel %vm9895, %v9885, %v9888
    %v9908 = vsel %vm9898, %v9894, 1326507024
    %v9909 = vsel %vm9897, %v9891, %v9908
    %v9910 = vsel %vm9896, %v9907, %v9909
    %v9911 = vshll.u32 %v9871, 8
    %v9912 = vmul.u32.u64.compose %v9911, %v9910
    %v9913 = vextract.low.u32 %v9912
    %v9914 = vextract.high.u32 %v9912
    %v9915 = vmul.u32.u64.compose %v9911, %v9906
    %v9916 = vextract.low.u32 %v9915
    %v9917 = vextract.high.u32 %v9915
    %v9918 = vmul.u32 %v9911, %v9902
    %v9919 = vadd.s32 %v9914, %v9916
    %vm9920 = vc.u32 %v9914, %v9916
    %v9921 = vadd.s32 %v9917, 1
    %v9922 = vsel %vm9920, %v9921, %v9917
    %v9923 = vadd.s32 %v9918, %v9922
    %v9924 = vadd.s32 %v9923, 536870912
    %v9925 = vshrl.u32 %v9924, 30
    %v9926 = vshll.u32 %v9925, 30
    %v9927 = vsub.s32 %v9923, %v9926
    %vm9928 = vcmp.lt.s32.totalorder %v9927, 0
    %v9929 = vsub.s32 0, %v9927
    %v9930 = vsel %vm9928, %v9929, %v9927
    %v9931 = vclz %v9930
    %v9932 = vsub.s32 %v9931, 2
    %vm9933 = vcmp.gt.s32.totalorder 0, %v9932
    %v9934 = vsel %vm9933, 0, %v9932
    %v9935 = vsub.s32 32, %v9934
    %v9936 = vshll.u32 %v9927, %v9934
    %v9937 = vshrl.u32 %v9919, %v9935
    %v9938 = vor.u32 %v9936, %v9937
    %v9939 = vsub.s32 4294967266, %v9934
    %v9940 = vadd.s32 %v9939, 127
    %v9941 = vshll.u32 %v9940, 23
    %v9942 = vor.u32 4788187, %v9941
    %v9943 = vand.u32 2147483647, %v9942
    %v9945 = vcvt.s32.f32 %v9938
    %v9946 = vmul.f32 %v9945, %v9943
    %v9947 = vxor.u32 %v9946, 2147483648
    %v9948 = vsel %vm9865, %v9947, %v9946
    %v9949 = vsub.s32 4, %v9925
    %v9950 = vsel %vm9865, %v9949, %v9925
    %v9951 = vsel %vm9864, %v8397, %v9948
    %v9952 = vsel %vm9864, 0, %v9950
    %v9953 = vcosq.f32.pop %v9951
    %v9954 = vsinq.f32.pop %v9951
    %vm9955 = vweird.f32 %v8397
    %v9956 = vadd.s32 %v9952, 3
    %v9957 = vand.u32 %v9956, 3
    %vm9958 = vcmp.lt.s32.totalorder %v9957, 2
    %vm9959 = vcmp.eq.s32.totalorder %v9957, 0
    %v9960 = vxor.u32 %v9954, 2147483648
    %v9961 = vsel %vm9959, %v9953, %v9960
    %vm9962 = vcmp.eq.s32.totalorder %v9957, 2
    %v9963 = vxor.u32 %v9953, 2147483648
    %v9964 = vsel %vm9962, %v9963, %v9954
    %v9965 = vsel %vm9958, %v9961, %v9964
    %v9966 = vsel %vm9955, nan, %v9965
    %v9967 = vand.u32 2147483647, %v8398
    %vm9968 = vcmp.le.f32.partialorder %v9967, 0.7853982
    %vm9969 = vcmp.lt.s32.totalorder %v8398, 0
    %v9970 = vand.u32 %v8398, 2139095040
    %v9971 = vshrl.u32 %v9970, 23
    %v9972 = vsub.s32 %v9971, 127
    %v9973 = vand.u32 2147483647, %v8398
    %v9974 = vand.u32 %v9973, 8388607
    %v9975 = vor.u32 %v9974, 8388608
    %v9976 = vsub.s32 0, %v9975
    %v9977 = vadd.s32 %v9972, 1
    %vm9978 = vcmp.gt.s32.totalorder %v9977, 0
    %v9979 = vsel %vm9978, %v9977, 0
    %v9980 = vshrl.u32 %v9979, 5
    %v9981 = vand.u32 %v9979, 31
    %v9982 = vsub.s32 32, %v9981
    %v9983 = vshrl.u32 683565275, %v9982
    %v9984 = vshll.u32 683565275, %v9981
    %v9985 = vshrl.u32 2475754826, %v9982
    %v9986 = vor.u32 %v9984, %v9985
    %v9987 = vshll.u32 2475754826, %v9981
    %v9988 = vshrl.u32 2131351028, %v9982
    %v9989 = vor.u32 %v9987, %v9988
    %v9990 = vshll.u32 2131351028, %v9981
    %v9991 = vshrl.u32 2102212464, %v9982
    %v9992 = vor.u32 %v9990, %v9991
    %v9993 = vshll.u32 2102212464, %v9981
    %v9994 = vshrl.u32 920167782, %v9982
    %v9995 = vor.u32 %v9993, %v9994
    %v9996 = vshll.u32 920167782, %v9981
    %v9997 = vshrl.u32 1326507024, %v9982
    %v9998 = vor.u32 %v9996, %v9997
    %vm9999 = vcmp.lt.s32.totalorder %v9980, 1
    %vm10000 = vcmp.lt.s32.totalorder %v9980, 2
    %vm10001 = vcmp.lt.s32.totalorder %v9980, 3
    %vm10002 = vcmp.lt.s32.totalorder %v9980, 4
    %v10003 = vsel %vm9999, %v9983, %v9986
    %v10004 = vsel %vm10002, %v9992, 2102212464
    %v10005 = vsel %vm10001, %v9989, %v10004
    %v10006 = vsel %vm10000, %v10003, %v10005
    %v10007 = vsel %vm9999, %v9986, %v9989
    %v10008 = vsel %vm10002, %v9995, 920167782
    %v10009 = vsel %vm10001, %v9992, %v10008
    %v10010 = vsel %vm10000, %v10007, %v10009
    %v10011 = vsel %vm9999, %v9989, %v9992
    %v10012 = vsel %vm10002, %v9998, 1326507024
    %v10013 = vsel %vm10001, %v9995, %v10012
    %v10014 = vsel %vm10000, %v10011, %v10013
    %v10015 = vshll.u32 %v9975, 8
    %v10016 = vmul.u32.u64.compose %v10015, %v10014
    %v10017 = vextract.low.u32 %v10016
    %v10018 = vextract.high.u32 %v10016
    %v10019 = vmul.u32.u64.compose %v10015, %v10010
    %v10020 = vextract.low.u32 %v10019
    %v10021 = vextract.high.u32 %v10019
    %v10022 = vmul.u32 %v10015, %v10006
    %v10023 = vadd.s32 %v10018, %v10020
    %vm10024 = vc.u32 %v10018, %v10020
    %v10025 = vadd.s32 %v10021, 1
    %v10026 = vsel %vm10024, %v10025, %v10021
    %v10027 = vadd.s32 %v10022, %v10026
    %v10028 = vadd.s32 %v10027, 536870912
    %v10029 = vshrl.u32 %v10028, 30
    %v10030 = vshll.u32 %v10029, 30
    %v10031 = vsub.s32 %v10027, %v10030
    %vm10032 = vcmp.lt.s32.totalorder %v10031, 0
    %v10033 = vsub.s32 0, %v10031
    %v10034 = vsel %vm10032, %v10033, %v10031
    %v10035 = vclz %v10034
    %v10036 = vsub.s32 %v10035, 2
    %vm10037 = vcmp.gt.s32.totalorder 0, %v10036
    %v10038 = vsel %vm10037, 0, %v10036
    %v10039 = vsub.s32 32, %v10038
    %v10040 = vshll.u32 %v10031, %v10038
    %v10041 = vshrl.u32 %v10023, %v10039
    %v10042 = vor.u32 %v10040, %v10041
    %v10043 = vsub.s32 4294967266, %v10038
    %v10044 = vadd.s32 %v10043, 127
    %v10045 = vshll.u32 %v10044, 23
    %v10046 = vor.u32 4788187, %v10045
    %v10047 = vand.u32 2147483647, %v10046
    %v10049 = vcvt.s32.f32 %v10042
    %v10050 = vmul.f32 %v10049, %v10047
    %v10051 = vxor.u32 %v10050, 2147483648
    %v10052 = vsel %vm9969, %v10051, %v10050
    %v10053 = vsub.s32 4, %v10029
    %v10054 = vsel %vm9969, %v10053, %v10029
    %v10055 = vsel %vm9968, %v8398, %v10052
    %v10056 = vsel %vm9968, 0, %v10054
    %v10057 = vcosq.f32.pop %v10055
    %v10058 = vsinq.f32.pop %v10055
    %vm10059 = vweird.f32 %v8398
    %v10060 = vadd.s32 %v10056, 3
    %v10061 = vand.u32 %v10060, 3
    %vm10062 = vcmp.lt.s32.totalorder %v10061, 2
    %vm10063 = vcmp.eq.s32.totalorder %v10061, 0
    %v10064 = vxor.u32 %v10058, 2147483648
    %v10065 = vsel %vm10063, %v10057, %v10064
    %vm10066 = vcmp.eq.s32.totalorder %v10061, 2
    %v10067 = vxor.u32 %v10057, 2147483648
    %v10068 = vsel %vm10066, %v10067, %v10058
    %v10069 = vsel %vm10062, %v10065, %v10068
    %v10070 = vsel %vm10059, nan, %v10069
    %v10071 = vand.u32 2147483647, %v8399
    %vm10072 = vcmp.le.f32.partialorder %v10071, 0.7853982
    %vm10073 = vcmp.lt.s32.totalorder %v8399, 0
    %v10074 = vand.u32 %v8399, 2139095040
    %v10075 = vshrl.u32 %v10074, 23
    %v10076 = vsub.s32 %v10075, 127
    %v10077 = vand.u32 2147483647, %v8399
    %v10078 = vand.u32 %v10077, 8388607
    %v10079 = vor.u32 %v10078, 8388608
    %v10080 = vsub.s32 0, %v10079
    %v10081 = vadd.s32 %v10076, 1
    %vm10082 = vcmp.gt.s32.totalorder %v10081, 0
    %v10083 = vsel %vm10082, %v10081, 0
    %v10084 = vshrl.u32 %v10083, 5
    %v10085 = vand.u32 %v10083, 31
    %v10086 = vsub.s32 32, %v10085
    %v10087 = vshrl.u32 683565275, %v10086
    %v10088 = vshll.u32 683565275, %v10085
    %v10089 = vshrl.u32 2475754826, %v10086
    %v10090 = vor.u32 %v10088, %v10089
    %v10091 = vshll.u32 2475754826, %v10085
    %v10092 = vshrl.u32 2131351028, %v10086
    %v10093 = vor.u32 %v10091, %v10092
    %v10094 = vshll.u32 2131351028, %v10085
    %v10095 = vshrl.u32 2102212464, %v10086
    %v10096 = vor.u32 %v10094, %v10095
    %v10097 = vshll.u32 2102212464, %v10085
    %v10098 = vshrl.u32 920167782, %v10086
    %v10099 = vor.u32 %v10097, %v10098
    %v10100 = vshll.u32 920167782, %v10085
    %v10101 = vshrl.u32 1326507024, %v10086
    %v10102 = vor.u32 %v10100, %v10101
    %vm10103 = vcmp.lt.s32.totalorder %v10084, 1
    %vm10104 = vcmp.lt.s32.totalorder %v10084, 2
    %vm10105 = vcmp.lt.s32.totalorder %v10084, 3
    %vm10106 = vcmp.lt.s32.totalorder %v10084, 4
    %v10107 = vsel %vm10103, %v10087, %v10090
    %v10108 = vsel %vm10106, %v10096, 2102212464
    %v10109 = vsel %vm10105, %v10093, %v10108
    %v10110 = vsel %vm10104, %v10107, %v10109
    %v10111 = vsel %vm10103, %v10090, %v10093
    %v10112 = vsel %vm10106, %v10099, 920167782
    %v10113 = vsel %vm10105, %v10096, %v10112
    %v10114 = vsel %vm10104, %v10111, %v10113
    %v10115 = vsel %vm10103, %v10093, %v10096
    %v10116 = vsel %vm10106, %v10102, 1326507024
    %v10117 = vsel %vm10105, %v10099, %v10116
    %v10118 = vsel %vm10104, %v10115, %v10117
    %v10119 = vshll.u32 %v10079, 8
    %v10120 = vmul.u32.u64.compose %v10119, %v10118
    %v10121 = vextract.low.u32 %v10120
    %v10122 = vextract.high.u32 %v10120
    %v10123 = vmul.u32.u64.compose %v10119, %v10114
    %v10124 = vextract.low.u32 %v10123
    %v10125 = vextract.high.u32 %v10123
    %v10126 = vmul.u32 %v10119, %v10110
    %v10127 = vadd.s32 %v10122, %v10124
    %vm10128 = vc.u32 %v10122, %v10124
    %v10129 = vadd.s32 %v10125, 1
    %v10130 = vsel %vm10128, %v10129, %v10125
    %v10131 = vadd.s32 %v10126, %v10130
    %v10132 = vadd.s32 %v10131, 536870912
    %v10133 = vshrl.u32 %v10132, 30
    %v10134 = vshll.u32 %v10133, 30
    %v10135 = vsub.s32 %v10131, %v10134
    %vm10136 = vcmp.lt.s32.totalorder %v10135, 0
    %v10137 = vsub.s32 0, %v10135
    %v10138 = vsel %vm10136, %v10137, %v10135
    %v10139 = vclz %v10138
    %v10140 = vsub.s32 %v10139, 2
    %vm10141 = vcmp.gt.s32.totalorder 0, %v10140
    %v10142 = vsel %vm10141, 0, %v10140
    %v10143 = vsub.s32 32, %v10142
    %v10144 = vshll.u32 %v10135, %v10142
    %v10145 = vshrl.u32 %v10127, %v10143
    %v10146 = vor.u32 %v10144, %v10145
    %v10147 = vsub.s32 4294967266, %v10142
    %v10148 = vadd.s32 %v10147, 127
    %v10149 = vshll.u32 %v10148, 23
    %v10150 = vor.u32 4788187, %v10149
    %v10151 = vand.u32 2147483647, %v10150
    %v10153 = vcvt.s32.f32 %v10146
    %v10154 = vmul.f32 %v10153, %v10151
    %v10155 = vxor.u32 %v10154, 2147483648
    %v10156 = vsel %vm10073, %v10155, %v10154
    %v10157 = vsub.s32 4, %v10133
    %v10158 = vsel %vm10073, %v10157, %v10133
    %v10159 = vsel %vm10072, %v8399, %v10156
    %v10160 = vsel %vm10072, 0, %v10158
    %v10161 = vcosq.f32.pop %v10159
    %v10162 = vsinq.f32.pop %v10159
    %vm10163 = vweird.f32 %v8399
    %v10164 = vadd.s32 %v10160, 3
    %v10165 = vand.u32 %v10164, 3
    %vm10166 = vcmp.lt.s32.totalorder %v10165, 2
    %vm10167 = vcmp.eq.s32.totalorder %v10165, 0
    %v10168 = vxor.u32 %v10162, 2147483648
    %v10169 = vsel %vm10167, %v10161, %v10168
    %vm10170 = vcmp.eq.s32.totalorder %v10165, 2
    %v10171 = vxor.u32 %v10161, 2147483648
    %v10172 = vsel %vm10170, %v10171, %v10162
    %v10173 = vsel %vm10166, %v10169, %v10172
    %v10174 = vsel %vm10163, nan, %v10173
    %v10175 = vand.u32 2147483647, %v8400
    %vm10176 = vcmp.le.f32.partialorder %v10175, 0.7853982
    %vm10177 = vcmp.lt.s32.totalorder %v8400, 0
    %v10178 = vand.u32 %v8400, 2139095040
    %v10179 = vshrl.u32 %v10178, 23
    %v10180 = vsub.s32 %v10179, 127
    %v10181 = vand.u32 2147483647, %v8400
    %v10182 = vand.u32 %v10181, 8388607
    %v10183 = vor.u32 %v10182, 8388608
    %v10184 = vsub.s32 0, %v10183
    %v10185 = vadd.s32 %v10180, 1
    %vm10186 = vcmp.gt.s32.totalorder %v10185, 0
    %v10187 = vsel %vm10186, %v10185, 0
    %v10188 = vshrl.u32 %v10187, 5
    %v10189 = vand.u32 %v10187, 31
    %v10190 = vsub.s32 32, %v10189
    %v10191 = vshrl.u32 683565275, %v10190
    %v10192 = vshll.u32 683565275, %v10189
    %v10193 = vshrl.u32 2475754826, %v10190
    %v10194 = vor.u32 %v10192, %v10193
    %v10195 = vshll.u32 2475754826, %v10189
    %v10196 = vshrl.u32 2131351028, %v10190
    %v10197 = vor.u32 %v10195, %v10196
    %v10198 = vshll.u32 2131351028, %v10189
    %v10199 = vshrl.u32 2102212464, %v10190
    %v10200 = vor.u32 %v10198, %v10199
    %v10201 = vshll.u32 2102212464, %v10189
    %v10202 = vshrl.u32 920167782, %v10190
    %v10203 = vor.u32 %v10201, %v10202
    %v10204 = vshll.u32 920167782, %v10189
    %v10205 = vshrl.u32 1326507024, %v10190
    %v10206 = vor.u32 %v10204, %v10205
    %vm10207 = vcmp.lt.s32.totalorder %v10188, 1
    %vm10208 = vcmp.lt.s32.totalorder %v10188, 2
    %vm10209 = vcmp.lt.s32.totalorder %v10188, 3
    %vm10210 = vcmp.lt.s32.totalorder %v10188, 4
    %v10211 = vsel %vm10207, %v10191, %v10194
    %v10212 = vsel %vm10210, %v10200, 2102212464
    %v10213 = vsel %vm10209, %v10197, %v10212
    %v10214 = vsel %vm10208, %v10211, %v10213
    %v10215 = vsel %vm10207, %v10194, %v10197
    %v10216 = vsel %vm10210, %v10203, 920167782
    %v10217 = vsel %vm10209, %v10200, %v10216
    %v10218 = vsel %vm10208, %v10215, %v10217
    %v10219 = vsel %vm10207, %v10197, %v10200
    %v10220 = vsel %vm10210, %v10206, 1326507024
    %v10221 = vsel %vm10209, %v10203, %v10220
    %v10222 = vsel %vm10208, %v10219, %v10221
    %v10223 = vshll.u32 %v10183, 8
    %v10224 = vmul.u32.u64.compose %v10223, %v10222
    %v10225 = vextract.low.u32 %v10224
    %v10226 = vextract.high.u32 %v10224
    %v10227 = vmul.u32.u64.compose %v10223, %v10218
    %v10228 = vextract.low.u32 %v10227
    %v10229 = vextract.high.u32 %v10227
    %v10230 = vmul.u32 %v10223, %v10214
    %v10231 = vadd.s32 %v10226, %v10228
    %vm10232 = vc.u32 %v10226, %v10228
    %v10233 = vadd.s32 %v10229, 1
    %v10234 = vsel %vm10232, %v10233, %v10229
    %v10235 = vadd.s32 %v10230, %v10234
    %v10236 = vadd.s32 %v10235, 536870912
    %v10237 = vshrl.u32 %v10236, 30
    %v10238 = vshll.u32 %v10237, 30
    %v10239 = vsub.s32 %v10235, %v10238
    %vm10240 = vcmp.lt.s32.totalorder %v10239, 0
    %v10241 = vsub.s32 0, %v10239
    %v10242 = vsel %vm10240, %v10241, %v10239
    %v10243 = vclz %v10242
    %v10244 = vsub.s32 %v10243, 2
    %vm10245 = vcmp.gt.s32.totalorder 0, %v10244
    %v10246 = vsel %vm10245, 0, %v10244
    %v10247 = vsub.s32 32, %v10246
    %v10248 = vshll.u32 %v10239, %v10246
    %v10249 = vshrl.u32 %v10231, %v10247
    %v10250 = vor.u32 %v10248, %v10249
    %v10251 = vsub.s32 4294967266, %v10246
    %v10252 = vadd.s32 %v10251, 127
    %v10253 = vshll.u32 %v10252, 23
    %v10254 = vor.u32 4788187, %v10253
    %v10255 = vand.u32 2147483647, %v10254
    %v10257 = vcvt.s32.f32 %v10250
    %v10258 = vmul.f32 %v10257, %v10255
    %v10259 = vxor.u32 %v10258, 2147483648
    %v10260 = vsel %vm10177, %v10259, %v10258
    %v10261 = vsub.s32 4, %v10237
    %v10262 = vsel %vm10177, %v10261, %v10237
    %v10263 = vsel %vm10176, %v8400, %v10260
    %v10264 = vsel %vm10176, 0, %v10262
    %v10265 = vcosq.f32.pop %v10263
    %v10266 = vsinq.f32.pop %v10263
    %vm10267 = vweird.f32 %v8400
    %v10268 = vadd.s32 %v10264, 3
    %v10269 = vand.u32 %v10268, 3
    %vm10270 = vcmp.lt.s32.totalorder %v10269, 2
    %vm10271 = vcmp.eq.s32.totalorder %v10269, 0
    %v10272 = vxor.u32 %v10266, 2147483648
    %v10273 = vsel %vm10271, %v10265, %v10272
    %vm10274 = vcmp.eq.s32.totalorder %v10269, 2
    %v10275 = vxor.u32 %v10265, 2147483648
    %v10276 = vsel %vm10274, %v10275, %v10266
    %v10277 = vsel %vm10270, %v10273, %v10276
    %v10278 = vsel %vm10267, nan, %v10277
    %v10279 = vand.u32 2147483647, %v8401
    %vm10280 = vcmp.le.f32.partialorder %v10279, 0.7853982
    %vm10281 = vcmp.lt.s32.totalorder %v8401, 0
    %v10282 = vand.u32 %v8401, 2139095040
    %v10283 = vshrl.u32 %v10282, 23
    %v10284 = vsub.s32 %v10283, 127
    %v10285 = vand.u32 2147483647, %v8401
    %v10286 = vand.u32 %v10285, 8388607
    %v10287 = vor.u32 %v10286, 8388608
    %v10288 = vsub.s32 0, %v10287
    %v10289 = vadd.s32 %v10284, 1
    %vm10290 = vcmp.gt.s32.totalorder %v10289, 0
    %v10291 = vsel %vm10290, %v10289, 0
    %v10292 = vshrl.u32 %v10291, 5
    %v10293 = vand.u32 %v10291, 31
    %v10294 = vsub.s32 32, %v10293
    %v10295 = vshrl.u32 683565275, %v10294
    %v10296 = vshll.u32 683565275, %v10293
    %v10297 = vshrl.u32 2475754826, %v10294
    %v10298 = vor.u32 %v10296, %v10297
    %v10299 = vshll.u32 2475754826, %v10293
    %v10300 = vshrl.u32 2131351028, %v10294
    %v10301 = vor.u32 %v10299, %v10300
    %v10302 = vshll.u32 2131351028, %v10293
    %v10303 = vshrl.u32 2102212464, %v10294
    %v10304 = vor.u32 %v10302, %v10303
    %v10305 = vshll.u32 2102212464, %v10293
    %v10306 = vshrl.u32 920167782, %v10294
    %v10307 = vor.u32 %v10305, %v10306
    %v10308 = vshll.u32 920167782, %v10293
    %v10309 = vshrl.u32 1326507024, %v10294
    %v10310 = vor.u32 %v10308, %v10309
    %vm10311 = vcmp.lt.s32.totalorder %v10292, 1
    %vm10312 = vcmp.lt.s32.totalorder %v10292, 2
    %vm10313 = vcmp.lt.s32.totalorder %v10292, 3
    %vm10314 = vcmp.lt.s32.totalorder %v10292, 4
    %v10315 = vsel %vm10311, %v10295, %v10298
    %v10316 = vsel %vm10314, %v10304, 2102212464
    %v10317 = vsel %vm10313, %v10301, %v10316
    %v10318 = vsel %vm10312, %v10315, %v10317
    %v10319 = vsel %vm10311, %v10298, %v10301
    %v10320 = vsel %vm10314, %v10307, 920167782
    %v10321 = vsel %vm10313, %v10304, %v10320
    %v10322 = vsel %vm10312, %v10319, %v10321
    %v10323 = vsel %vm10311, %v10301, %v10304
    %v10324 = vsel %vm10314, %v10310, 1326507024
    %v10325 = vsel %vm10313, %v10307, %v10324
    %v10326 = vsel %vm10312, %v10323, %v10325
    %v10327 = vshll.u32 %v10287, 8
    %v10328 = vmul.u32.u64.compose %v10327, %v10326
    %v10329 = vextract.low.u32 %v10328
    %v10330 = vextract.high.u32 %v10328
    %v10331 = vmul.u32.u64.compose %v10327, %v10322
    %v10332 = vextract.low.u32 %v10331
    %v10333 = vextract.high.u32 %v10331
    %v10334 = vmul.u32 %v10327, %v10318
    %v10335 = vadd.s32 %v10330, %v10332
    %vm10336 = vc.u32 %v10330, %v10332
    %v10337 = vadd.s32 %v10333, 1
    %v10338 = vsel %vm10336, %v10337, %v10333
    %v10339 = vadd.s32 %v10334, %v10338
    %v10340 = vadd.s32 %v10339, 536870912
    %v10341 = vshrl.u32 %v10340, 30
    %v10342 = vshll.u32 %v10341, 30
    %v10343 = vsub.s32 %v10339, %v10342
    %vm10344 = vcmp.lt.s32.totalorder %v10343, 0
    %v10345 = vsub.s32 0, %v10343
    %v10346 = vsel %vm10344, %v10345, %v10343
    %v10347 = vclz %v10346
    %v10348 = vsub.s32 %v10347, 2
    %vm10349 = vcmp.gt.s32.totalorder 0, %v10348
    %v10350 = vsel %vm10349, 0, %v10348
    %v10351 = vsub.s32 32, %v10350
    %v10352 = vshll.u32 %v10343, %v10350
    %v10353 = vshrl.u32 %v10335, %v10351
    %v10354 = vor.u32 %v10352, %v10353
    %v10355 = vsub.s32 4294967266, %v10350
    %v10356 = vadd.s32 %v10355, 127
    %v10357 = vshll.u32 %v10356, 23
    %v10358 = vor.u32 4788187, %v10357
    %v10359 = vand.u32 2147483647, %v10358
    %v10361 = vcvt.s32.f32 %v10354
    %v10362 = vmul.f32 %v10361, %v10359
    %v10363 = vxor.u32 %v10362, 2147483648
    %v10364 = vsel %vm10281, %v10363, %v10362
    %v10365 = vsub.s32 4, %v10341
    %v10366 = vsel %vm10281, %v10365, %v10341
    %v10367 = vsel %vm10280, %v8401, %v10364
    %v10368 = vsel %vm10280, 0, %v10366
    %v10369 = vcosq.f32.pop %v10367
    %v10370 = vsinq.f32.pop %v10367
    %vm10371 = vweird.f32 %v8401
    %v10372 = vadd.s32 %v10368, 3
    %v10373 = vand.u32 %v10372, 3
    %vm10374 = vcmp.lt.s32.totalorder %v10373, 2
    %vm10375 = vcmp.eq.s32.totalorder %v10373, 0
    %v10376 = vxor.u32 %v10370, 2147483648
    %v10377 = vsel %vm10375, %v10369, %v10376
    %vm10378 = vcmp.eq.s32.totalorder %v10373, 2
    %v10379 = vxor.u32 %v10369, 2147483648
    %v10380 = vsel %vm10378, %v10379, %v10370
    %v10381 = vsel %vm10374, %v10377, %v10380
    %v10382 = vsel %vm10371, nan, %v10381
    %v10383 = vand.u32 2147483647, %v8402
    %vm10384 = vcmp.le.f32.partialorder %v10383, 0.7853982
    %vm10385 = vcmp.lt.s32.totalorder %v8402, 0
    %v10386 = vand.u32 %v8402, 2139095040
    %v10387 = vshrl.u32 %v10386, 23
    %v10388 = vsub.s32 %v10387, 127
    %v10389 = vand.u32 2147483647, %v8402
    %v10390 = vand.u32 %v10389, 8388607
    %v10391 = vor.u32 %v10390, 8388608
    %v10392 = vsub.s32 0, %v10391
    %v10393 = vadd.s32 %v10388, 1
    %vm10394 = vcmp.gt.s32.totalorder %v10393, 0
    %v10395 = vsel %vm10394, %v10393, 0
    %v10396 = vshrl.u32 %v10395, 5
    %v10397 = vand.u32 %v10395, 31
    %v10398 = vsub.s32 32, %v10397
    %v10399 = vshrl.u32 683565275, %v10398
    %v10400 = vshll.u32 683565275, %v10397
    %v10401 = vshrl.u32 2475754826, %v10398
    %v10402 = vor.u32 %v10400, %v10401
    %v10403 = vshll.u32 2475754826, %v10397
    %v10404 = vshrl.u32 2131351028, %v10398
    %v10405 = vor.u32 %v10403, %v10404
    %v10406 = vshll.u32 2131351028, %v10397
    %v10407 = vshrl.u32 2102212464, %v10398
    %v10408 = vor.u32 %v10406, %v10407
    %v10409 = vshll.u32 2102212464, %v10397
    %v10410 = vshrl.u32 920167782, %v10398
    %v10411 = vor.u32 %v10409, %v10410
    %v10412 = vshll.u32 920167782, %v10397
    %v10413 = vshrl.u32 1326507024, %v10398
    %v10414 = vor.u32 %v10412, %v10413
    %vm10415 = vcmp.lt.s32.totalorder %v10396, 1
    %vm10416 = vcmp.lt.s32.totalorder %v10396, 2
    %vm10417 = vcmp.lt.s32.totalorder %v10396, 3
    %vm10418 = vcmp.lt.s32.totalorder %v10396, 4
    %v10419 = vsel %vm10415, %v10399, %v10402
    %v10420 = vsel %vm10418, %v10408, 2102212464
    %v10421 = vsel %vm10417, %v10405, %v10420
    %v10422 = vsel %vm10416, %v10419, %v10421
    %v10423 = vsel %vm10415, %v10402, %v10405
    %v10424 = vsel %vm10418, %v10411, 920167782
    %v10425 = vsel %vm10417, %v10408, %v10424
    %v10426 = vsel %vm10416, %v10423, %v10425
    %v10427 = vsel %vm10415, %v10405, %v10408
    %v10428 = vsel %vm10418, %v10414, 1326507024
    %v10429 = vsel %vm10417, %v10411, %v10428
    %v10430 = vsel %vm10416, %v10427, %v10429
    %v10431 = vshll.u32 %v10391, 8
    %v10432 = vmul.u32.u64.compose %v10431, %v10430
    %v10433 = vextract.low.u32 %v10432
    %v10434 = vextract.high.u32 %v10432
    %v10435 = vmul.u32.u64.compose %v10431, %v10426
    %v10436 = vextract.low.u32 %v10435
    %v10437 = vextract.high.u32 %v10435
    %v10438 = vmul.u32 %v10431, %v10422
    %v10439 = vadd.s32 %v10434, %v10436
    %vm10440 = vc.u32 %v10434, %v10436
    %v10441 = vadd.s32 %v10437, 1
    %v10442 = vsel %vm10440, %v10441, %v10437
    %v10443 = vadd.s32 %v10438, %v10442
    %v10444 = vadd.s32 %v10443, 536870912
    %v10445 = vshrl.u32 %v10444, 30
    %v10446 = vshll.u32 %v10445, 30
    %v10447 = vsub.s32 %v10443, %v10446
    %vm10448 = vcmp.lt.s32.totalorder %v10447, 0
    %v10449 = vsub.s32 0, %v10447
    %v10450 = vsel %vm10448, %v10449, %v10447
    %v10451 = vclz %v10450
    %v10452 = vsub.s32 %v10451, 2
    %vm10453 = vcmp.gt.s32.totalorder 0, %v10452
    %v10454 = vsel %vm10453, 0, %v10452
    %v10455 = vsub.s32 32, %v10454
    %v10456 = vshll.u32 %v10447, %v10454
    %v10457 = vshrl.u32 %v10439, %v10455
    %v10458 = vor.u32 %v10456, %v10457
    %v10459 = vsub.s32 4294967266, %v10454
    %v10460 = vadd.s32 %v10459, 127
    %v10461 = vshll.u32 %v10460, 23
    %v10462 = vor.u32 4788187, %v10461
    %v10463 = vand.u32 2147483647, %v10462
    %v10465 = vcvt.s32.f32 %v10458
    %v10466 = vmul.f32 %v10465, %v10463
    %v10467 = vxor.u32 %v10466, 2147483648
    %v10468 = vsel %vm10385, %v10467, %v10466
    %v10469 = vsub.s32 4, %v10445
    %v10470 = vsel %vm10385, %v10469, %v10445
    %v10471 = vsel %vm10384, %v8402, %v10468
    %v10472 = vsel %vm10384, 0, %v10470
    %v10473 = vcosq.f32.pop %v10471
    %v10474 = vsinq.f32.pop %v10471
    %vm10475 = vweird.f32 %v8402
    %v10476 = vadd.s32 %v10472, 3
    %v10477 = vand.u32 %v10476, 3
    %vm10478 = vcmp.lt.s32.totalorder %v10477, 2
    %vm10479 = vcmp.eq.s32.totalorder %v10477, 0
    %v10480 = vxor.u32 %v10474, 2147483648
    %v10481 = vsel %vm10479, %v10473, %v10480
    %vm10482 = vcmp.eq.s32.totalorder %v10477, 2
    %v10483 = vxor.u32 %v10473, 2147483648
    %v10484 = vsel %vm10482, %v10483, %v10474
    %v10485 = vsel %vm10478, %v10481, %v10484
    %v10486 = vsel %vm10475, nan, %v10485
    %v10487 = vand.u32 2147483647, %v8403
    %vm10488 = vcmp.le.f32.partialorder %v10487, 0.7853982
    %vm10489 = vcmp.lt.s32.totalorder %v8403, 0
    %v10490 = vand.u32 %v8403, 2139095040
    %v10491 = vshrl.u32 %v10490, 23
    %v10492 = vsub.s32 %v10491, 127
    %v10493 = vand.u32 2147483647, %v8403
    %v10494 = vand.u32 %v10493, 8388607
    %v10495 = vor.u32 %v10494, 8388608
    %v10496 = vsub.s32 0, %v10495
    %v10497 = vadd.s32 %v10492, 1
    %vm10498 = vcmp.gt.s32.totalorder %v10497, 0
    %v10499 = vsel %vm10498, %v10497, 0
    %v10500 = vshrl.u32 %v10499, 5
    %v10501 = vand.u32 %v10499, 31
    %v10502 = vsub.s32 32, %v10501
    %v10503 = vshrl.u32 683565275, %v10502
    %v10504 = vshll.u32 683565275, %v10501
    %v10505 = vshrl.u32 2475754826, %v10502
    %v10506 = vor.u32 %v10504, %v10505
    %v10507 = vshll.u32 2475754826, %v10501
    %v10508 = vshrl.u32 2131351028, %v10502
    %v10509 = vor.u32 %v10507, %v10508
    %v10510 = vshll.u32 2131351028, %v10501
    %v10511 = vshrl.u32 2102212464, %v10502
    %v10512 = vor.u32 %v10510, %v10511
    %v10513 = vshll.u32 2102212464, %v10501
    %v10514 = vshrl.u32 920167782, %v10502
    %v10515 = vor.u32 %v10513, %v10514
    %v10516 = vshll.u32 920167782, %v10501
    %v10517 = vshrl.u32 1326507024, %v10502
    %v10518 = vor.u32 %v10516, %v10517
    %vm10519 = vcmp.lt.s32.totalorder %v10500, 1
    %vm10520 = vcmp.lt.s32.totalorder %v10500, 2
    %vm10521 = vcmp.lt.s32.totalorder %v10500, 3
    %vm10522 = vcmp.lt.s32.totalorder %v10500, 4
    %v10523 = vsel %vm10519, %v10503, %v10506
    %v10524 = vsel %vm10522, %v10512, 2102212464
    %v10525 = vsel %vm10521, %v10509, %v10524
    %v10526 = vsel %vm10520, %v10523, %v10525
    %v10527 = vsel %vm10519, %v10506, %v10509
    %v10528 = vsel %vm10522, %v10515, 920167782
    %v10529 = vsel %vm10521, %v10512, %v10528
    %v10530 = vsel %vm10520, %v10527, %v10529
    %v10531 = vsel %vm10519, %v10509, %v10512
    %v10532 = vsel %vm10522, %v10518, 1326507024
    %v10533 = vsel %vm10521, %v10515, %v10532
    %v10534 = vsel %vm10520, %v10531, %v10533
    %v10535 = vshll.u32 %v10495, 8
    %v10536 = vmul.u32.u64.compose %v10535, %v10534
    %v10537 = vextract.low.u32 %v10536
    %v10538 = vextract.high.u32 %v10536
    %v10539 = vmul.u32.u64.compose %v10535, %v10530
    %v10540 = vextract.low.u32 %v10539
    %v10541 = vextract.high.u32 %v10539
    %v10542 = vmul.u32 %v10535, %v10526
    %v10543 = vadd.s32 %v10538, %v10540
    %vm10544 = vc.u32 %v10538, %v10540
    %v10545 = vadd.s32 %v10541, 1
    %v10546 = vsel %vm10544, %v10545, %v10541
    %v10547 = vadd.s32 %v10542, %v10546
    %v10548 = vadd.s32 %v10547, 536870912
    %v10549 = vshrl.u32 %v10548, 30
    %v10550 = vshll.u32 %v10549, 30
    %v10551 = vsub.s32 %v10547, %v10550
    %vm10552 = vcmp.lt.s32.totalorder %v10551, 0
    %v10553 = vsub.s32 0, %v10551
    %v10554 = vsel %vm10552, %v10553, %v10551
    %v10555 = vclz %v10554
    %v10556 = vsub.s32 %v10555, 2
    %vm10557 = vcmp.gt.s32.totalorder 0, %v10556
    %v10558 = vsel %vm10557, 0, %v10556
    %v10559 = vsub.s32 32, %v10558
    %v10560 = vshll.u32 %v10551, %v10558
    %v10561 = vshrl.u32 %v10543, %v10559
    %v10562 = vor.u32 %v10560, %v10561
    %v10563 = vsub.s32 4294967266, %v10558
    %v10564 = vadd.s32 %v10563, 127
    %v10565 = vshll.u32 %v10564, 23
    %v10566 = vor.u32 4788187, %v10565
    %v10567 = vand.u32 2147483647, %v10566
    %v10569 = vcvt.s32.f32 %v10562
    %v10570 = vmul.f32 %v10569, %v10567
    %v10571 = vxor.u32 %v10570, 2147483648
    %v10572 = vsel %vm10489, %v10571, %v10570
    %v10573 = vsub.s32 4, %v10549
    %v10574 = vsel %vm10489, %v10573, %v10549
    %v10575 = vsel %vm10488, %v8403, %v10572
    %v10576 = vsel %vm10488, 0, %v10574
    %v10577 = vcosq.f32.pop %v10575
    %v10578 = vsinq.f32.pop %v10575
    %vm10579 = vweird.f32 %v8403
    %v10580 = vadd.s32 %v10576, 3
    %v10581 = vand.u32 %v10580, 3
    %vm10582 = vcmp.lt.s32.totalorder %v10581, 2
    %vm10583 = vcmp.eq.s32.totalorder %v10581, 0
    %v10584 = vxor.u32 %v10578, 2147483648
    %v10585 = vsel %vm10583, %v10577, %v10584
    %vm10586 = vcmp.eq.s32.totalorder %v10581, 2
    %v10587 = vxor.u32 %v10577, 2147483648
    %v10588 = vsel %vm10586, %v10587, %v10578
    %v10589 = vsel %vm10582, %v10585, %v10588
    %v10590 = vsel %vm10579, nan, %v10589
    %v10591 = vand.u32 2147483647, %v8404
    %vm10592 = vcmp.le.f32.partialorder %v10591, 0.7853982
    %vm10593 = vcmp.lt.s32.totalorder %v8404, 0
    %v10594 = vand.u32 %v8404, 2139095040
    %v10595 = vshrl.u32 %v10594, 23
    %v10596 = vsub.s32 %v10595, 127
    %v10597 = vand.u32 2147483647, %v8404
    %v10598 = vand.u32 %v10597, 8388607
    %v10599 = vor.u32 %v10598, 8388608
    %v10600 = vsub.s32 0, %v10599
    %v10601 = vadd.s32 %v10596, 1
    %vm10602 = vcmp.gt.s32.totalorder %v10601, 0
    %v10603 = vsel %vm10602, %v10601, 0
    %v10604 = vshrl.u32 %v10603, 5
    %v10605 = vand.u32 %v10603, 31
    %v10606 = vsub.s32 32, %v10605
    %v10607 = vshrl.u32 683565275, %v10606
    %v10608 = vshll.u32 683565275, %v10605
    %v10609 = vshrl.u32 2475754826, %v10606
    %v10610 = vor.u32 %v10608, %v10609
    %v10611 = vshll.u32 2475754826, %v10605
    %v10612 = vshrl.u32 2131351028, %v10606
    %v10613 = vor.u32 %v10611, %v10612
    %v10614 = vshll.u32 2131351028, %v10605
    %v10615 = vshrl.u32 2102212464, %v10606
    %v10616 = vor.u32 %v10614, %v10615
    %v10617 = vshll.u32 2102212464, %v10605
    %v10618 = vshrl.u32 920167782, %v10606
    %v10619 = vor.u32 %v10617, %v10618
    %v10620 = vshll.u32 920167782, %v10605
    %v10621 = vshrl.u32 1326507024, %v10606
    %v10622 = vor.u32 %v10620, %v10621
    %vm10623 = vcmp.lt.s32.totalorder %v10604, 1
    %vm10624 = vcmp.lt.s32.totalorder %v10604, 2
    %vm10625 = vcmp.lt.s32.totalorder %v10604, 3
    %vm10626 = vcmp.lt.s32.totalorder %v10604, 4
    %v10627 = vsel %vm10623, %v10607, %v10610
    %v10628 = vsel %vm10626, %v10616, 2102212464
    %v10629 = vsel %vm10625, %v10613, %v10628
    %v10630 = vsel %vm10624, %v10627, %v10629
    %v10631 = vsel %vm10623, %v10610, %v10613
    %v10632 = vsel %vm10626, %v10619, 920167782
    %v10633 = vsel %vm10625, %v10616, %v10632
    %v10634 = vsel %vm10624, %v10631, %v10633
    %v10635 = vsel %vm10623, %v10613, %v10616
    %v10636 = vsel %vm10626, %v10622, 1326507024
    %v10637 = vsel %vm10625, %v10619, %v10636
    %v10638 = vsel %vm10624, %v10635, %v10637
    %v10639 = vshll.u32 %v10599, 8
    %v10640 = vmul.u32.u64.compose %v10639, %v10638
    %v10641 = vextract.low.u32 %v10640
    %v10642 = vextract.high.u32 %v10640
    %v10643 = vmul.u32.u64.compose %v10639, %v10634
    %v10644 = vextract.low.u32 %v10643
    %v10645 = vextract.high.u32 %v10643
    %v10646 = vmul.u32 %v10639, %v10630
    %v10647 = vadd.s32 %v10642, %v10644
    %vm10648 = vc.u32 %v10642, %v10644
    %v10649 = vadd.s32 %v10645, 1
    %v10650 = vsel %vm10648, %v10649, %v10645
    %v10651 = vadd.s32 %v10646, %v10650
    %v10652 = vadd.s32 %v10651, 536870912
    %v10653 = vshrl.u32 %v10652, 30
    %v10654 = vshll.u32 %v10653, 30
    %v10655 = vsub.s32 %v10651, %v10654
    %vm10656 = vcmp.lt.s32.totalorder %v10655, 0
    %v10657 = vsub.s32 0, %v10655
    %v10658 = vsel %vm10656, %v10657, %v10655
    %v10659 = vclz %v10658
    %v10660 = vsub.s32 %v10659, 2
    %vm10661 = vcmp.gt.s32.totalorder 0, %v10660
    %v10662 = vsel %vm10661, 0, %v10660
    %v10663 = vsub.s32 32, %v10662
    %v10664 = vshll.u32 %v10655, %v10662
    %v10665 = vshrl.u32 %v10647, %v10663
    %v10666 = vor.u32 %v10664, %v10665
    %v10667 = vsub.s32 4294967266, %v10662
    %v10668 = vadd.s32 %v10667, 127
    %v10669 = vshll.u32 %v10668, 23
    %v10670 = vor.u32 4788187, %v10669
    %v10671 = vand.u32 2147483647, %v10670
    %v10673 = vcvt.s32.f32 %v10666
    %v10674 = vmul.f32 %v10673, %v10671
    %v10675 = vxor.u32 %v10674, 2147483648
    %v10676 = vsel %vm10593, %v10675, %v10674
    %v10677 = vsub.s32 4, %v10653
    %v10678 = vsel %vm10593, %v10677, %v10653
    %v10679 = vsel %vm10592, %v8404, %v10676
    %v10680 = vsel %vm10592, 0, %v10678
    %v10681 = vcosq.f32.pop %v10679
    %v10682 = vsinq.f32.pop %v10679
    %vm10683 = vweird.f32 %v8404
    %v10684 = vadd.s32 %v10680, 3
    %v10685 = vand.u32 %v10684, 3
    %vm10686 = vcmp.lt.s32.totalorder %v10685, 2
    %vm10687 = vcmp.eq.s32.totalorder %v10685, 0
    %v10688 = vxor.u32 %v10682, 2147483648
    %v10689 = vsel %vm10687, %v10681, %v10688
    %vm10690 = vcmp.eq.s32.totalorder %v10685, 2
    %v10691 = vxor.u32 %v10681, 2147483648
    %v10692 = vsel %vm10690, %v10691, %v10682
    %v10693 = vsel %vm10686, %v10689, %v10692
    %v10694 = vsel %vm10683, nan, %v10693
    %v10695 = vand.u32 2147483647, %v8405
    %vm10696 = vcmp.le.f32.partialorder %v10695, 0.7853982
    %vm10697 = vcmp.lt.s32.totalorder %v8405, 0
    %v10698 = vand.u32 %v8405, 2139095040
    %v10699 = vshrl.u32 %v10698, 23
    %v10700 = vsub.s32 %v10699, 127
    %v10701 = vand.u32 2147483647, %v8405
    %v10702 = vand.u32 %v10701, 8388607
    %v10703 = vor.u32 %v10702, 8388608
    %v10704 = vsub.s32 0, %v10703
    %v10705 = vadd.s32 %v10700, 1
    %vm10706 = vcmp.gt.s32.totalorder %v10705, 0
    %v10707 = vsel %vm10706, %v10705, 0
    %v10708 = vshrl.u32 %v10707, 5
    %v10709 = vand.u32 %v10707, 31
    %v10710 = vsub.s32 32, %v10709
    %v10711 = vshrl.u32 683565275, %v10710
    %v10712 = vshll.u32 683565275, %v10709
    %v10713 = vshrl.u32 2475754826, %v10710
    %v10714 = vor.u32 %v10712, %v10713
    %v10715 = vshll.u32 2475754826, %v10709
    %v10716 = vshrl.u32 2131351028, %v10710
    %v10717 = vor.u32 %v10715, %v10716
    %v10718 = vshll.u32 2131351028, %v10709
    %v10719 = vshrl.u32 2102212464, %v10710
    %v10720 = vor.u32 %v10718, %v10719
    %v10721 = vshll.u32 2102212464, %v10709
    %v10722 = vshrl.u32 920167782, %v10710
    %v10723 = vor.u32 %v10721, %v10722
    %v10724 = vshll.u32 920167782, %v10709
    %v10725 = vshrl.u32 1326507024, %v10710
    %v10726 = vor.u32 %v10724, %v10725
    %vm10727 = vcmp.lt.s32.totalorder %v10708, 1
    %vm10728 = vcmp.lt.s32.totalorder %v10708, 2
    %vm10729 = vcmp.lt.s32.totalorder %v10708, 3
    %vm10730 = vcmp.lt.s32.totalorder %v10708, 4
    %v10731 = vsel %vm10727, %v10711, %v10714
    %v10732 = vsel %vm10730, %v10720, 2102212464
    %v10733 = vsel %vm10729, %v10717, %v10732
    %v10734 = vsel %vm10728, %v10731, %v10733
    %v10735 = vsel %vm10727, %v10714, %v10717
    %v10736 = vsel %vm10730, %v10723, 920167782
    %v10737 = vsel %vm10729, %v10720, %v10736
    %v10738 = vsel %vm10728, %v10735, %v10737
    %v10739 = vsel %vm10727, %v10717, %v10720
    %v10740 = vsel %vm10730, %v10726, 1326507024
    %v10741 = vsel %vm10729, %v10723, %v10740
    %v10742 = vsel %vm10728, %v10739, %v10741
    %v10743 = vshll.u32 %v10703, 8
    %v10744 = vmul.u32.u64.compose %v10743, %v10742
    %v10745 = vextract.low.u32 %v10744
    %v10746 = vextract.high.u32 %v10744
    %v10747 = vmul.u32.u64.compose %v10743, %v10738
    %v10748 = vextract.low.u32 %v10747
    %v10749 = vextract.high.u32 %v10747
    %v10750 = vmul.u32 %v10743, %v10734
    %v10751 = vadd.s32 %v10746, %v10748
    %vm10752 = vc.u32 %v10746, %v10748
    %v10753 = vadd.s32 %v10749, 1
    %v10754 = vsel %vm10752, %v10753, %v10749
    %v10755 = vadd.s32 %v10750, %v10754
    %v10756 = vadd.s32 %v10755, 536870912
    %v10757 = vshrl.u32 %v10756, 30
    %v10758 = vshll.u32 %v10757, 30
    %v10759 = vsub.s32 %v10755, %v10758
    %vm10760 = vcmp.lt.s32.totalorder %v10759, 0
    %v10761 = vsub.s32 0, %v10759
    %v10762 = vsel %vm10760, %v10761, %v10759
    %v10763 = vclz %v10762
    %v10764 = vsub.s32 %v10763, 2
    %vm10765 = vcmp.gt.s32.totalorder 0, %v10764
    %v10766 = vsel %vm10765, 0, %v10764
    %v10767 = vsub.s32 32, %v10766
    %v10768 = vshll.u32 %v10759, %v10766
    %v10769 = vshrl.u32 %v10751, %v10767
    %v10770 = vor.u32 %v10768, %v10769
    %v10771 = vsub.s32 4294967266, %v10766
    %v10772 = vadd.s32 %v10771, 127
    %v10773 = vshll.u32 %v10772, 23
    %v10774 = vor.u32 4788187, %v10773
    %v10775 = vand.u32 2147483647, %v10774
    %v10777 = vcvt.s32.f32 %v10770
    %v10778 = vmul.f32 %v10777, %v10775
    %v10779 = vxor.u32 %v10778, 2147483648
    %v10780 = vsel %vm10697, %v10779, %v10778
    %v10781 = vsub.s32 4, %v10757
    %v10782 = vsel %vm10697, %v10781, %v10757
    %v10783 = vsel %vm10696, %v8405, %v10780
    %v10784 = vsel %vm10696, 0, %v10782
    %v10785 = vcosq.f32.pop %v10783
    %v10786 = vsinq.f32.pop %v10783
    %vm10787 = vweird.f32 %v8405
    %v10788 = vadd.s32 %v10784, 3
    %v10789 = vand.u32 %v10788, 3
    %vm10790 = vcmp.lt.s32.totalorder %v10789, 2
    %vm10791 = vcmp.eq.s32.totalorder %v10789, 0
    %v10792 = vxor.u32 %v10786, 2147483648
    %v10793 = vsel %vm10791, %v10785, %v10792
    %vm10794 = vcmp.eq.s32.totalorder %v10789, 2
    %v10795 = vxor.u32 %v10785, 2147483648
    %v10796 = vsel %vm10794, %v10795, %v10786
    %v10797 = vsel %vm10790, %v10793, %v10796
    %v10798 = vsel %vm10787, nan, %v10797
    %v10799 = vand.u32 2147483647, %v8406
    %vm10800 = vcmp.le.f32.partialorder %v10799, 0.7853982
    %vm10801 = vcmp.lt.s32.totalorder %v8406, 0
    %v10802 = vand.u32 %v8406, 2139095040
    %v10803 = vshrl.u32 %v10802, 23
    %v10804 = vsub.s32 %v10803, 127
    %v10805 = vand.u32 2147483647, %v8406
    %v10806 = vand.u32 %v10805, 8388607
    %v10807 = vor.u32 %v10806, 8388608
    %v10808 = vsub.s32 0, %v10807
    %v10809 = vadd.s32 %v10804, 1
    %vm10810 = vcmp.gt.s32.totalorder %v10809, 0
    %v10811 = vsel %vm10810, %v10809, 0
    %v10812 = vshrl.u32 %v10811, 5
    %v10813 = vand.u32 %v10811, 31
    %v10814 = vsub.s32 32, %v10813
    %v10815 = vshrl.u32 683565275, %v10814
    %v10816 = vshll.u32 683565275, %v10813
    %v10817 = vshrl.u32 2475754826, %v10814
    %v10818 = vor.u32 %v10816, %v10817
    %v10819 = vshll.u32 2475754826, %v10813
    %v10820 = vshrl.u32 2131351028, %v10814
    %v10821 = vor.u32 %v10819, %v10820
    %v10822 = vshll.u32 2131351028, %v10813
    %v10823 = vshrl.u32 2102212464, %v10814
    %v10824 = vor.u32 %v10822, %v10823
    %v10825 = vshll.u32 2102212464, %v10813
    %v10826 = vshrl.u32 920167782, %v10814
    %v10827 = vor.u32 %v10825, %v10826
    %v10828 = vshll.u32 920167782, %v10813
    %v10829 = vshrl.u32 1326507024, %v10814
    %v10830 = vor.u32 %v10828, %v10829
    %vm10831 = vcmp.lt.s32.totalorder %v10812, 1
    %vm10832 = vcmp.lt.s32.totalorder %v10812, 2
    %vm10833 = vcmp.lt.s32.totalorder %v10812, 3
    %vm10834 = vcmp.lt.s32.totalorder %v10812, 4
    %v10835 = vsel %vm10831, %v10815, %v10818
    %v10836 = vsel %vm10834, %v10824, 2102212464
    %v10837 = vsel %vm10833, %v10821, %v10836
    %v10838 = vsel %vm10832, %v10835, %v10837
    %v10839 = vsel %vm10831, %v10818, %v10821
    %v10840 = vsel %vm10834, %v10827, 920167782
    %v10841 = vsel %vm10833, %v10824, %v10840
    %v10842 = vsel %vm10832, %v10839, %v10841
    %v10843 = vsel %vm10831, %v10821, %v10824
    %v10844 = vsel %vm10834, %v10830, 1326507024
    %v10845 = vsel %vm10833, %v10827, %v10844
    %v10846 = vsel %vm10832, %v10843, %v10845
    %v10847 = vshll.u32 %v10807, 8
    %v10848 = vmul.u32.u64.compose %v10847, %v10846
    %v10849 = vextract.low.u32 %v10848
    %v10850 = vextract.high.u32 %v10848
    %v10851 = vmul.u32.u64.compose %v10847, %v10842
    %v10852 = vextract.low.u32 %v10851
    %v10853 = vextract.high.u32 %v10851
    %v10854 = vmul.u32 %v10847, %v10838
    %v10855 = vadd.s32 %v10850, %v10852
    %vm10856 = vc.u32 %v10850, %v10852
    %v10857 = vadd.s32 %v10853, 1
    %v10858 = vsel %vm10856, %v10857, %v10853
    %v10859 = vadd.s32 %v10854, %v10858
    %v10860 = vadd.s32 %v10859, 536870912
    %v10861 = vshrl.u32 %v10860, 30
    %v10862 = vshll.u32 %v10861, 30
    %v10863 = vsub.s32 %v10859, %v10862
    %vm10864 = vcmp.lt.s32.totalorder %v10863, 0
    %v10865 = vsub.s32 0, %v10863
    %v10866 = vsel %vm10864, %v10865, %v10863
    %v10867 = vclz %v10866
    %v10868 = vsub.s32 %v10867, 2
    %vm10869 = vcmp.gt.s32.totalorder 0, %v10868
    %v10870 = vsel %vm10869, 0, %v10868
    %v10871 = vsub.s32 32, %v10870
    %v10872 = vshll.u32 %v10863, %v10870
    %v10873 = vshrl.u32 %v10855, %v10871
    %v10874 = vor.u32 %v10872, %v10873
    %v10875 = vsub.s32 4294967266, %v10870
    %v10876 = vadd.s32 %v10875, 127
    %v10877 = vshll.u32 %v10876, 23
    %v10878 = vor.u32 4788187, %v10877
    %v10879 = vand.u32 2147483647, %v10878
    %v10881 = vcvt.s32.f32 %v10874
    %v10882 = vmul.f32 %v10881, %v10879
    %v10883 = vxor.u32 %v10882, 2147483648
    %v10884 = vsel %vm10801, %v10883, %v10882
    %v10885 = vsub.s32 4, %v10861
    %v10886 = vsel %vm10801, %v10885, %v10861
    %v10887 = vsel %vm10800, %v8406, %v10884
    %v10888 = vsel %vm10800, 0, %v10886
    %v10889 = vcosq.f32.pop %v10887
    %v10890 = vsinq.f32.pop %v10887
    %vm10891 = vweird.f32 %v8406
    %v10892 = vadd.s32 %v10888, 3
    %v10893 = vand.u32 %v10892, 3
    %vm10894 = vcmp.lt.s32.totalorder %v10893, 2
    %vm10895 = vcmp.eq.s32.totalorder %v10893, 0
    %v10896 = vxor.u32 %v10890, 2147483648
    %v10897 = vsel %vm10895, %v10889, %v10896
    %vm10898 = vcmp.eq.s32.totalorder %v10893, 2
    %v10899 = vxor.u32 %v10889, 2147483648
    %v10900 = vsel %vm10898, %v10899, %v10890
    %v10901 = vsel %vm10894, %v10897, %v10900
    %v10902 = vsel %vm10891, nan, %v10901
    %10904 = vset.pattern.permute.xlu0 0
    %10905 = vperm.xlu0 %10904, %v8353
    %v10906 = vpop.permute.xlu0 %10905
    %10909 = vset.pattern.permute.xlu0 0
    %10910 = vperm.xlu0 %10909, %v8354
    %v10911 = vpop.permute.xlu0 %10910
    %v10913 = vmul.f32 %v10906, %v8510
    %v10914 = vmul.f32 %v10911, %v8614
    %v10915 = vmul.f32 %v10906, %v8718
    %v10916 = vmul.f32 %v10911, %v8822
    %v10917 = vmul.f32 %v10906, %v8926
    %v10918 = vmul.f32 %v10911, %v9030
    %v10919 = vmul.f32 %v10906, %v9134
    %v10920 = vmul.f32 %v10911, %v9238
    %v10921 = vmul.f32 %v10906, %v9342
    %v10922 = vmul.f32 %v10911, %v9446
    %v10923 = vmul.f32 %v10906, %v9550
    %v10924 = vmul.f32 %v10911, %v9654
    %v10925 = vmul.f32 %v10906, %v9758
    %v10926 = vmul.f32 %v10911, %v9862
    %v10927 = vmul.f32 %v10906, %v9966
    %v10928 = vmul.f32 %v10911, %v10070
    %v10929 = vmul.f32 %v10906, %v10174
    %v10930 = vmul.f32 %v10911, %v10278
    %v10931 = vmul.f32 %v10906, %v10382
    %v10932 = vmul.f32 %v10911, %v10486
    %v10933 = vmul.f32 %v10906, %v10590
    %v10934 = vmul.f32 %v10911, %v10694
    %v10935 = vmul.f32 %v10906, %v10798
    %v10936 = vmul.f32 %v10911, %v10902
    %v10937 = vadd.f32 %v10913, %v10914
    %v10938 = vrot.slane %v10937, 4
    %v10939 = vadd.f32 %v10937, %v10938
    %v10940 = vrot.slane %v10939, 2
    %v10941 = vadd.f32 %v10939, %v10940
    %v10942 = vrot.slane %v10941, 1
    %v10943 = vadd.f32 %v10941, %v10942
    %v10944 = vadd.f32 %v10915, %v10916
    %v10945 = vrot.slane %v10944, 4
    %v10946 = vadd.f32 %v10944, %v10945
    %v10947 = vrot.slane %v10946, 2
    %v10948 = vadd.f32 %v10946, %v10947
    %v10949 = vrot.slane %v10948, 1
    %v10950 = vadd.f32 %v10948, %v10949
    %v10951 = vadd.f32 %v10917, %v10918
    %v10952 = vrot.slane %v10951, 4
    %v10953 = vadd.f32 %v10951, %v10952
    %v10954 = vrot.slane %v10953, 2
    %v10955 = vadd.f32 %v10953, %v10954
    %v10956 = vrot.slane %v10955, 1
    %v10957 = vadd.f32 %v10955, %v10956
    %v10958 = vadd.f32 %v10919, %v10920
    %v10959 = vrot.slane %v10958, 4
    %v10960 = vadd.f32 %v10958, %v10959
    %v10961 = vrot.slane %v10960, 2
    %v10962 = vadd.f32 %v10960, %v10961
    %v10963 = vrot.slane %v10962, 1
    %v10964 = vadd.f32 %v10962, %v10963
    %v10965 = vadd.f32 %v10921, %v10922
    %v10966 = vrot.slane %v10965, 4
    %v10967 = vadd.f32 %v10965, %v10966
    %v10968 = vrot.slane %v10967, 2
    %v10969 = vadd.f32 %v10967, %v10968
    %v10970 = vrot.slane %v10969, 1
    %v10971 = vadd.f32 %v10969, %v10970
    %v10972 = vadd.f32 %v10923, %v10924
    %v10973 = vrot.slane %v10972, 4
    %v10974 = vadd.f32 %v10972, %v10973
    %v10975 = vrot.slane %v10974, 2
    %v10976 = vadd.f32 %v10974, %v10975
    %v10977 = vrot.slane %v10976, 1
    %v10978 = vadd.f32 %v10976, %v10977
    %v10979 = vadd.f32 %v10925, %v10926
    %v10980 = vrot.slane %v10979, 4
    %v10981 = vadd.f32 %v10979, %v10980
    %v10982 = vrot.slane %v10981, 2
    %v10983 = vadd.f32 %v10981, %v10982
    %v10984 = vrot.slane %v10983, 1
    %v10985 = vadd.f32 %v10983, %v10984
    %v10986 = vadd.f32 %v10927, %v10928
    %v10987 = vrot.slane %v10986, 4
    %v10988 = vadd.f32 %v10986, %v10987
    %v10989 = vrot.slane %v10988, 2
    %v10990 = vadd.f32 %v10988, %v10989
    %v10991 = vrot.slane %v10990, 1
    %v10992 = vadd.f32 %v10990, %v10991
    %v10993 = vadd.f32 %v10929, %v10930
    %v10994 = vrot.slane %v10993, 4
    %v10995 = vadd.f32 %v10993, %v10994
    %v10996 = vrot.slane %v10995, 2
    %v10997 = vadd.f32 %v10995, %v10996
    %v10998 = vrot.slane %v10997, 1
    %v10999 = vadd.f32 %v10997, %v10998
    %v11000 = vadd.f32 %v10931, %v10932
    %v11001 = vrot.slane %v11000, 4
    %v11002 = vadd.f32 %v11000, %v11001
    %v11003 = vrot.slane %v11002, 2
    %v11004 = vadd.f32 %v11002, %v11003
    %v11005 = vrot.slane %v11004, 1
    %v11006 = vadd.f32 %v11004, %v11005
    %v11007 = vadd.f32 %v10933, %v10934
    %v11008 = vrot.slane %v11007, 4
    %v11009 = vadd.f32 %v11007, %v11008
    %v11010 = vrot.slane %v11009, 2
    %v11011 = vadd.f32 %v11009, %v11010
    %v11012 = vrot.slane %v11011, 1
    %v11013 = vadd.f32 %v11011, %v11012
    %v11014 = vadd.f32 %v10935, %v10936
    %v11015 = vrot.slane %v11014, 4
    %v11016 = vadd.f32 %v11014, %v11015
    %v11017 = vrot.slane %v11016, 2
    %v11018 = vadd.f32 %v11016, %v11017
    %v11019 = vrot.slane %v11018, 1
    %v11020 = vadd.f32 %v11018, %v11019
    %v11021 = vadd.f32 %v8339, %v10943
    %v11022 = vadd.f32 %v8340, %v10950
    %v11023 = vadd.f32 %v8341, %v10957
    %v11024 = vadd.f32 %v8342, %v10964
    %v11025 = vadd.f32 %v8343, %v10971
    %v11026 = vadd.f32 %v8344, %v10978
    %v11027 = vadd.f32 %v8345, %v10985
    %v11028 = vadd.f32 %v8346, %v10992
    %v11029 = vadd.f32 %v8347, %v10999
    %v11030 = vadd.f32 %v8348, %v11006
    %v11031 = vadd.f32 %v8349, %v11013
    %v11032 = vadd.f32 %v8350, %v11020
    %vm11045 = vcmask 1041409
    %v11046 = vsel %vm11045, %v11022, %v11021
    %vm11047 = vcmask 1042434
    %v11048 = vsel %vm11047, %v11023, %v11046
    %vm11049 = vcmask 1043459
    %v11050 = vsel %vm11049, %v11024, %v11048
    %vm11051 = vcmask 1044484
    %v11052 = vsel %vm11051, %v11025, %v11050
    %vm11053 = vcmask 1045509
    %v11054 = vsel %vm11053, %v11026, %v11052
    %vm11055 = vcmask 1046534
    %v11056 = vsel %vm11055, %v11027, %v11054
    %vm11057 = vcmask 1047559
    %v11058 = vsel %vm11057, %v11028, %v11056
    %v11059 = vsel %vm11045, %v11030, %v11029
    %v11060 = vsel %vm11047, %v11031, %v11059
    %v11061 = vsel %vm11049, %v11032, %v11060
    %11064 = vst [vmem:[#allocation2] sm:$0xff] %v11058
    %11065 = vst [vmem:[#allocation2 + $0x8] sm:$0xf] %v11061
    // Predicated region
    $region18: #{tpu_custom_call.1} parent=1 // pred_check
      _
    $region19: #{tpu_custom_call.1} parent=1 // pred_check_branch
      %11067 = sbr.rel (0) target = $region21
    $region20: #{tpu_custom_call.1} parent=1 // pred_region
      %s11069 = ssub.s32 256, 256
      %11070 = vsyncadd [#allocation3], %s11069
      %s11071 = sshll.u32 [#allocation2], 4
      %s11072 = int_to_ptr.vmem [resolvable:$true] %s11071
      %11077 = dma.vmem_to_hbm [thread:$0]  %s11072, 256, %s4, [#allocation3], 128, 128, 8
    $region21: #{tpu_custom_call.1} parent=1 // pred_fallthru
      _
    // Predicated region
    $region22: #{tpu_custom_call.1} parent=1 // pred_check
      _
    $region23: #{tpu_custom_call.1} parent=1 // pred_check_branch
      %11079 = sbr.rel (0) target = $region25
    $region24: #{tpu_custom_call.1} parent=1 // pred_region
      %11080 = dma.done [#allocation3], 256
    $region25: #{tpu_custom_call.1} parent=1 // pred_fallthru
      _
    %11081 = vsyncpa [#allocation3], 1

</llo_original>
